<compile_context>
chip_gen: v7x
topology: tpu7x:2x2x1
jax: 0.10.0
libtpu: 0.0.40
codegen_flags: <defaults>
</compile_context>

<pallas_src>
import functools
import numpy as np
import jax
import jax.numpy as jnp
from jax.experimental import pallas as pl
from jax.experimental.pallas import tpu as pltpu

F32 = jnp.float32
BF16 = jnp.bfloat16


# ------------------------------ fused kernel --------------------------------

def _hswish(v):
    return v * (jnp.clip(v + 3.0, 0.0, 6.0) * (1.0 / 6.0))


def _hsigmoid(v):
    return jnp.clip(v + 3.0, 0.0, 6.0) * (1.0 / 6.0)


def _lt_block_kernel(
    x_ref,
    w_pe_ref, b_pe_ref,
    wq_ref, bq_ref, wk_ref, bk_ref, wv_ref, bv_ref,
    wo_ref, bo_ref,
    w_pr_ref, b_pr_ref,
    mask_ref, wg_ref, b_g_ref, w_cp_ref,
    w_e_ref, b_e_ref,
    w_dw_ref, b_dw_ref,
    w_se1_ref, b_se1_ref, w_se2_ref, b_se2_ref,
    w_p_ref, b_p_ref,
    o_ref,
    *, ipb, n_tok, heads, hd, shifts,
):
    R = ipb * n_tok
    cin = x_ref.shape[-1]
    x = x_ref[...].reshape(R, cin)                              # (R, Cin) bf16

    def mm(a, w, b=None):
        y = jnp.dot(a.astype(BF16), w, preferred_element_type=F32)
        return y if b is None else y + b

    def shifted(v, t):
        # 3x3 tap shift (pad=1) of a token-major (R, C) slab: sublane roll
        # (XLU) + boundary mask (VPU).  Cross-image leakage is always masked.
        if shifts[t] == 0:
            return v
        return pltpu.roll(v, shifts[t], axis=0) * mask_ref[t]

    # ---- patch_embed: 1x1 conv + BN (folded) ----
    pe = mm(x, w_pe_ref[...], b_pe_ref[...])                    # (R, mhsa) f32
    pe_b = pe.astype(BF16)

    # ---- norm1 + E-MHSA: fused QKV (norm1 + softmax scale folded into wq) ----
    q_b = mm(pe_b, wq_ref[...], bq_ref[...]).astype(BF16)       # (R, mhsa)
    k_b = mm(pe_b, wk_ref[...], bk_ref[...]).astype(BF16)
    v_b = mm(pe_b, wv_ref[...], bv_ref[...]).astype(BF16)

    img_ctx = []
    for img in range(ipb):                                      # per-image attention
        r0 = img * n_tok
        head_ctx = []
        for h in range(heads):
            c0 = h * hd
            qh = q_b[r0:r0 + n_tok, c0:c0 + hd]
            kh = k_b[r0:r0 + n_tok, c0:c0 + hd]
            vh = v_b[r0:r0 + n_tok, c0:c0 + hd]
            s = jax.lax.dot_general(qh, kh, (((1,), (1,)), ((), ())),
                                    preferred_element_type=F32)  # (n_tok, n_tok)
            s = s - jnp.max(s, axis=-1, keepdims=True)
            p = jnp.exp(s)
            p = (p * pl.reciprocal(jnp.sum(p, axis=-1, keepdims=True),
                                   approx=True)).astype(BF16)
            head_ctx.append(jnp.dot(p, vh, preferred_element_type=F32))
        img_ctx.append(jnp.concatenate(head_ctx, axis=-1))       # (n_tok, mhsa)
    ctx = img_ctx[0] if ipb == 1 else jnp.concatenate(img_ctx, axis=0)

    attn = mm(ctx, wo_ref[...], bo_ref[...])                     # single out-proj
    x1 = pe + attn                                               # residual (DropPath=id)

    # ---- projection: 1x1 conv + BN (folded) ----
    proj = mm(x1, w_pr_ref[...], b_pr_ref[...])                  # (R, mhca)

    # ---- MHCA: grouped 3x3 via roll+mask, ONE K=9*mhca matmul, +BN+ReLU, 1x1 ----
    # TODO(synk): MultiCHA group count assumed = num_heads (consistent with
    # init_params); real MedViT uses groups = out_channels // 32.
    gcat = jnp.concatenate([shifted(proj, t) for t in range(9)],
                           axis=-1).astype(BF16)                 # (R, 9*mhca)
    g = jnp.maximum(
        jnp.dot(gcat, wg_ref[...], preferred_element_type=F32) + b_g_ref[...], 0.0)
    out2 = proj + mm(g, w_cp_ref[...])                           # residual

    # ---- concat x1|out2 -> lane-dense 128-wide residual base, park in output ----
    cat = jnp.concatenate([x1, out2], axis=-1)                   # (R, out_ch)
    out_ch = cat.shape[-1]
    o_ref[...] = cat.reshape(ipb, n_tok, out_ch)
    cat_b = cat.astype(BF16)

    # ---- norm2 + LFF expand (1x1 + BN + h_swish), all folded, single matmul ----
    h1 = _hswish(jnp.dot(cat_b, w_e_ref[...], preferred_element_type=F32)
                 + b_e_ref[...])                                 # (R, hidden)

    # ---- LFF depthwise 3x3 (+BN) via roll+mask + per-channel VPU MAC ----
    acc0 = jnp.zeros_like(h1)
    acc1 = jnp.zeros_like(h1)
    for t in range(9):
        contrib = shifted(h1, t) * w_dw_ref[t]
        if t % 2 == 0:
            acc0 = acc0 + contrib
        else:
            acc1 = acc1 + contrib
    h2 = _hswish(acc0 + acc1 + b_dw_ref[...])                    # (R, hidden)

    # ---- SE gate (per image) on the VPU / XLU, no MXU ----
    hidden = h2.shape[-1]
    se_r = w_se1_ref.shape[0]
    h2_3d = h2.reshape(ipb, n_tok, hidden)
    pooled = jnp.mean(h2_3d, axis=1)                             # (ipb, hidden)
    excite = jnp.zeros((ipb, hidden), F32)
    for r in range(se_r):
        z = jnp.sum(pooled * w_se1_ref[r], axis=-1, keepdims=True) + b_se1_ref[r]
        excite = excite + jnp.maximum(z, 0.0) * w_se2_ref[r]
    gate = _hsigmoid(excite + b_se2_ref[...])                    # (ipb, hidden)
    h3 = (h2_3d * gate[:, None, :]).reshape(R, hidden).astype(BF16)

    # ---- LFF project (1x1 + BN, folded) + final residual into output ref ----
    final = jnp.dot(h3, w_p_ref[...], preferred_element_type=F32) + b_p_ref[...]
    o_ref[...] = o_ref[...] + final.reshape(ipb, n_tok, out_ch)


# --------------------------- one-time preprocessing --------------------------

def _make_divisible(v, divisor, min_value=None):
    if min_value is None:
        min_value = divisor
    new_v = max(min_value, int(v + divisor / 2) // divisor * divisor)
    if new_v < 0.9 * v:
        new_v += divisor
    return new_v


def _bn_fold(bn, eps):
    s = bn["gamma"] / jnp.sqrt(bn["var"] + eps)
    return s, bn["beta"] - bn["mean"] * s


def _shift_masks(H, W):
    """(9, H*W, 1) 0/1 masks: valid positions for each 3x3 tap (pad=1)."""
    N = H * W
    m = np.zeros((9, N, 1), np.float32)
    for dy in range(3):
        for dx in range(3):
            t = dy * 3 + dx
            for y in range(H):
                sy = y + dy - 1
                for x in range(W):
                    sx = x + dx - 1
                    if 0 <= sy < H and 0 <= sx < W:
                        m[t, y * W + x, 0] = 1.0
    return m


def _group_conv_taps(w_ochw, groups):
    """torch grouped-conv weight (Cout, Cin//g, 3, 3) -> (9, Cin, Cout) block-diag mats."""
    w = np.asarray(w_ochw)                       # one-time, outside jit
    Cout, Cin_g, _, _ = w.shape
    Cin = Cin_g * groups
    cog = Cout // groups
    taps = np.zeros((9, Cin, Cout), np.float32)
    for co in range(Cout):
        g = co // cog
        for cig in range(Cin_g):
            ci = g * Cin_g + cig
            for dy in range(3):
                for dx in range(3):
                    taps[dy * 3 + dx, ci, co] = w[co, cig, dy, dx]
    return taps


def prepare_kernel_weights(p, H, W):
    """Fold BN, fuse/reshape weights, precompute boundary masks. Runs once, outside jit."""
    EPS6, EPS5 = 1e-6, 1e-5            # MedViT NORM_EPS vs default BN eps inside LFF
    mhsa, mhca, hidden, heads = p["mhsa"], p["mhca"], p["hidden"], p["num_heads"]
    out_ch = mhsa + mhca
    hd = mhsa // heads
    scale = float(hd) ** -0.5
    kw = {}

    # patch_embed: 1x1 conv (no bias) + BN
    s, sh = _bn_fold(p["pe_bn"], EPS6)
    kw["w_pe"] = (p["pe_w"] * s[None, :]).astype(BF16)
    kw["b_pe"] = sh.reshape(1, mhsa).astype(F32)

    # norm1 folded into fused q/k/v Linears; softmax scale folded into q
    s1, sh1 = _bn_fold(p["n1_bn"], EPS6)

    def lin_fold(wm, bm, extra=1.0):
        wf = (wm * s1[:, None]) * extra
        bf = (sh1 @ wm + bm) * extra
        return wf.astype(BF16), bf.reshape(1, -1).astype(F32)

    kw["wq"], kw["bq"] = lin_fold(p["wq"], p["bq"], extra=scale)
    kw["wk"], kw["bk"] = lin_fold(p["wk"], p["bk"])
    kw["wv"], kw["bv"] = lin_fold(p["wv"], p["bv"])
    kw["wo"] = p["wo"].astype(BF16)
    kw["bo"] = p["bo"].reshape(1, mhsa).astype(F32)

    # projection: 1x1 conv + BN
    s, sh = _bn_fold(p["pr_bn"], EPS6)
    kw["w_pr"] = (p["pr_w"] * s[None, :]).astype(BF16)
    kw["b_pr"] = sh.reshape(1, mhca).astype(F32)

    # shared 3x3 boundary masks (per tap, per token)
    kw["mask"] = jnp.asarray(_shift_masks(H, W))                   # (9, N, 1) f32

    # MHCA grouped 3x3 conv + BN folded -> one (9*mhca, mhca) weight; 1x1 projection
    s, sh = _bn_fold(p["g_bn"], EPS6)
    g_taps = _group_conv_taps(p["gconv_w"], groups=heads) * np.asarray(s)[None, None, :]
    kw["wg"] = jnp.asarray(g_taps.reshape(9 * mhca, mhca)).astype(BF16)
    kw["b_g"] = sh.reshape(1, mhca).astype(F32)
    kw["w_cp"] = p["mhca_proj_w"].astype(BF16)

    # norm2 + LFF expand BN folded (un-split: acts on the in-kernel x1|out2 concat)
    s2, sh2 = _bn_fold(p["n2_bn"], EPS6)
    se_, she_ = _bn_fold(p["lff_e_bn"], EPS5)
    kw["w_e"] = ((p["lff_e_w"] * s2[:, None]) * se_[None, :]).astype(BF16)
    kw["b_e"] = ((sh2 @ p["lff_e_w"]) * se_ + she_).reshape(1, hidden).astype(F32)

    # LFF depthwise 3x3 + BN folded -> (9, 1, hidden) per-tap per-channel scales
    s, sh = _bn_fold(p["lff_dw_bn"], EPS5)
    w_dw = jnp.transpose(p["lff_dw_w"].reshape(hidden, 9), (1, 0)) * s[None, :]
    kw["w_dw"] = w_dw.reshape(9, 1, hidden).astype(F32)
    kw["b_dw"] = sh.reshape(1, hidden).astype(F32)

    # SE (stored transposed for the VPU/XLU squeeze-excite formulation)
    se_r = p["se_w1"].shape[1]
    kw["w_se1"] = jnp.transpose(p["se_w1"], (1, 0)).reshape(se_r, 1, hidden).astype(F32)
    kw["b_se1"] = p["se_b1"].reshape(se_r, 1, 1).astype(F32)
    kw["w_se2"] = p["se_w2"].reshape(se_r, 1, hidden).astype(F32)
    kw["b_se2"] = p["se_b2"].reshape(1, hidden).astype(F32)

    # LFF project + BN folded (un-split: one lane-dense 128-wide output)
    s, sh = _bn_fold(p["lff_p_bn"], EPS5)
    kw["w_p"] = (p["lff_p_w"] * s[None, :]).astype(BF16)
    kw["b_p"] = sh.reshape(1, out_ch).astype(F32)

    cfg = dict(mhsa=mhsa, mhca=mhca, hidden=hidden, heads=heads, hd=hd,
               out_ch=out_ch, se_r=se_r)
    return kw, cfg


# --------------------------------- forward ----------------------------------

_WEIGHT_ORDER = [
    "w_pe", "b_pe", "wq", "bq", "wk", "bk", "wv", "bv", "wo", "bo",
    "w_pr", "b_pr", "mask", "wg", "b_g", "w_cp",
    "w_e", "b_e", "w_dw", "b_dw",
    "w_se1", "b_se1", "w_se2", "b_se2",
    "w_p", "b_p",
]


def lt_block_forward(x_nchw, kw, cfg, images_per_step=2):
    B, Cin, H, W = x_nchw.shape
    N = H * W
    out_ch = cfg["out_ch"]

    # images packed per grid step (row-fill for the pointwise matmuls).
    ipb = images_per_step if (images_per_step > 0 and B % images_per_step == 0) else 1
    R = ipb * N

    # static sublane-roll amounts for the 9 conv taps (row-major tokens, pad=1)
    shifts = tuple((-((t // 3 - 1) * W + (t % 3 - 1))) % R for t in range(9))

    # NCHW -> tokens (B, N, C) in bf16 (halves input DMA bytes).
    x_tok = jnp.transpose(x_nchw, (0, 2, 3, 1)).reshape(B, N, Cin).astype(BF16)

    weights = []
    for k in _WEIGHT_ORDER:
        a = kw[k]
        if k == "mask" and ipb > 1:
            a = jnp.tile(a, (1, ipb, 1))     # (9, ipb*N, 1)
        weights.append(a)

    def rep_spec(a):
        nd = a.ndim
        return pl.BlockSpec(a.shape, lambda b, _nd=nd: (0,) * _nd)

    in_specs = [pl.BlockSpec((ipb, N, Cin), lambda b: (b, 0, 0))]
    in_specs += [rep_spec(a) for a in weights]

    out = pl.pallas_call(
        functools.partial(_lt_block_kernel, ipb=ipb, n_tok=N,
                          heads=cfg["heads"], hd=cfg["hd"], shifts=shifts),
        out_shape=jax.ShapeDtypeStruct((B, N, out_ch), F32),
        grid=(B // ipb,),
        in_specs=in_specs,
        out_specs=pl.BlockSpec((ipb, N, out_ch), lambda b: (b, 0, 0)),
        compiler_params=pltpu.CompilerParams(
            dimension_semantics=("parallel",)),
    )(x_tok, *weights)

    # back to NCHW (trivial XLA epilogue; the channel concat already happened in-kernel)
    return out.reshape(B, H, W, out_ch).transpose(0, 3, 1, 2)


# --------------------------------- params -----------------------------------

def init_params(key, in_ch, out_ch, num_heads, mlp_ratio, mix_block_ratio=0.75):
    mhsa = _make_divisible(int(out_ch * mix_block_ratio), 32)
    mhca = out_ch - mhsa
    hidden = out_ch * mlp_ratio
    se_r = hidden // out_ch        # SE reduction=out_channels -> bottleneck = mlp_ratio
    assert mhca > 0 and mhsa % num_heads == 0 and mhca % num_heads == 0

    keys = iter(jax.random.split(key, 64))

    def nrm(shape, std=0.05):
        return (std * jax.random.normal(next(keys), shape)).astype(F32)

    def bn(c):
        return {"gamma": (1.0 + 0.1 * jax.random.normal(next(keys), (c,))).astype(F32),
                "beta": nrm((c,), 0.1),
                "mean": nrm((c,), 0.1),
                "var": (0.5 + jax.random.uniform(next(keys), (c,))).astype(F32)}

    # Linear / 1x1 conv weights stored as (in, out): y = x @ W + b
    return dict(
        mhsa=mhsa, mhca=mhca, hidden=hidden, num_heads=num_heads,
        pe_w=nrm((in_ch, mhsa)), pe_bn=bn(mhsa),
        n1_bn=bn(mhsa),
        wq=nrm((mhsa, mhsa)), bq=nrm((mhsa,)),
        wk=nrm((mhsa, mhsa)), bk=nrm((mhsa,)),
        wv=nrm((mhsa, mhsa)), bv=nrm((mhsa,)),
        wo=nrm((mhsa, mhsa)), bo=nrm((mhsa,)),
        pr_w=nrm((mhsa, mhca)), pr_bn=bn(mhca),
        gconv_w=nrm((mhca, mhca // num_heads, 3, 3), 0.1), g_bn=bn(mhca),
        mhca_proj_w=nrm((mhca, mhca)),
        n2_bn=bn(out_ch),
        lff_e_w=nrm((out_ch, hidden)), lff_e_bn=bn(hidden),
        lff_dw_w=nrm((hidden, 1, 3, 3), 0.1), lff_dw_bn=bn(hidden),
        se_w1=nrm((hidden, se_r)), se_b1=nrm((se_r,)),
        se_w2=nrm((se_r, hidden)), se_b2=nrm((hidden,)),
        lff_p_w=nrm((hidden, out_ch)), lff_p_bn=bn(out_ch),
    )


if __name__ == "__main__":
    # LTBlock(in_channels=32, out_channels=128, num_heads=8, mlp_ratio=2, mix_block_ratio=0.75)
    #   -> mhsa_out_channels=96, mhca_out_channels=32, hidden=256
    B, Cin, H, W = 2, 32, 8, 8
    out_ch, num_heads, mlp_ratio = 128, 8, 2

    key = jax.random.PRNGKey(0)
    kx, kp = jax.random.split(key)
    x = jax.random.normal(kx, (B, Cin, H, W), dtype=F32)

    params = init_params(kp, Cin, out_ch, num_heads, mlp_ratio)
    kernel_weights, cfg = prepare_kernel_weights(params, H, W)     # one-time prep

    fwd = jax.jit(functools.partial(lt_block_forward, cfg=cfg, images_per_step=2))
    y = fwd(x, kernel_weights)
    jax.block_until_ready(y)

    assert y.shape == (B, out_ch, H, W), y.shape
    assert bool(jnp.all(jnp.isfinite(y)))
    print("KERNEL_OK")
</pallas_src>

<mosaic_0001>
module attributes {stable_mosaic.version = 11 : i64} {
  func.func @_lt_block_kernel(%arg0: i32, %arg1: memref<2x64x32xbf16, #tpu.memory_space<vmem>>, %arg2: memref<32x96xbf16, #tpu.memory_space<vmem>>, %arg3: memref<1x96xf32, #tpu.memory_space<vmem>>, %arg4: memref<96x96xbf16, #tpu.memory_space<vmem>>, %arg5: memref<1x96xf32, #tpu.memory_space<vmem>>, %arg6: memref<96x96xbf16, #tpu.memory_space<vmem>>, %arg7: memref<1x96xf32, #tpu.memory_space<vmem>>, %arg8: memref<96x96xbf16, #tpu.memory_space<vmem>>, %arg9: memref<1x96xf32, #tpu.memory_space<vmem>>, %arg10: memref<96x96xbf16, #tpu.memory_space<vmem>>, %arg11: memref<1x96xf32, #tpu.memory_space<vmem>>, %arg12: memref<96x32xbf16, #tpu.memory_space<vmem>>, %arg13: memref<1x32xf32, #tpu.memory_space<vmem>>, %arg14: memref<9x128x1xf32, #tpu.memory_space<vmem>>, %arg15: memref<288x32xbf16, #tpu.memory_space<vmem>>, %arg16: memref<1x32xf32, #tpu.memory_space<vmem>>, %arg17: memref<32x32xbf16, #tpu.memory_space<vmem>>, %arg18: memref<128x256xbf16, #tpu.memory_space<vmem>>, %arg19: memref<1x256xf32, #tpu.memory_space<vmem>>, %arg20: memref<9x1x256xf32, #tpu.memory_space<vmem>>, %arg21: memref<1x256xf32, #tpu.memory_space<vmem>>, %arg22: memref<2x1x256xf32, #tpu.memory_space<vmem>>, %arg23: memref<2x1x1xf32, #tpu.memory_space<vmem>>, %arg24: memref<2x1x256xf32, #tpu.memory_space<vmem>>, %arg25: memref<1x256xf32, #tpu.memory_space<vmem>>, %arg26: memref<256x128xbf16, #tpu.memory_space<vmem>>, %arg27: memref<1x128xf32, #tpu.memory_space<vmem>>, %arg28: memref<2x64x128xf32, #tpu.memory_space<vmem>>) attributes {dimension_semantics = [#tpu.dimension_semantics<parallel>], iteration_bounds = array<i64: 1>, scalar_prefetch = 0 : i64, scratch_operands = 0 : i64, tpu.core_type = #tpu.core_type<tc>, window_params = [{transform_indices = @transform_0, window_bounds = array<i64: 2, 64, 32>}, {pipeline_mode = #tpu.pipeline_mode<synchronous>, transform_indices = @transform_1, window_bounds = array<i64: 32, 96>}, {pipeline_mode = #tpu.pipeline_mode<synchronous>, transform_indices = @transform_2, window_bounds = array<i64: 1, 96>}, {pipeline_mode = #tpu.pipeline_mode<synchronous>, transform_indices = @transform_3, window_bounds = array<i64: 96, 96>}, {pipeline_mode = #tpu.pipeline_mode<synchronous>, transform_indices = @transform_4, window_bounds = array<i64: 1, 96>}, {pipeline_mode = #tpu.pipeline_mode<synchronous>, transform_indices = @transform_5, window_bounds = array<i64: 96, 96>}, {pipeline_mode = #tpu.pipeline_mode<synchronous>, transform_indices = @transform_6, window_bounds = array<i64: 1, 96>}, {pipeline_mode = #tpu.pipeline_mode<synchronous>, transform_indices = @transform_7, window_bounds = array<i64: 96, 96>}, {pipeline_mode = #tpu.pipeline_mode<synchronous>, transform_indices = @transform_8, window_bounds = array<i64: 1, 96>}, {pipeline_mode = #tpu.pipeline_mode<synchronous>, transform_indices = @transform_9, window_bounds = array<i64: 96, 96>}, {pipeline_mode = #tpu.pipeline_mode<synchronous>, transform_indices = @transform_10, window_bounds = array<i64: 1, 96>}, {pipeline_mode = #tpu.pipeline_mode<synchronous>, transform_indices = @transform_11, window_bounds = array<i64: 96, 32>}, {pipeline_mode = #tpu.pipeline_mode<synchronous>, transform_indices = @transform_12, window_bounds = array<i64: 1, 32>}, {pipeline_mode = #tpu.pipeline_mode<synchronous>, transform_indices = @transform_13, window_bounds = array<i64: 9, 128, 1>}, {pipeline_mode = #tpu.pipeline_mode<synchronous>, transform_indices = @transform_14, window_bounds = array<i64: 288, 32>}, {pipeline_mode = #tpu.pipeline_mode<synchronous>, transform_indices = @transform_15, window_bounds = array<i64: 1, 32>}, {pipeline_mode = #tpu.pipeline_mode<synchronous>, transform_indices = @transform_16, window_bounds = array<i64: 32, 32>}, {pipeline_mode = #tpu.pipeline_mode<synchronous>, transform_indices = @transform_17, window_bounds = array<i64: 128, 256>}, {pipeline_mode = #tpu.pipeline_mode<synchronous>, transform_indices = @transform_18, window_bounds = array<i64: 1, 256>}, {pipeline_mode = #tpu.pipeline_mode<synchronous>, transform_indices = @transform_19, window_bounds = array<i64: 9, 1, 256>}, {pipeline_mode = #tpu.pipeline_mode<synchronous>, transform_indices = @transform_20, window_bounds = array<i64: 1, 256>}, {pipeline_mode = #tpu.pipeline_mode<synchronous>, transform_indices = @transform_21, window_bounds = array<i64: 2, 1, 256>}, {pipeline_mode = #tpu.pipeline_mode<synchronous>, transform_indices = @transform_22, window_bounds = array<i64: 2, 1, 1>}, {pipeline_mode = #tpu.pipeline_mode<synchronous>, transform_indices = @transform_23, window_bounds = array<i64: 2, 1, 256>}, {pipeline_mode = #tpu.pipeline_mode<synchronous>, transform_indices = @transform_24, window_bounds = array<i64: 1, 256>}, {pipeline_mode = #tpu.pipeline_mode<synchronous>, transform_indices = @transform_25, window_bounds = array<i64: 256, 128>}, {pipeline_mode = #tpu.pipeline_mode<synchronous>, transform_indices = @transform_26, window_bounds = array<i64: 1, 128>}, {transform_indices = @transform_27, window_bounds = array<i64: 2, 64, 128>}]} {
    %c0 = arith.constant 0 : index
    %c0_0 = arith.constant 0 : index
    %c0_1 = arith.constant 0 : index
    %0 = vector.load %arg1[%c0, %c0_0, %c0_1] : memref<2x64x32xbf16, #tpu.memory_space<vmem>>, vector<2x64x32xbf16>
    %1 = vector.shape_cast %0 : vector<2x64x32xbf16> to vector<128x32xbf16>
    %c0_2 = arith.constant 0 : index
    %c0_3 = arith.constant 0 : index
    %2 = vector.load %arg2[%c0_2, %c0_3] : memref<32x96xbf16, #tpu.memory_space<vmem>>, vector<32x96xbf16>
    %c0_4 = arith.constant 0 : index
    %c0_5 = arith.constant 0 : index
    %3 = vector.load %arg3[%c0_4, %c0_5] : memref<1x96xf32, #tpu.memory_space<vmem>>, vector<1x96xf32>
    %cst = arith.constant dense<0.000000e+00> : vector<128x96xf32>
    %4 = tpu.matmul %1, %2, %cst {dimension_numbers = #tpu.dot_dimension_numbers<[1], [0], [0], [1], [0, 0, 1, 1], [], []>} : vector<128x32xbf16>, vector<32x96xbf16>, vector<128x96xf32> -> vector<128x96xf32>
    %5 = vector.broadcast %3 : vector<1x96xf32> to vector<128x96xf32>
    %6 = arith.addf %4, %5 : vector<128x96xf32>
    %7 = arith.truncf %6 : vector<128x96xf32> to vector<128x96xbf16>
    %c0_6 = arith.constant 0 : index
    %c0_7 = arith.constant 0 : index
    %8 = vector.load %arg4[%c0_6, %c0_7] : memref<96x96xbf16, #tpu.memory_space<vmem>>, vector<96x96xbf16>
    %c0_8 = arith.constant 0 : index
    %c0_9 = arith.constant 0 : index
    %9 = vector.load %arg5[%c0_8, %c0_9] : memref<1x96xf32, #tpu.memory_space<vmem>>, vector<1x96xf32>
    %cst_10 = arith.constant dense<0.000000e+00> : vector<128x96xf32>
    %10 = tpu.matmul %7, %8, %cst_10 {dimension_numbers = #tpu.dot_dimension_numbers<[1], [0], [0], [1], [0, 0, 1, 1], [], []>} : vector<128x96xbf16>, vector<96x96xbf16>, vector<128x96xf32> -> vector<128x96xf32>
    %11 = vector.broadcast %9 : vector<1x96xf32> to vector<128x96xf32>
    %12 = arith.addf %10, %11 : vector<128x96xf32>
    %13 = arith.truncf %12 : vector<128x96xf32> to vector<128x96xbf16>
    %c0_11 = arith.constant 0 : index
    %c0_12 = arith.constant 0 : index
    %14 = vector.load %arg6[%c0_11, %c0_12] : memref<96x96xbf16, #tpu.memory_space<vmem>>, vector<96x96xbf16>
    %c0_13 = arith.constant 0 : index
    %c0_14 = arith.constant 0 : index
    %15 = vector.load %arg7[%c0_13, %c0_14] : memref<1x96xf32, #tpu.memory_space<vmem>>, vector<1x96xf32>
    %cst_15 = arith.constant dense<0.000000e+00> : vector<128x96xf32>
    %16 = tpu.matmul %7, %14, %cst_15 {dimension_numbers = #tpu.dot_dimension_numbers<[1], [0], [0], [1], [0, 0, 1, 1], [], []>} : vector<128x96xbf16>, vector<96x96xbf16>, vector<128x96xf32> -> vector<128x96xf32>
    %17 = vector.broadcast %15 : vector<1x96xf32> to vector<128x96xf32>
    %18 = arith.addf %16, %17 : vector<128x96xf32>
    %19 = arith.truncf %18 : vector<128x96xf32> to vector<128x96xbf16>
    %c0_16 = arith.constant 0 : index
    %c0_17 = arith.constant 0 : index
    %20 = vector.load %arg8[%c0_16, %c0_17] : memref<96x96xbf16, #tpu.memory_space<vmem>>, vector<96x96xbf16>
    %c0_18 = arith.constant 0 : index
    %c0_19 = arith.constant 0 : index
    %21 = vector.load %arg9[%c0_18, %c0_19] : memref<1x96xf32, #tpu.memory_space<vmem>>, vector<1x96xf32>
    %cst_20 = arith.constant dense<0.000000e+00> : vector<128x96xf32>
    %22 = tpu.matmul %7, %20, %cst_20 {dimension_numbers = #tpu.dot_dimension_numbers<[1], [0], [0], [1], [0, 0, 1, 1], [], []>} : vector<128x96xbf16>, vector<96x96xbf16>, vector<128x96xf32> -> vector<128x96xf32>
    %23 = vector.broadcast %21 : vector<1x96xf32> to vector<128x96xf32>
    %24 = arith.addf %22, %23 : vector<128x96xf32>
    %25 = arith.truncf %24 : vector<128x96xf32> to vector<128x96xbf16>
    %26 = vector.extract_strided_slice %13 {offsets = [0, 0], sizes = [64, 12], strides = [1, 1]} : vector<128x96xbf16> to vector<64x12xbf16>
    %27 = vector.extract_strided_slice %19 {offsets = [0, 0], sizes = [64, 12], strides = [1, 1]} : vector<128x96xbf16> to vector<64x12xbf16>
    %28 = vector.extract_strided_slice %25 {offsets = [0, 0], sizes = [64, 12], strides = [1, 1]} : vector<128x96xbf16> to vector<64x12xbf16>
    %cst_21 = arith.constant dense<0.000000e+00> : vector<64x64xf32>
    %29 = tpu.matmul %26, %27, %cst_21 {dimension_numbers = #tpu.dot_dimension_numbers<[1], [1], [0], [0], [0, 0, 1, 0], [], []>} : vector<64x12xbf16>, vector<64x12xbf16>, vector<64x64xf32> -> vector<64x64xf32>
    %cst_22 = arith.constant dense<0xFF800000> : vector<64xf32>
    %30 = vector.multi_reduction <maximumf>, %29, %cst_22 [1] : vector<64x64xf32> to vector<64xf32>
    %31 = vector.shape_cast %30 : vector<64xf32> to vector<64x1xf32>
    %32 = vector.broadcast %31 : vector<64x1xf32> to vector<64x64xf32>
    %33 = arith.subf %29, %32 : vector<64x64xf32>
    %34 = math.exp %33 : vector<64x64xf32>
    %cst_23 = arith.constant dense<0.000000e+00> : vector<64xf32>
    %35 = vector.multi_reduction <add>, %34, %cst_23 [1] : vector<64x64xf32> to vector<64xf32>
    %36 = vector.shape_cast %35 : vector<64xf32> to vector<64x1xf32>
    %37 = tpu.reciprocal %36 {approx = true} : vector<64x1xf32> -> vector<64x1xf32>
    %38 = vector.broadcast %37 : vector<64x1xf32> to vector<64x64xf32>
    %39 = arith.mulf %34, %38 : vector<64x64xf32>
    %40 = arith.truncf %39 : vector<64x64xf32> to vector<64x64xbf16>
    %cst_24 = arith.constant dense<0.000000e+00> : vector<64x12xf32>
    %41 = tpu.matmul %40, %28, %cst_24 {dimension_numbers = #tpu.dot_dimension_numbers<[1], [0], [0], [1], [0, 0, 1, 1], [], []>} : vector<64x64xbf16>, vector<64x12xbf16>, vector<64x12xf32> -> vector<64x12xf32>
    %42 = vector.extract_strided_slice %13 {offsets = [0, 12], sizes = [64, 12], strides = [1, 1]} : vector<128x96xbf16> to vector<64x12xbf16>
    %43 = vector.extract_strided_slice %19 {offsets = [0, 12], sizes = [64, 12], strides = [1, 1]} : vector<128x96xbf16> to vector<64x12xbf16>
    %44 = vector.extract_strided_slice %25 {offsets = [0, 12], sizes = [64, 12], strides = [1, 1]} : vector<128x96xbf16> to vector<64x12xbf16>
    %cst_25 = arith.constant dense<0.000000e+00> : vector<64x64xf32>
    %45 = tpu.matmul %42, %43, %cst_25 {dimension_numbers = #tpu.dot_dimension_numbers<[1], [1], [0], [0], [0, 0, 1, 0], [], []>} : vector<64x12xbf16>, vector<64x12xbf16>, vector<64x64xf32> -> vector<64x64xf32>
    %cst_26 = arith.constant dense<0xFF800000> : vector<64xf32>
    %46 = vector.multi_reduction <maximumf>, %45, %cst_26 [1] : vector<64x64xf32> to vector<64xf32>
    %47 = vector.shape_cast %46 : vector<64xf32> to vector<64x1xf32>
    %48 = vector.broadcast %47 : vector<64x1xf32> to vector<64x64xf32>
    %49 = arith.subf %45, %48 : vector<64x64xf32>
    %50 = math.exp %49 : vector<64x64xf32>
    %cst_27 = arith.constant dense<0.000000e+00> : vector<64xf32>
    %51 = vector.multi_reduction <add>, %50, %cst_27 [1] : vector<64x64xf32> to vector<64xf32>
    %52 = vector.shape_cast %51 : vector<64xf32> to vector<64x1xf32>
    %53 = tpu.reciprocal %52 {approx = true} : vector<64x1xf32> -> vector<64x1xf32>
    %54 = vector.broadcast %53 : vector<64x1xf32> to vector<64x64xf32>
    %55 = arith.mulf %50, %54 : vector<64x64xf32>
    %56 = arith.truncf %55 : vector<64x64xf32> to vector<64x64xbf16>
    %cst_28 = arith.constant dense<0.000000e+00> : vector<64x12xf32>
    %57 = tpu.matmul %56, %44, %cst_28 {dimension_numbers = #tpu.dot_dimension_numbers<[1], [0], [0], [1], [0, 0, 1, 1], [], []>} : vector<64x64xbf16>, vector<64x12xbf16>, vector<64x12xf32> -> vector<64x12xf32>
    %58 = vector.extract_strided_slice %13 {offsets = [0, 24], sizes = [64, 12], strides = [1, 1]} : vector<128x96xbf16> to vector<64x12xbf16>
    %59 = vector.extract_strided_slice %19 {offsets = [0, 24], sizes = [64, 12], strides = [1, 1]} : vector<128x96xbf16> to vector<64x12xbf16>
    %60 = vector.extract_strided_slice %25 {offsets = [0, 24], sizes = [64, 12], strides = [1, 1]} : vector<128x96xbf16> to vector<64x12xbf16>
    %cst_29 = arith.constant dense<0.000000e+00> : vector<64x64xf32>
    %61 = tpu.matmul %58, %59, %cst_29 {dimension_numbers = #tpu.dot_dimension_numbers<[1], [1], [0], [0], [0, 0, 1, 0], [], []>} : vector<64x12xbf16>, vector<64x12xbf16>, vector<64x64xf32> -> vector<64x64xf32>
    %cst_30 = arith.constant dense<0xFF800000> : vector<64xf32>
    %62 = vector.multi_reduction <maximumf>, %61, %cst_30 [1] : vector<64x64xf32> to vector<64xf32>
    %63 = vector.shape_cast %62 : vector<64xf32> to vector<64x1xf32>
    %64 = vector.broadcast %63 : vector<64x1xf32> to vector<64x64xf32>
    %65 = arith.subf %61, %64 : vector<64x64xf32>
    %66 = math.exp %65 : vector<64x64xf32>
    %cst_31 = arith.constant dense<0.000000e+00> : vector<64xf32>
    %67 = vector.multi_reduction <add>, %66, %cst_31 [1] : vector<64x64xf32> to vector<64xf32>
    %68 = vector.shape_cast %67 : vector<64xf32> to vector<64x1xf32>
    %69 = tpu.reciprocal %68 {approx = true} : vector<64x1xf32> -> vector<64x1xf32>
    %70 = vector.broadcast %69 : vector<64x1xf32> to vector<64x64xf32>
    %71 = arith.mulf %66, %70 : vector<64x64xf32>
    %72 = arith.truncf %71 : vector<64x64xf32> to vector<64x64xbf16>
    %cst_32 = arith.constant dense<0.000000e+00> : vector<64x12xf32>
    %73 = tpu.matmul %72, %60, %cst_32 {dimension_numbers = #tpu.dot_dimension_numbers<[1], [0], [0], [1], [0, 0, 1, 1], [], []>} : vector<64x64xbf16>, vector<64x12xbf16>, vector<64x12xf32> -> vector<64x12xf32>
    %74 = vector.extract_strided_slice %13 {offsets = [0, 36], sizes = [64, 12], strides = [1, 1]} : vector<128x96xbf16> to vector<64x12xbf16>
    %75 = vector.extract_strided_slice %19 {offsets = [0, 36], sizes = [64, 12], strides = [1, 1]} : vector<128x96xbf16> to vector<64x12xbf16>
    %76 = vector.extract_strided_slice %25 {offsets = [0, 36], sizes = [64, 12], strides = [1, 1]} : vector<128x96xbf16> to vector<64x12xbf16>
    %cst_33 = arith.constant dense<0.000000e+00> : vector<64x64xf32>
    %77 = tpu.matmul %74, %75, %cst_33 {dimension_numbers = #tpu.dot_dimension_numbers<[1], [1], [0], [0], [0, 0, 1, 0], [], []>} : vector<64x12xbf16>, vector<64x12xbf16>, vector<64x64xf32> -> vector<64x64xf32>
    %cst_34 = arith.constant dense<0xFF800000> : vector<64xf32>
    %78 = vector.multi_reduction <maximumf>, %77, %cst_34 [1] : vector<64x64xf32> to vector<64xf32>
    %79 = vector.shape_cast %78 : vector<64xf32> to vector<64x1xf32>
    %80 = vector.broadcast %79 : vector<64x1xf32> to vector<64x64xf32>
    %81 = arith.subf %77, %80 : vector<64x64xf32>
    %82 = math.exp %81 : vector<64x64xf32>
    %cst_35 = arith.constant dense<0.000000e+00> : vector<64xf32>
    %83 = vector.multi_reduction <add>, %82, %cst_35 [1] : vector<64x64xf32> to vector<64xf32>
    %84 = vector.shape_cast %83 : vector<64xf32> to vector<64x1xf32>
    %85 = tpu.reciprocal %84 {approx = true} : vector<64x1xf32> -> vector<64x1xf32>
    %86 = vector.broadcast %85 : vector<64x1xf32> to vector<64x64xf32>
    %87 = arith.mulf %82, %86 : vector<64x64xf32>
    %88 = arith.truncf %87 : vector<64x64xf32> to vector<64x64xbf16>
    %cst_36 = arith.constant dense<0.000000e+00> : vector<64x12xf32>
    %89 = tpu.matmul %88, %76, %cst_36 {dimension_numbers = #tpu.dot_dimension_numbers<[1], [0], [0], [1], [0, 0, 1, 1], [], []>} : vector<64x64xbf16>, vector<64x12xbf16>, vector<64x12xf32> -> vector<64x12xf32>
    %90 = vector.extract_strided_slice %13 {offsets = [0, 48], sizes = [64, 12], strides = [1, 1]} : vector<128x96xbf16> to vector<64x12xbf16>
    %91 = vector.extract_strided_slice %19 {offsets = [0, 48], sizes = [64, 12], strides = [1, 1]} : vector<128x96xbf16> to vector<64x12xbf16>
    %92 = vector.extract_strided_slice %25 {offsets = [0, 48], sizes = [64, 12], strides = [1, 1]} : vector<128x96xbf16> to vector<64x12xbf16>
    %cst_37 = arith.constant dense<0.000000e+00> : vector<64x64xf32>
    %93 = tpu.matmul %90, %91, %cst_37 {dimension_numbers = #tpu.dot_dimension_numbers<[1], [1], [0], [0], [0, 0, 1, 0], [], []>} : vector<64x12xbf16>, vector<64x12xbf16>, vector<64x64xf32> -> vector<64x64xf32>
    %cst_38 = arith.constant dense<0xFF800000> : vector<64xf32>
    %94 = vector.multi_reduction <maximumf>, %93, %cst_38 [1] : vector<64x64xf32> to vector<64xf32>
    %95 = vector.shape_cast %94 : vector<64xf32> to vector<64x1xf32>
    %96 = vector.broadcast %95 : vector<64x1xf32> to vector<64x64xf32>
    %97 = arith.subf %93, %96 : vector<64x64xf32>
    %98 = math.exp %97 : vector<64x64xf32>
    %cst_39 = arith.constant dense<0.000000e+00> : vector<64xf32>
    %99 = vector.multi_reduction <add>, %98, %cst_39 [1] : vector<64x64xf32> to vector<64xf32>
    %100 = vector.shape_cast %99 : vector<64xf32> to vector<64x1xf32>
    %101 = tpu.reciprocal %100 {approx = true} : vector<64x1xf32> -> vector<64x1xf32>
    %102 = vector.broadcast %101 : vector<64x1xf32> to vector<64x64xf32>
    %103 = arith.mulf %98, %102 : vector<64x64xf32>
    %104 = arith.truncf %103 : vector<64x64xf32> to vector<64x64xbf16>
    %cst_40 = arith.constant dense<0.000000e+00> : vector<64x12xf32>
    %105 = tpu.matmul %104, %92, %cst_40 {dimension_numbers = #tpu.dot_dimension_numbers<[1], [0], [0], [1], [0, 0, 1, 1], [], []>} : vector<64x64xbf16>, vector<64x12xbf16>, vector<64x12xf32> -> vector<64x12xf32>
    %106 = vector.extract_strided_slice %13 {offsets = [0, 60], sizes = [64, 12], strides = [1, 1]} : vector<128x96xbf16> to vector<64x12xbf16>
    %107 = vector.extract_strided_slice %19 {offsets = [0, 60], sizes = [64, 12], strides = [1, 1]} : vector<128x96xbf16> to vector<64x12xbf16>
    %108 = vector.extract_strided_slice %25 {offsets = [0, 60], sizes = [64, 12], strides = [1, 1]} : vector<128x96xbf16> to vector<64x12xbf16>
    %cst_41 = arith.constant dense<0.000000e+00> : vector<64x64xf32>
    %109 = tpu.matmul %106, %107, %cst_41 {dimension_numbers = #tpu.dot_dimension_numbers<[1], [1], [0], [0], [0, 0, 1, 0], [], []>} : vector<64x12xbf16>, vector<64x12xbf16>, vector<64x64xf32> -> vector<64x64xf32>
    %cst_42 = arith.constant dense<0xFF800000> : vector<64xf32>
    %110 = vector.multi_reduction <maximumf>, %109, %cst_42 [1] : vector<64x64xf32> to vector<64xf32>
    %111 = vector.shape_cast %110 : vector<64xf32> to vector<64x1xf32>
    %112 = vector.broadcast %111 : vector<64x1xf32> to vector<64x64xf32>
    %113 = arith.subf %109, %112 : vector<64x64xf32>
    %114 = math.exp %113 : vector<64x64xf32>
    %cst_43 = arith.constant dense<0.000000e+00> : vector<64xf32>
    %115 = vector.multi_reduction <add>, %114, %cst_43 [1] : vector<64x64xf32> to vector<64xf32>
    %116 = vector.shape_cast %115 : vector<64xf32> to vector<64x1xf32>
    %117 = tpu.reciprocal %116 {approx = true} : vector<64x1xf32> -> vector<64x1xf32>
    %118 = vector.broadcast %117 : vector<64x1xf32> to vector<64x64xf32>
    %119 = arith.mulf %114, %118 : vector<64x64xf32>
    %120 = arith.truncf %119 : vector<64x64xf32> to vector<64x64xbf16>
    %cst_44 = arith.constant dense<0.000000e+00> : vector<64x12xf32>
    %121 = tpu.matmul %120, %108, %cst_44 {dimension_numbers = #tpu.dot_dimension_numbers<[1], [0], [0], [1], [0, 0, 1, 1], [], []>} : vector<64x64xbf16>, vector<64x12xbf16>, vector<64x12xf32> -> vector<64x12xf32>
    %122 = vector.extract_strided_slice %13 {offsets = [0, 72], sizes = [64, 12], strides = [1, 1]} : vector<128x96xbf16> to vector<64x12xbf16>
    %123 = vector.extract_strided_slice %19 {offsets = [0, 72], sizes = [64, 12], strides = [1, 1]} : vector<128x96xbf16> to vector<64x12xbf16>
    %124 = vector.extract_strided_slice %25 {offsets = [0, 72], sizes = [64, 12], strides = [1, 1]} : vector<128x96xbf16> to vector<64x12xbf16>
    %cst_45 = arith.constant dense<0.000000e+00> : vector<64x64xf32>
    %125 = tpu.matmul %122, %123, %cst_45 {dimension_numbers = #tpu.dot_dimension_numbers<[1], [1], [0], [0], [0, 0, 1, 0], [], []>} : vector<64x12xbf16>, vector<64x12xbf16>, vector<64x64xf32> -> vector<64x64xf32>
    %cst_46 = arith.constant dense<0xFF800000> : vector<64xf32>
    %126 = vector.multi_reduction <maximumf>, %125, %cst_46 [1] : vector<64x64xf32> to vector<64xf32>
    %127 = vector.shape_cast %126 : vector<64xf32> to vector<64x1xf32>
    %128 = vector.broadcast %127 : vector<64x1xf32> to vector<64x64xf32>
    %129 = arith.subf %125, %128 : vector<64x64xf32>
    %130 = math.exp %129 : vector<64x64xf32>
    %cst_47 = arith.constant dense<0.000000e+00> : vector<64xf32>
    %131 = vector.multi_reduction <add>, %130, %cst_47 [1] : vector<64x64xf32> to vector<64xf32>
    %132 = vector.shape_cast %131 : vector<64xf32> to vector<64x1xf32>
    %133 = tpu.reciprocal %132 {approx = true} : vector<64x1xf32> -> vector<64x1xf32>
    %134 = vector.broadcast %133 : vector<64x1xf32> to vector<64x64xf32>
    %135 = arith.mulf %130, %134 : vector<64x64xf32>
    %136 = arith.truncf %135 : vector<64x64xf32> to vector<64x64xbf16>
    %cst_48 = arith.constant dense<0.000000e+00> : vector<64x12xf32>
    %137 = tpu.matmul %136, %124, %cst_48 {dimension_numbers = #tpu.dot_dimension_numbers<[1], [0], [0], [1], [0, 0, 1, 1], [], []>} : vector<64x64xbf16>, vector<64x12xbf16>, vector<64x12xf32> -> vector<64x12xf32>
    %138 = vector.extract_strided_slice %13 {offsets = [0, 84], sizes = [64, 12], strides = [1, 1]} : vector<128x96xbf16> to vector<64x12xbf16>
    %139 = vector.extract_strided_slice %19 {offsets = [0, 84], sizes = [64, 12], strides = [1, 1]} : vector<128x96xbf16> to vector<64x12xbf16>
    %140 = vector.extract_strided_slice %25 {offsets = [0, 84], sizes = [64, 12], strides = [1, 1]} : vector<128x96xbf16> to vector<64x12xbf16>
    %cst_49 = arith.constant dense<0.000000e+00> : vector<64x64xf32>
    %141 = tpu.matmul %138, %139, %cst_49 {dimension_numbers = #tpu.dot_dimension_numbers<[1], [1], [0], [0], [0, 0, 1, 0], [], []>} : vector<64x12xbf16>, vector<64x12xbf16>, vector<64x64xf32> -> vector<64x64xf32>
    %cst_50 = arith.constant dense<0xFF800000> : vector<64xf32>
    %142 = vector.multi_reduction <maximumf>, %141, %cst_50 [1] : vector<64x64xf32> to vector<64xf32>
    %143 = vector.shape_cast %142 : vector<64xf32> to vector<64x1xf32>
    %144 = vector.broadcast %143 : vector<64x1xf32> to vector<64x64xf32>
    %145 = arith.subf %141, %144 : vector<64x64xf32>
    %146 = math.exp %145 : vector<64x64xf32>
    %cst_51 = arith.constant dense<0.000000e+00> : vector<64xf32>
    %147 = vector.multi_reduction <add>, %146, %cst_51 [1] : vector<64x64xf32> to vector<64xf32>
    %148 = vector.shape_cast %147 : vector<64xf32> to vector<64x1xf32>
    %149 = tpu.reciprocal %148 {approx = true} : vector<64x1xf32> -> vector<64x1xf32>
    %150 = vector.broadcast %149 : vector<64x1xf32> to vector<64x64xf32>
    %151 = arith.mulf %146, %150 : vector<64x64xf32>
    %152 = arith.truncf %151 : vector<64x64xf32> to vector<64x64xbf16>
    %cst_52 = arith.constant dense<0.000000e+00> : vector<64x12xf32>
    %153 = tpu.matmul %152, %140, %cst_52 {dimension_numbers = #tpu.dot_dimension_numbers<[1], [0], [0], [1], [0, 0, 1, 1], [], []>} : vector<64x64xbf16>, vector<64x12xbf16>, vector<64x12xf32> -> vector<64x12xf32>
    %154 = tpu.concatenate %41, %57, %73, %89, %105, %121, %137, %153 in 1 : vector<64x12xf32>, vector<64x12xf32>, vector<64x12xf32>, vector<64x12xf32>, vector<64x12xf32>, vector<64x12xf32>, vector<64x12xf32>, vector<64x12xf32> -> vector<64x96xf32>
    %155 = vector.extract_strided_slice %13 {offsets = [64, 0], sizes = [64, 12], strides = [1, 1]} : vector<128x96xbf16> to vector<64x12xbf16>
    %156 = vector.extract_strided_slice %19 {offsets = [64, 0], sizes = [64, 12], strides = [1, 1]} : vector<128x96xbf16> to vector<64x12xbf16>
    %157 = vector.extract_strided_slice %25 {offsets = [64, 0], sizes = [64, 12], strides = [1, 1]} : vector<128x96xbf16> to vector<64x12xbf16>
    %cst_53 = arith.constant dense<0.000000e+00> : vector<64x64xf32>
    %158 = tpu.matmul %155, %156, %cst_53 {dimension_numbers = #tpu.dot_dimension_numbers<[1], [1], [0], [0], [0, 0, 1, 0], [], []>} : vector<64x12xbf16>, vector<64x12xbf16>, vector<64x64xf32> -> vector<64x64xf32>
    %cst_54 = arith.constant dense<0xFF800000> : vector<64xf32>
    %159 = vector.multi_reduction <maximumf>, %158, %cst_54 [1] : vector<64x64xf32> to vector<64xf32>
    %160 = vector.shape_cast %159 : vector<64xf32> to vector<64x1xf32>
    %161 = vector.broadcast %160 : vector<64x1xf32> to vector<64x64xf32>
    %162 = arith.subf %158, %161 : vector<64x64xf32>
    %163 = math.exp %162 : vector<64x64xf32>
    %cst_55 = arith.constant dense<0.000000e+00> : vector<64xf32>
    %164 = vector.multi_reduction <add>, %163, %cst_55 [1] : vector<64x64xf32> to vector<64xf32>
    %165 = vector.shape_cast %164 : vector<64xf32> to vector<64x1xf32>
    %166 = tpu.reciprocal %165 {approx = true} : vector<64x1xf32> -> vector<64x1xf32>
    %167 = vector.broadcast %166 : vector<64x1xf32> to vector<64x64xf32>
    %168 = arith.mulf %163, %167 : vector<64x64xf32>
    %169 = arith.truncf %168 : vector<64x64xf32> to vector<64x64xbf16>
    %cst_56 = arith.constant dense<0.000000e+00> : vector<64x12xf32>
    %170 = tpu.matmul %169, %157, %cst_56 {dimension_numbers = #tpu.dot_dimension_numbers<[1], [0], [0], [1], [0, 0, 1, 1], [], []>} : vector<64x64xbf16>, vector<64x12xbf16>, vector<64x12xf32> -> vector<64x12xf32>
    %171 = vector.extract_strided_slice %13 {offsets = [64, 12], sizes = [64, 12], strides = [1, 1]} : vector<128x96xbf16> to vector<64x12xbf16>
    %172 = vector.extract_strided_slice %19 {offsets = [64, 12], sizes = [64, 12], strides = [1, 1]} : vector<128x96xbf16> to vector<64x12xbf16>
    %173 = vector.extract_strided_slice %25 {offsets = [64, 12], sizes = [64, 12], strides = [1, 1]} : vector<128x96xbf16> to vector<64x12xbf16>
    %cst_57 = arith.constant dense<0.000000e+00> : vector<64x64xf32>
    %174 = tpu.matmul %171, %172, %cst_57 {dimension_numbers = #tpu.dot_dimension_numbers<[1], [1], [0], [0], [0, 0, 1, 0], [], []>} : vector<64x12xbf16>, vector<64x12xbf16>, vector<64x64xf32> -> vector<64x64xf32>
    %cst_58 = arith.constant dense<0xFF800000> : vector<64xf32>
    %175 = vector.multi_reduction <maximumf>, %174, %cst_58 [1] : vector<64x64xf32> to vector<64xf32>
    %176 = vector.shape_cast %175 : vector<64xf32> to vector<64x1xf32>
    %177 = vector.broadcast %176 : vector<64x1xf32> to vector<64x64xf32>
    %178 = arith.subf %174, %177 : vector<64x64xf32>
    %179 = math.exp %178 : vector<64x64xf32>
    %cst_59 = arith.constant dense<0.000000e+00> : vector<64xf32>
    %180 = vector.multi_reduction <add>, %179, %cst_59 [1] : vector<64x64xf32> to vector<64xf32>
    %181 = vector.shape_cast %180 : vector<64xf32> to vector<64x1xf32>
    %182 = tpu.reciprocal %181 {approx = true} : vector<64x1xf32> -> vector<64x1xf32>
    %183 = vector.broadcast %182 : vector<64x1xf32> to vector<64x64xf32>
    %184 = arith.mulf %179, %183 : vector<64x64xf32>
    %185 = arith.truncf %184 : vector<64x64xf32> to vector<64x64xbf16>
    %cst_60 = arith.constant dense<0.000000e+00> : vector<64x12xf32>
    %186 = tpu.matmul %185, %173, %cst_60 {dimension_numbers = #tpu.dot_dimension_numbers<[1], [0], [0], [1], [0, 0, 1, 1], [], []>} : vector<64x64xbf16>, vector<64x12xbf16>, vector<64x12xf32> -> vector<64x12xf32>
    %187 = vector.extract_strided_slice %13 {offsets = [64, 24], sizes = [64, 12], strides = [1, 1]} : vector<128x96xbf16> to vector<64x12xbf16>
    %188 = vector.extract_strided_slice %19 {offsets = [64, 24], sizes = [64, 12], strides = [1, 1]} : vector<128x96xbf16> to vector<64x12xbf16>
    %189 = vector.extract_strided_slice %25 {offsets = [64, 24], sizes = [64, 12], strides = [1, 1]} : vector<128x96xbf16> to vector<64x12xbf16>
    %cst_61 = arith.constant dense<0.000000e+00> : vector<64x64xf32>
    %190 = tpu.matmul %187, %188, %cst_61 {dimension_numbers = #tpu.dot_dimension_numbers<[1], [1], [0], [0], [0, 0, 1, 0], [], []>} : vector<64x12xbf16>, vector<64x12xbf16>, vector<64x64xf32> -> vector<64x64xf32>
    %cst_62 = arith.constant dense<0xFF800000> : vector<64xf32>
    %191 = vector.multi_reduction <maximumf>, %190, %cst_62 [1] : vector<64x64xf32> to vector<64xf32>
    %192 = vector.shape_cast %191 : vector<64xf32> to vector<64x1xf32>
    %193 = vector.broadcast %192 : vector<64x1xf32> to vector<64x64xf32>
    %194 = arith.subf %190, %193 : vector<64x64xf32>
    %195 = math.exp %194 : vector<64x64xf32>
    %cst_63 = arith.constant dense<0.000000e+00> : vector<64xf32>
    %196 = vector.multi_reduction <add>, %195, %cst_63 [1] : vector<64x64xf32> to vector<64xf32>
    %197 = vector.shape_cast %196 : vector<64xf32> to vector<64x1xf32>
    %198 = tpu.reciprocal %197 {approx = true} : vector<64x1xf32> -> vector<64x1xf32>
    %199 = vector.broadcast %198 : vector<64x1xf32> to vector<64x64xf32>
    %200 = arith.mulf %195, %199 : vector<64x64xf32>
    %201 = arith.truncf %200 : vector<64x64xf32> to vector<64x64xbf16>
    %cst_64 = arith.constant dense<0.000000e+00> : vector<64x12xf32>
    %202 = tpu.matmul %201, %189, %cst_64 {dimension_numbers = #tpu.dot_dimension_numbers<[1], [0], [0], [1], [0, 0, 1, 1], [], []>} : vector<64x64xbf16>, vector<64x12xbf16>, vector<64x12xf32> -> vector<64x12xf32>
    %203 = vector.extract_strided_slice %13 {offsets = [64, 36], sizes = [64, 12], strides = [1, 1]} : vector<128x96xbf16> to vector<64x12xbf16>
    %204 = vector.extract_strided_slice %19 {offsets = [64, 36], sizes = [64, 12], strides = [1, 1]} : vector<128x96xbf16> to vector<64x12xbf16>
    %205 = vector.extract_strided_slice %25 {offsets = [64, 36], sizes = [64, 12], strides = [1, 1]} : vector<128x96xbf16> to vector<64x12xbf16>
    %cst_65 = arith.constant dense<0.000000e+00> : vector<64x64xf32>
    %206 = tpu.matmul %203, %204, %cst_65 {dimension_numbers = #tpu.dot_dimension_numbers<[1], [1], [0], [0], [0, 0, 1, 0], [], []>} : vector<64x12xbf16>, vector<64x12xbf16>, vector<64x64xf32> -> vector<64x64xf32>
    %cst_66 = arith.constant dense<0xFF800000> : vector<64xf32>
    %207 = vector.multi_reduction <maximumf>, %206, %cst_66 [1] : vector<64x64xf32> to vector<64xf32>
    %208 = vector.shape_cast %207 : vector<64xf32> to vector<64x1xf32>
    %209 = vector.broadcast %208 : vector<64x1xf32> to vector<64x64xf32>
    %210 = arith.subf %206, %209 : vector<64x64xf32>
    %211 = math.exp %210 : vector<64x64xf32>
    %cst_67 = arith.constant dense<0.000000e+00> : vector<64xf32>
    %212 = vector.multi_reduction <add>, %211, %cst_67 [1] : vector<64x64xf32> to vector<64xf32>
    %213 = vector.shape_cast %212 : vector<64xf32> to vector<64x1xf32>
    %214 = tpu.reciprocal %213 {approx = true} : vector<64x1xf32> -> vector<64x1xf32>
    %215 = vector.broadcast %214 : vector<64x1xf32> to vector<64x64xf32>
    %216 = arith.mulf %211, %215 : vector<64x64xf32>
    %217 = arith.truncf %216 : vector<64x64xf32> to vector<64x64xbf16>
    %cst_68 = arith.constant dense<0.000000e+00> : vector<64x12xf32>
    %218 = tpu.matmul %217, %205, %cst_68 {dimension_numbers = #tpu.dot_dimension_numbers<[1], [0], [0], [1], [0, 0, 1, 1], [], []>} : vector<64x64xbf16>, vector<64x12xbf16>, vector<64x12xf32> -> vector<64x12xf32>
    %219 = vector.extract_strided_slice %13 {offsets = [64, 48], sizes = [64, 12], strides = [1, 1]} : vector<128x96xbf16> to vector<64x12xbf16>
    %220 = vector.extract_strided_slice %19 {offsets = [64, 48], sizes = [64, 12], strides = [1, 1]} : vector<128x96xbf16> to vector<64x12xbf16>
    %221 = vector.extract_strided_slice %25 {offsets = [64, 48], sizes = [64, 12], strides = [1, 1]} : vector<128x96xbf16> to vector<64x12xbf16>
    %cst_69 = arith.constant dense<0.000000e+00> : vector<64x64xf32>
    %222 = tpu.matmul %219, %220, %cst_69 {dimension_numbers = #tpu.dot_dimension_numbers<[1], [1], [0], [0], [0, 0, 1, 0], [], []>} : vector<64x12xbf16>, vector<64x12xbf16>, vector<64x64xf32> -> vector<64x64xf32>
    %cst_70 = arith.constant dense<0xFF800000> : vector<64xf32>
    %223 = vector.multi_reduction <maximumf>, %222, %cst_70 [1] : vector<64x64xf32> to vector<64xf32>
    %224 = vector.shape_cast %223 : vector<64xf32> to vector<64x1xf32>
    %225 = vector.broadcast %224 : vector<64x1xf32> to vector<64x64xf32>
    %226 = arith.subf %222, %225 : vector<64x64xf32>
    %227 = math.exp %226 : vector<64x64xf32>
    %cst_71 = arith.constant dense<0.000000e+00> : vector<64xf32>
    %228 = vector.multi_reduction <add>, %227, %cst_71 [1] : vector<64x64xf32> to vector<64xf32>
    %229 = vector.shape_cast %228 : vector<64xf32> to vector<64x1xf32>
    %230 = tpu.reciprocal %229 {approx = true} : vector<64x1xf32> -> vector<64x1xf32>
    %231 = vector.broadcast %230 : vector<64x1xf32> to vector<64x64xf32>
    %232 = arith.mulf %227, %231 : vector<64x64xf32>
    %233 = arith.truncf %232 : vector<64x64xf32> to vector<64x64xbf16>
    %cst_72 = arith.constant dense<0.000000e+00> : vector<64x12xf32>
    %234 = tpu.matmul %233, %221, %cst_72 {dimension_numbers = #tpu.dot_dimension_numbers<[1], [0], [0], [1], [0, 0, 1, 1], [], []>} : vector<64x64xbf16>, vector<64x12xbf16>, vector<64x12xf32> -> vector<64x12xf32>
    %235 = vector.extract_strided_slice %13 {offsets = [64, 60], sizes = [64, 12], strides = [1, 1]} : vector<128x96xbf16> to vector<64x12xbf16>
    %236 = vector.extract_strided_slice %19 {offsets = [64, 60], sizes = [64, 12], strides = [1, 1]} : vector<128x96xbf16> to vector<64x12xbf16>
    %237 = vector.extract_strided_slice %25 {offsets = [64, 60], sizes = [64, 12], strides = [1, 1]} : vector<128x96xbf16> to vector<64x12xbf16>
    %cst_73 = arith.constant dense<0.000000e+00> : vector<64x64xf32>
    %238 = tpu.matmul %235, %236, %cst_73 {dimension_numbers = #tpu.dot_dimension_numbers<[1], [1], [0], [0], [0, 0, 1, 0], [], []>} : vector<64x12xbf16>, vector<64x12xbf16>, vector<64x64xf32> -> vector<64x64xf32>
    %cst_74 = arith.constant dense<0xFF800000> : vector<64xf32>
    %239 = vector.multi_reduction <maximumf>, %238, %cst_74 [1] : vector<64x64xf32> to vector<64xf32>
    %240 = vector.shape_cast %239 : vector<64xf32> to vector<64x1xf32>
    %241 = vector.broadcast %240 : vector<64x1xf32> to vector<64x64xf32>
    %242 = arith.subf %238, %241 : vector<64x64xf32>
    %243 = math.exp %242 : vector<64x64xf32>
    %cst_75 = arith.constant dense<0.000000e+00> : vector<64xf32>
    %244 = vector.multi_reduction <add>, %243, %cst_75 [1] : vector<64x64xf32> to vector<64xf32>
    %245 = vector.shape_cast %244 : vector<64xf32> to vector<64x1xf32>
    %246 = tpu.reciprocal %245 {approx = true} : vector<64x1xf32> -> vector<64x1xf32>
    %247 = vector.broadcast %246 : vector<64x1xf32> to vector<64x64xf32>
    %248 = arith.mulf %243, %247 : vector<64x64xf32>
    %249 = arith.truncf %248 : vector<64x64xf32> to vector<64x64xbf16>
    %cst_76 = arith.constant dense<0.000000e+00> : vector<64x12xf32>
    %250 = tpu.matmul %249, %237, %cst_76 {dimension_numbers = #tpu.dot_dimension_numbers<[1], [0], [0], [1], [0, 0, 1, 1], [], []>} : vector<64x64xbf16>, vector<64x12xbf16>, vector<64x12xf32> -> vector<64x12xf32>
    %251 = vector.extract_strided_slice %13 {offsets = [64, 72], sizes = [64, 12], strides = [1, 1]} : vector<128x96xbf16> to vector<64x12xbf16>
    %252 = vector.extract_strided_slice %19 {offsets = [64, 72], sizes = [64, 12], strides = [1, 1]} : vector<128x96xbf16> to vector<64x12xbf16>
    %253 = vector.extract_strided_slice %25 {offsets = [64, 72], sizes = [64, 12], strides = [1, 1]} : vector<128x96xbf16> to vector<64x12xbf16>
    %cst_77 = arith.constant dense<0.000000e+00> : vector<64x64xf32>
    %254 = tpu.matmul %251, %252, %cst_77 {dimension_numbers = #tpu.dot_dimension_numbers<[1], [1], [0], [0], [0, 0, 1, 0], [], []>} : vector<64x12xbf16>, vector<64x12xbf16>, vector<64x64xf32> -> vector<64x64xf32>
    %cst_78 = arith.constant dense<0xFF800000> : vector<64xf32>
    %255 = vector.multi_reduction <maximumf>, %254, %cst_78 [1] : vector<64x64xf32> to vector<64xf32>
    %256 = vector.shape_cast %255 : vector<64xf32> to vector<64x1xf32>
    %257 = vector.broadcast %256 : vector<64x1xf32> to vector<64x64xf32>
    %258 = arith.subf %254, %257 : vector<64x64xf32>
    %259 = math.exp %258 : vector<64x64xf32>
    %cst_79 = arith.constant dense<0.000000e+00> : vector<64xf32>
    %260 = vector.multi_reduction <add>, %259, %cst_79 [1] : vector<64x64xf32> to vector<64xf32>
    %261 = vector.shape_cast %260 : vector<64xf32> to vector<64x1xf32>
    %262 = tpu.reciprocal %261 {approx = true} : vector<64x1xf32> -> vector<64x1xf32>
    %263 = vector.broadcast %262 : vector<64x1xf32> to vector<64x64xf32>
    %264 = arith.mulf %259, %263 : vector<64x64xf32>
    %265 = arith.truncf %264 : vector<64x64xf32> to vector<64x64xbf16>
    %cst_80 = arith.constant dense<0.000000e+00> : vector<64x12xf32>
    %266 = tpu.matmul %265, %253, %cst_80 {dimension_numbers = #tpu.dot_dimension_numbers<[1], [0], [0], [1], [0, 0, 1, 1], [], []>} : vector<64x64xbf16>, vector<64x12xbf16>, vector<64x12xf32> -> vector<64x12xf32>
    %267 = vector.extract_strided_slice %13 {offsets = [64, 84], sizes = [64, 12], strides = [1, 1]} : vector<128x96xbf16> to vector<64x12xbf16>
    %268 = vector.extract_strided_slice %19 {offsets = [64, 84], sizes = [64, 12], strides = [1, 1]} : vector<128x96xbf16> to vector<64x12xbf16>
    %269 = vector.extract_strided_slice %25 {offsets = [64, 84], sizes = [64, 12], strides = [1, 1]} : vector<128x96xbf16> to vector<64x12xbf16>
    %cst_81 = arith.constant dense<0.000000e+00> : vector<64x64xf32>
    %270 = tpu.matmul %267, %268, %cst_81 {dimension_numbers = #tpu.dot_dimension_numbers<[1], [1], [0], [0], [0, 0, 1, 0], [], []>} : vector<64x12xbf16>, vector<64x12xbf16>, vector<64x64xf32> -> vector<64x64xf32>
    %cst_82 = arith.constant dense<0xFF800000> : vector<64xf32>
    %271 = vector.multi_reduction <maximumf>, %270, %cst_82 [1] : vector<64x64xf32> to vector<64xf32>
    %272 = vector.shape_cast %271 : vector<64xf32> to vector<64x1xf32>
    %273 = vector.broadcast %272 : vector<64x1xf32> to vector<64x64xf32>
    %274 = arith.subf %270, %273 : vector<64x64xf32>
    %275 = math.exp %274 : vector<64x64xf32>
    %cst_83 = arith.constant dense<0.000000e+00> : vector<64xf32>
    %276 = vector.multi_reduction <add>, %275, %cst_83 [1] : vector<64x64xf32> to vector<64xf32>
    %277 = vector.shape_cast %276 : vector<64xf32> to vector<64x1xf32>
    %278 = tpu.reciprocal %277 {approx = true} : vector<64x1xf32> -> vector<64x1xf32>
    %279 = vector.broadcast %278 : vector<64x1xf32> to vector<64x64xf32>
    %280 = arith.mulf %275, %279 : vector<64x64xf32>
    %281 = arith.truncf %280 : vector<64x64xf32> to vector<64x64xbf16>
    %cst_84 = arith.constant dense<0.000000e+00> : vector<64x12xf32>
    %282 = tpu.matmul %281, %269, %cst_84 {dimension_numbers = #tpu.dot_dimension_numbers<[1], [0], [0], [1], [0, 0, 1, 1], [], []>} : vector<64x64xbf16>, vector<64x12xbf16>, vector<64x12xf32> -> vector<64x12xf32>
    %283 = tpu.concatenate %170, %186, %202, %218, %234, %250, %266, %282 in 1 : vector<64x12xf32>, vector<64x12xf32>, vector<64x12xf32>, vector<64x12xf32>, vector<64x12xf32>, vector<64x12xf32>, vector<64x12xf32>, vector<64x12xf32> -> vector<64x96xf32>
    %284 = tpu.concatenate %154, %283 in 0 : vector<64x96xf32>, vector<64x96xf32> -> vector<128x96xf32>
    %c0_85 = arith.constant 0 : index
    %c0_86 = arith.constant 0 : index
    %285 = vector.load %arg10[%c0_85, %c0_86] : memref<96x96xbf16, #tpu.memory_space<vmem>>, vector<96x96xbf16>
    %c0_87 = arith.constant 0 : index
    %c0_88 = arith.constant 0 : index
    %286 = vector.load %arg11[%c0_87, %c0_88] : memref<1x96xf32, #tpu.memory_space<vmem>>, vector<1x96xf32>
    %287 = arith.truncf %284 : vector<128x96xf32> to vector<128x96xbf16>
    %cst_89 = arith.constant dense<0.000000e+00> : vector<128x96xf32>
    %288 = tpu.matmul %287, %285, %cst_89 {dimension_numbers = #tpu.dot_dimension_numbers<[1], [0], [0], [1], [0, 0, 1, 1], [], []>} : vector<128x96xbf16>, vector<96x96xbf16>, vector<128x96xf32> -> vector<128x96xf32>
    %289 = vector.broadcast %286 : vector<1x96xf32> to vector<128x96xf32>
    %290 = arith.addf %288, %289 : vector<128x96xf32>
    %291 = arith.addf %6, %290 : vector<128x96xf32>
    %c0_90 = arith.constant 0 : index
    %c0_91 = arith.constant 0 : index
    %292 = vector.load %arg12[%c0_90, %c0_91] : memref<96x32xbf16, #tpu.memory_space<vmem>>, vector<96x32xbf16>
    %c0_92 = arith.constant 0 : index
    %c0_93 = arith.constant 0 : index
    %293 = vector.load %arg13[%c0_92, %c0_93] : memref<1x32xf32, #tpu.memory_space<vmem>>, vector<1x32xf32>
    %294 = arith.truncf %291 : vector<128x96xf32> to vector<128x96xbf16>
    %cst_94 = arith.constant dense<0.000000e+00> : vector<128x32xf32>
    %295 = tpu.matmul %294, %292, %cst_94 {dimension_numbers = #tpu.dot_dimension_numbers<[1], [0], [0], [1], [0, 0, 1, 1], [], []>} : vector<128x96xbf16>, vector<96x32xbf16>, vector<128x32xf32> -> vector<128x32xf32>
    %296 = vector.broadcast %293 : vector<1x32xf32> to vector<128x32xf32>
    %297 = arith.addf %295, %296 : vector<128x32xf32>
    %c9_i32 = arith.constant 9 : i32
    %298 = tpu.dynamic_rotate %297 by %c9_i32 dim 0 : vector<128x32xf32>, i32 -> vector<128x32xf32>
    %c0_95 = arith.constant 0 : index
    %c0_96 = arith.constant 0 : index
    %c0_97 = arith.constant 0 : index
    %299 = vector.load %arg14[%c0_95, %c0_96, %c0_97] : memref<9x128x1xf32, #tpu.memory_space<vmem>>, vector<1x128x1xf32>
    %300 = vector.shape_cast %299 : vector<1x128x1xf32> to vector<128x1xf32>
    %301 = vector.broadcast %300 : vector<128x1xf32> to vector<128x32xf32>
    %302 = arith.mulf %298, %301 : vector<128x32xf32>
    %c8_i32 = arith.constant 8 : i32
    %303 = tpu.dynamic_rotate %297 by %c8_i32 dim 0 : vector<128x32xf32>, i32 -> vector<128x32xf32>
    %c1 = arith.constant 1 : index
    %c0_98 = arith.constant 0 : index
    %c0_99 = arith.constant 0 : index
    %304 = vector.load %arg14[%c1, %c0_98, %c0_99] : memref<9x128x1xf32, #tpu.memory_space<vmem>>, vector<1x128x1xf32>
    %305 = vector.shape_cast %304 : vector<1x128x1xf32> to vector<128x1xf32>
    %306 = vector.broadcast %305 : vector<128x1xf32> to vector<128x32xf32>
    %307 = arith.mulf %303, %306 : vector<128x32xf32>
    %c7_i32 = arith.constant 7 : i32
    %308 = tpu.dynamic_rotate %297 by %c7_i32 dim 0 : vector<128x32xf32>, i32 -> vector<128x32xf32>
    %c2 = arith.constant 2 : index
    %c0_100 = arith.constant 0 : index
    %c0_101 = arith.constant 0 : index
    %309 = vector.load %arg14[%c2, %c0_100, %c0_101] : memref<9x128x1xf32, #tpu.memory_space<vmem>>, vector<1x128x1xf32>
    %310 = vector.shape_cast %309 : vector<1x128x1xf32> to vector<128x1xf32>
    %311 = vector.broadcast %310 : vector<128x1xf32> to vector<128x32xf32>
    %312 = arith.mulf %308, %311 : vector<128x32xf32>
    %c1_i32 = arith.constant 1 : i32
    %313 = tpu.dynamic_rotate %297 by %c1_i32 dim 0 : vector<128x32xf32>, i32 -> vector<128x32xf32>
    %c3 = arith.constant 3 : index
    %c0_102 = arith.constant 0 : index
    %c0_103 = arith.constant 0 : index
    %314 = vector.load %arg14[%c3, %c0_102, %c0_103] : memref<9x128x1xf32, #tpu.memory_space<vmem>>, vector<1x128x1xf32>
    %315 = vector.shape_cast %314 : vector<1x128x1xf32> to vector<128x1xf32>
    %316 = vector.broadcast %315 : vector<128x1xf32> to vector<128x32xf32>
    %317 = arith.mulf %313, %316 : vector<128x32xf32>
    %c127_i32 = arith.constant 127 : i32
    %318 = tpu.dynamic_rotate %297 by %c127_i32 dim 0 : vector<128x32xf32>, i32 -> vector<128x32xf32>
    %c5 = arith.constant 5 : index
    %c0_104 = arith.constant 0 : index
    %c0_105 = arith.constant 0 : index
    %319 = vector.load %arg14[%c5, %c0_104, %c0_105] : memref<9x128x1xf32, #tpu.memory_space<vmem>>, vector<1x128x1xf32>
    %320 = vector.shape_cast %319 : vector<1x128x1xf32> to vector<128x1xf32>
    %321 = vector.broadcast %320 : vector<128x1xf32> to vector<128x32xf32>
    %322 = arith.mulf %318, %321 : vector<128x32xf32>
    %c121_i32 = arith.constant 121 : i32
    %323 = tpu.dynamic_rotate %297 by %c121_i32 dim 0 : vector<128x32xf32>, i32 -> vector<128x32xf32>
    %c6 = arith.constant 6 : index
    %c0_106 = arith.constant 0 : index
    %c0_107 = arith.constant 0 : index
    %324 = vector.load %arg14[%c6, %c0_106, %c0_107] : memref<9x128x1xf32, #tpu.memory_space<vmem>>, vector<1x128x1xf32>
    %325 = vector.shape_cast %324 : vector<1x128x1xf32> to vector<128x1xf32>
    %326 = vector.broadcast %325 : vector<128x1xf32> to vector<128x32xf32>
    %327 = arith.mulf %323, %326 : vector<128x32xf32>
    %c120_i32 = arith.constant 120 : i32
    %328 = tpu.dynamic_rotate %297 by %c120_i32 dim 0 : vector<128x32xf32>, i32 -> vector<128x32xf32>
    %c7 = arith.constant 7 : index
    %c0_108 = arith.constant 0 : index
    %c0_109 = arith.constant 0 : index
    %329 = vector.load %arg14[%c7, %c0_108, %c0_109] : memref<9x128x1xf32, #tpu.memory_space<vmem>>, vector<1x128x1xf32>
    %330 = vector.shape_cast %329 : vector<1x128x1xf32> to vector<128x1xf32>
    %331 = vector.broadcast %330 : vector<128x1xf32> to vector<128x32xf32>
    %332 = arith.mulf %328, %331 : vector<128x32xf32>
    %c119_i32 = arith.constant 119 : i32
    %333 = tpu.dynamic_rotate %297 by %c119_i32 dim 0 : vector<128x32xf32>, i32 -> vector<128x32xf32>
    %c8 = arith.constant 8 : index
    %c0_110 = arith.constant 0 : index
    %c0_111 = arith.constant 0 : index
    %334 = vector.load %arg14[%c8, %c0_110, %c0_111] : memref<9x128x1xf32, #tpu.memory_space<vmem>>, vector<1x128x1xf32>
    %335 = vector.shape_cast %334 : vector<1x128x1xf32> to vector<128x1xf32>
    %336 = vector.broadcast %335 : vector<128x1xf32> to vector<128x32xf32>
    %337 = arith.mulf %333, %336 : vector<128x32xf32>
    %338 = tpu.concatenate %302, %307, %312, %317, %297, %322, %327, %332, %337 in 1 : vector<128x32xf32>, vector<128x32xf32>, vector<128x32xf32>, vector<128x32xf32>, vector<128x32xf32>, vector<128x32xf32>, vector<128x32xf32>, vector<128x32xf32>, vector<128x32xf32> -> vector<128x288xf32>
    %339 = arith.truncf %338 : vector<128x288xf32> to vector<128x288xbf16>
    %c0_112 = arith.constant 0 : index
    %c0_113 = arith.constant 0 : index
    %340 = vector.load %arg15[%c0_112, %c0_113] : memref<288x32xbf16, #tpu.memory_space<vmem>>, vector<288x32xbf16>
    %cst_114 = arith.constant dense<0.000000e+00> : vector<128x32xf32>
    %341 = tpu.matmul %339, %340, %cst_114 {dimension_numbers = #tpu.dot_dimension_numbers<[1], [0], [0], [1], [0, 0, 1, 1], [], []>} : vector<128x288xbf16>, vector<288x32xbf16>, vector<128x32xf32> -> vector<128x32xf32>
    %c0_115 = arith.constant 0 : index
    %c0_116 = arith.constant 0 : index
    %342 = vector.load %arg16[%c0_115, %c0_116] : memref<1x32xf32, #tpu.memory_space<vmem>>, vector<1x32xf32>
    %343 = vector.broadcast %342 : vector<1x32xf32> to vector<128x32xf32>
    %344 = arith.addf %341, %343 : vector<128x32xf32>
    %cst_117 = arith.constant 0.000000e+00 : f32
    %345 = vector.broadcast %cst_117 : f32 to vector<128x32xf32>
    %346 = arith.maximumf %344, %345 : vector<128x32xf32>
    %c0_118 = arith.constant 0 : index
    %c0_119 = arith.constant 0 : index
    %347 = vector.load %arg17[%c0_118, %c0_119] : memref<32x32xbf16, #tpu.memory_space<vmem>>, vector<32x32xbf16>
    %348 = arith.truncf %346 : vector<128x32xf32> to vector<128x32xbf16>
    %cst_120 = arith.constant dense<0.000000e+00> : vector<128x32xf32>
    %349 = tpu.matmul %348, %347, %cst_120 {dimension_numbers = #tpu.dot_dimension_numbers<[1], [0], [0], [1], [0, 0, 1, 1], [], []>} : vector<128x32xbf16>, vector<32x32xbf16>, vector<128x32xf32> -> vector<128x32xf32>
    %350 = arith.addf %297, %349 : vector<128x32xf32>
    %351 = tpu.concatenate %291, %350 in 1 : vector<128x96xf32>, vector<128x32xf32> -> vector<128x128xf32>
    %352 = vector.shape_cast %351 : vector<128x128xf32> to vector<2x64x128xf32>
    %c0_121 = arith.constant 0 : index
    %c0_122 = arith.constant 0 : index
    %c0_123 = arith.constant 0 : index
    %353 = vector.load %arg28[%c0_121, %c0_122, %c0_123] : memref<2x64x128xf32, #tpu.memory_space<vmem>>, vector<2x64x128xf32>
    tpu.vector_store %arg28[%c0_121, %c0_122, %c0_123], %352 {strides = array<i32>} : memref<2x64x128xf32, #tpu.memory_space<vmem>>, vector<2x64x128xf32>,
    %354 = arith.truncf %351 : vector<128x128xf32> to vector<128x128xbf16>
    %c0_124 = arith.constant 0 : index
    %c0_125 = arith.constant 0 : index
    %355 = vector.load %arg18[%c0_124, %c0_125] : memref<128x256xbf16, #tpu.memory_space<vmem>>, vector<128x256xbf16>
    %cst_126 = arith.constant dense<0.000000e+00> : vector<128x256xf32>
    %356 = tpu.matmul %354, %355, %cst_126 {dimension_numbers = #tpu.dot_dimension_numbers<[1], [0], [0], [1], [0, 0, 1, 1], [], []>} : vector<128x128xbf16>, vector<128x256xbf16>, vector<128x256xf32> -> vector<128x256xf32>
    %c0_127 = arith.constant 0 : index
    %c0_128 = arith.constant 0 : index
    %357 = vector.load %arg19[%c0_127, %c0_128] : memref<1x256xf32, #tpu.memory_space<vmem>>, vector<1x256xf32>
    %358 = vector.broadcast %357 : vector<1x256xf32> to vector<128x256xf32>
    %359 = arith.addf %356, %358 : vector<128x256xf32>
    %cst_129 = arith.constant 3.000000e+00 : f32
    %360 = vector.broadcast %cst_129 : f32 to vector<128x256xf32>
    %361 = arith.addf %359, %360 : vector<128x256xf32>
    %cst_130 = arith.constant 0.000000e+00 : f32
    %cst_131 = arith.constant 6.000000e+00 : f32
    %362 = vector.broadcast %cst_130 : f32 to vector<128x256xf32>
    %363 = arith.maximumf %362, %361 : vector<128x256xf32>
    %364 = vector.broadcast %cst_131 : f32 to vector<128x256xf32>
    %365 = arith.minimumf %364, %363 : vector<128x256xf32>
    %cst_132 = arith.constant 0.166666672 : f32
    %366 = vector.broadcast %cst_132 : f32 to vector<128x256xf32>
    %367 = arith.mulf %365, %366 : vector<128x256xf32>
    %368 = arith.mulf %359, %367 : vector<128x256xf32>
    %cst_133 = arith.constant 0.000000e+00 : f32
    %369 = vector.broadcast %cst_133 : f32 to vector<128x256xf32>
    %cst_134 = arith.constant 0.000000e+00 : f32
    %370 = vector.broadcast %cst_134 : f32 to vector<128x256xf32>
    %c9_i32_135 = arith.constant 9 : i32
    %371 = tpu.dynamic_rotate %368 by %c9_i32_135 dim 0 : vector<128x256xf32>, i32 -> vector<128x256xf32>
    %c0_136 = arith.constant 0 : index
    %c0_137 = arith.constant 0 : index
    %c0_138 = arith.constant 0 : index
    %372 = vector.load %arg14[%c0_136, %c0_137, %c0_138] : memref<9x128x1xf32, #tpu.memory_space<vmem>>, vector<1x128x1xf32>
    %373 = vector.shape_cast %372 : vector<1x128x1xf32> to vector<128x1xf32>
    %374 = vector.broadcast %373 : vector<128x1xf32> to vector<128x256xf32>
    %375 = arith.mulf %371, %374 : vector<128x256xf32>
    %c0_139 = arith.constant 0 : index
    %c0_140 = arith.constant 0 : index
    %c0_141 = arith.constant 0 : index
    %376 = vector.load %arg20[%c0_139, %c0_140, %c0_141] : memref<9x1x256xf32, #tpu.memory_space<vmem>>, vector<1x1x256xf32>
    %377 = vector.shape_cast %376 : vector<1x1x256xf32> to vector<1x256xf32>
    %378 = vector.broadcast %377 : vector<1x256xf32> to vector<128x256xf32>
    %379 = arith.mulf %375, %378 : vector<128x256xf32>
    %380 = arith.addf %369, %379 : vector<128x256xf32>
    %c8_i32_142 = arith.constant 8 : i32
    %381 = tpu.dynamic_rotate %368 by %c8_i32_142 dim 0 : vector<128x256xf32>, i32 -> vector<128x256xf32>
    %c1_143 = arith.constant 1 : index
    %c0_144 = arith.constant 0 : index
    %c0_145 = arith.constant 0 : index
    %382 = vector.load %arg14[%c1_143, %c0_144, %c0_145] : memref<9x128x1xf32, #tpu.memory_space<vmem>>, vector<1x128x1xf32>
    %383 = vector.shape_cast %382 : vector<1x128x1xf32> to vector<128x1xf32>
    %384 = vector.broadcast %383 : vector<128x1xf32> to vector<128x256xf32>
    %385 = arith.mulf %381, %384 : vector<128x256xf32>
    %c1_146 = arith.constant 1 : index
    %c0_147 = arith.constant 0 : index
    %c0_148 = arith.constant 0 : index
    %386 = vector.load %arg20[%c1_146, %c0_147, %c0_148] : memref<9x1x256xf32, #tpu.memory_space<vmem>>, vector<1x1x256xf32>
    %387 = vector.shape_cast %386 : vector<1x1x256xf32> to vector<1x256xf32>
    %388 = vector.broadcast %387 : vector<1x256xf32> to vector<128x256xf32>
    %389 = arith.mulf %385, %388 : vector<128x256xf32>
    %390 = arith.addf %370, %389 : vector<128x256xf32>
    %c7_i32_149 = arith.constant 7 : i32
    %391 = tpu.dynamic_rotate %368 by %c7_i32_149 dim 0 : vector<128x256xf32>, i32 -> vector<128x256xf32>
    %c2_150 = arith.constant 2 : index
    %c0_151 = arith.constant 0 : index
    %c0_152 = arith.constant 0 : index
    %392 = vector.load %arg14[%c2_150, %c0_151, %c0_152] : memref<9x128x1xf32, #tpu.memory_space<vmem>>, vector<1x128x1xf32>
    %393 = vector.shape_cast %392 : vector<1x128x1xf32> to vector<128x1xf32>
    %394 = vector.broadcast %393 : vector<128x1xf32> to vector<128x256xf32>
    %395 = arith.mulf %391, %394 : vector<128x256xf32>
    %c2_153 = arith.constant 2 : index
    %c0_154 = arith.constant 0 : index
    %c0_155 = arith.constant 0 : index
    %396 = vector.load %arg20[%c2_153, %c0_154, %c0_155] : memref<9x1x256xf32, #tpu.memory_space<vmem>>, vector<1x1x256xf32>
    %397 = vector.shape_cast %396 : vector<1x1x256xf32> to vector<1x256xf32>
    %398 = vector.broadcast %397 : vector<1x256xf32> to vector<128x256xf32>
    %399 = arith.mulf %395, %398 : vector<128x256xf32>
    %400 = arith.addf %380, %399 : vector<128x256xf32>
    %c1_i32_156 = arith.constant 1 : i32
    %401 = tpu.dynamic_rotate %368 by %c1_i32_156 dim 0 : vector<128x256xf32>, i32 -> vector<128x256xf32>
    %c3_157 = arith.constant 3 : index
    %c0_158 = arith.constant 0 : index
    %c0_159 = arith.constant 0 : index
    %402 = vector.load %arg14[%c3_157, %c0_158, %c0_159] : memref<9x128x1xf32, #tpu.memory_space<vmem>>, vector<1x128x1xf32>
    %403 = vector.shape_cast %402 : vector<1x128x1xf32> to vector<128x1xf32>
    %404 = vector.broadcast %403 : vector<128x1xf32> to vector<128x256xf32>
    %405 = arith.mulf %401, %404 : vector<128x256xf32>
    %c3_160 = arith.constant 3 : index
    %c0_161 = arith.constant 0 : index
    %c0_162 = arith.constant 0 : index
    %406 = vector.load %arg20[%c3_160, %c0_161, %c0_162] : memref<9x1x256xf32, #tpu.memory_space<vmem>>, vector<1x1x256xf32>
    %407 = vector.shape_cast %406 : vector<1x1x256xf32> to vector<1x256xf32>
    %408 = vector.broadcast %407 : vector<1x256xf32> to vector<128x256xf32>
    %409 = arith.mulf %405, %408 : vector<128x256xf32>
    %410 = arith.addf %390, %409 : vector<128x256xf32>
    %c4 = arith.constant 4 : index
    %c0_163 = arith.constant 0 : index
    %c0_164 = arith.constant 0 : index
    %411 = vector.load %arg20[%c4, %c0_163, %c0_164] : memref<9x1x256xf32, #tpu.memory_space<vmem>>, vector<1x1x256xf32>
    %412 = vector.shape_cast %411 : vector<1x1x256xf32> to vector<1x256xf32>
    %413 = vector.broadcast %412 : vector<1x256xf32> to vector<128x256xf32>
    %414 = arith.mulf %368, %413 : vector<128x256xf32>
    %415 = arith.addf %400, %414 : vector<128x256xf32>
    %c127_i32_165 = arith.constant 127 : i32
    %416 = tpu.dynamic_rotate %368 by %c127_i32_165 dim 0 : vector<128x256xf32>, i32 -> vector<128x256xf32>
    %c5_166 = arith.constant 5 : index
    %c0_167 = arith.constant 0 : index
    %c0_168 = arith.constant 0 : index
    %417 = vector.load %arg14[%c5_166, %c0_167, %c0_168] : memref<9x128x1xf32, #tpu.memory_space<vmem>>, vector<1x128x1xf32>
    %418 = vector.shape_cast %417 : vector<1x128x1xf32> to vector<128x1xf32>
    %419 = vector.broadcast %418 : vector<128x1xf32> to vector<128x256xf32>
    %420 = arith.mulf %416, %419 : vector<128x256xf32>
    %c5_169 = arith.constant 5 : index
    %c0_170 = arith.constant 0 : index
    %c0_171 = arith.constant 0 : index
    %421 = vector.load %arg20[%c5_169, %c0_170, %c0_171] : memref<9x1x256xf32, #tpu.memory_space<vmem>>, vector<1x1x256xf32>
    %422 = vector.shape_cast %421 : vector<1x1x256xf32> to vector<1x256xf32>
    %423 = vector.broadcast %422 : vector<1x256xf32> to vector<128x256xf32>
    %424 = arith.mulf %420, %423 : vector<128x256xf32>
    %425 = arith.addf %410, %424 : vector<128x256xf32>
    %c121_i32_172 = arith.constant 121 : i32
    %426 = tpu.dynamic_rotate %368 by %c121_i32_172 dim 0 : vector<128x256xf32>, i32 -> vector<128x256xf32>
    %c6_173 = arith.constant 6 : index
    %c0_174 = arith.constant 0 : index
    %c0_175 = arith.constant 0 : index
    %427 = vector.load %arg14[%c6_173, %c0_174, %c0_175] : memref<9x128x1xf32, #tpu.memory_space<vmem>>, vector<1x128x1xf32>
    %428 = vector.shape_cast %427 : vector<1x128x1xf32> to vector<128x1xf32>
    %429 = vector.broadcast %428 : vector<128x1xf32> to vector<128x256xf32>
    %430 = arith.mulf %426, %429 : vector<128x256xf32>
    %c6_176 = arith.constant 6 : index
    %c0_177 = arith.constant 0 : index
    %c0_178 = arith.constant 0 : index
    %431 = vector.load %arg20[%c6_176, %c0_177, %c0_178] : memref<9x1x256xf32, #tpu.memory_space<vmem>>, vector<1x1x256xf32>
    %432 = vector.shape_cast %431 : vector<1x1x256xf32> to vector<1x256xf32>
    %433 = vector.broadcast %432 : vector<1x256xf32> to vector<128x256xf32>
    %434 = arith.mulf %430, %433 : vector<128x256xf32>
    %435 = arith.addf %415, %434 : vector<128x256xf32>
    %c120_i32_179 = arith.constant 120 : i32
    %436 = tpu.dynamic_rotate %368 by %c120_i32_179 dim 0 : vector<128x256xf32>, i32 -> vector<128x256xf32>
    %c7_180 = arith.constant 7 : index
    %c0_181 = arith.constant 0 : index
    %c0_182 = arith.constant 0 : index
    %437 = vector.load %arg14[%c7_180, %c0_181, %c0_182] : memref<9x128x1xf32, #tpu.memory_space<vmem>>, vector<1x128x1xf32>
    %438 = vector.shape_cast %437 : vector<1x128x1xf32> to vector<128x1xf32>
    %439 = vector.broadcast %438 : vector<128x1xf32> to vector<128x256xf32>
    %440 = arith.mulf %436, %439 : vector<128x256xf32>
    %c7_183 = arith.constant 7 : index
    %c0_184 = arith.constant 0 : index
    %c0_185 = arith.constant 0 : index
    %441 = vector.load %arg20[%c7_183, %c0_184, %c0_185] : memref<9x1x256xf32, #tpu.memory_space<vmem>>, vector<1x1x256xf32>
    %442 = vector.shape_cast %441 : vector<1x1x256xf32> to vector<1x256xf32>
    %443 = vector.broadcast %442 : vector<1x256xf32> to vector<128x256xf32>
    %444 = arith.mulf %440, %443 : vector<128x256xf32>
    %445 = arith.addf %425, %444 : vector<128x256xf32>
    %c119_i32_186 = arith.constant 119 : i32
    %446 = tpu.dynamic_rotate %368 by %c119_i32_186 dim 0 : vector<128x256xf32>, i32 -> vector<128x256xf32>
    %c8_187 = arith.constant 8 : index
    %c0_188 = arith.constant 0 : index
    %c0_189 = arith.constant 0 : index
    %447 = vector.load %arg14[%c8_187, %c0_188, %c0_189] : memref<9x128x1xf32, #tpu.memory_space<vmem>>, vector<1x128x1xf32>
    %448 = vector.shape_cast %447 : vector<1x128x1xf32> to vector<128x1xf32>
    %449 = vector.broadcast %448 : vector<128x1xf32> to vector<128x256xf32>
    %450 = arith.mulf %446, %449 : vector<128x256xf32>
    %c8_190 = arith.constant 8 : index
    %c0_191 = arith.constant 0 : index
    %c0_192 = arith.constant 0 : index
    %451 = vector.load %arg20[%c8_190, %c0_191, %c0_192] : memref<9x1x256xf32, #tpu.memory_space<vmem>>, vector<1x1x256xf32>
    %452 = vector.shape_cast %451 : vector<1x1x256xf32> to vector<1x256xf32>
    %453 = vector.broadcast %452 : vector<1x256xf32> to vector<128x256xf32>
    %454 = arith.mulf %450, %453 : vector<128x256xf32>
    %455 = arith.addf %435, %454 : vector<128x256xf32>
    %456 = arith.addf %455, %445 : vector<128x256xf32>
    %c0_193 = arith.constant 0 : index
    %c0_194 = arith.constant 0 : index
    %457 = vector.load %arg21[%c0_193, %c0_194] : memref<1x256xf32, #tpu.memory_space<vmem>>, vector<1x256xf32>
    %458 = vector.broadcast %457 : vector<1x256xf32> to vector<128x256xf32>
    %459 = arith.addf %456, %458 : vector<128x256xf32>
    %cst_195 = arith.constant 3.000000e+00 : f32
    %460 = vector.broadcast %cst_195 : f32 to vector<128x256xf32>
    %461 = arith.addf %459, %460 : vector<128x256xf32>
    %cst_196 = arith.constant 0.000000e+00 : f32
    %cst_197 = arith.constant 6.000000e+00 : f32
    %462 = vector.broadcast %cst_196 : f32 to vector<128x256xf32>
    %463 = arith.maximumf %462, %461 : vector<128x256xf32>
    %464 = vector.broadcast %cst_197 : f32 to vector<128x256xf32>
    %465 = arith.minimumf %464, %463 : vector<128x256xf32>
    %cst_198 = arith.constant 0.166666672 : f32
    %466 = vector.broadcast %cst_198 : f32 to vector<128x256xf32>
    %467 = arith.mulf %465, %466 : vector<128x256xf32>
    %468 = arith.mulf %459, %467 : vector<128x256xf32>
    %469 = vector.shape_cast %468 : vector<128x256xf32> to vector<2x64x256xf32>
    %cst_199 = arith.constant dense<0.000000e+00> : vector<2x256xf32>
    %470 = vector.multi_reduction <add>, %469, %cst_199 [1] : vector<2x64x256xf32> to vector<2x256xf32>
    %cst_200 = arith.constant 6.400000e+01 : f32
    %471 = vector.broadcast %cst_200 : f32 to vector<2x256xf32>
    %472 = arith.divf %470, %471 : vector<2x256xf32>
    %cst_201 = arith.constant 0.000000e+00 : f32
    %473 = vector.broadcast %cst_201 : f32 to vector<2x256xf32>
    %c0_202 = arith.constant 0 : index
    %c0_203 = arith.constant 0 : index
    %c0_204 = arith.constant 0 : index
    %474 = vector.load %arg22[%c0_202, %c0_203, %c0_204] : memref<2x1x256xf32, #tpu.memory_space<vmem>>, vector<1x1x256xf32>
    %475 = vector.shape_cast %474 : vector<1x1x256xf32> to vector<1x256xf32>
    %476 = vector.broadcast %475 : vector<1x256xf32> to vector<2x256xf32>
    %477 = arith.mulf %472, %476 : vector<2x256xf32>
    %cst_205 = arith.constant dense<0.000000e+00> : vector<2xf32>
    %478 = vector.multi_reduction <add>, %477, %cst_205 [1] : vector<2x256xf32> to vector<2xf32>
    %479 = vector.shape_cast %478 : vector<2xf32> to vector<2x1xf32>
    %c0_206 = arith.constant 0 : index
    %c0_207 = arith.constant 0 : index
    %c0_208 = arith.constant 0 : index
    %480 = vector.load %arg23[%c0_206, %c0_207, %c0_208] : memref<2x1x1xf32, #tpu.memory_space<vmem>>, vector<1x1x1xf32>
    %481 = vector.shape_cast %480 : vector<1x1x1xf32> to vector<1x1xf32>
    %482 = vector.broadcast %481 : vector<1x1xf32> to vector<2x1xf32>
    %483 = arith.addf %479, %482 : vector<2x1xf32>
    %cst_209 = arith.constant 0.000000e+00 : f32
    %484 = vector.broadcast %cst_209 : f32 to vector<2x1xf32>
    %485 = arith.maximumf %483, %484 : vector<2x1xf32>
    %c0_210 = arith.constant 0 : index
    %c0_211 = arith.constant 0 : index
    %c0_212 = arith.constant 0 : index
    %486 = vector.load %arg24[%c0_210, %c0_211, %c0_212] : memref<2x1x256xf32, #tpu.memory_space<vmem>>, vector<1x1x256xf32>
    %487 = vector.shape_cast %486 : vector<1x1x256xf32> to vector<1x256xf32>
    %488 = vector.broadcast %485 : vector<2x1xf32> to vector<2x256xf32>
    %489 = vector.broadcast %487 : vector<1x256xf32> to vector<2x256xf32>
    %490 = arith.mulf %488, %489 : vector<2x256xf32>
    %491 = arith.addf %473, %490 : vector<2x256xf32>
    %c1_213 = arith.constant 1 : index
    %c0_214 = arith.constant 0 : index
    %c0_215 = arith.constant 0 : index
    %492 = vector.load %arg22[%c1_213, %c0_214, %c0_215] : memref<2x1x256xf32, #tpu.memory_space<vmem>>, vector<1x1x256xf32>
    %493 = vector.shape_cast %492 : vector<1x1x256xf32> to vector<1x256xf32>
    %494 = vector.broadcast %493 : vector<1x256xf32> to vector<2x256xf32>
    %495 = arith.mulf %472, %494 : vector<2x256xf32>
    %cst_216 = arith.constant dense<0.000000e+00> : vector<2xf32>
    %496 = vector.multi_reduction <add>, %495, %cst_216 [1] : vector<2x256xf32> to vector<2xf32>
    %497 = vector.shape_cast %496 : vector<2xf32> to vector<2x1xf32>
    %c1_217 = arith.constant 1 : index
    %c0_218 = arith.constant 0 : index
    %c0_219 = arith.constant 0 : index
    %498 = vector.load %arg23[%c1_217, %c0_218, %c0_219] : memref<2x1x1xf32, #tpu.memory_space<vmem>>, vector<1x1x1xf32>
    %499 = vector.shape_cast %498 : vector<1x1x1xf32> to vector<1x1xf32>
    %500 = vector.broadcast %499 : vector<1x1xf32> to vector<2x1xf32>
    %501 = arith.addf %497, %500 : vector<2x1xf32>
    %cst_220 = arith.constant 0.000000e+00 : f32
    %502 = vector.broadcast %cst_220 : f32 to vector<2x1xf32>
    %503 = arith.maximumf %501, %502 : vector<2x1xf32>
    %c1_221 = arith.constant 1 : index
    %c0_222 = arith.constant 0 : index
    %c0_223 = arith.constant 0 : index
    %504 = vector.load %arg24[%c1_221, %c0_222, %c0_223] : memref<2x1x256xf32, #tpu.memory_space<vmem>>, vector<1x1x256xf32>
    %505 = vector.shape_cast %504 : vector<1x1x256xf32> to vector<1x256xf32>
    %506 = vector.broadcast %503 : vector<2x1xf32> to vector<2x256xf32>
    %507 = vector.broadcast %505 : vector<1x256xf32> to vector<2x256xf32>
    %508 = arith.mulf %506, %507 : vector<2x256xf32>
    %509 = arith.addf %491, %508 : vector<2x256xf32>
    %c0_224 = arith.constant 0 : index
    %c0_225 = arith.constant 0 : index
    %510 = vector.load %arg25[%c0_224, %c0_225] : memref<1x256xf32, #tpu.memory_space<vmem>>, vector<1x256xf32>
    %511 = vector.broadcast %510 : vector<1x256xf32> to vector<2x256xf32>
    %512 = arith.addf %509, %511 : vector<2x256xf32>
    %cst_226 = arith.constant 3.000000e+00 : f32
    %513 = vector.broadcast %cst_226 : f32 to vector<2x256xf32>
    %514 = arith.addf %512, %513 : vector<2x256xf32>
    %cst_227 = arith.constant 0.000000e+00 : f32
    %cst_228 = arith.constant 6.000000e+00 : f32
    %515 = vector.broadcast %cst_227 : f32 to vector<2x256xf32>
    %516 = arith.maximumf %515, %514 : vector<2x256xf32>
    %517 = vector.broadcast %cst_228 : f32 to vector<2x256xf32>
    %518 = arith.minimumf %517, %516 : vector<2x256xf32>
    %cst_229 = arith.constant 0.166666672 : f32
    %519 = vector.broadcast %cst_229 : f32 to vector<2x256xf32>
    %520 = arith.mulf %518, %519 : vector<2x256xf32>
    %521 = vector.shape_cast %520 : vector<2x256xf32> to vector<2x1x256xf32>
    %522 = vector.broadcast %521 : vector<2x1x256xf32> to vector<2x64x256xf32>
    %523 = arith.mulf %469, %522 : vector<2x64x256xf32>
    %524 = vector.shape_cast %523 : vector<2x64x256xf32> to vector<128x256xf32>
    %525 = arith.truncf %524 : vector<128x256xf32> to vector<128x256xbf16>
    %c0_230 = arith.constant 0 : index
    %c0_231 = arith.constant 0 : index
    %526 = vector.load %arg26[%c0_230, %c0_231] : memref<256x128xbf16, #tpu.memory_space<vmem>>, vector<256x128xbf16>
    %cst_232 = arith.constant dense<0.000000e+00> : vector<128x128xf32>
    %527 = tpu.matmul %525, %526, %cst_232 {dimension_numbers = #tpu.dot_dimension_numbers<[1], [0], [0], [1], [0, 0, 1, 1], [], []>} : vector<128x256xbf16>, vector<256x128xbf16>, vector<128x128xf32> -> vector<128x128xf32>
    %c0_233 = arith.constant 0 : index
    %c0_234 = arith.constant 0 : index
    %528 = vector.load %arg27[%c0_233, %c0_234] : memref<1x128xf32, #tpu.memory_space<vmem>>, vector<1x128xf32>
    %529 = vector.broadcast %528 : vector<1x128xf32> to vector<128x128xf32>
    %530 = arith.addf %527, %529 : vector<128x128xf32>
    %c0_235 = arith.constant 0 : index
    %c0_236 = arith.constant 0 : index
    %c0_237 = arith.constant 0 : index
    %531 = vector.load %arg28[%c0_235, %c0_236, %c0_237] : memref<2x64x128xf32, #tpu.memory_space<vmem>>, vector<2x64x128xf32>
    %532 = vector.shape_cast %530 : vector<128x128xf32> to vector<2x64x128xf32>
    %533 = arith.addf %531, %532 : vector<2x64x128xf32>
    %c0_238 = arith.constant 0 : index
    %c0_239 = arith.constant 0 : index
    %c0_240 = arith.constant 0 : index
    %534 = vector.load %arg28[%c0_238, %c0_239, %c0_240] : memref<2x64x128xf32, #tpu.memory_space<vmem>>, vector<2x64x128xf32>
    tpu.vector_store %arg28[%c0_238, %c0_239, %c0_240], %533 {strides = array<i32>} : memref<2x64x128xf32, #tpu.memory_space<vmem>>, vector<2x64x128xf32>,
    return
  }
  func.func @transform_0(%arg0: i32) -> (i32, i32, i32) {
    %c0_i32 = arith.constant 0 : i32
    %c0_i32_0 = arith.constant 0 : i32
    %c0_i32_1 = arith.constant 0 : i32
    return %arg0, %c0_i32, %c0_i32_0 : i32, i32, i32
  }
  func.func @transform_1(%arg0: i32) -> (i32, i32) {
    %c0_i32 = arith.constant 0 : i32
    %c0_i32_0 = arith.constant 0 : i32
    %c0_i32_1 = arith.constant 0 : i32
    return %c0_i32, %c0_i32_0 : i32, i32
  }
  func.func @transform_2(%arg0: i32) -> (i32, i32) {
    %c0_i32 = arith.constant 0 : i32
    %c0_i32_0 = arith.constant 0 : i32
    %c0_i32_1 = arith.constant 0 : i32
    return %c0_i32, %c0_i32_0 : i32, i32
  }
  func.func @transform_3(%arg0: i32) -> (i32, i32) {
    %c0_i32 = arith.constant 0 : i32
    %c0_i32_0 = arith.constant 0 : i32
    %c0_i32_1 = arith.constant 0 : i32
    return %c0_i32, %c0_i32_0 : i32, i32
  }
  func.func @transform_4(%arg0: i32) -> (i32, i32) {
    %c0_i32 = arith.constant 0 : i32
    %c0_i32_0 = arith.constant 0 : i32
    %c0_i32_1 = arith.constant 0 : i32
    return %c0_i32, %c0_i32_0 : i32, i32
  }
  func.func @transform_5(%arg0: i32) -> (i32, i32) {
    %c0_i32 = arith.constant 0 : i32
    %c0_i32_0 = arith.constant 0 : i32
    %c0_i32_1 = arith.constant 0 : i32
    return %c0_i32, %c0_i32_0 : i32, i32
  }
  func.func @transform_6(%arg0: i32) -> (i32, i32) {
    %c0_i32 = arith.constant 0 : i32
    %c0_i32_0 = arith.constant 0 : i32
    %c0_i32_1 = arith.constant 0 : i32
    return %c0_i32, %c0_i32_0 : i32, i32
  }
  func.func @transform_7(%arg0: i32) -> (i32, i32) {
    %c0_i32 = arith.constant 0 : i32
    %c0_i32_0 = arith.constant 0 : i32
    %c0_i32_1 = arith.constant 0 : i32
    return %c0_i32, %c0_i32_0 : i32, i32
  }
  func.func @transform_8(%arg0: i32) -> (i32, i32) {
    %c0_i32 = arith.constant 0 : i32
    %c0_i32_0 = arith.constant 0 : i32
    %c0_i32_1 = arith.constant 0 : i32
    return %c0_i32, %c0_i32_0 : i32, i32
  }
  func.func @transform_9(%arg0: i32) -> (i32, i32) {
    %c0_i32 = arith.constant 0 : i32
    %c0_i32_0 = arith.constant 0 : i32
    %c0_i32_1 = arith.constant 0 : i32
    return %c0_i32, %c0_i32_0 : i32, i32
  }
  func.func @transform_10(%arg0: i32) -> (i32, i32) {
    %c0_i32 = arith.constant 0 : i32
    %c0_i32_0 = arith.constant 0 : i32
    %c0_i32_1 = arith.constant 0 : i32
    return %c0_i32, %c0_i32_0 : i32, i32
  }
  func.func @transform_11(%arg0: i32) -> (i32, i32) {
    %c0_i32 = arith.constant 0 : i32
    %c0_i32_0 = arith.constant 0 : i32
    %c0_i32_1 = arith.constant 0 : i32
    return %c0_i32, %c0_i32_0 : i32, i32
  }
  func.func @transform_12(%arg0: i32) -> (i32, i32) {
    %c0_i32 = arith.constant 0 : i32
    %c0_i32_0 = arith.constant 0 : i32
    %c0_i32_1 = arith.constant 0 : i32
    return %c0_i32, %c0_i32_0 : i32, i32
  }
  func.func @transform_13(%arg0: i32) -> (i32, i32, i32) {
    %c0_i32 = arith.constant 0 : i32
    %c0_i32_0 = arith.constant 0 : i32
    %c0_i32_1 = arith.constant 0 : i32
    %c0_i32_2 = arith.constant 0 : i32
    return %c0_i32, %c0_i32_0, %c0_i32_1 : i32, i32, i32
  }
  func.func @transform_14(%arg0: i32) -> (i32, i32) {
    %c0_i32 = arith.constant 0 : i32
    %c0_i32_0 = arith.constant 0 : i32
    %c0_i32_1 = arith.constant 0 : i32
    return %c0_i32, %c0_i32_0 : i32, i32
  }
  func.func @transform_15(%arg0: i32) -> (i32, i32) {
    %c0_i32 = arith.constant 0 : i32
    %c0_i32_0 = arith.constant 0 : i32
    %c0_i32_1 = arith.constant 0 : i32
    return %c0_i32, %c0_i32_0 : i32, i32
  }
  func.func @transform_16(%arg0: i32) -> (i32, i32) {
    %c0_i32 = arith.constant 0 : i32
    %c0_i32_0 = arith.constant 0 : i32
    %c0_i32_1 = arith.constant 0 : i32
    return %c0_i32, %c0_i32_0 : i32, i32
  }
  func.func @transform_17(%arg0: i32) -> (i32, i32) {
    %c0_i32 = arith.constant 0 : i32
    %c0_i32_0 = arith.constant 0 : i32
    %c0_i32_1 = arith.constant 0 : i32
    return %c0_i32, %c0_i32_0 : i32, i32
  }
  func.func @transform_18(%arg0: i32) -> (i32, i32) {
    %c0_i32 = arith.constant 0 : i32
    %c0_i32_0 = arith.constant 0 : i32
    %c0_i32_1 = arith.constant 0 : i32
    return %c0_i32, %c0_i32_0 : i32, i32
  }
  func.func @transform_19(%arg0: i32) -> (i32, i32, i32) {
    %c0_i32 = arith.constant 0 : i32
    %c0_i32_0 = arith.constant 0 : i32
    %c0_i32_1 = arith.constant 0 : i32
    %c0_i32_2 = arith.constant 0 : i32
    return %c0_i32, %c0_i32_0, %c0_i32_1 : i32, i32, i32
  }
  func.func @transform_20(%arg0: i32) -> (i32, i32) {
    %c0_i32 = arith.constant 0 : i32
    %c0_i32_0 = arith.constant 0 : i32
    %c0_i32_1 = arith.constant 0 : i32
    return %c0_i32, %c0_i32_0 : i32, i32
  }
  func.func @transform_21(%arg0: i32) -> (i32, i32, i32) {
    %c0_i32 = arith.constant 0 : i32
    %c0_i32_0 = arith.constant 0 : i32
    %c0_i32_1 = arith.constant 0 : i32
    %c0_i32_2 = arith.constant 0 : i32
    return %c0_i32, %c0_i32_0, %c0_i32_1 : i32, i32, i32
  }
  func.func @transform_22(%arg0: i32) -> (i32, i32, i32) {
    %c0_i32 = arith.constant 0 : i32
    %c0_i32_0 = arith.constant 0 : i32
    %c0_i32_1 = arith.constant 0 : i32
    %c0_i32_2 = arith.constant 0 : i32
    return %c0_i32, %c0_i32_0, %c0_i32_1 : i32, i32, i32
  }
  func.func @transform_23(%arg0: i32) -> (i32, i32, i32) {
    %c0_i32 = arith.constant 0 : i32
    %c0_i32_0 = arith.constant 0 : i32
    %c0_i32_1 = arith.constant 0 : i32
    %c0_i32_2 = arith.constant 0 : i32
    return %c0_i32, %c0_i32_0, %c0_i32_1 : i32, i32, i32
  }
  func.func @transform_24(%arg0: i32) -> (i32, i32) {
    %c0_i32 = arith.constant 0 : i32
    %c0_i32_0 = arith.constant 0 : i32
    %c0_i32_1 = arith.constant 0 : i32
    return %c0_i32, %c0_i32_0 : i32, i32
  }
  func.func @transform_25(%arg0: i32) -> (i32, i32) {
    %c0_i32 = arith.constant 0 : i32
    %c0_i32_0 = arith.constant 0 : i32
    %c0_i32_1 = arith.constant 0 : i32
    return %c0_i32, %c0_i32_0 : i32, i32
  }
  func.func @transform_26(%arg0: i32) -> (i32, i32) {
    %c0_i32 = arith.constant 0 : i32
    %c0_i32_0 = arith.constant 0 : i32
    %c0_i32_1 = arith.constant 0 : i32
    return %c0_i32, %c0_i32_0 : i32, i32
  }
  func.func @transform_27(%arg0: i32) -> (i32, i32, i32) {
    %c0_i32 = arith.constant 0 : i32
    %c0_i32_0 = arith.constant 0 : i32
    %c0_i32_1 = arith.constant 0 : i32
    return %arg0, %c0_i32, %c0_i32_0 : i32, i32, i32
  }
}

</mosaic_0001>

<llo_original>
// kernel: lt_block_forward.1
$region0: #{lt_block_forward.1}
  #allocation0 [shape = 'u32[]', space=smem, size = 0x4, offset = 0x4, fixed_abs, tag = 'smem constant byte address 0x4 - core index']
  #allocation1 [shape = 'u32[144,128]{1,0:T(1,128)}', space=vmem, size = 0x12000, scoped, tag = 'internal scratch']
  %s0 = inlined_call_operand.vmem [shape: bf16[2,64,32], index: 0, kind: input, shape index: {}]
  %s1 = inlined_call_operand.vmem [shape: bf16[32,96], index: 1, kind: input, shape index: {}]
  %s2 = inlined_call_operand.vmem [shape: f32[1,96], index: 2, kind: input, shape index: {}]
  %s3 = inlined_call_operand.vmem [shape: bf16[96,96], index: 3, kind: input, shape index: {}]
  %s4 = inlined_call_operand.vmem [shape: f32[1,96], index: 4, kind: input, shape index: {}]
  %s5 = inlined_call_operand.vmem [shape: bf16[96,96], index: 5, kind: input, shape index: {}]
  %s6 = inlined_call_operand.vmem [shape: f32[1,96], index: 6, kind: input, shape index: {}]
  %s7 = inlined_call_operand.vmem [shape: bf16[96,96], index: 7, kind: input, shape index: {}]
  %s8 = inlined_call_operand.vmem [shape: f32[1,96], index: 8, kind: input, shape index: {}]
  %s9 = inlined_call_operand.vmem [shape: bf16[96,96], index: 9, kind: input, shape index: {}]
  %s10 = inlined_call_operand.vmem [shape: f32[1,96], index: 10, kind: input, shape index: {}]
  %s11 = inlined_call_operand.vmem [shape: bf16[96,32], index: 11, kind: input, shape index: {}]
  %s12 = inlined_call_operand.vmem [shape: f32[1,32], index: 12, kind: input, shape index: {}]
  %s13 = inlined_call_operand.vmem [shape: f32[9,128,1], index: 13, kind: input, shape index: {}]
  %s14 = inlined_call_operand.vmem [shape: bf16[288,32], index: 14, kind: input, shape index: {}]
  %s15 = inlined_call_operand.vmem [shape: f32[1,32], index: 15, kind: input, shape index: {}]
  %s16 = inlined_call_operand.vmem [shape: bf16[32,32], index: 16, kind: input, shape index: {}]
  %s17 = inlined_call_operand.vmem [shape: bf16[128,256], index: 17, kind: input, shape index: {}]
  %s18 = inlined_call_operand.vmem [shape: f32[1,256], index: 18, kind: input, shape index: {}]
  %s19 = inlined_call_operand.vmem [shape: f32[9,1,256], index: 19, kind: input, shape index: {}]
  %s20 = inlined_call_operand.vmem [shape: f32[1,256], index: 20, kind: input, shape index: {}]
  %s21 = inlined_call_operand.vmem [shape: f32[2,1,256], index: 21, kind: input, shape index: {}]
  %s22 = inlined_call_operand.vmem [shape: f32[2,1,1], index: 22, kind: input, shape index: {}]
  %s23 = inlined_call_operand.vmem [shape: f32[2,1,256], index: 23, kind: input, shape index: {}]
  %s24 = inlined_call_operand.vmem [shape: f32[1,256], index: 24, kind: input, shape index: {}]
  %s25 = inlined_call_operand.vmem [shape: bf16[256,128], index: 25, kind: input, shape index: {}]
  %s26 = inlined_call_operand.vmem [shape: f32[1,128], index: 26, kind: input, shape index: {}]
  %s27 = inlined_call_operand.hbm [shape: f32[2,64,128], index: 27, kind: output, shape index: {}]
  %s28 = sld [smem:[#allocation0]]
  $region118: #{lt_block_forward.1} parent=0
    _
  %s30 = ssub.s32 1, %s28
  %s31 = scalar_select 0, %s30, %s28
  $region1: #{lt_block_forward.1} parent=0
    #allocation2 [shape = 'u8[65536]{0}', space=vmem, size = 0x10000, scoped, tag = 'output window, operand 0, single buffered']
    #allocation3 [shape = 's32[1]{0}', space=sflag, size = 0x4, scoped, tag = 'scoped memory for lt_block_forward.1']
    %32 = vsyncpa [#allocation3], 0
    // Predicated region
    $region2: #{lt_block_forward.1} parent=1 // pred_check
      _
    $region3: #{lt_block_forward.1} parent=1 // pred_check_branch
      %34 = sbr.rel (0) target = $region5
    $region4: #{lt_block_forward.1} parent=1 // pred_region
      _
    $region5: #{lt_block_forward.1} parent=1 // pred_fallthru
      _
    // Predicated region
    $region6: #{lt_block_forward.1} parent=1 // pred_check
      _
    $region7: #{lt_block_forward.1} parent=1 // pred_check_branch
      %36 = sbr.rel (0) target = $region9
    $region8: #{lt_block_forward.1} parent=1 // pred_region
      _
    $region9: #{lt_block_forward.1} parent=1 // pred_fallthru
      _
    // Predicated region
    $region10: #{lt_block_forward.1} parent=1 // pred_check
      _
    $region11: #{lt_block_forward.1} parent=1 // pred_check_branch
      %38 = sbr.rel (0) target = $region13
    $region12: #{lt_block_forward.1} parent=1 // pred_region
      _
    $region13: #{lt_block_forward.1} parent=1 // pred_fallthru
      _
    // Predicated region
    $region14: #{lt_block_forward.1} parent=1 // pred_check
      _
    $region15: #{lt_block_forward.1} parent=1 // pred_check_branch
      %40 = sbr.rel (0) target = $region17
    $region16: #{lt_block_forward.1} parent=1 // pred_region
      _
    $region17: #{lt_block_forward.1} parent=1 // pred_fallthru
      _
    // Predicated region
    $region18: #{lt_block_forward.1} parent=1 // pred_check
      _
    $region19: #{lt_block_forward.1} parent=1 // pred_check_branch
      %42 = sbr.rel (0) target = $region21
    $region20: #{lt_block_forward.1} parent=1 // pred_region
      _
    $region21: #{lt_block_forward.1} parent=1 // pred_fallthru
      _
    // Predicated region
    $region22: #{lt_block_forward.1} parent=1 // pred_check
      _
    $region23: #{lt_block_forward.1} parent=1 // pred_check_branch
      %44 = sbr.rel (0) target = $region25
    $region24: #{lt_block_forward.1} parent=1 // pred_region
      _
    $region25: #{lt_block_forward.1} parent=1 // pred_fallthru
      _
    // Predicated region
    $region26: #{lt_block_forward.1} parent=1 // pred_check
      _
    $region27: #{lt_block_forward.1} parent=1 // pred_check_branch
      %46 = sbr.rel (0) target = $region29
    $region28: #{lt_block_forward.1} parent=1 // pred_region
      _
    $region29: #{lt_block_forward.1} parent=1 // pred_fallthru
      _
    // Predicated region
    $region30: #{lt_block_forward.1} parent=1 // pred_check
      _
    $region31: #{lt_block_forward.1} parent=1 // pred_check_branch
      %48 = sbr.rel (0) target = $region33
    $region32: #{lt_block_forward.1} parent=1 // pred_region
      _
    $region33: #{lt_block_forward.1} parent=1 // pred_fallthru
      _
    // Predicated region
    $region34: #{lt_block_forward.1} parent=1 // pred_check
      _
    $region35: #{lt_block_forward.1} parent=1 // pred_check_branch
      %50 = sbr.rel (0) target = $region37
    $region36: #{lt_block_forward.1} parent=1 // pred_region
      _
    $region37: #{lt_block_forward.1} parent=1 // pred_fallthru
      _
    // Predicated region
    $region38: #{lt_block_forward.1} parent=1 // pred_check
      _
    $region39: #{lt_block_forward.1} parent=1 // pred_check_branch
      %52 = sbr.rel (0) target = $region41
    $region40: #{lt_block_forward.1} parent=1 // pred_region
      _
    $region41: #{lt_block_forward.1} parent=1 // pred_fallthru
      _
    // Predicated region
    $region42: #{lt_block_forward.1} parent=1 // pred_check
      _
    $region43: #{lt_block_forward.1} parent=1 // pred_check_branch
      %54 = sbr.rel (0) target = $region45
    $region44: #{lt_block_forward.1} parent=1 // pred_region
      _
    $region45: #{lt_block_forward.1} parent=1 // pred_fallthru
      _
    // Predicated region
    $region46: #{lt_block_forward.1} parent=1 // pred_check
      _
    $region47: #{lt_block_forward.1} parent=1 // pred_check_branch
      %56 = sbr.rel (0) target = $region49
    $region48: #{lt_block_forward.1} parent=1 // pred_region
      _
    $region49: #{lt_block_forward.1} parent=1 // pred_fallthru
      _
    // Predicated region
    $region50: #{lt_block_forward.1} parent=1 // pred_check
      _
    $region51: #{lt_block_forward.1} parent=1 // pred_check_branch
      %58 = sbr.rel (0) target = $region53
    $region52: #{lt_block_forward.1} parent=1 // pred_region
      _
    $region53: #{lt_block_forward.1} parent=1 // pred_fallthru
      _
    // Predicated region
    $region54: #{lt_block_forward.1} parent=1 // pred_check
      _
    $region55: #{lt_block_forward.1} parent=1 // pred_check_branch
      %60 = sbr.rel (0) target = $region57
    $region56: #{lt_block_forward.1} parent=1 // pred_region
      _
    $region57: #{lt_block_forward.1} parent=1 // pred_fallthru
      _
    // Predicated region
    $region58: #{lt_block_forward.1} parent=1 // pred_check
      _
    $region59: #{lt_block_forward.1} parent=1 // pred_check_branch
      %62 = sbr.rel (0) target = $region61
    $region60: #{lt_block_forward.1} parent=1 // pred_region
      _
    $region61: #{lt_block_forward.1} parent=1 // pred_fallthru
      _
    // Predicated region
    $region62: #{lt_block_forward.1} parent=1 // pred_check
      _
    $region63: #{lt_block_forward.1} parent=1 // pred_check_branch
      %64 = sbr.rel (0) target = $region65
    $region64: #{lt_block_forward.1} parent=1 // pred_region
      _
    $region65: #{lt_block_forward.1} parent=1 // pred_fallthru
      _
    // Predicated region
    $region66: #{lt_block_forward.1} parent=1 // pred_check
      _
    $region67: #{lt_block_forward.1} parent=1 // pred_check_branch
      %66 = sbr.rel (0) target = $region69
    $region68: #{lt_block_forward.1} parent=1 // pred_region
      _
    $region69: #{lt_block_forward.1} parent=1 // pred_fallthru
      _
    // Predicated region
    $region70: #{lt_block_forward.1} parent=1 // pred_check
      _
    $region71: #{lt_block_forward.1} parent=1 // pred_check_branch
      %68 = sbr.rel (0) target = $region73
    $region72: #{lt_block_forward.1} parent=1 // pred_region
      _
    $region73: #{lt_block_forward.1} parent=1 // pred_fallthru
      _
    // Predicated region
    $region74: #{lt_block_forward.1} parent=1 // pred_check
      _
    $region75: #{lt_block_forward.1} parent=1 // pred_check_branch
      %70 = sbr.rel (0) target = $region77
    $region76: #{lt_block_forward.1} parent=1 // pred_region
      _
    $region77: #{lt_block_forward.1} parent=1 // pred_fallthru
      _
    // Predicated region
    $region78: #{lt_block_forward.1} parent=1 // pred_check
      _
    $region79: #{lt_block_forward.1} parent=1 // pred_check_branch
      %72 = sbr.rel (0) target = $region81
    $region80: #{lt_block_forward.1} parent=1 // pred_region
      _
    $region81: #{lt_block_forward.1} parent=1 // pred_fallthru
      _
    // Predicated region
    $region82: #{lt_block_forward.1} parent=1 // pred_check
      _
    $region83: #{lt_block_forward.1} parent=1 // pred_check_branch
      %74 = sbr.rel (0) target = $region85
    $region84: #{lt_block_forward.1} parent=1 // pred_region
      _
    $region85: #{lt_block_forward.1} parent=1 // pred_fallthru
      _
    // Predicated region
    $region86: #{lt_block_forward.1} parent=1 // pred_check
      _
    $region87: #{lt_block_forward.1} parent=1 // pred_check_branch
      %76 = sbr.rel (0) target = $region89
    $region88: #{lt_block_forward.1} parent=1 // pred_region
      _
    $region89: #{lt_block_forward.1} parent=1 // pred_fallthru
      _
    // Predicated region
    $region90: #{lt_block_forward.1} parent=1 // pred_check
      _
    $region91: #{lt_block_forward.1} parent=1 // pred_check_branch
      %78 = sbr.rel (0) target = $region93
    $region92: #{lt_block_forward.1} parent=1 // pred_region
      _
    $region93: #{lt_block_forward.1} parent=1 // pred_fallthru
      _
    // Predicated region
    $region94: #{lt_block_forward.1} parent=1 // pred_check
      _
    $region95: #{lt_block_forward.1} parent=1 // pred_check_branch
      %80 = sbr.rel (0) target = $region97
    $region96: #{lt_block_forward.1} parent=1 // pred_region
      _
    $region97: #{lt_block_forward.1} parent=1 // pred_fallthru
      _
    // Predicated region
    $region98: #{lt_block_forward.1} parent=1 // pred_check
      _
    $region99: #{lt_block_forward.1} parent=1 // pred_check_branch
      %82 = sbr.rel (0) target = $region101
    $region100: #{lt_block_forward.1} parent=1 // pred_region
      _
    $region101: #{lt_block_forward.1} parent=1 // pred_fallthru
      _
    // Predicated region
    $region102: #{lt_block_forward.1} parent=1 // pred_check
      _
    $region103: #{lt_block_forward.1} parent=1 // pred_check_branch
      %84 = sbr.rel (0) target = $region105
    $region104: #{lt_block_forward.1} parent=1 // pred_region
      _
    $region105: #{lt_block_forward.1} parent=1 // pred_fallthru
      _
    // Predicated region
    $region106: #{lt_block_forward.1} parent=1 // pred_check
      _
    $region107: #{lt_block_forward.1} parent=1 // pred_check_branch
      %86 = sbr.rel (0) target = $region109
    $region108: #{lt_block_forward.1} parent=1 // pred_region
      _
    $region109: #{lt_block_forward.1} parent=1 // pred_fallthru
      _
    %v88 = vld [vmem:[%s0] sm:$0xf]
    %v89 = vld [vmem:[%s0 + $0x4] sm:$0xf]
    %v90 = vld [vmem:[%s0 + $0x8] sm:$0xf]
    %v91 = vld [vmem:[%s0 + $0xc] sm:$0xf]
    %v92 = vld [vmem:[%s0 + $0x10] sm:$0xf]
    %v93 = vld [vmem:[%s0 + $0x14] sm:$0xf]
    %v94 = vld [vmem:[%s0 + $0x18] sm:$0xf]
    %v95 = vld [vmem:[%s0 + $0x1c] sm:$0xf]
    %v96 = vld [vmem:[%s0 + $0x20] sm:$0xf]
    %v97 = vld [vmem:[%s0 + $0x24] sm:$0xf]
    %v98 = vld [vmem:[%s0 + $0x28] sm:$0xf]
    %v99 = vld [vmem:[%s0 + $0x2c] sm:$0xf]
    %v100 = vld [vmem:[%s0 + $0x30] sm:$0xf]
    %v101 = vld [vmem:[%s0 + $0x34] sm:$0xf]
    %v102 = vld [vmem:[%s0 + $0x38] sm:$0xf]
    %v103 = vld [vmem:[%s0 + $0x3c] sm:$0xf]
    %v104 = vld [vmem:[%s1] sm:$0xf]
    %v105 = vld [vmem:[%s1 + $0x4] sm:$0xf]
    %v106 = vld [vmem:[%s1 + $0x8] sm:$0xf]
    %v107 = vld [vmem:[%s1 + $0xc] sm:$0xf]
    %v108 = vld [vmem:[%s2] sm:$0x1]
    %v110 = vlaneseq
    %v111 = vshrl.u32 %v110, 7
    %v112 = vsub.s32 0, %v111
    %v113 = vrot.slane %v108, %v112
    %v131 = vunpack.c.l.b16 %v88
    %v132 = vunpack.c.l.b16 %v89
    %v133 = vunpack.c.l.b16 %v90
    %v134 = vunpack.c.l.b16 %v91
    %v135 = vunpack.c.l.b16 %v92
    %v136 = vunpack.c.l.b16 %v93
    %v137 = vunpack.c.l.b16 %v94
    %v138 = vunpack.c.l.b16 %v95
    %v139 = vunpack.c.l.b16 %v96
    %v140 = vunpack.c.l.b16 %v97
    %v141 = vunpack.c.l.b16 %v98
    %v142 = vunpack.c.l.b16 %v99
    %v143 = vunpack.c.l.b16 %v100
    %v144 = vunpack.c.l.b16 %v101
    %v145 = vunpack.c.l.b16 %v102
    %v146 = vunpack.c.l.b16 %v103
    %v147 = vpack.c.b16 %v132, %v131
    %v148 = vpack.c.b16 %v134, %v133
    %v149 = vpack.c.b16 %v136, %v135
    %v150 = vpack.c.b16 %v138, %v137
    %v151 = vpack.c.b16 %v140, %v139
    %v152 = vpack.c.b16 %v142, %v141
    %v153 = vpack.c.b16 %v144, %v143
    %v154 = vpack.c.b16 %v146, %v145
    %v159 = vunpack.c.l.b16 %v104
    %v160 = vunpack.c.l.b16 %v105
    %v161 = vunpack.c.l.b16 %v106
    %v162 = vunpack.c.l.b16 %v107
    %v163 = vpack.c.b16 %v160, %v159
    %v164 = vpack.c.b16 %v162, %v161
    %vm167 = vcmask 261120
    %v169 = vsel %vm167, %v147, 0
    %v172 = vsel %vm167, %v148, 0
    %v175 = vsel %vm167, %v149, 0
    %v178 = vsel %vm167, %v150, 0
    %v181 = vsel %vm167, %v151, 0
    %v184 = vsel %vm167, %v152, 0
    %v187 = vsel %vm167, %v153, 0
    %v190 = vsel %vm167, %v154, 0
    %192 = vmatprep.subr.bf16.mxu0 0
    %193 = vmatpush1.bf16.msra.mxu0 %v163
    %194 = vmatprep.subr.bf16.mxu0 0
    %195 = vmatpush1.bf16.msra.mxu0 %v164
    %196 = vmatprep.subr.bf16.mxu0 0
    %197 = vmatpush1.bf16.msra.mxu0 0
    %198 = vmatprep.subr.bf16.mxu0 0
    %199 = vmatpush1.bf16.msra.mxu0 0
    %200 = vmatprep.subr.bf16.mxu0 0
    %201 = vmatpush1.bf16.msra.mxu0 0
    %202 = vmatprep.subr.bf16.mxu0 0
    %203 = vmatpush1.bf16.msra.mxu0 0
    %204 = vmatprep.subr.bf16.mxu0 0
    %205 = vmatpush1.bf16.msra.mxu0 0
    %206 = vmatprep.subr.bf16.mxu0 0
    %207 = vmatpush1.bf16.msra.mxu0 0
    %208 = vmatprep.subr.bf16.mxu0 0
    %209 = vmatpush1.bf16.msra.mxu0 0
    %210 = vmatprep.subr.bf16.mxu0 0
    %211 = vmatpush1.bf16.msra.mxu0 0
    %212 = vmatprep.subr.bf16.mxu0 0
    %213 = vmatpush1.bf16.msra.mxu0 0
    %214 = vmatprep.subr.bf16.mxu0 0
    %215 = vmatpush1.bf16.msra.mxu0 0
    %216 = vmatprep.subr.bf16.mxu0 0
    %217 = vmatpush1.bf16.msra.mxu0 0
    %218 = vmatprep.subr.bf16.mxu0 0
    %219 = vmatpush1.bf16.msra.mxu0 0
    %220 = vmatprep.subr.bf16.mxu0 0
    %221 = vmatpush1.bf16.msra.mxu0 0
    %222 = vmatprep.subr.bf16.mxu0 0
    %223 = vmatpush1.bf16.msra.mxu0 0
    %224 = vmatprep.mubr.bf16.mxu0 0
    %225 = vmatmul.mubr.bf16.gmra.mrb[0].mxu0 %v169
    %v226 = vpop.f32.mrb[0].mxu0
    %v227 = vadd.f32 %v113, %v226
    %v228 = vpop.f32.mrb[0].mxu0
    %v229 = vpop.f32.mrb[0].mxu0
    %v230 = vadd.f32 %v113, %v229
    %v231 = vpop.f32.mrb[0].mxu0
    %232 = vmatprep.mubr.bf16.mxu0 0
    %233 = vmatmul.mubr.bf16.gmra.mrb[0].mxu0 %v172
    %v234 = vpop.f32.mrb[0].mxu0
    %v235 = vadd.f32 %v113, %v234
    %v236 = vpop.f32.mrb[0].mxu0
    %v237 = vpop.f32.mrb[0].mxu0
    %v238 = vadd.f32 %v113, %v237
    %v239 = vpop.f32.mrb[0].mxu0
    %240 = vmatprep.mubr.bf16.mxu0 0
    %241 = vmatmul.mubr.bf16.gmra.mrb[0].mxu0 %v175
    %v242 = vpop.f32.mrb[0].mxu0
    %v243 = vadd.f32 %v113, %v242
    %v244 = vpop.f32.mrb[0].mxu0
    %v245 = vpop.f32.mrb[0].mxu0
    %v246 = vadd.f32 %v113, %v245
    %v247 = vpop.f32.mrb[0].mxu0
    %248 = vmatprep.mubr.bf16.mxu0 0
    %249 = vmatmul.mubr.bf16.gmra.mrb[0].mxu0 %v178
    %v250 = vpop.f32.mrb[0].mxu0
    %v251 = vadd.f32 %v113, %v250
    %v252 = vpop.f32.mrb[0].mxu0
    %v253 = vpop.f32.mrb[0].mxu0
    %v254 = vadd.f32 %v113, %v253
    %v255 = vpop.f32.mrb[0].mxu0
    %256 = vmatprep.mubr.bf16.mxu0 0
    %257 = vmatmul.mubr.bf16.gmra.mrb[0].mxu0 %v181
    %v258 = vpop.f32.mrb[0].mxu0
    %v259 = vadd.f32 %v113, %v258
    %v260 = vpop.f32.mrb[0].mxu0
    %v261 = vpop.f32.mrb[0].mxu0
    %v262 = vadd.f32 %v113, %v261
    %v263 = vpop.f32.mrb[0].mxu0
    %264 = vmatprep.mubr.bf16.mxu0 0
    %265 = vmatmul.mubr.bf16.gmra.mrb[0].mxu0 %v184
    %v266 = vpop.f32.mrb[0].mxu0
    %v267 = vadd.f32 %v113, %v266
    %v268 = vpop.f32.mrb[0].mxu0
    %v269 = vpop.f32.mrb[0].mxu0
    %v270 = vadd.f32 %v113, %v269
    %v271 = vpop.f32.mrb[0].mxu0
    %272 = vmatprep.mubr.bf16.mxu0 0
    %273 = vmatmul.mubr.bf16.gmra.mrb[0].mxu0 %v187
    %v274 = vpop.f32.mrb[0].mxu0
    %v275 = vadd.f32 %v113, %v274
    %v276 = vpop.f32.mrb[0].mxu0
    %v277 = vpop.f32.mrb[0].mxu0
    %v278 = vadd.f32 %v113, %v277
    %v279 = vpop.f32.mrb[0].mxu0
    %280 = vmatprep.mubr.bf16.mxu0 0
    %281 = vmatmul.mubr.bf16.gmra.mrb[0].mxu0 %v190
    %v282 = vpop.f32.mrb[0].mxu0
    %v283 = vadd.f32 %v113, %v282
    %v284 = vpop.f32.mrb[0].mxu0
    %v285 = vpop.f32.mrb[0].mxu0
    %v286 = vadd.f32 %v113, %v285
    %v287 = vpop.f32.mrb[0].mxu0
    %288 = vdwg.mxu0
    %v289 = vpack.c.bf16 %v230, %v227
    %v290 = vpack.c.bf16 %v238, %v235
    %v291 = vpack.c.bf16 %v246, %v243
    %v292 = vpack.c.bf16 %v254, %v251
    %v293 = vpack.c.bf16 %v262, %v259
    %v294 = vpack.c.bf16 %v270, %v267
    %v295 = vpack.c.bf16 %v278, %v275
    %v296 = vpack.c.bf16 %v286, %v283
    %v297 = vld [vmem:[%s3] sm:$0xf]
    %v298 = vld [vmem:[%s3 + $0x4] sm:$0xf]
    %v299 = vld [vmem:[%s3 + $0x8] sm:$0xf]
    %v300 = vld [vmem:[%s3 + $0xc] sm:$0xf]
    %v301 = vld [vmem:[%s3 + $0x10] sm:$0xf]
    %v302 = vld [vmem:[%s3 + $0x14] sm:$0xf]
    %v303 = vld [vmem:[%s3 + $0x18] sm:$0xf]
    %v304 = vld [vmem:[%s3 + $0x1c] sm:$0xf]
    %v305 = vld [vmem:[%s3 + $0x20] sm:$0xf]
    %v306 = vld [vmem:[%s3 + $0x24] sm:$0xf]
    %v307 = vld [vmem:[%s3 + $0x28] sm:$0xf]
    %v308 = vld [vmem:[%s3 + $0x2c] sm:$0xf]
    %v309 = vld [vmem:[%s4] sm:$0x1]
    %v311 = vlaneseq
    %v312 = vshrl.u32 %v311, 7
    %v313 = vsub.s32 0, %v312
    %v314 = vrot.slane %v309, %v313
    %v328 = vunpack.c.l.b16 %v297
    %v329 = vunpack.c.l.b16 %v298
    %v330 = vunpack.c.l.b16 %v299
    %v331 = vunpack.c.l.b16 %v300
    %v332 = vunpack.c.l.b16 %v301
    %v333 = vunpack.c.l.b16 %v302
    %v334 = vunpack.c.l.b16 %v303
    %v335 = vunpack.c.l.b16 %v304
    %v336 = vunpack.c.l.b16 %v305
    %v337 = vunpack.c.l.b16 %v306
    %v338 = vunpack.c.l.b16 %v307
    %v339 = vunpack.c.l.b16 %v308
    %v340 = vpack.c.b16 %v329, %v328
    %v341 = vpack.c.b16 %v331, %v330
    %v342 = vpack.c.b16 %v333, %v332
    %v343 = vpack.c.b16 %v335, %v334
    %v344 = vpack.c.b16 %v337, %v336
    %v345 = vpack.c.b16 %v339, %v338
    %vm352 = vcmask 785408
    %v354 = vsel %vm352, %v289, 0
    %v357 = vsel %vm352, %v290, 0
    %v360 = vsel %vm352, %v291, 0
    %v363 = vsel %vm352, %v292, 0
    %v366 = vsel %vm352, %v293, 0
    %v369 = vsel %vm352, %v294, 0
    %v372 = vsel %vm352, %v295, 0
    %v375 = vsel %vm352, %v296, 0
    %377 = vmatprep.subr.bf16.mxu0 0
    %378 = vmatpush1.bf16.msra.mxu0 %v340
    %379 = vmatprep.subr.bf16.mxu0 0
    %380 = vmatpush1.bf16.msra.mxu0 %v341
    %381 = vmatprep.subr.bf16.mxu0 0
    %382 = vmatpush1.bf16.msra.mxu0 %v342
    %383 = vmatprep.subr.bf16.mxu0 0
    %384 = vmatpush1.bf16.msra.mxu0 %v343
    %385 = vmatprep.subr.bf16.mxu0 0
    %386 = vmatpush1.bf16.msra.mxu0 %v344
    %387 = vmatprep.subr.bf16.mxu0 0
    %388 = vmatpush1.bf16.msra.mxu0 %v345
    %389 = vmatprep.subr.bf16.mxu0 0
    %390 = vmatpush1.bf16.msra.mxu0 0
    %391 = vmatprep.subr.bf16.mxu0 0
    %392 = vmatpush1.bf16.msra.mxu0 0
    %393 = vmatprep.subr.bf16.mxu0 0
    %394 = vmatpush1.bf16.msra.mxu0 0
    %395 = vmatprep.subr.bf16.mxu0 0
    %396 = vmatpush1.bf16.msra.mxu0 0
    %397 = vmatprep.subr.bf16.mxu0 0
    %398 = vmatpush1.bf16.msra.mxu0 0
    %399 = vmatprep.subr.bf16.mxu0 0
    %400 = vmatpush1.bf16.msra.mxu0 0
    %401 = vmatprep.subr.bf16.mxu0 0
    %402 = vmatpush1.bf16.msra.mxu0 0
    %403 = vmatprep.subr.bf16.mxu0 0
    %404 = vmatpush1.bf16.msra.mxu0 0
    %405 = vmatprep.subr.bf16.mxu0 0
    %406 = vmatpush1.bf16.msra.mxu0 0
    %407 = vmatprep.subr.bf16.mxu0 0
    %408 = vmatpush1.bf16.msra.mxu0 0
    %409 = vmatprep.mubr.bf16.mxu0 0
    %410 = vmatmul.mubr.bf16.gmra.mrb[0].mxu0 %v354
    %v411 = vpop.f32.mrb[0].mxu0
    %v412 = vadd.f32 %v314, %v411
    %v413 = vpop.f32.mrb[0].mxu0
    %v414 = vpop.f32.mrb[0].mxu0
    %v415 = vadd.f32 %v314, %v414
    %v416 = vpop.f32.mrb[0].mxu0
    %417 = vmatprep.mubr.bf16.mxu0 0
    %418 = vmatmul.mubr.bf16.gmra.mrb[0].mxu0 %v357
    %v419 = vpop.f32.mrb[0].mxu0
    %v420 = vadd.f32 %v314, %v419
    %v421 = vpop.f32.mrb[0].mxu0
    %v422 = vpop.f32.mrb[0].mxu0
    %v423 = vadd.f32 %v314, %v422
    %v424 = vpop.f32.mrb[0].mxu0
    %425 = vmatprep.mubr.bf16.mxu0 0
    %426 = vmatmul.mubr.bf16.gmra.mrb[0].mxu0 %v360
    %v427 = vpop.f32.mrb[0].mxu0
    %v428 = vadd.f32 %v314, %v427
    %v429 = vpop.f32.mrb[0].mxu0
    %v430 = vpop.f32.mrb[0].mxu0
    %v431 = vadd.f32 %v314, %v430
    %v432 = vpop.f32.mrb[0].mxu0
    %433 = vmatprep.mubr.bf16.mxu0 0
    %434 = vmatmul.mubr.bf16.gmra.mrb[0].mxu0 %v363
    %v435 = vpop.f32.mrb[0].mxu0
    %v436 = vadd.f32 %v314, %v435
    %v437 = vpop.f32.mrb[0].mxu0
    %v438 = vpop.f32.mrb[0].mxu0
    %v439 = vadd.f32 %v314, %v438
    %v440 = vpop.f32.mrb[0].mxu0
    %441 = vmatprep.mubr.bf16.mxu0 0
    %442 = vmatmul.mubr.bf16.gmra.mrb[0].mxu0 %v366
    %v443 = vpop.f32.mrb[0].mxu0
    %v444 = vadd.f32 %v314, %v443
    %v445 = vpop.f32.mrb[0].mxu0
    %v446 = vpop.f32.mrb[0].mxu0
    %v447 = vadd.f32 %v314, %v446
    %v448 = vpop.f32.mrb[0].mxu0
    %449 = vmatprep.mubr.bf16.mxu0 0
    %450 = vmatmul.mubr.bf16.gmra.mrb[0].mxu0 %v369
    %v451 = vpop.f32.mrb[0].mxu0
    %v452 = vadd.f32 %v314, %v451
    %v453 = vpop.f32.mrb[0].mxu0
    %v454 = vpop.f32.mrb[0].mxu0
    %v455 = vadd.f32 %v314, %v454
    %v456 = vpop.f32.mrb[0].mxu0
    %457 = vmatprep.mubr.bf16.mxu0 0
    %458 = vmatmul.mubr.bf16.gmra.mrb[0].mxu0 %v372
    %v459 = vpop.f32.mrb[0].mxu0
    %v460 = vadd.f32 %v314, %v459
    %v461 = vpop.f32.mrb[0].mxu0
    %v462 = vpop.f32.mrb[0].mxu0
    %v463 = vadd.f32 %v314, %v462
    %v464 = vpop.f32.mrb[0].mxu0
    %465 = vmatprep.mubr.bf16.mxu0 0
    %466 = vmatmul.mubr.bf16.gmra.mrb[0].mxu0 %v375
    %v467 = vpop.f32.mrb[0].mxu0
    %v468 = vadd.f32 %v314, %v467
    %v469 = vpop.f32.mrb[0].mxu0
    %v470 = vpop.f32.mrb[0].mxu0
    %v471 = vadd.f32 %v314, %v470
    %v472 = vpop.f32.mrb[0].mxu0
    %473 = vdwg.mxu0
    %v474 = vpack.c.bf16 %v415, %v412
    %v475 = vpack.c.bf16 %v423, %v420
    %v476 = vpack.c.bf16 %v431, %v428
    %v477 = vpack.c.bf16 %v439, %v436
    %v478 = vpack.c.bf16 %v447, %v444
    %v479 = vpack.c.bf16 %v455, %v452
    %v480 = vpack.c.bf16 %v463, %v460
    %v481 = vpack.c.bf16 %v471, %v468
    %v482 = vld [vmem:[%s5] sm:$0xf]
    %v483 = vld [vmem:[%s5 + $0x4] sm:$0xf]
    %v484 = vld [vmem:[%s5 + $0x8] sm:$0xf]
    %v485 = vld [vmem:[%s5 + $0xc] sm:$0xf]
    %v486 = vld [vmem:[%s5 + $0x10] sm:$0xf]
    %v487 = vld [vmem:[%s5 + $0x14] sm:$0xf]
    %v488 = vld [vmem:[%s5 + $0x18] sm:$0xf]
    %v489 = vld [vmem:[%s5 + $0x1c] sm:$0xf]
    %v490 = vld [vmem:[%s5 + $0x20] sm:$0xf]
    %v491 = vld [vmem:[%s5 + $0x24] sm:$0xf]
    %v492 = vld [vmem:[%s5 + $0x28] sm:$0xf]
    %v493 = vld [vmem:[%s5 + $0x2c] sm:$0xf]
    %v494 = vld [vmem:[%s6] sm:$0x1]
    %v496 = vlaneseq
    %v497 = vshrl.u32 %v496, 7
    %v498 = vsub.s32 0, %v497
    %v499 = vrot.slane %v494, %v498
    %v513 = vunpack.c.l.b16 %v482
    %v514 = vunpack.c.l.b16 %v483
    %v515 = vunpack.c.l.b16 %v484
    %v516 = vunpack.c.l.b16 %v485
    %v517 = vunpack.c.l.b16 %v486
    %v518 = vunpack.c.l.b16 %v487
    %v519 = vunpack.c.l.b16 %v488
    %v520 = vunpack.c.l.b16 %v489
    %v521 = vunpack.c.l.b16 %v490
    %v522 = vunpack.c.l.b16 %v491
    %v523 = vunpack.c.l.b16 %v492
    %v524 = vunpack.c.l.b16 %v493
    %v525 = vpack.c.b16 %v514, %v513
    %v526 = vpack.c.b16 %v516, %v515
    %v527 = vpack.c.b16 %v518, %v517
    %v528 = vpack.c.b16 %v520, %v519
    %v529 = vpack.c.b16 %v522, %v521
    %v530 = vpack.c.b16 %v524, %v523
    %537 = vmatprep.subr.bf16.mxu0 0
    %538 = vmatpush1.bf16.msra.mxu0 %v525
    %539 = vmatprep.subr.bf16.mxu0 0
    %540 = vmatpush1.bf16.msra.mxu0 %v526
    %541 = vmatprep.subr.bf16.mxu0 0
    %542 = vmatpush1.bf16.msra.mxu0 %v527
    %543 = vmatprep.subr.bf16.mxu0 0
    %544 = vmatpush1.bf16.msra.mxu0 %v528
    %545 = vmatprep.subr.bf16.mxu0 0
    %546 = vmatpush1.bf16.msra.mxu0 %v529
    %547 = vmatprep.subr.bf16.mxu0 0
    %548 = vmatpush1.bf16.msra.mxu0 %v530
    %549 = vmatprep.subr.bf16.mxu0 0
    %550 = vmatpush1.bf16.msra.mxu0 0
    %551 = vmatprep.subr.bf16.mxu0 0
    %552 = vmatpush1.bf16.msra.mxu0 0
    %553 = vmatprep.subr.bf16.mxu0 0
    %554 = vmatpush1.bf16.msra.mxu0 0
    %555 = vmatprep.subr.bf16.mxu0 0
    %556 = vmatpush1.bf16.msra.mxu0 0
    %557 = vmatprep.subr.bf16.mxu0 0
    %558 = vmatpush1.bf16.msra.mxu0 0
    %559 = vmatprep.subr.bf16.mxu0 0
    %560 = vmatpush1.bf16.msra.mxu0 0
    %561 = vmatprep.subr.bf16.mxu0 0
    %562 = vmatpush1.bf16.msra.mxu0 0
    %563 = vmatprep.subr.bf16.mxu0 0
    %564 = vmatpush1.bf16.msra.mxu0 0
    %565 = vmatprep.subr.bf16.mxu0 0
    %566 = vmatpush1.bf16.msra.mxu0 0
    %567 = vmatprep.subr.bf16.mxu0 0
    %568 = vmatpush1.bf16.msra.mxu0 0
    %569 = vmatprep.mubr.bf16.mxu0 0
    %570 = vmatmul.mubr.bf16.gmra.mrb[0].mxu0 %v354
    %v571 = vpop.f32.mrb[0].mxu0
    %v572 = vadd.f32 %v499, %v571
    %v573 = vpop.f32.mrb[0].mxu0
    %v574 = vpop.f32.mrb[0].mxu0
    %v575 = vadd.f32 %v499, %v574
    %v576 = vpop.f32.mrb[0].mxu0
    %577 = vmatprep.mubr.bf16.mxu0 0
    %578 = vmatmul.mubr.bf16.gmra.mrb[0].mxu0 %v357
    %v579 = vpop.f32.mrb[0].mxu0
    %v580 = vadd.f32 %v499, %v579
    %v581 = vpop.f32.mrb[0].mxu0
    %v582 = vpop.f32.mrb[0].mxu0
    %v583 = vadd.f32 %v499, %v582
    %v584 = vpop.f32.mrb[0].mxu0
    %585 = vmatprep.mubr.bf16.mxu0 0
    %586 = vmatmul.mubr.bf16.gmra.mrb[0].mxu0 %v360
    %v587 = vpop.f32.mrb[0].mxu0
    %v588 = vadd.f32 %v499, %v587
    %v589 = vpop.f32.mrb[0].mxu0
    %v590 = vpop.f32.mrb[0].mxu0
    %v591 = vadd.f32 %v499, %v590
    %v592 = vpop.f32.mrb[0].mxu0
    %593 = vmatprep.mubr.bf16.mxu0 0
    %594 = vmatmul.mubr.bf16.gmra.mrb[0].mxu0 %v363
    %v595 = vpop.f32.mrb[0].mxu0
    %v596 = vadd.f32 %v499, %v595
    %v597 = vpop.f32.mrb[0].mxu0
    %v598 = vpop.f32.mrb[0].mxu0
    %v599 = vadd.f32 %v499, %v598
    %v600 = vpop.f32.mrb[0].mxu0
    %601 = vmatprep.mubr.bf16.mxu0 0
    %602 = vmatmul.mubr.bf16.gmra.mrb[0].mxu0 %v366
    %v603 = vpop.f32.mrb[0].mxu0
    %v604 = vadd.f32 %v499, %v603
    %v605 = vpop.f32.mrb[0].mxu0
    %v606 = vpop.f32.mrb[0].mxu0
    %v607 = vadd.f32 %v499, %v606
    %v608 = vpop.f32.mrb[0].mxu0
    %609 = vmatprep.mubr.bf16.mxu0 0
    %610 = vmatmul.mubr.bf16.gmra.mrb[0].mxu0 %v369
    %v611 = vpop.f32.mrb[0].mxu0
    %v612 = vadd.f32 %v499, %v611
    %v613 = vpop.f32.mrb[0].mxu0
    %v614 = vpop.f32.mrb[0].mxu0
    %v615 = vadd.f32 %v499, %v614
    %v616 = vpop.f32.mrb[0].mxu0
    %617 = vmatprep.mubr.bf16.mxu0 0
    %618 = vmatmul.mubr.bf16.gmra.mrb[0].mxu0 %v372
    %v619 = vpop.f32.mrb[0].mxu0
    %v620 = vadd.f32 %v499, %v619
    %v621 = vpop.f32.mrb[0].mxu0
    %v622 = vpop.f32.mrb[0].mxu0
    %v623 = vadd.f32 %v499, %v622
    %v624 = vpop.f32.mrb[0].mxu0
    %625 = vmatprep.mubr.bf16.mxu0 0
    %626 = vmatmul.mubr.bf16.gmra.mrb[0].mxu0 %v375
    %v627 = vpop.f32.mrb[0].mxu0
    %v628 = vadd.f32 %v499, %v627
    %v629 = vpop.f32.mrb[0].mxu0
    %v630 = vpop.f32.mrb[0].mxu0
    %v631 = vadd.f32 %v499, %v630
    %v632 = vpop.f32.mrb[0].mxu0
    %633 = vdwg.mxu0
    %v634 = vpack.c.bf16 %v575, %v572
    %v635 = vpack.c.bf16 %v583, %v580
    %v636 = vpack.c.bf16 %v591, %v588
    %v637 = vpack.c.bf16 %v599, %v596
    %v638 = vpack.c.bf16 %v607, %v604
    %v639 = vpack.c.bf16 %v615, %v612
    %v640 = vpack.c.bf16 %v623, %v620
    %v641 = vpack.c.bf16 %v631, %v628
    %v642 = vld [vmem:[%s7] sm:$0xf]
    %v643 = vld [vmem:[%s7 + $0x4] sm:$0xf]
    %v644 = vld [vmem:[%s7 + $0x8] sm:$0xf]
    %v645 = vld [vmem:[%s7 + $0xc] sm:$0xf]
    %v646 = vld [vmem:[%s7 + $0x10] sm:$0xf]
    %v647 = vld [vmem:[%s7 + $0x14] sm:$0xf]
    %v648 = vld [vmem:[%s7 + $0x18] sm:$0xf]
    %v649 = vld [vmem:[%s7 + $0x1c] sm:$0xf]
    %v650 = vld [vmem:[%s7 + $0x20] sm:$0xf]
    %v651 = vld [vmem:[%s7 + $0x24] sm:$0xf]
    %v652 = vld [vmem:[%s7 + $0x28] sm:$0xf]
    %v653 = vld [vmem:[%s7 + $0x2c] sm:$0xf]
    %v654 = vld [vmem:[%s8] sm:$0x1]
    %v656 = vlaneseq
    %v657 = vshrl.u32 %v656, 7
    %v658 = vsub.s32 0, %v657
    %v659 = vrot.slane %v654, %v658
    %v673 = vunpack.c.l.b16 %v642
    %v674 = vunpack.c.l.b16 %v643
    %v675 = vunpack.c.l.b16 %v644
    %v676 = vunpack.c.l.b16 %v645
    %v677 = vunpack.c.l.b16 %v646
    %v678 = vunpack.c.l.b16 %v647
    %v679 = vunpack.c.l.b16 %v648
    %v680 = vunpack.c.l.b16 %v649
    %v681 = vunpack.c.l.b16 %v650
    %v682 = vunpack.c.l.b16 %v651
    %v683 = vunpack.c.l.b16 %v652
    %v684 = vunpack.c.l.b16 %v653
    %v685 = vpack.c.b16 %v674, %v673
    %v686 = vpack.c.b16 %v676, %v675
    %v687 = vpack.c.b16 %v678, %v677
    %v688 = vpack.c.b16 %v680, %v679
    %v689 = vpack.c.b16 %v682, %v681
    %v690 = vpack.c.b16 %v684, %v683
    %697 = vmatprep.subr.bf16.mxu0 0
    %698 = vmatpush1.bf16.msra.mxu0 %v685
    %699 = vmatprep.subr.bf16.mxu0 0
    %700 = vmatpush1.bf16.msra.mxu0 %v686
    %701 = vmatprep.subr.bf16.mxu0 0
    %702 = vmatpush1.bf16.msra.mxu0 %v687
    %703 = vmatprep.subr.bf16.mxu0 0
    %704 = vmatpush1.bf16.msra.mxu0 %v688
    %705 = vmatprep.subr.bf16.mxu0 0
    %706 = vmatpush1.bf16.msra.mxu0 %v689
    %707 = vmatprep.subr.bf16.mxu0 0
    %708 = vmatpush1.bf16.msra.mxu0 %v690
    %709 = vmatprep.subr.bf16.mxu0 0
    %710 = vmatpush1.bf16.msra.mxu0 0
    %711 = vmatprep.subr.bf16.mxu0 0
    %712 = vmatpush1.bf16.msra.mxu0 0
    %713 = vmatprep.subr.bf16.mxu0 0
    %714 = vmatpush1.bf16.msra.mxu0 0
    %715 = vmatprep.subr.bf16.mxu0 0
    %716 = vmatpush1.bf16.msra.mxu0 0
    %717 = vmatprep.subr.bf16.mxu0 0
    %718 = vmatpush1.bf16.msra.mxu0 0
    %719 = vmatprep.subr.bf16.mxu0 0
    %720 = vmatpush1.bf16.msra.mxu0 0
    %721 = vmatprep.subr.bf16.mxu0 0
    %722 = vmatpush1.bf16.msra.mxu0 0
    %723 = vmatprep.subr.bf16.mxu0 0
    %724 = vmatpush1.bf16.msra.mxu0 0
    %725 = vmatprep.subr.bf16.mxu0 0
    %726 = vmatpush1.bf16.msra.mxu0 0
    %727 = vmatprep.subr.bf16.mxu0 0
    %728 = vmatpush1.bf16.msra.mxu0 0
    %729 = vmatprep.mubr.bf16.mxu0 0
    %730 = vmatmul.mubr.bf16.gmra.mrb[0].mxu0 %v354
    %v731 = vpop.f32.mrb[0].mxu0
    %v732 = vadd.f32 %v659, %v731
    %v733 = vpop.f32.mrb[0].mxu0
    %v734 = vpop.f32.mrb[0].mxu0
    %v735 = vadd.f32 %v659, %v734
    %v736 = vpop.f32.mrb[0].mxu0
    %737 = vmatprep.mubr.bf16.mxu0 0
    %738 = vmatmul.mubr.bf16.gmra.mrb[0].mxu0 %v357
    %v739 = vpop.f32.mrb[0].mxu0
    %v740 = vadd.f32 %v659, %v739
    %v741 = vpop.f32.mrb[0].mxu0
    %v742 = vpop.f32.mrb[0].mxu0
    %v743 = vadd.f32 %v659, %v742
    %v744 = vpop.f32.mrb[0].mxu0
    %745 = vmatprep.mubr.bf16.mxu0 0
    %746 = vmatmul.mubr.bf16.gmra.mrb[0].mxu0 %v360
    %v747 = vpop.f32.mrb[0].mxu0
    %v748 = vadd.f32 %v659, %v747
    %v749 = vpop.f32.mrb[0].mxu0
    %v750 = vpop.f32.mrb[0].mxu0
    %v751 = vadd.f32 %v659, %v750
    %v752 = vpop.f32.mrb[0].mxu0
    %753 = vmatprep.mubr.bf16.mxu0 0
    %754 = vmatmul.mubr.bf16.gmra.mrb[0].mxu0 %v363
    %v755 = vpop.f32.mrb[0].mxu0
    %v756 = vadd.f32 %v659, %v755
    %v757 = vpop.f32.mrb[0].mxu0
    %v758 = vpop.f32.mrb[0].mxu0
    %v759 = vadd.f32 %v659, %v758
    %v760 = vpop.f32.mrb[0].mxu0
    %761 = vmatprep.mubr.bf16.mxu0 0
    %762 = vmatmul.mubr.bf16.gmra.mrb[0].mxu0 %v366
    %v763 = vpop.f32.mrb[0].mxu0
    %v764 = vadd.f32 %v659, %v763
    %v765 = vpop.f32.mrb[0].mxu0
    %v766 = vpop.f32.mrb[0].mxu0
    %v767 = vadd.f32 %v659, %v766
    %v768 = vpop.f32.mrb[0].mxu0
    %769 = vmatprep.mubr.bf16.mxu0 0
    %770 = vmatmul.mubr.bf16.gmra.mrb[0].mxu0 %v369
    %v771 = vpop.f32.mrb[0].mxu0
    %v772 = vadd.f32 %v659, %v771
    %v773 = vpop.f32.mrb[0].mxu0
    %v774 = vpop.f32.mrb[0].mxu0
    %v775 = vadd.f32 %v659, %v774
    %v776 = vpop.f32.mrb[0].mxu0
    %777 = vmatprep.mubr.bf16.mxu0 0
    %778 = vmatmul.mubr.bf16.gmra.mrb[0].mxu0 %v372
    %v779 = vpop.f32.mrb[0].mxu0
    %v780 = vadd.f32 %v659, %v779
    %v781 = vpop.f32.mrb[0].mxu0
    %v782 = vpop.f32.mrb[0].mxu0
    %v783 = vadd.f32 %v659, %v782
    %v784 = vpop.f32.mrb[0].mxu0
    %785 = vmatprep.mubr.bf16.mxu0 0
    %786 = vmatmul.mubr.bf16.gmra.mrb[0].mxu0 %v375
    %v787 = vpop.f32.mrb[0].mxu0
    %v788 = vadd.f32 %v659, %v787
    %v789 = vpop.f32.mrb[0].mxu0
    %v790 = vpop.f32.mrb[0].mxu0
    %v791 = vadd.f32 %v659, %v790
    %v792 = vpop.f32.mrb[0].mxu0
    %793 = vdwg.mxu0
    %v794 = vpack.c.bf16 %v735, %v732
    %v795 = vpack.c.bf16 %v743, %v740
    %v796 = vpack.c.bf16 %v751, %v748
    %v797 = vpack.c.bf16 %v759, %v756
    %v798 = vpack.c.bf16 %v767, %v764
    %v799 = vpack.c.bf16 %v775, %v772
    %v800 = vpack.c.bf16 %v783, %v780
    %v801 = vpack.c.bf16 %v791, %v788
    %vm802 = vcmask 97280
    %v804 = vsel %vm802, %v474, 0
    %v807 = vsel %vm802, %v475, 0
    %v810 = vsel %vm802, %v476, 0
    %v813 = vsel %vm802, %v477, 0
    %v816 = vsel %vm802, %v634, 0
    %v819 = vsel %vm802, %v635, 0
    %v822 = vsel %vm802, %v636, 0
    %v825 = vsel %vm802, %v637, 0
    %827 = vmatprep.subr.bf16.mxu0 0
    %828 = vmatpush1.bf16.xpose.msra.mxu0 %v816
    %829 = vmatprep.subr.bf16.mxu0 0
    %830 = vmatpush1.bf16.xpose.msra.mxu0 %v819
    %831 = vmatprep.subr.bf16.mxu0 0
    %832 = vmatpush1.bf16.xpose.msra.mxu0 %v822
    %833 = vmatprep.subr.bf16.mxu0 0
    %834 = vmatpush1.bf16.xpose.msra.mxu0 %v825
    %835 = vmatprep.subr.bf16.mxu0 0
    %836 = vmatpush1.bf16.xpose.msra.mxu0 0
    %837 = vmatprep.subr.bf16.mxu0 0
    %838 = vmatpush1.bf16.xpose.msra.mxu0 0
    %839 = vmatprep.subr.bf16.mxu0 0
    %840 = vmatpush1.bf16.xpose.msra.mxu0 0
    %841 = vmatprep.subr.bf16.mxu0 0
    %842 = vmatpush1.bf16.xpose.msra.mxu0 0
    %843 = vmatprep.subr.bf16.mxu0 0
    %844 = vmatpush1.bf16.xpose.msra.mxu0 0
    %845 = vmatprep.subr.bf16.mxu0 0
    %846 = vmatpush1.bf16.xpose.msra.mxu0 0
    %847 = vmatprep.subr.bf16.mxu0 0
    %848 = vmatpush1.bf16.xpose.msra.mxu0 0
    %849 = vmatprep.subr.bf16.mxu0 0
    %850 = vmatpush1.bf16.xpose.msra.mxu0 0
    %851 = vmatprep.subr.bf16.mxu0 0
    %852 = vmatpush1.bf16.xpose.msra.mxu0 0
    %853 = vmatprep.subr.bf16.mxu0 0
    %854 = vmatpush1.bf16.xpose.msra.mxu0 0
    %855 = vmatprep.subr.bf16.mxu0 0
    %856 = vmatpush1.bf16.xpose.msra.mxu0 0
    %857 = vmatprep.subr.bf16.mxu0 0
    %858 = vmatpush1.bf16.xpose.msra.mxu0 0
    %859 = vmatprep.mubr.bf16.mxu0 0
    %860 = vmatmul.mubr.bf16.gmra.mrb[0].mxu0 %v804
    %v861 = vpop.f32.mrb[0].mxu0
    %v862 = vadd.f32 0.0, %v861
    %v863 = vpop.f32.mrb[0].mxu0
    %v864 = vpop.f32.mrb[0].mxu0
    %v865 = vadd.f32 0.0, %v864
    %v866 = vpop.f32.mrb[0].mxu0
    %867 = vmatprep.mubr.bf16.mxu0 0
    %868 = vmatmul.mubr.bf16.gmra.mrb[0].mxu0 %v807
    %v869 = vpop.f32.mrb[0].mxu0
    %v870 = vadd.f32 0.0, %v869
    %v871 = vpop.f32.mrb[0].mxu0
    %v872 = vpop.f32.mrb[0].mxu0
    %v873 = vadd.f32 0.0, %v872
    %v874 = vpop.f32.mrb[0].mxu0
    %875 = vmatprep.mubr.bf16.mxu0 0
    %876 = vmatmul.mubr.bf16.gmra.mrb[0].mxu0 %v810
    %v877 = vpop.f32.mrb[0].mxu0
    %v878 = vadd.f32 0.0, %v877
    %v879 = vpop.f32.mrb[0].mxu0
    %v880 = vpop.f32.mrb[0].mxu0
    %v881 = vadd.f32 0.0, %v880
    %v882 = vpop.f32.mrb[0].mxu0
    %883 = vmatprep.mubr.bf16.mxu0 0
    %884 = vmatmul.mubr.bf16.gmra.mrb[0].mxu0 %v813
    %v885 = vpop.f32.mrb[0].mxu0
    %v886 = vadd.f32 0.0, %v885
    %v887 = vpop.f32.mrb[0].mxu0
    %v888 = vpop.f32.mrb[0].mxu0
    %v889 = vadd.f32 0.0, %v888
    %v890 = vpop.f32.mrb[0].mxu0
    %891 = vdwg.mxu0
    %vm892 = vcmask 523264
    %v893 = vsel %vm892, %v862, -inf
    %894 = vmax.xlane.f32.xlu0 %v893
    %v895 = vpop.xlane.xlu0 %894
    %v896 = vsel %vm892, %v865, -inf
    %897 = vmax.xlane.f32.xlu0 %v896
    %v898 = vpop.xlane.xlu0 %897
    %v899 = vsel %vm892, %v870, -inf
    %900 = vmax.xlane.f32.xlu0 %v899
    %v901 = vpop.xlane.xlu0 %900
    %v902 = vsel %vm892, %v873, -inf
    %903 = vmax.xlane.f32.xlu0 %v902
    %v904 = vpop.xlane.xlu0 %903
    %v905 = vsel %vm892, %v878, -inf
    %906 = vmax.xlane.f32.xlu0 %v905
    %v907 = vpop.xlane.xlu0 %906
    %v908 = vsel %vm892, %v881, -inf
    %909 = vmax.xlane.f32.xlu0 %v908
    %v910 = vpop.xlane.xlu0 %909
    %v911 = vsel %vm892, %v886, -inf
    %912 = vmax.xlane.f32.xlu0 %v911
    %v913 = vpop.xlane.xlu0 %912
    %v914 = vsel %vm892, %v889, -inf
    %915 = vmax.xlane.f32.xlu0 %v914
    %v916 = vpop.xlane.xlu0 %915
    %v917 = vsub.f32 %v862, %v895
    %v918 = vsub.f32 %v865, %v898
    %v919 = vsub.f32 %v870, %v901
    %v920 = vsub.f32 %v873, %v904
    %v921 = vsub.f32 %v878, %v907
    %v922 = vsub.f32 %v881, %v910
    %v923 = vsub.f32 %v886, %v913
    %v924 = vsub.f32 %v889, %v916
    %v925 = vmul.f32 %v917, 1.442695
    %v926 = vpow.pop %v925
    %v927 = vmul.f32 %v918, 1.442695
    %v928 = vpow.pop %v927
    %v929 = vmul.f32 %v919, 1.442695
    %v930 = vpow.pop %v929
    %v931 = vmul.f32 %v920, 1.442695
    %v932 = vpow.pop %v931
    %v933 = vmul.f32 %v921, 1.442695
    %v934 = vpow.pop %v933
    %v935 = vmul.f32 %v922, 1.442695
    %v936 = vpow.pop %v935
    %v937 = vmul.f32 %v923, 1.442695
    %v938 = vpow.pop %v937
    %v939 = vmul.f32 %v924, 1.442695
    %v940 = vpow.pop %v939
    %v941 = vsel %vm892, %v926, 0.0
    %942 = vadd.xlane.f32.xlu0 %v941
    %v943 = vpop.xlane.xlu0 %942
    %v944 = vsel %vm892, %v928, 0.0
    %945 = vadd.xlane.f32.xlu0 %v944
    %v946 = vpop.xlane.xlu0 %945
    %v947 = vsel %vm892, %v930, 0.0
    %948 = vadd.xlane.f32.xlu0 %v947
    %v949 = vpop.xlane.xlu0 %948
    %v950 = vsel %vm892, %v932, 0.0
    %951 = vadd.xlane.f32.xlu0 %v950
    %v952 = vpop.xlane.xlu0 %951
    %v953 = vsel %vm892, %v934, 0.0
    %954 = vadd.xlane.f32.xlu0 %v953
    %v955 = vpop.xlane.xlu0 %954
    %v956 = vsel %vm892, %v936, 0.0
    %957 = vadd.xlane.f32.xlu0 %v956
    %v958 = vpop.xlane.xlu0 %957
    %v959 = vsel %vm892, %v938, 0.0
    %960 = vadd.xlane.f32.xlu0 %v959
    %v961 = vpop.xlane.xlu0 %960
    %v962 = vsel %vm892, %v940, 0.0
    %963 = vadd.xlane.f32.xlu0 %v962
    %v964 = vpop.xlane.xlu0 %963
    %v965 = vrcp.pop %v943
    %v966 = vrcp.pop %v946
    %v967 = vrcp.pop %v949
    %v968 = vrcp.pop %v952
    %v969 = vrcp.pop %v955
    %v970 = vrcp.pop %v958
    %v971 = vrcp.pop %v961
    %v972 = vrcp.pop %v964
    %v973 = vmul.f32 %v926, %v965
    %v974 = vmul.f32 %v928, %v966
    %v975 = vmul.f32 %v930, %v967
    %v976 = vmul.f32 %v932, %v968
    %v977 = vmul.f32 %v934, %v969
    %v978 = vmul.f32 %v936, %v970
    %v979 = vmul.f32 %v938, %v971
    %v980 = vmul.f32 %v940, %v972
    %v981 = vpack.c.bf16 %v974, %v973
    %v982 = vpack.c.bf16 %v976, %v975
    %v983 = vpack.c.bf16 %v978, %v977
    %v984 = vpack.c.bf16 %v980, %v979
    %v986 = vsel %vm892, %v981, 0
    %v989 = vsel %vm892, %v982, 0
    %v992 = vsel %vm892, %v983, 0
    %v995 = vsel %vm892, %v984, 0
    %997 = vmatprep.subr.bf16.mxu0 0
    %998 = vmatpush1.bf16.msra.mxu0 %v794
    %999 = vmatprep.subr.bf16.mxu0 0
    %1000 = vmatpush1.bf16.msra.mxu0 %v795
    %1001 = vmatprep.subr.bf16.mxu0 0
    %1002 = vmatpush1.bf16.msra.mxu0 %v796
    %1003 = vmatprep.subr.bf16.mxu0 0
    %1004 = vmatpush1.bf16.msra.mxu0 %v797
    %1005 = vmatprep.subr.bf16.mxu0 0
    %1006 = vmatpush1.bf16.msra.mxu0 0
    %1007 = vmatprep.subr.bf16.mxu0 0
    %1008 = vmatpush1.bf16.msra.mxu0 0
    %1009 = vmatprep.subr.bf16.mxu0 0
    %1010 = vmatpush1.bf16.msra.mxu0 0
    %1011 = vmatprep.subr.bf16.mxu0 0
    %1012 = vmatpush1.bf16.msra.mxu0 0
    %1013 = vmatprep.subr.bf16.mxu0 0
    %1014 = vmatpush1.bf16.msra.mxu0 0
    %1015 = vmatprep.subr.bf16.mxu0 0
    %1016 = vmatpush1.bf16.msra.mxu0 0
    %1017 = vmatprep.subr.bf16.mxu0 0
    %1018 = vmatpush1.bf16.msra.mxu0 0
    %1019 = vmatprep.subr.bf16.mxu0 0
    %1020 = vmatpush1.bf16.msra.mxu0 0
    %1021 = vmatprep.subr.bf16.mxu0 0
    %1022 = vmatpush1.bf16.msra.mxu0 0
    %1023 = vmatprep.subr.bf16.mxu0 0
    %1024 = vmatpush1.bf16.msra.mxu0 0
    %1025 = vmatprep.subr.bf16.mxu0 0
    %1026 = vmatpush1.bf16.msra.mxu0 0
    %1027 = vmatprep.subr.bf16.mxu0 0
    %1028 = vmatpush1.bf16.msra.mxu0 0
    %1029 = vmatprep.mubr.bf16.mxu0 0
    %1030 = vmatmul.mubr.bf16.gmra.mrb[0].mxu0 %v986
    %v1031 = vpop.f32.mrb[0].mxu0
    %v1032 = vadd.f32 0.0, %v1031
    %v1033 = vpop.f32.mrb[0].mxu0
    %v1034 = vpop.f32.mrb[0].mxu0
    %v1035 = vadd.f32 0.0, %v1034
    %v1036 = vpop.f32.mrb[0].mxu0
    %1037 = vmatprep.mubr.bf16.mxu0 0
    %1038 = vmatmul.mubr.bf16.gmra.mrb[0].mxu0 %v989
    %v1039 = vpop.f32.mrb[0].mxu0
    %v1040 = vadd.f32 0.0, %v1039
    %v1041 = vpop.f32.mrb[0].mxu0
    %v1042 = vpop.f32.mrb[0].mxu0
    %v1043 = vadd.f32 0.0, %v1042
    %v1044 = vpop.f32.mrb[0].mxu0
    %1045 = vmatprep.mubr.bf16.mxu0 0
    %1046 = vmatmul.mubr.bf16.gmra.mrb[0].mxu0 %v992
    %v1047 = vpop.f32.mrb[0].mxu0
    %v1048 = vadd.f32 0.0, %v1047
    %v1049 = vpop.f32.mrb[0].mxu0
    %v1050 = vpop.f32.mrb[0].mxu0
    %v1051 = vadd.f32 0.0, %v1050
    %v1052 = vpop.f32.mrb[0].mxu0
    %1053 = vmatprep.mubr.bf16.mxu0 0
    %1054 = vmatmul.mubr.bf16.gmra.mrb[0].mxu0 %v995
    %v1055 = vpop.f32.mrb[0].mxu0
    %v1056 = vadd.f32 0.0, %v1055
    %v1057 = vpop.f32.mrb[0].mxu0
    %v1058 = vpop.f32.mrb[0].mxu0
    %v1059 = vadd.f32 0.0, %v1058
    %v1060 = vpop.f32.mrb[0].mxu0
    %1061 = vdwg.mxu0
    %1066 = vrot.lane.b32.xlu0 %v474, 116
    %v1067 = vpop.permute.xlu0 %1066
    %1068 = vrot.lane.b32.xlu0 %v475, 116
    %v1069 = vpop.permute.xlu0 %1068
    %1070 = vrot.lane.b32.xlu0 %v476, 116
    %v1071 = vpop.permute.xlu0 %1070
    %1072 = vrot.lane.b32.xlu0 %v477, 116
    %v1073 = vpop.permute.xlu0 %1072
    %1078 = vrot.lane.b32.xlu0 %v634, 116
    %v1079 = vpop.permute.xlu0 %1078
    %1080 = vrot.lane.b32.xlu0 %v635, 116
    %v1081 = vpop.permute.xlu0 %1080
    %1082 = vrot.lane.b32.xlu0 %v636, 116
    %v1083 = vpop.permute.xlu0 %1082
    %1084 = vrot.lane.b32.xlu0 %v637, 116
    %v1085 = vpop.permute.xlu0 %1084
    %v1087 = vsel %vm802, %v1067, 0
    %v1090 = vsel %vm802, %v1069, 0
    %v1093 = vsel %vm802, %v1071, 0
    %v1096 = vsel %vm802, %v1073, 0
    %v1099 = vsel %vm802, %v1079, 0
    %v1102 = vsel %vm802, %v1081, 0
    %v1105 = vsel %vm802, %v1083, 0
    %v1108 = vsel %vm802, %v1085, 0
    %1110 = vmatprep.subr.bf16.mxu0 0
    %1111 = vmatpush1.bf16.xpose.msra.mxu0 %v1099
    %1112 = vmatprep.subr.bf16.mxu0 0
    %1113 = vmatpush1.bf16.xpose.msra.mxu0 %v1102
    %1114 = vmatprep.subr.bf16.mxu0 0
    %1115 = vmatpush1.bf16.xpose.msra.mxu0 %v1105
    %1116 = vmatprep.subr.bf16.mxu0 0
    %1117 = vmatpush1.bf16.xpose.msra.mxu0 %v1108
    %1118 = vmatprep.subr.bf16.mxu0 0
    %1119 = vmatpush1.bf16.xpose.msra.mxu0 0
    %1120 = vmatprep.subr.bf16.mxu0 0
    %1121 = vmatpush1.bf16.xpose.msra.mxu0 0
    %1122 = vmatprep.subr.bf16.mxu0 0
    %1123 = vmatpush1.bf16.xpose.msra.mxu0 0
    %1124 = vmatprep.subr.bf16.mxu0 0
    %1125 = vmatpush1.bf16.xpose.msra.mxu0 0
    %1126 = vmatprep.subr.bf16.mxu0 0
    %1127 = vmatpush1.bf16.xpose.msra.mxu0 0
    %1128 = vmatprep.subr.bf16.mxu0 0
    %1129 = vmatpush1.bf16.xpose.msra.mxu0 0
    %1130 = vmatprep.subr.bf16.mxu0 0
    %1131 = vmatpush1.bf16.xpose.msra.mxu0 0
    %1132 = vmatprep.subr.bf16.mxu0 0
    %1133 = vmatpush1.bf16.xpose.msra.mxu0 0
    %1134 = vmatprep.subr.bf16.mxu0 0
    %1135 = vmatpush1.bf16.xpose.msra.mxu0 0
    %1136 = vmatprep.subr.bf16.mxu0 0
    %1137 = vmatpush1.bf16.xpose.msra.mxu0 0
    %1138 = vmatprep.subr.bf16.mxu0 0
    %1139 = vmatpush1.bf16.xpose.msra.mxu0 0
    %1140 = vmatprep.subr.bf16.mxu0 0
    %1141 = vmatpush1.bf16.xpose.msra.mxu0 0
    %1142 = vmatprep.mubr.bf16.mxu0 0
    %1143 = vmatmul.mubr.bf16.gmra.mrb[0].mxu0 %v1087
    %v1144 = vpop.f32.mrb[0].mxu0
    %v1145 = vadd.f32 0.0, %v1144
    %v1146 = vpop.f32.mrb[0].mxu0
    %v1147 = vpop.f32.mrb[0].mxu0
    %v1148 = vadd.f32 0.0, %v1147
    %v1149 = vpop.f32.mrb[0].mxu0
    %1150 = vmatprep.mubr.bf16.mxu0 0
    %1151 = vmatmul.mubr.bf16.gmra.mrb[0].mxu0 %v1090
    %v1152 = vpop.f32.mrb[0].mxu0
    %v1153 = vadd.f32 0.0, %v1152
    %v1154 = vpop.f32.mrb[0].mxu0
    %v1155 = vpop.f32.mrb[0].mxu0
    %v1156 = vadd.f32 0.0, %v1155
    %v1157 = vpop.f32.mrb[0].mxu0
    %1158 = vmatprep.mubr.bf16.mxu0 0
    %1159 = vmatmul.mubr.bf16.gmra.mrb[0].mxu0 %v1093
    %v1160 = vpop.f32.mrb[0].mxu0
    %v1161 = vadd.f32 0.0, %v1160
    %v1162 = vpop.f32.mrb[0].mxu0
    %v1163 = vpop.f32.mrb[0].mxu0
    %v1164 = vadd.f32 0.0, %v1163
    %v1165 = vpop.f32.mrb[0].mxu0
    %1166 = vmatprep.mubr.bf16.mxu0 0
    %1167 = vmatmul.mubr.bf16.gmra.mrb[0].mxu0 %v1096
    %v1168 = vpop.f32.mrb[0].mxu0
    %v1169 = vadd.f32 0.0, %v1168
    %v1170 = vpop.f32.mrb[0].mxu0
    %v1171 = vpop.f32.mrb[0].mxu0
    %v1172 = vadd.f32 0.0, %v1171
    %v1173 = vpop.f32.mrb[0].mxu0
    %1174 = vdwg.mxu0
    %v1175 = vsel %vm892, %v1145, -inf
    %1176 = vmax.xlane.f32.xlu0 %v1175
    %v1177 = vpop.xlane.xlu0 %1176
    %v1178 = vsel %vm892, %v1148, -inf
    %1179 = vmax.xlane.f32.xlu0 %v1178
    %v1180 = vpop.xlane.xlu0 %1179
    %v1181 = vsel %vm892, %v1153, -inf
    %1182 = vmax.xlane.f32.xlu0 %v1181
    %v1183 = vpop.xlane.xlu0 %1182
    %v1184 = vsel %vm892, %v1156, -inf
    %1185 = vmax.xlane.f32.xlu0 %v1184
    %v1186 = vpop.xlane.xlu0 %1185
    %v1187 = vsel %vm892, %v1161, -inf
    %1188 = vmax.xlane.f32.xlu0 %v1187
    %v1189 = vpop.xlane.xlu0 %1188
    %v1190 = vsel %vm892, %v1164, -inf
    %1191 = vmax.xlane.f32.xlu0 %v1190
    %v1192 = vpop.xlane.xlu0 %1191
    %v1193 = vsel %vm892, %v1169, -inf
    %1194 = vmax.xlane.f32.xlu0 %v1193
    %v1195 = vpop.xlane.xlu0 %1194
    %v1196 = vsel %vm892, %v1172, -inf
    %1197 = vmax.xlane.f32.xlu0 %v1196
    %v1198 = vpop.xlane.xlu0 %1197
    %v1199 = vsub.f32 %v1145, %v1177
    %v1200 = vsub.f32 %v1148, %v1180
    %v1201 = vsub.f32 %v1153, %v1183
    %v1202 = vsub.f32 %v1156, %v1186
    %v1203 = vsub.f32 %v1161, %v1189
    %v1204 = vsub.f32 %v1164, %v1192
    %v1205 = vsub.f32 %v1169, %v1195
    %v1206 = vsub.f32 %v1172, %v1198
    %v1207 = vmul.f32 %v1199, 1.442695
    %v1208 = vpow.pop %v1207
    %v1209 = vmul.f32 %v1200, 1.442695
    %v1210 = vpow.pop %v1209
    %v1211 = vmul.f32 %v1201, 1.442695
    %v1212 = vpow.pop %v1211
    %v1213 = vmul.f32 %v1202, 1.442695
    %v1214 = vpow.pop %v1213
    %v1215 = vmul.f32 %v1203, 1.442695
    %v1216 = vpow.pop %v1215
    %v1217 = vmul.f32 %v1204, 1.442695
    %v1218 = vpow.pop %v1217
    %v1219 = vmul.f32 %v1205, 1.442695
    %v1220 = vpow.pop %v1219
    %v1221 = vmul.f32 %v1206, 1.442695
    %v1222 = vpow.pop %v1221
    %v1223 = vsel %vm892, %v1208, 0.0
    %1224 = vadd.xlane.f32.xlu0 %v1223
    %v1225 = vpop.xlane.xlu0 %1224
    %v1226 = vsel %vm892, %v1210, 0.0
    %1227 = vadd.xlane.f32.xlu0 %v1226
    %v1228 = vpop.xlane.xlu0 %1227
    %v1229 = vsel %vm892, %v1212, 0.0
    %1230 = vadd.xlane.f32.xlu0 %v1229
    %v1231 = vpop.xlane.xlu0 %1230
    %v1232 = vsel %vm892, %v1214, 0.0
    %1233 = vadd.xlane.f32.xlu0 %v1232
    %v1234 = vpop.xlane.xlu0 %1233
    %v1235 = vsel %vm892, %v1216, 0.0
    %1236 = vadd.xlane.f32.xlu0 %v1235
    %v1237 = vpop.xlane.xlu0 %1236
    %v1238 = vsel %vm892, %v1218, 0.0
    %1239 = vadd.xlane.f32.xlu0 %v1238
    %v1240 = vpop.xlane.xlu0 %1239
    %v1241 = vsel %vm892, %v1220, 0.0
    %1242 = vadd.xlane.f32.xlu0 %v1241
    %v1243 = vpop.xlane.xlu0 %1242
    %v1244 = vsel %vm892, %v1222, 0.0
    %1245 = vadd.xlane.f32.xlu0 %v1244
    %v1246 = vpop.xlane.xlu0 %1245
    %v1247 = vrcp.pop %v1225
    %v1248 = vrcp.pop %v1228
    %v1249 = vrcp.pop %v1231
    %v1250 = vrcp.pop %v1234
    %v1251 = vrcp.pop %v1237
    %v1252 = vrcp.pop %v1240
    %v1253 = vrcp.pop %v1243
    %v1254 = vrcp.pop %v1246
    %v1255 = vmul.f32 %v1208, %v1247
    %v1256 = vmul.f32 %v1210, %v1248
    %v1257 = vmul.f32 %v1212, %v1249
    %v1258 = vmul.f32 %v1214, %v1250
    %v1259 = vmul.f32 %v1216, %v1251
    %v1260 = vmul.f32 %v1218, %v1252
    %v1261 = vmul.f32 %v1220, %v1253
    %v1262 = vmul.f32 %v1222, %v1254
    %v1263 = vpack.c.bf16 %v1256, %v1255
    %v1264 = vpack.c.bf16 %v1258, %v1257
    %v1265 = vpack.c.bf16 %v1260, %v1259
    %v1266 = vpack.c.bf16 %v1262, %v1261
    %1271 = vrot.lane.b32.xlu0 %v794, 116
    %v1272 = vpop.permute.xlu0 %1271
    %1273 = vrot.lane.b32.xlu0 %v795, 116
    %v1274 = vpop.permute.xlu0 %1273
    %1275 = vrot.lane.b32.xlu0 %v796, 116
    %v1276 = vpop.permute.xlu0 %1275
    %1277 = vrot.lane.b32.xlu0 %v797, 116
    %v1278 = vpop.permute.xlu0 %1277
    %v1284 = vsel %vm892, %v1263, 0
    %v1287 = vsel %vm892, %v1264, 0
    %v1290 = vsel %vm892, %v1265, 0
    %v1293 = vsel %vm892, %v1266, 0
    %1295 = vmatprep.subr.bf16.mxu0 0
    %1296 = vmatpush1.bf16.msra.mxu0 %v1272
    %1297 = vmatprep.subr.bf16.mxu0 0
    %1298 = vmatpush1.bf16.msra.mxu0 %v1274
    %1299 = vmatprep.subr.bf16.mxu0 0
    %1300 = vmatpush1.bf16.msra.mxu0 %v1276
    %1301 = vmatprep.subr.bf16.mxu0 0
    %1302 = vmatpush1.bf16.msra.mxu0 %v1278
    %1303 = vmatprep.subr.bf16.mxu0 0
    %1304 = vmatpush1.bf16.msra.mxu0 0
    %1305 = vmatprep.subr.bf16.mxu0 0
    %1306 = vmatpush1.bf16.msra.mxu0 0
    %1307 = vmatprep.subr.bf16.mxu0 0
    %1308 = vmatpush1.bf16.msra.mxu0 0
    %1309 = vmatprep.subr.bf16.mxu0 0
    %1310 = vmatpush1.bf16.msra.mxu0 0
    %1311 = vmatprep.subr.bf16.mxu0 0
    %1312 = vmatpush1.bf16.msra.mxu0 0
    %1313 = vmatprep.subr.bf16.mxu0 0
    %1314 = vmatpush1.bf16.msra.mxu0 0
    %1315 = vmatprep.subr.bf16.mxu0 0
    %1316 = vmatpush1.bf16.msra.mxu0 0
    %1317 = vmatprep.subr.bf16.mxu0 0
    %1318 = vmatpush1.bf16.msra.mxu0 0
    %1319 = vmatprep.subr.bf16.mxu0 0
    %1320 = vmatpush1.bf16.msra.mxu0 0
    %1321 = vmatprep.subr.bf16.mxu0 0
    %1322 = vmatpush1.bf16.msra.mxu0 0
    %1323 = vmatprep.subr.bf16.mxu0 0
    %1324 = vmatpush1.bf16.msra.mxu0 0
    %1325 = vmatprep.subr.bf16.mxu0 0
    %1326 = vmatpush1.bf16.msra.mxu0 0
    %1327 = vmatprep.mubr.bf16.mxu0 0
    %1328 = vmatmul.mubr.bf16.gmra.mrb[0].mxu0 %v1284
    %v1329 = vpop.f32.mrb[0].mxu0
    %v1330 = vadd.f32 0.0, %v1329
    %v1331 = vpop.f32.mrb[0].mxu0
    %v1332 = vpop.f32.mrb[0].mxu0
    %v1333 = vadd.f32 0.0, %v1332
    %v1334 = vpop.f32.mrb[0].mxu0
    %1335 = vmatprep.mubr.bf16.mxu0 0
    %1336 = vmatmul.mubr.bf16.gmra.mrb[0].mxu0 %v1287
    %v1337 = vpop.f32.mrb[0].mxu0
    %v1338 = vadd.f32 0.0, %v1337
    %v1339 = vpop.f32.mrb[0].mxu0
    %v1340 = vpop.f32.mrb[0].mxu0
    %v1341 = vadd.f32 0.0, %v1340
    %v1342 = vpop.f32.mrb[0].mxu0
    %1343 = vmatprep.mubr.bf16.mxu0 0
    %1344 = vmatmul.mubr.bf16.gmra.mrb[0].mxu0 %v1290
    %v1345 = vpop.f32.mrb[0].mxu0
    %v1346 = vadd.f32 0.0, %v1345
    %v1347 = vpop.f32.mrb[0].mxu0
    %v1348 = vpop.f32.mrb[0].mxu0
    %v1349 = vadd.f32 0.0, %v1348
    %v1350 = vpop.f32.mrb[0].mxu0
    %1351 = vmatprep.mubr.bf16.mxu0 0
    %1352 = vmatmul.mubr.bf16.gmra.mrb[0].mxu0 %v1293
    %v1353 = vpop.f32.mrb[0].mxu0
    %v1354 = vadd.f32 0.0, %v1353
    %v1355 = vpop.f32.mrb[0].mxu0
    %v1356 = vpop.f32.mrb[0].mxu0
    %v1357 = vadd.f32 0.0, %v1356
    %v1358 = vpop.f32.mrb[0].mxu0
    %1359 = vdwg.mxu0
    %1360 = vrot.lane.b32.xlu0 %v474, 104
    %v1361 = vpop.permute.xlu0 %1360
    %1362 = vrot.lane.b32.xlu0 %v475, 104
    %v1363 = vpop.permute.xlu0 %1362
    %1364 = vrot.lane.b32.xlu0 %v476, 104
    %v1365 = vpop.permute.xlu0 %1364
    %1366 = vrot.lane.b32.xlu0 %v477, 104
    %v1367 = vpop.permute.xlu0 %1366
    %1368 = vrot.lane.b32.xlu0 %v634, 104
    %v1369 = vpop.permute.xlu0 %1368
    %1370 = vrot.lane.b32.xlu0 %v635, 104
    %v1371 = vpop.permute.xlu0 %1370
    %1372 = vrot.lane.b32.xlu0 %v636, 104
    %v1373 = vpop.permute.xlu0 %1372
    %1374 = vrot.lane.b32.xlu0 %v637, 104
    %v1375 = vpop.permute.xlu0 %1374
    %v1377 = vsel %vm802, %v1361, 0
    %v1380 = vsel %vm802, %v1363, 0
    %v1383 = vsel %vm802, %v1365, 0
    %v1386 = vsel %vm802, %v1367, 0
    %v1389 = vsel %vm802, %v1369, 0
    %v1392 = vsel %vm802, %v1371, 0
    %v1395 = vsel %vm802, %v1373, 0
    %v1398 = vsel %vm802, %v1375, 0
    %1400 = vmatprep.subr.bf16.mxu0 0
    %1401 = vmatpush1.bf16.xpose.msra.mxu0 %v1389
    %1402 = vmatprep.subr.bf16.mxu0 0
    %1403 = vmatpush1.bf16.xpose.msra.mxu0 %v1392
    %1404 = vmatprep.subr.bf16.mxu0 0
    %1405 = vmatpush1.bf16.xpose.msra.mxu0 %v1395
    %1406 = vmatprep.subr.bf16.mxu0 0
    %1407 = vmatpush1.bf16.xpose.msra.mxu0 %v1398
    %1408 = vmatprep.subr.bf16.mxu0 0
    %1409 = vmatpush1.bf16.xpose.msra.mxu0 0
    %1410 = vmatprep.subr.bf16.mxu0 0
    %1411 = vmatpush1.bf16.xpose.msra.mxu0 0
    %1412 = vmatprep.subr.bf16.mxu0 0
    %1413 = vmatpush1.bf16.xpose.msra.mxu0 0
    %1414 = vmatprep.subr.bf16.mxu0 0
    %1415 = vmatpush1.bf16.xpose.msra.mxu0 0
    %1416 = vmatprep.subr.bf16.mxu0 0
    %1417 = vmatpush1.bf16.xpose.msra.mxu0 0
    %1418 = vmatprep.subr.bf16.mxu0 0
    %1419 = vmatpush1.bf16.xpose.msra.mxu0 0
    %1420 = vmatprep.subr.bf16.mxu0 0
    %1421 = vmatpush1.bf16.xpose.msra.mxu0 0
    %1422 = vmatprep.subr.bf16.mxu0 0
    %1423 = vmatpush1.bf16.xpose.msra.mxu0 0
    %1424 = vmatprep.subr.bf16.mxu0 0
    %1425 = vmatpush1.bf16.xpose.msra.mxu0 0
    %1426 = vmatprep.subr.bf16.mxu0 0
    %1427 = vmatpush1.bf16.xpose.msra.mxu0 0
    %1428 = vmatprep.subr.bf16.mxu0 0
    %1429 = vmatpush1.bf16.xpose.msra.mxu0 0
    %1430 = vmatprep.subr.bf16.mxu0 0
    %1431 = vmatpush1.bf16.xpose.msra.mxu0 0
    %1432 = vmatprep.mubr.bf16.mxu0 0
    %1433 = vmatmul.mubr.bf16.gmra.mrb[0].mxu0 %v1377
    %v1434 = vpop.f32.mrb[0].mxu0
    %v1435 = vadd.f32 0.0, %v1434
    %v1436 = vpop.f32.mrb[0].mxu0
    %v1437 = vpop.f32.mrb[0].mxu0
    %v1438 = vadd.f32 0.0, %v1437
    %v1439 = vpop.f32.mrb[0].mxu0
    %1440 = vmatprep.mubr.bf16.mxu0 0
    %1441 = vmatmul.mubr.bf16.gmra.mrb[0].mxu0 %v1380
    %v1442 = vpop.f32.mrb[0].mxu0
    %v1443 = vadd.f32 0.0, %v1442
    %v1444 = vpop.f32.mrb[0].mxu0
    %v1445 = vpop.f32.mrb[0].mxu0
    %v1446 = vadd.f32 0.0, %v1445
    %v1447 = vpop.f32.mrb[0].mxu0
    %1448 = vmatprep.mubr.bf16.mxu0 0
    %1449 = vmatmul.mubr.bf16.gmra.mrb[0].mxu0 %v1383
    %v1450 = vpop.f32.mrb[0].mxu0
    %v1451 = vadd.f32 0.0, %v1450
    %v1452 = vpop.f32.mrb[0].mxu0
    %v1453 = vpop.f32.mrb[0].mxu0
    %v1454 = vadd.f32 0.0, %v1453
    %v1455 = vpop.f32.mrb[0].mxu0
    %1456 = vmatprep.mubr.bf16.mxu0 0
    %1457 = vmatmul.mubr.bf16.gmra.mrb[0].mxu0 %v1386
    %v1458 = vpop.f32.mrb[0].mxu0
    %v1459 = vadd.f32 0.0, %v1458
    %v1460 = vpop.f32.mrb[0].mxu0
    %v1461 = vpop.f32.mrb[0].mxu0
    %v1462 = vadd.f32 0.0, %v1461
    %v1463 = vpop.f32.mrb[0].mxu0
    %1464 = vdwg.mxu0
    %v1465 = vsel %vm892, %v1435, -inf
    %1466 = vmax.xlane.f32.xlu0 %v1465
    %v1467 = vpop.xlane.xlu0 %1466
    %v1468 = vsel %vm892, %v1438, -inf
    %1469 = vmax.xlane.f32.xlu0 %v1468
    %v1470 = vpop.xlane.xlu0 %1469
    %v1471 = vsel %vm892, %v1443, -inf
    %1472 = vmax.xlane.f32.xlu0 %v1471
    %v1473 = vpop.xlane.xlu0 %1472
    %v1474 = vsel %vm892, %v1446, -inf
    %1475 = vmax.xlane.f32.xlu0 %v1474
    %v1476 = vpop.xlane.xlu0 %1475
    %v1477 = vsel %vm892, %v1451, -inf
    %1478 = vmax.xlane.f32.xlu0 %v1477
    %v1479 = vpop.xlane.xlu0 %1478
    %v1480 = vsel %vm892, %v1454, -inf
    %1481 = vmax.xlane.f32.xlu0 %v1480
    %v1482 = vpop.xlane.xlu0 %1481
    %v1483 = vsel %vm892, %v1459, -inf
    %1484 = vmax.xlane.f32.xlu0 %v1483
    %v1485 = vpop.xlane.xlu0 %1484
    %v1486 = vsel %vm892, %v1462, -inf
    %1487 = vmax.xlane.f32.xlu0 %v1486
    %v1488 = vpop.xlane.xlu0 %1487
    %v1489 = vsub.f32 %v1435, %v1467
    %v1490 = vsub.f32 %v1438, %v1470
    %v1491 = vsub.f32 %v1443, %v1473
    %v1492 = vsub.f32 %v1446, %v1476
    %v1493 = vsub.f32 %v1451, %v1479
    %v1494 = vsub.f32 %v1454, %v1482
    %v1495 = vsub.f32 %v1459, %v1485
    %v1496 = vsub.f32 %v1462, %v1488
    %v1497 = vmul.f32 %v1489, 1.442695
    %v1498 = vpow.pop %v1497
    %v1499 = vmul.f32 %v1490, 1.442695
    %v1500 = vpow.pop %v1499
    %v1501 = vmul.f32 %v1491, 1.442695
    %v1502 = vpow.pop %v1501
    %v1503 = vmul.f32 %v1492, 1.442695
    %v1504 = vpow.pop %v1503
    %v1505 = vmul.f32 %v1493, 1.442695
    %v1506 = vpow.pop %v1505
    %v1507 = vmul.f32 %v1494, 1.442695
    %v1508 = vpow.pop %v1507
    %v1509 = vmul.f32 %v1495, 1.442695
    %v1510 = vpow.pop %v1509
    %v1511 = vmul.f32 %v1496, 1.442695
    %v1512 = vpow.pop %v1511
    %v1513 = vsel %vm892, %v1498, 0.0
    %1514 = vadd.xlane.f32.xlu0 %v1513
    %v1515 = vpop.xlane.xlu0 %1514
    %v1516 = vsel %vm892, %v1500, 0.0
    %1517 = vadd.xlane.f32.xlu0 %v1516
    %v1518 = vpop.xlane.xlu0 %1517
    %v1519 = vsel %vm892, %v1502, 0.0
    %1520 = vadd.xlane.f32.xlu0 %v1519
    %v1521 = vpop.xlane.xlu0 %1520
    %v1522 = vsel %vm892, %v1504, 0.0
    %1523 = vadd.xlane.f32.xlu0 %v1522
    %v1524 = vpop.xlane.xlu0 %1523
    %v1525 = vsel %vm892, %v1506, 0.0
    %1526 = vadd.xlane.f32.xlu0 %v1525
    %v1527 = vpop.xlane.xlu0 %1526
    %v1528 = vsel %vm892, %v1508, 0.0
    %1529 = vadd.xlane.f32.xlu0 %v1528
    %v1530 = vpop.xlane.xlu0 %1529
    %v1531 = vsel %vm892, %v1510, 0.0
    %1532 = vadd.xlane.f32.xlu0 %v1531
    %v1533 = vpop.xlane.xlu0 %1532
    %v1534 = vsel %vm892, %v1512, 0.0
    %1535 = vadd.xlane.f32.xlu0 %v1534
    %v1536 = vpop.xlane.xlu0 %1535
    %v1537 = vrcp.pop %v1515
    %v1538 = vrcp.pop %v1518
    %v1539 = vrcp.pop %v1521
    %v1540 = vrcp.pop %v1524
    %v1541 = vrcp.pop %v1527
    %v1542 = vrcp.pop %v1530
    %v1543 = vrcp.pop %v1533
    %v1544 = vrcp.pop %v1536
    %v1545 = vmul.f32 %v1498, %v1537
    %v1546 = vmul.f32 %v1500, %v1538
    %v1547 = vmul.f32 %v1502, %v1539
    %v1548 = vmul.f32 %v1504, %v1540
    %v1549 = vmul.f32 %v1506, %v1541
    %v1550 = vmul.f32 %v1508, %v1542
    %v1551 = vmul.f32 %v1510, %v1543
    %v1552 = vmul.f32 %v1512, %v1544
    %v1553 = vpack.c.bf16 %v1546, %v1545
    %v1554 = vpack.c.bf16 %v1548, %v1547
    %v1555 = vpack.c.bf16 %v1550, %v1549
    %v1556 = vpack.c.bf16 %v1552, %v1551
    %1557 = vrot.lane.b32.xlu0 %v794, 104
    %v1558 = vpop.permute.xlu0 %1557
    %1559 = vrot.lane.b32.xlu0 %v795, 104
    %v1560 = vpop.permute.xlu0 %1559
    %1561 = vrot.lane.b32.xlu0 %v796, 104
    %v1562 = vpop.permute.xlu0 %1561
    %1563 = vrot.lane.b32.xlu0 %v797, 104
    %v1564 = vpop.permute.xlu0 %1563
    %v1570 = vsel %vm892, %v1553, 0
    %v1573 = vsel %vm892, %v1554, 0
    %v1576 = vsel %vm892, %v1555, 0
    %v1579 = vsel %vm892, %v1556, 0
    %1581 = vmatprep.subr.bf16.mxu0 0
    %1582 = vmatpush1.bf16.msra.mxu0 %v1558
    %1583 = vmatprep.subr.bf16.mxu0 0
    %1584 = vmatpush1.bf16.msra.mxu0 %v1560
    %1585 = vmatprep.subr.bf16.mxu0 0
    %1586 = vmatpush1.bf16.msra.mxu0 %v1562
    %1587 = vmatprep.subr.bf16.mxu0 0
    %1588 = vmatpush1.bf16.msra.mxu0 %v1564
    %1589 = vmatprep.subr.bf16.mxu0 0
    %1590 = vmatpush1.bf16.msra.mxu0 0
    %1591 = vmatprep.subr.bf16.mxu0 0
    %1592 = vmatpush1.bf16.msra.mxu0 0
    %1593 = vmatprep.subr.bf16.mxu0 0
    %1594 = vmatpush1.bf16.msra.mxu0 0
    %1595 = vmatprep.subr.bf16.mxu0 0
    %1596 = vmatpush1.bf16.msra.mxu0 0
    %1597 = vmatprep.subr.bf16.mxu0 0
    %1598 = vmatpush1.bf16.msra.mxu0 0
    %1599 = vmatprep.subr.bf16.mxu0 0
    %1600 = vmatpush1.bf16.msra.mxu0 0
    %1601 = vmatprep.subr.bf16.mxu0 0
    %1602 = vmatpush1.bf16.msra.mxu0 0
    %1603 = vmatprep.subr.bf16.mxu0 0
    %1604 = vmatpush1.bf16.msra.mxu0 0
    %1605 = vmatprep.subr.bf16.mxu0 0
    %1606 = vmatpush1.bf16.msra.mxu0 0
    %1607 = vmatprep.subr.bf16.mxu0 0
    %1608 = vmatpush1.bf16.msra.mxu0 0
    %1609 = vmatprep.subr.bf16.mxu0 0
    %1610 = vmatpush1.bf16.msra.mxu0 0
    %1611 = vmatprep.subr.bf16.mxu0 0
    %1612 = vmatpush1.bf16.msra.mxu0 0
    %1613 = vmatprep.mubr.bf16.mxu0 0
    %1614 = vmatmul.mubr.bf16.gmra.mrb[0].mxu0 %v1570
    %v1615 = vpop.f32.mrb[0].mxu0
    %v1616 = vadd.f32 0.0, %v1615
    %v1617 = vpop.f32.mrb[0].mxu0
    %v1618 = vpop.f32.mrb[0].mxu0
    %v1619 = vadd.f32 0.0, %v1618
    %v1620 = vpop.f32.mrb[0].mxu0
    %1621 = vmatprep.mubr.bf16.mxu0 0
    %1622 = vmatmul.mubr.bf16.gmra.mrb[0].mxu0 %v1573
    %v1623 = vpop.f32.mrb[0].mxu0
    %v1624 = vadd.f32 0.0, %v1623
    %v1625 = vpop.f32.mrb[0].mxu0
    %v1626 = vpop.f32.mrb[0].mxu0
    %v1627 = vadd.f32 0.0, %v1626
    %v1628 = vpop.f32.mrb[0].mxu0
    %1629 = vmatprep.mubr.bf16.mxu0 0
    %1630 = vmatmul.mubr.bf16.gmra.mrb[0].mxu0 %v1576
    %v1631 = vpop.f32.mrb[0].mxu0
    %v1632 = vadd.f32 0.0, %v1631
    %v1633 = vpop.f32.mrb[0].mxu0
    %v1634 = vpop.f32.mrb[0].mxu0
    %v1635 = vadd.f32 0.0, %v1634
    %v1636 = vpop.f32.mrb[0].mxu0
    %1637 = vmatprep.mubr.bf16.mxu0 0
    %1638 = vmatmul.mubr.bf16.gmra.mrb[0].mxu0 %v1579
    %v1639 = vpop.f32.mrb[0].mxu0
    %v1640 = vadd.f32 0.0, %v1639
    %v1641 = vpop.f32.mrb[0].mxu0
    %v1642 = vpop.f32.mrb[0].mxu0
    %v1643 = vadd.f32 0.0, %v1642
    %v1644 = vpop.f32.mrb[0].mxu0
    %1645 = vdwg.mxu0
    %1646 = vrot.lane.b32.xlu0 %v474, 92
    %v1647 = vpop.permute.xlu0 %1646
    %1648 = vrot.lane.b32.xlu0 %v475, 92
    %v1649 = vpop.permute.xlu0 %1648
    %1650 = vrot.lane.b32.xlu0 %v476, 92
    %v1651 = vpop.permute.xlu0 %1650
    %1652 = vrot.lane.b32.xlu0 %v477, 92
    %v1653 = vpop.permute.xlu0 %1652
    %1654 = vrot.lane.b32.xlu0 %v634, 92
    %v1655 = vpop.permute.xlu0 %1654
    %1656 = vrot.lane.b32.xlu0 %v635, 92
    %v1657 = vpop.permute.xlu0 %1656
    %1658 = vrot.lane.b32.xlu0 %v636, 92
    %v1659 = vpop.permute.xlu0 %1658
    %1660 = vrot.lane.b32.xlu0 %v637, 92
    %v1661 = vpop.permute.xlu0 %1660
    %v1663 = vsel %vm802, %v1647, 0
    %v1666 = vsel %vm802, %v1649, 0
    %v1669 = vsel %vm802, %v1651, 0
    %v1672 = vsel %vm802, %v1653, 0
    %v1675 = vsel %vm802, %v1655, 0
    %v1678 = vsel %vm802, %v1657, 0
    %v1681 = vsel %vm802, %v1659, 0
    %v1684 = vsel %vm802, %v1661, 0
    %1686 = vmatprep.subr.bf16.mxu0 0
    %1687 = vmatpush1.bf16.xpose.msra.mxu0 %v1675
    %1688 = vmatprep.subr.bf16.mxu0 0
    %1689 = vmatpush1.bf16.xpose.msra.mxu0 %v1678
    %1690 = vmatprep.subr.bf16.mxu0 0
    %1691 = vmatpush1.bf16.xpose.msra.mxu0 %v1681
    %1692 = vmatprep.subr.bf16.mxu0 0
    %1693 = vmatpush1.bf16.xpose.msra.mxu0 %v1684
    %1694 = vmatprep.subr.bf16.mxu0 0
    %1695 = vmatpush1.bf16.xpose.msra.mxu0 0
    %1696 = vmatprep.subr.bf16.mxu0 0
    %1697 = vmatpush1.bf16.xpose.msra.mxu0 0
    %1698 = vmatprep.subr.bf16.mxu0 0
    %1699 = vmatpush1.bf16.xpose.msra.mxu0 0
    %1700 = vmatprep.subr.bf16.mxu0 0
    %1701 = vmatpush1.bf16.xpose.msra.mxu0 0
    %1702 = vmatprep.subr.bf16.mxu0 0
    %1703 = vmatpush1.bf16.xpose.msra.mxu0 0
    %1704 = vmatprep.subr.bf16.mxu0 0
    %1705 = vmatpush1.bf16.xpose.msra.mxu0 0
    %1706 = vmatprep.subr.bf16.mxu0 0
    %1707 = vmatpush1.bf16.xpose.msra.mxu0 0
    %1708 = vmatprep.subr.bf16.mxu0 0
    %1709 = vmatpush1.bf16.xpose.msra.mxu0 0
    %1710 = vmatprep.subr.bf16.mxu0 0
    %1711 = vmatpush1.bf16.xpose.msra.mxu0 0
    %1712 = vmatprep.subr.bf16.mxu0 0
    %1713 = vmatpush1.bf16.xpose.msra.mxu0 0
    %1714 = vmatprep.subr.bf16.mxu0 0
    %1715 = vmatpush1.bf16.xpose.msra.mxu0 0
    %1716 = vmatprep.subr.bf16.mxu0 0
    %1717 = vmatpush1.bf16.xpose.msra.mxu0 0
    %1718 = vmatprep.mubr.bf16.mxu0 0
    %1719 = vmatmul.mubr.bf16.gmra.mrb[0].mxu0 %v1663
    %v1720 = vpop.f32.mrb[0].mxu0
    %v1721 = vadd.f32 0.0, %v1720
    %v1722 = vpop.f32.mrb[0].mxu0
    %v1723 = vpop.f32.mrb[0].mxu0
    %v1724 = vadd.f32 0.0, %v1723
    %v1725 = vpop.f32.mrb[0].mxu0
    %1726 = vmatprep.mubr.bf16.mxu0 0
    %1727 = vmatmul.mubr.bf16.gmra.mrb[0].mxu0 %v1666
    %v1728 = vpop.f32.mrb[0].mxu0
    %v1729 = vadd.f32 0.0, %v1728
    %v1730 = vpop.f32.mrb[0].mxu0
    %v1731 = vpop.f32.mrb[0].mxu0
    %v1732 = vadd.f32 0.0, %v1731
    %v1733 = vpop.f32.mrb[0].mxu0
    %1734 = vmatprep.mubr.bf16.mxu0 0
    %1735 = vmatmul.mubr.bf16.gmra.mrb[0].mxu0 %v1669
    %v1736 = vpop.f32.mrb[0].mxu0
    %v1737 = vadd.f32 0.0, %v1736
    %v1738 = vpop.f32.mrb[0].mxu0
    %v1739 = vpop.f32.mrb[0].mxu0
    %v1740 = vadd.f32 0.0, %v1739
    %v1741 = vpop.f32.mrb[0].mxu0
    %1742 = vmatprep.mubr.bf16.mxu0 0
    %1743 = vmatmul.mubr.bf16.gmra.mrb[0].mxu0 %v1672
    %v1744 = vpop.f32.mrb[0].mxu0
    %v1745 = vadd.f32 0.0, %v1744
    %v1746 = vpop.f32.mrb[0].mxu0
    %v1747 = vpop.f32.mrb[0].mxu0
    %v1748 = vadd.f32 0.0, %v1747
    %v1749 = vpop.f32.mrb[0].mxu0
    %1750 = vdwg.mxu0
    %v1751 = vsel %vm892, %v1721, -inf
    %1752 = vmax.xlane.f32.xlu0 %v1751
    %v1753 = vpop.xlane.xlu0 %1752
    %v1754 = vsel %vm892, %v1724, -inf
    %1755 = vmax.xlane.f32.xlu0 %v1754
    %v1756 = vpop.xlane.xlu0 %1755
    %v1757 = vsel %vm892, %v1729, -inf
    %1758 = vmax.xlane.f32.xlu0 %v1757
    %v1759 = vpop.xlane.xlu0 %1758
    %v1760 = vsel %vm892, %v1732, -inf
    %1761 = vmax.xlane.f32.xlu0 %v1760
    %v1762 = vpop.xlane.xlu0 %1761
    %v1763 = vsel %vm892, %v1737, -inf
    %1764 = vmax.xlane.f32.xlu0 %v1763
    %v1765 = vpop.xlane.xlu0 %1764
    %v1766 = vsel %vm892, %v1740, -inf
    %1767 = vmax.xlane.f32.xlu0 %v1766
    %v1768 = vpop.xlane.xlu0 %1767
    %v1769 = vsel %vm892, %v1745, -inf
    %1770 = vmax.xlane.f32.xlu0 %v1769
    %v1771 = vpop.xlane.xlu0 %1770
    %v1772 = vsel %vm892, %v1748, -inf
    %1773 = vmax.xlane.f32.xlu0 %v1772
    %v1774 = vpop.xlane.xlu0 %1773
    %v1775 = vsub.f32 %v1721, %v1753
    %v1776 = vsub.f32 %v1724, %v1756
    %v1777 = vsub.f32 %v1729, %v1759
    %v1778 = vsub.f32 %v1732, %v1762
    %v1779 = vsub.f32 %v1737, %v1765
    %v1780 = vsub.f32 %v1740, %v1768
    %v1781 = vsub.f32 %v1745, %v1771
    %v1782 = vsub.f32 %v1748, %v1774
    %v1783 = vmul.f32 %v1775, 1.442695
    %v1784 = vpow.pop %v1783
    %v1785 = vmul.f32 %v1776, 1.442695
    %v1786 = vpow.pop %v1785
    %v1787 = vmul.f32 %v1777, 1.442695
    %v1788 = vpow.pop %v1787
    %v1789 = vmul.f32 %v1778, 1.442695
    %v1790 = vpow.pop %v1789
    %v1791 = vmul.f32 %v1779, 1.442695
    %v1792 = vpow.pop %v1791
    %v1793 = vmul.f32 %v1780, 1.442695
    %v1794 = vpow.pop %v1793
    %v1795 = vmul.f32 %v1781, 1.442695
    %v1796 = vpow.pop %v1795
    %v1797 = vmul.f32 %v1782, 1.442695
    %v1798 = vpow.pop %v1797
    %v1799 = vsel %vm892, %v1784, 0.0
    %1800 = vadd.xlane.f32.xlu0 %v1799
    %v1801 = vpop.xlane.xlu0 %1800
    %v1802 = vsel %vm892, %v1786, 0.0
    %1803 = vadd.xlane.f32.xlu0 %v1802
    %v1804 = vpop.xlane.xlu0 %1803
    %v1805 = vsel %vm892, %v1788, 0.0
    %1806 = vadd.xlane.f32.xlu0 %v1805
    %v1807 = vpop.xlane.xlu0 %1806
    %v1808 = vsel %vm892, %v1790, 0.0
    %1809 = vadd.xlane.f32.xlu0 %v1808
    %v1810 = vpop.xlane.xlu0 %1809
    %v1811 = vsel %vm892, %v1792, 0.0
    %1812 = vadd.xlane.f32.xlu0 %v1811
    %v1813 = vpop.xlane.xlu0 %1812
    %v1814 = vsel %vm892, %v1794, 0.0
    %1815 = vadd.xlane.f32.xlu0 %v1814
    %v1816 = vpop.xlane.xlu0 %1815
    %v1817 = vsel %vm892, %v1796, 0.0
    %1818 = vadd.xlane.f32.xlu0 %v1817
    %v1819 = vpop.xlane.xlu0 %1818
    %v1820 = vsel %vm892, %v1798, 0.0
    %1821 = vadd.xlane.f32.xlu0 %v1820
    %v1822 = vpop.xlane.xlu0 %1821
    %v1823 = vrcp.pop %v1801
    %v1824 = vrcp.pop %v1804
    %v1825 = vrcp.pop %v1807
    %v1826 = vrcp.pop %v1810
    %v1827 = vrcp.pop %v1813
    %v1828 = vrcp.pop %v1816
    %v1829 = vrcp.pop %v1819
    %v1830 = vrcp.pop %v1822
    %v1831 = vmul.f32 %v1784, %v1823
    %v1832 = vmul.f32 %v1786, %v1824
    %v1833 = vmul.f32 %v1788, %v1825
    %v1834 = vmul.f32 %v1790, %v1826
    %v1835 = vmul.f32 %v1792, %v1827
    %v1836 = vmul.f32 %v1794, %v1828
    %v1837 = vmul.f32 %v1796, %v1829
    %v1838 = vmul.f32 %v1798, %v1830
    %v1839 = vpack.c.bf16 %v1832, %v1831
    %v1840 = vpack.c.bf16 %v1834, %v1833
    %v1841 = vpack.c.bf16 %v1836, %v1835
    %v1842 = vpack.c.bf16 %v1838, %v1837
    %1843 = vrot.lane.b32.xlu0 %v794, 92
    %v1844 = vpop.permute.xlu0 %1843
    %1845 = vrot.lane.b32.xlu0 %v795, 92
    %v1846 = vpop.permute.xlu0 %1845
    %1847 = vrot.lane.b32.xlu0 %v796, 92
    %v1848 = vpop.permute.xlu0 %1847
    %1849 = vrot.lane.b32.xlu0 %v797, 92
    %v1850 = vpop.permute.xlu0 %1849
    %v1856 = vsel %vm892, %v1839, 0
    %v1859 = vsel %vm892, %v1840, 0
    %v1862 = vsel %vm892, %v1841, 0
    %v1865 = vsel %vm892, %v1842, 0
    %1867 = vmatprep.subr.bf16.mxu0 0
    %1868 = vmatpush1.bf16.msra.mxu0 %v1844
    %1869 = vmatprep.subr.bf16.mxu0 0
    %1870 = vmatpush1.bf16.msra.mxu0 %v1846
    %1871 = vmatprep.subr.bf16.mxu0 0
    %1872 = vmatpush1.bf16.msra.mxu0 %v1848
    %1873 = vmatprep.subr.bf16.mxu0 0
    %1874 = vmatpush1.bf16.msra.mxu0 %v1850
    %1875 = vmatprep.subr.bf16.mxu0 0
    %1876 = vmatpush1.bf16.msra.mxu0 0
    %1877 = vmatprep.subr.bf16.mxu0 0
    %1878 = vmatpush1.bf16.msra.mxu0 0
    %1879 = vmatprep.subr.bf16.mxu0 0
    %1880 = vmatpush1.bf16.msra.mxu0 0
    %1881 = vmatprep.subr.bf16.mxu0 0
    %1882 = vmatpush1.bf16.msra.mxu0 0
    %1883 = vmatprep.subr.bf16.mxu0 0
    %1884 = vmatpush1.bf16.msra.mxu0 0
    %1885 = vmatprep.subr.bf16.mxu0 0
    %1886 = vmatpush1.bf16.msra.mxu0 0
    %1887 = vmatprep.subr.bf16.mxu0 0
    %1888 = vmatpush1.bf16.msra.mxu0 0
    %1889 = vmatprep.subr.bf16.mxu0 0
    %1890 = vmatpush1.bf16.msra.mxu0 0
    %1891 = vmatprep.subr.bf16.mxu0 0
    %1892 = vmatpush1.bf16.msra.mxu0 0
    %1893 = vmatprep.subr.bf16.mxu0 0
    %1894 = vmatpush1.bf16.msra.mxu0 0
    %1895 = vmatprep.subr.bf16.mxu0 0
    %1896 = vmatpush1.bf16.msra.mxu0 0
    %1897 = vmatprep.subr.bf16.mxu0 0
    %1898 = vmatpush1.bf16.msra.mxu0 0
    %1899 = vmatprep.mubr.bf16.mxu0 0
    %1900 = vmatmul.mubr.bf16.gmra.mrb[0].mxu0 %v1856
    %v1901 = vpop.f32.mrb[0].mxu0
    %v1902 = vadd.f32 0.0, %v1901
    %v1903 = vpop.f32.mrb[0].mxu0
    %v1904 = vpop.f32.mrb[0].mxu0
    %v1905 = vadd.f32 0.0, %v1904
    %v1906 = vpop.f32.mrb[0].mxu0
    %1907 = vmatprep.mubr.bf16.mxu0 0
    %1908 = vmatmul.mubr.bf16.gmra.mrb[0].mxu0 %v1859
    %v1909 = vpop.f32.mrb[0].mxu0
    %v1910 = vadd.f32 0.0, %v1909
    %v1911 = vpop.f32.mrb[0].mxu0
    %v1912 = vpop.f32.mrb[0].mxu0
    %v1913 = vadd.f32 0.0, %v1912
    %v1914 = vpop.f32.mrb[0].mxu0
    %1915 = vmatprep.mubr.bf16.mxu0 0
    %1916 = vmatmul.mubr.bf16.gmra.mrb[0].mxu0 %v1862
    %v1917 = vpop.f32.mrb[0].mxu0
    %v1918 = vadd.f32 0.0, %v1917
    %v1919 = vpop.f32.mrb[0].mxu0
    %v1920 = vpop.f32.mrb[0].mxu0
    %v1921 = vadd.f32 0.0, %v1920
    %v1922 = vpop.f32.mrb[0].mxu0
    %1923 = vmatprep.mubr.bf16.mxu0 0
    %1924 = vmatmul.mubr.bf16.gmra.mrb[0].mxu0 %v1865
    %v1925 = vpop.f32.mrb[0].mxu0
    %v1926 = vadd.f32 0.0, %v1925
    %v1927 = vpop.f32.mrb[0].mxu0
    %v1928 = vpop.f32.mrb[0].mxu0
    %v1929 = vadd.f32 0.0, %v1928
    %v1930 = vpop.f32.mrb[0].mxu0
    %1931 = vdwg.mxu0
    %1932 = vrot.lane.b32.xlu0 %v474, 80
    %v1933 = vpop.permute.xlu0 %1932
    %1934 = vrot.lane.b32.xlu0 %v475, 80
    %v1935 = vpop.permute.xlu0 %1934
    %1936 = vrot.lane.b32.xlu0 %v476, 80
    %v1937 = vpop.permute.xlu0 %1936
    %1938 = vrot.lane.b32.xlu0 %v477, 80
    %v1939 = vpop.permute.xlu0 %1938
    %1940 = vrot.lane.b32.xlu0 %v634, 80
    %v1941 = vpop.permute.xlu0 %1940
    %1942 = vrot.lane.b32.xlu0 %v635, 80
    %v1943 = vpop.permute.xlu0 %1942
    %1944 = vrot.lane.b32.xlu0 %v636, 80
    %v1945 = vpop.permute.xlu0 %1944
    %1946 = vrot.lane.b32.xlu0 %v637, 80
    %v1947 = vpop.permute.xlu0 %1946
    %v1949 = vsel %vm802, %v1933, 0
    %v1952 = vsel %vm802, %v1935, 0
    %v1955 = vsel %vm802, %v1937, 0
    %v1958 = vsel %vm802, %v1939, 0
    %v1961 = vsel %vm802, %v1941, 0
    %v1964 = vsel %vm802, %v1943, 0
    %v1967 = vsel %vm802, %v1945, 0
    %v1970 = vsel %vm802, %v1947, 0
    %1972 = vmatprep.subr.bf16.mxu0 0
    %1973 = vmatpush1.bf16.xpose.msra.mxu0 %v1961
    %1974 = vmatprep.subr.bf16.mxu0 0
    %1975 = vmatpush1.bf16.xpose.msra.mxu0 %v1964
    %1976 = vmatprep.subr.bf16.mxu0 0
    %1977 = vmatpush1.bf16.xpose.msra.mxu0 %v1967
    %1978 = vmatprep.subr.bf16.mxu0 0
    %1979 = vmatpush1.bf16.xpose.msra.mxu0 %v1970
    %1980 = vmatprep.subr.bf16.mxu0 0
    %1981 = vmatpush1.bf16.xpose.msra.mxu0 0
    %1982 = vmatprep.subr.bf16.mxu0 0
    %1983 = vmatpush1.bf16.xpose.msra.mxu0 0
    %1984 = vmatprep.subr.bf16.mxu0 0
    %1985 = vmatpush1.bf16.xpose.msra.mxu0 0
    %1986 = vmatprep.subr.bf16.mxu0 0
    %1987 = vmatpush1.bf16.xpose.msra.mxu0 0
    %1988 = vmatprep.subr.bf16.mxu0 0
    %1989 = vmatpush1.bf16.xpose.msra.mxu0 0
    %1990 = vmatprep.subr.bf16.mxu0 0
    %1991 = vmatpush1.bf16.xpose.msra.mxu0 0
    %1992 = vmatprep.subr.bf16.mxu0 0
    %1993 = vmatpush1.bf16.xpose.msra.mxu0 0
    %1994 = vmatprep.subr.bf16.mxu0 0
    %1995 = vmatpush1.bf16.xpose.msra.mxu0 0
    %1996 = vmatprep.subr.bf16.mxu0 0
    %1997 = vmatpush1.bf16.xpose.msra.mxu0 0
    %1998 = vmatprep.subr.bf16.mxu0 0
    %1999 = vmatpush1.bf16.xpose.msra.mxu0 0
    %2000 = vmatprep.subr.bf16.mxu0 0
    %2001 = vmatpush1.bf16.xpose.msra.mxu0 0
    %2002 = vmatprep.subr.bf16.mxu0 0
    %2003 = vmatpush1.bf16.xpose.msra.mxu0 0
    %2004 = vmatprep.mubr.bf16.mxu0 0
    %2005 = vmatmul.mubr.bf16.gmra.mrb[0].mxu0 %v1949
    %v2006 = vpop.f32.mrb[0].mxu0
    %v2007 = vadd.f32 0.0, %v2006
    %v2008 = vpop.f32.mrb[0].mxu0
    %v2009 = vpop.f32.mrb[0].mxu0
    %v2010 = vadd.f32 0.0, %v2009
    %v2011 = vpop.f32.mrb[0].mxu0
    %2012 = vmatprep.mubr.bf16.mxu0 0
    %2013 = vmatmul.mubr.bf16.gmra.mrb[0].mxu0 %v1952
    %v2014 = vpop.f32.mrb[0].mxu0
    %v2015 = vadd.f32 0.0, %v2014
    %v2016 = vpop.f32.mrb[0].mxu0
    %v2017 = vpop.f32.mrb[0].mxu0
    %v2018 = vadd.f32 0.0, %v2017
    %v2019 = vpop.f32.mrb[0].mxu0
    %2020 = vmatprep.mubr.bf16.mxu0 0
    %2021 = vmatmul.mubr.bf16.gmra.mrb[0].mxu0 %v1955
    %v2022 = vpop.f32.mrb[0].mxu0
    %v2023 = vadd.f32 0.0, %v2022
    %v2024 = vpop.f32.mrb[0].mxu0
    %v2025 = vpop.f32.mrb[0].mxu0
    %v2026 = vadd.f32 0.0, %v2025
    %v2027 = vpop.f32.mrb[0].mxu0
    %2028 = vmatprep.mubr.bf16.mxu0 0
    %2029 = vmatmul.mubr.bf16.gmra.mrb[0].mxu0 %v1958
    %v2030 = vpop.f32.mrb[0].mxu0
    %v2031 = vadd.f32 0.0, %v2030
    %v2032 = vpop.f32.mrb[0].mxu0
    %v2033 = vpop.f32.mrb[0].mxu0
    %v2034 = vadd.f32 0.0, %v2033
    %v2035 = vpop.f32.mrb[0].mxu0
    %2036 = vdwg.mxu0
    %v2037 = vsel %vm892, %v2007, -inf
    %2038 = vmax.xlane.f32.xlu0 %v2037
    %v2039 = vpop.xlane.xlu0 %2038
    %v2040 = vsel %vm892, %v2010, -inf
    %2041 = vmax.xlane.f32.xlu0 %v2040
    %v2042 = vpop.xlane.xlu0 %2041
    %v2043 = vsel %vm892, %v2015, -inf
    %2044 = vmax.xlane.f32.xlu0 %v2043
    %v2045 = vpop.xlane.xlu0 %2044
    %v2046 = vsel %vm892, %v2018, -inf
    %2047 = vmax.xlane.f32.xlu0 %v2046
    %v2048 = vpop.xlane.xlu0 %2047
    %v2049 = vsel %vm892, %v2023, -inf
    %2050 = vmax.xlane.f32.xlu0 %v2049
    %v2051 = vpop.xlane.xlu0 %2050
    %v2052 = vsel %vm892, %v2026, -inf
    %2053 = vmax.xlane.f32.xlu0 %v2052
    %v2054 = vpop.xlane.xlu0 %2053
    %v2055 = vsel %vm892, %v2031, -inf
    %2056 = vmax.xlane.f32.xlu0 %v2055
    %v2057 = vpop.xlane.xlu0 %2056
    %v2058 = vsel %vm892, %v2034, -inf
    %2059 = vmax.xlane.f32.xlu0 %v2058
    %v2060 = vpop.xlane.xlu0 %2059
    %v2061 = vsub.f32 %v2007, %v2039
    %v2062 = vsub.f32 %v2010, %v2042
    %v2063 = vsub.f32 %v2015, %v2045
    %v2064 = vsub.f32 %v2018, %v2048
    %v2065 = vsub.f32 %v2023, %v2051
    %v2066 = vsub.f32 %v2026, %v2054
    %v2067 = vsub.f32 %v2031, %v2057
    %v2068 = vsub.f32 %v2034, %v2060
    %v2069 = vmul.f32 %v2061, 1.442695
    %v2070 = vpow.pop %v2069
    %v2071 = vmul.f32 %v2062, 1.442695
    %v2072 = vpow.pop %v2071
    %v2073 = vmul.f32 %v2063, 1.442695
    %v2074 = vpow.pop %v2073
    %v2075 = vmul.f32 %v2064, 1.442695
    %v2076 = vpow.pop %v2075
    %v2077 = vmul.f32 %v2065, 1.442695
    %v2078 = vpow.pop %v2077
    %v2079 = vmul.f32 %v2066, 1.442695
    %v2080 = vpow.pop %v2079
    %v2081 = vmul.f32 %v2067, 1.442695
    %v2082 = vpow.pop %v2081
    %v2083 = vmul.f32 %v2068, 1.442695
    %v2084 = vpow.pop %v2083
    %v2085 = vsel %vm892, %v2070, 0.0
    %2086 = vadd.xlane.f32.xlu0 %v2085
    %v2087 = vpop.xlane.xlu0 %2086
    %v2088 = vsel %vm892, %v2072, 0.0
    %2089 = vadd.xlane.f32.xlu0 %v2088
    %v2090 = vpop.xlane.xlu0 %2089
    %v2091 = vsel %vm892, %v2074, 0.0
    %2092 = vadd.xlane.f32.xlu0 %v2091
    %v2093 = vpop.xlane.xlu0 %2092
    %v2094 = vsel %vm892, %v2076, 0.0
    %2095 = vadd.xlane.f32.xlu0 %v2094
    %v2096 = vpop.xlane.xlu0 %2095
    %v2097 = vsel %vm892, %v2078, 0.0
    %2098 = vadd.xlane.f32.xlu0 %v2097
    %v2099 = vpop.xlane.xlu0 %2098
    %v2100 = vsel %vm892, %v2080, 0.0
    %2101 = vadd.xlane.f32.xlu0 %v2100
    %v2102 = vpop.xlane.xlu0 %2101
    %v2103 = vsel %vm892, %v2082, 0.0
    %2104 = vadd.xlane.f32.xlu0 %v2103
    %v2105 = vpop.xlane.xlu0 %2104
    %v2106 = vsel %vm892, %v2084, 0.0
    %2107 = vadd.xlane.f32.xlu0 %v2106
    %v2108 = vpop.xlane.xlu0 %2107
    %v2109 = vrcp.pop %v2087
    %v2110 = vrcp.pop %v2090
    %v2111 = vrcp.pop %v2093
    %v2112 = vrcp.pop %v2096
    %v2113 = vrcp.pop %v2099
    %v2114 = vrcp.pop %v2102
    %v2115 = vrcp.pop %v2105
    %v2116 = vrcp.pop %v2108
    %v2117 = vmul.f32 %v2070, %v2109
    %v2118 = vmul.f32 %v2072, %v2110
    %v2119 = vmul.f32 %v2074, %v2111
    %v2120 = vmul.f32 %v2076, %v2112
    %v2121 = vmul.f32 %v2078, %v2113
    %v2122 = vmul.f32 %v2080, %v2114
    %v2123 = vmul.f32 %v2082, %v2115
    %v2124 = vmul.f32 %v2084, %v2116
    %v2125 = vpack.c.bf16 %v2118, %v2117
    %v2126 = vpack.c.bf16 %v2120, %v2119
    %v2127 = vpack.c.bf16 %v2122, %v2121
    %v2128 = vpack.c.bf16 %v2124, %v2123
    %2129 = vrot.lane.b32.xlu0 %v794, 80
    %v2130 = vpop.permute.xlu0 %2129
    %2131 = vrot.lane.b32.xlu0 %v795, 80
    %v2132 = vpop.permute.xlu0 %2131
    %2133 = vrot.lane.b32.xlu0 %v796, 80
    %v2134 = vpop.permute.xlu0 %2133
    %2135 = vrot.lane.b32.xlu0 %v797, 80
    %v2136 = vpop.permute.xlu0 %2135
    %v2142 = vsel %vm892, %v2125, 0
    %v2145 = vsel %vm892, %v2126, 0
    %v2148 = vsel %vm892, %v2127, 0
    %v2151 = vsel %vm892, %v2128, 0
    %2153 = vmatprep.subr.bf16.mxu0 0
    %2154 = vmatpush1.bf16.msra.mxu0 %v2130
    %2155 = vmatprep.subr.bf16.mxu0 0
    %2156 = vmatpush1.bf16.msra.mxu0 %v2132
    %2157 = vmatprep.subr.bf16.mxu0 0
    %2158 = vmatpush1.bf16.msra.mxu0 %v2134
    %2159 = vmatprep.subr.bf16.mxu0 0
    %2160 = vmatpush1.bf16.msra.mxu0 %v2136
    %2161 = vmatprep.subr.bf16.mxu0 0
    %2162 = vmatpush1.bf16.msra.mxu0 0
    %2163 = vmatprep.subr.bf16.mxu0 0
    %2164 = vmatpush1.bf16.msra.mxu0 0
    %2165 = vmatprep.subr.bf16.mxu0 0
    %2166 = vmatpush1.bf16.msra.mxu0 0
    %2167 = vmatprep.subr.bf16.mxu0 0
    %2168 = vmatpush1.bf16.msra.mxu0 0
    %2169 = vmatprep.subr.bf16.mxu0 0
    %2170 = vmatpush1.bf16.msra.mxu0 0
    %2171 = vmatprep.subr.bf16.mxu0 0
    %2172 = vmatpush1.bf16.msra.mxu0 0
    %2173 = vmatprep.subr.bf16.mxu0 0
    %2174 = vmatpush1.bf16.msra.mxu0 0
    %2175 = vmatprep.subr.bf16.mxu0 0
    %2176 = vmatpush1.bf16.msra.mxu0 0
    %2177 = vmatprep.subr.bf16.mxu0 0
    %2178 = vmatpush1.bf16.msra.mxu0 0
    %2179 = vmatprep.subr.bf16.mxu0 0
    %2180 = vmatpush1.bf16.msra.mxu0 0
    %2181 = vmatprep.subr.bf16.mxu0 0
    %2182 = vmatpush1.bf16.msra.mxu0 0
    %2183 = vmatprep.subr.bf16.mxu0 0
    %2184 = vmatpush1.bf16.msra.mxu0 0
    %2185 = vmatprep.mubr.bf16.mxu0 0
    %2186 = vmatmul.mubr.bf16.gmra.mrb[0].mxu0 %v2142
    %v2187 = vpop.f32.mrb[0].mxu0
    %v2188 = vadd.f32 0.0, %v2187
    %v2189 = vpop.f32.mrb[0].mxu0
    %v2190 = vpop.f32.mrb[0].mxu0
    %v2191 = vadd.f32 0.0, %v2190
    %v2192 = vpop.f32.mrb[0].mxu0
    %2193 = vmatprep.mubr.bf16.mxu0 0
    %2194 = vmatmul.mubr.bf16.gmra.mrb[0].mxu0 %v2145
    %v2195 = vpop.f32.mrb[0].mxu0
    %v2196 = vadd.f32 0.0, %v2195
    %v2197 = vpop.f32.mrb[0].mxu0
    %v2198 = vpop.f32.mrb[0].mxu0
    %v2199 = vadd.f32 0.0, %v2198
    %v2200 = vpop.f32.mrb[0].mxu0
    %2201 = vmatprep.mubr.bf16.mxu0 0
    %2202 = vmatmul.mubr.bf16.gmra.mrb[0].mxu0 %v2148
    %v2203 = vpop.f32.mrb[0].mxu0
    %v2204 = vadd.f32 0.0, %v2203
    %v2205 = vpop.f32.mrb[0].mxu0
    %v2206 = vpop.f32.mrb[0].mxu0
    %v2207 = vadd.f32 0.0, %v2206
    %v2208 = vpop.f32.mrb[0].mxu0
    %2209 = vmatprep.mubr.bf16.mxu0 0
    %2210 = vmatmul.mubr.bf16.gmra.mrb[0].mxu0 %v2151
    %v2211 = vpop.f32.mrb[0].mxu0
    %v2212 = vadd.f32 0.0, %v2211
    %v2213 = vpop.f32.mrb[0].mxu0
    %v2214 = vpop.f32.mrb[0].mxu0
    %v2215 = vadd.f32 0.0, %v2214
    %v2216 = vpop.f32.mrb[0].mxu0
    %2217 = vdwg.mxu0
    %2218 = vrot.lane.b32.xlu0 %v474, 68
    %v2219 = vpop.permute.xlu0 %2218
    %2220 = vrot.lane.b32.xlu0 %v475, 68
    %v2221 = vpop.permute.xlu0 %2220
    %2222 = vrot.lane.b32.xlu0 %v476, 68
    %v2223 = vpop.permute.xlu0 %2222
    %2224 = vrot.lane.b32.xlu0 %v477, 68
    %v2225 = vpop.permute.xlu0 %2224
    %2226 = vrot.lane.b32.xlu0 %v634, 68
    %v2227 = vpop.permute.xlu0 %2226
    %2228 = vrot.lane.b32.xlu0 %v635, 68
    %v2229 = vpop.permute.xlu0 %2228
    %2230 = vrot.lane.b32.xlu0 %v636, 68
    %v2231 = vpop.permute.xlu0 %2230
    %2232 = vrot.lane.b32.xlu0 %v637, 68
    %v2233 = vpop.permute.xlu0 %2232
    %v2235 = vsel %vm802, %v2219, 0
    %v2238 = vsel %vm802, %v2221, 0
    %v2241 = vsel %vm802, %v2223, 0
    %v2244 = vsel %vm802, %v2225, 0
    %v2247 = vsel %vm802, %v2227, 0
    %v2250 = vsel %vm802, %v2229, 0
    %v2253 = vsel %vm802, %v2231, 0
    %v2256 = vsel %vm802, %v2233, 0
    %2258 = vmatprep.subr.bf16.mxu0 0
    %2259 = vmatpush1.bf16.xpose.msra.mxu0 %v2247
    %2260 = vmatprep.subr.bf16.mxu0 0
    %2261 = vmatpush1.bf16.xpose.msra.mxu0 %v2250
    %2262 = vmatprep.subr.bf16.mxu0 0
    %2263 = vmatpush1.bf16.xpose.msra.mxu0 %v2253
    %2264 = vmatprep.subr.bf16.mxu0 0
    %2265 = vmatpush1.bf16.xpose.msra.mxu0 %v2256
    %2266 = vmatprep.subr.bf16.mxu0 0
    %2267 = vmatpush1.bf16.xpose.msra.mxu0 0
    %2268 = vmatprep.subr.bf16.mxu0 0
    %2269 = vmatpush1.bf16.xpose.msra.mxu0 0
    %2270 = vmatprep.subr.bf16.mxu0 0
    %2271 = vmatpush1.bf16.xpose.msra.mxu0 0
    %2272 = vmatprep.subr.bf16.mxu0 0
    %2273 = vmatpush1.bf16.xpose.msra.mxu0 0
    %2274 = vmatprep.subr.bf16.mxu0 0
    %2275 = vmatpush1.bf16.xpose.msra.mxu0 0
    %2276 = vmatprep.subr.bf16.mxu0 0
    %2277 = vmatpush1.bf16.xpose.msra.mxu0 0
    %2278 = vmatprep.subr.bf16.mxu0 0
    %2279 = vmatpush1.bf16.xpose.msra.mxu0 0
    %2280 = vmatprep.subr.bf16.mxu0 0
    %2281 = vmatpush1.bf16.xpose.msra.mxu0 0
    %2282 = vmatprep.subr.bf16.mxu0 0
    %2283 = vmatpush1.bf16.xpose.msra.mxu0 0
    %2284 = vmatprep.subr.bf16.mxu0 0
    %2285 = vmatpush1.bf16.xpose.msra.mxu0 0
    %2286 = vmatprep.subr.bf16.mxu0 0
    %2287 = vmatpush1.bf16.xpose.msra.mxu0 0
    %2288 = vmatprep.subr.bf16.mxu0 0
    %2289 = vmatpush1.bf16.xpose.msra.mxu0 0
    %2290 = vmatprep.mubr.bf16.mxu0 0
    %2291 = vmatmul.mubr.bf16.gmra.mrb[0].mxu0 %v2235
    %v2292 = vpop.f32.mrb[0].mxu0
    %v2293 = vadd.f32 0.0, %v2292
    %v2294 = vpop.f32.mrb[0].mxu0
    %v2295 = vpop.f32.mrb[0].mxu0
    %v2296 = vadd.f32 0.0, %v2295
    %v2297 = vpop.f32.mrb[0].mxu0
    %2298 = vmatprep.mubr.bf16.mxu0 0
    %2299 = vmatmul.mubr.bf16.gmra.mrb[0].mxu0 %v2238
    %v2300 = vpop.f32.mrb[0].mxu0
    %v2301 = vadd.f32 0.0, %v2300
    %v2302 = vpop.f32.mrb[0].mxu0
    %v2303 = vpop.f32.mrb[0].mxu0
    %v2304 = vadd.f32 0.0, %v2303
    %v2305 = vpop.f32.mrb[0].mxu0
    %2306 = vmatprep.mubr.bf16.mxu0 0
    %2307 = vmatmul.mubr.bf16.gmra.mrb[0].mxu0 %v2241
    %v2308 = vpop.f32.mrb[0].mxu0
    %v2309 = vadd.f32 0.0, %v2308
    %v2310 = vpop.f32.mrb[0].mxu0
    %v2311 = vpop.f32.mrb[0].mxu0
    %v2312 = vadd.f32 0.0, %v2311
    %v2313 = vpop.f32.mrb[0].mxu0
    %2314 = vmatprep.mubr.bf16.mxu0 0
    %2315 = vmatmul.mubr.bf16.gmra.mrb[0].mxu0 %v2244
    %v2316 = vpop.f32.mrb[0].mxu0
    %v2317 = vadd.f32 0.0, %v2316
    %v2318 = vpop.f32.mrb[0].mxu0
    %v2319 = vpop.f32.mrb[0].mxu0
    %v2320 = vadd.f32 0.0, %v2319
    %v2321 = vpop.f32.mrb[0].mxu0
    %2322 = vdwg.mxu0
    %v2323 = vsel %vm892, %v2293, -inf
    %2324 = vmax.xlane.f32.xlu0 %v2323
    %v2325 = vpop.xlane.xlu0 %2324
    %v2326 = vsel %vm892, %v2296, -inf
    %2327 = vmax.xlane.f32.xlu0 %v2326
    %v2328 = vpop.xlane.xlu0 %2327
    %v2329 = vsel %vm892, %v2301, -inf
    %2330 = vmax.xlane.f32.xlu0 %v2329
    %v2331 = vpop.xlane.xlu0 %2330
    %v2332 = vsel %vm892, %v2304, -inf
    %2333 = vmax.xlane.f32.xlu0 %v2332
    %v2334 = vpop.xlane.xlu0 %2333
    %v2335 = vsel %vm892, %v2309, -inf
    %2336 = vmax.xlane.f32.xlu0 %v2335
    %v2337 = vpop.xlane.xlu0 %2336
    %v2338 = vsel %vm892, %v2312, -inf
    %2339 = vmax.xlane.f32.xlu0 %v2338
    %v2340 = vpop.xlane.xlu0 %2339
    %v2341 = vsel %vm892, %v2317, -inf
    %2342 = vmax.xlane.f32.xlu0 %v2341
    %v2343 = vpop.xlane.xlu0 %2342
    %v2344 = vsel %vm892, %v2320, -inf
    %2345 = vmax.xlane.f32.xlu0 %v2344
    %v2346 = vpop.xlane.xlu0 %2345
    %v2347 = vsub.f32 %v2293, %v2325
    %v2348 = vsub.f32 %v2296, %v2328
    %v2349 = vsub.f32 %v2301, %v2331
    %v2350 = vsub.f32 %v2304, %v2334
    %v2351 = vsub.f32 %v2309, %v2337
    %v2352 = vsub.f32 %v2312, %v2340
    %v2353 = vsub.f32 %v2317, %v2343
    %v2354 = vsub.f32 %v2320, %v2346
    %v2355 = vmul.f32 %v2347, 1.442695
    %v2356 = vpow.pop %v2355
    %v2357 = vmul.f32 %v2348, 1.442695
    %v2358 = vpow.pop %v2357
    %v2359 = vmul.f32 %v2349, 1.442695
    %v2360 = vpow.pop %v2359
    %v2361 = vmul.f32 %v2350, 1.442695
    %v2362 = vpow.pop %v2361
    %v2363 = vmul.f32 %v2351, 1.442695
    %v2364 = vpow.pop %v2363
    %v2365 = vmul.f32 %v2352, 1.442695
    %v2366 = vpow.pop %v2365
    %v2367 = vmul.f32 %v2353, 1.442695
    %v2368 = vpow.pop %v2367
    %v2369 = vmul.f32 %v2354, 1.442695
    %v2370 = vpow.pop %v2369
    %v2371 = vsel %vm892, %v2356, 0.0
    %2372 = vadd.xlane.f32.xlu0 %v2371
    %v2373 = vpop.xlane.xlu0 %2372
    %v2374 = vsel %vm892, %v2358, 0.0
    %2375 = vadd.xlane.f32.xlu0 %v2374
    %v2376 = vpop.xlane.xlu0 %2375
    %v2377 = vsel %vm892, %v2360, 0.0
    %2378 = vadd.xlane.f32.xlu0 %v2377
    %v2379 = vpop.xlane.xlu0 %2378
    %v2380 = vsel %vm892, %v2362, 0.0
    %2381 = vadd.xlane.f32.xlu0 %v2380
    %v2382 = vpop.xlane.xlu0 %2381
    %v2383 = vsel %vm892, %v2364, 0.0
    %2384 = vadd.xlane.f32.xlu0 %v2383
    %v2385 = vpop.xlane.xlu0 %2384
    %v2386 = vsel %vm892, %v2366, 0.0
    %2387 = vadd.xlane.f32.xlu0 %v2386
    %v2388 = vpop.xlane.xlu0 %2387
    %v2389 = vsel %vm892, %v2368, 0.0
    %2390 = vadd.xlane.f32.xlu0 %v2389
    %v2391 = vpop.xlane.xlu0 %2390
    %v2392 = vsel %vm892, %v2370, 0.0
    %2393 = vadd.xlane.f32.xlu0 %v2392
    %v2394 = vpop.xlane.xlu0 %2393
    %v2395 = vrcp.pop %v2373
    %v2396 = vrcp.pop %v2376
    %v2397 = vrcp.pop %v2379
    %v2398 = vrcp.pop %v2382
    %v2399 = vrcp.pop %v2385
    %v2400 = vrcp.pop %v2388
    %v2401 = vrcp.pop %v2391
    %v2402 = vrcp.pop %v2394
    %v2403 = vmul.f32 %v2356, %v2395
    %v2404 = vmul.f32 %v2358, %v2396
    %v2405 = vmul.f32 %v2360, %v2397
    %v2406 = vmul.f32 %v2362, %v2398
    %v2407 = vmul.f32 %v2364, %v2399
    %v2408 = vmul.f32 %v2366, %v2400
    %v2409 = vmul.f32 %v2368, %v2401
    %v2410 = vmul.f32 %v2370, %v2402
    %v2411 = vpack.c.bf16 %v2404, %v2403
    %v2412 = vpack.c.bf16 %v2406, %v2405
    %v2413 = vpack.c.bf16 %v2408, %v2407
    %v2414 = vpack.c.bf16 %v2410, %v2409
    %2415 = vrot.lane.b32.xlu0 %v794, 68
    %v2416 = vpop.permute.xlu0 %2415
    %2417 = vrot.lane.b32.xlu0 %v795, 68
    %v2418 = vpop.permute.xlu0 %2417
    %2419 = vrot.lane.b32.xlu0 %v796, 68
    %v2420 = vpop.permute.xlu0 %2419
    %2421 = vrot.lane.b32.xlu0 %v797, 68
    %v2422 = vpop.permute.xlu0 %2421
    %v2428 = vsel %vm892, %v2411, 0
    %v2431 = vsel %vm892, %v2412, 0
    %v2434 = vsel %vm892, %v2413, 0
    %v2437 = vsel %vm892, %v2414, 0
    %2439 = vmatprep.subr.bf16.mxu0 0
    %2440 = vmatpush1.bf16.msra.mxu0 %v2416
    %2441 = vmatprep.subr.bf16.mxu0 0
    %2442 = vmatpush1.bf16.msra.mxu0 %v2418
    %2443 = vmatprep.subr.bf16.mxu0 0
    %2444 = vmatpush1.bf16.msra.mxu0 %v2420
    %2445 = vmatprep.subr.bf16.mxu0 0
    %2446 = vmatpush1.bf16.msra.mxu0 %v2422
    %2447 = vmatprep.subr.bf16.mxu0 0
    %2448 = vmatpush1.bf16.msra.mxu0 0
    %2449 = vmatprep.subr.bf16.mxu0 0
    %2450 = vmatpush1.bf16.msra.mxu0 0
    %2451 = vmatprep.subr.bf16.mxu0 0
    %2452 = vmatpush1.bf16.msra.mxu0 0
    %2453 = vmatprep.subr.bf16.mxu0 0
    %2454 = vmatpush1.bf16.msra.mxu0 0
    %2455 = vmatprep.subr.bf16.mxu0 0
    %2456 = vmatpush1.bf16.msra.mxu0 0
    %2457 = vmatprep.subr.bf16.mxu0 0
    %2458 = vmatpush1.bf16.msra.mxu0 0
    %2459 = vmatprep.subr.bf16.mxu0 0
    %2460 = vmatpush1.bf16.msra.mxu0 0
    %2461 = vmatprep.subr.bf16.mxu0 0
    %2462 = vmatpush1.bf16.msra.mxu0 0
    %2463 = vmatprep.subr.bf16.mxu0 0
    %2464 = vmatpush1.bf16.msra.mxu0 0
    %2465 = vmatprep.subr.bf16.mxu0 0
    %2466 = vmatpush1.bf16.msra.mxu0 0
    %2467 = vmatprep.subr.bf16.mxu0 0
    %2468 = vmatpush1.bf16.msra.mxu0 0
    %2469 = vmatprep.subr.bf16.mxu0 0
    %2470 = vmatpush1.bf16.msra.mxu0 0
    %2471 = vmatprep.mubr.bf16.mxu0 0
    %2472 = vmatmul.mubr.bf16.gmra.mrb[0].mxu0 %v2428
    %v2473 = vpop.f32.mrb[0].mxu0
    %v2474 = vadd.f32 0.0, %v2473
    %v2475 = vpop.f32.mrb[0].mxu0
    %v2476 = vpop.f32.mrb[0].mxu0
    %v2477 = vadd.f32 0.0, %v2476
    %v2478 = vpop.f32.mrb[0].mxu0
    %2479 = vmatprep.mubr.bf16.mxu0 0
    %2480 = vmatmul.mubr.bf16.gmra.mrb[0].mxu0 %v2431
    %v2481 = vpop.f32.mrb[0].mxu0
    %v2482 = vadd.f32 0.0, %v2481
    %v2483 = vpop.f32.mrb[0].mxu0
    %v2484 = vpop.f32.mrb[0].mxu0
    %v2485 = vadd.f32 0.0, %v2484
    %v2486 = vpop.f32.mrb[0].mxu0
    %2487 = vmatprep.mubr.bf16.mxu0 0
    %2488 = vmatmul.mubr.bf16.gmra.mrb[0].mxu0 %v2434
    %v2489 = vpop.f32.mrb[0].mxu0
    %v2490 = vadd.f32 0.0, %v2489
    %v2491 = vpop.f32.mrb[0].mxu0
    %v2492 = vpop.f32.mrb[0].mxu0
    %v2493 = vadd.f32 0.0, %v2492
    %v2494 = vpop.f32.mrb[0].mxu0
    %2495 = vmatprep.mubr.bf16.mxu0 0
    %2496 = vmatmul.mubr.bf16.gmra.mrb[0].mxu0 %v2437
    %v2497 = vpop.f32.mrb[0].mxu0
    %v2498 = vadd.f32 0.0, %v2497
    %v2499 = vpop.f32.mrb[0].mxu0
    %v2500 = vpop.f32.mrb[0].mxu0
    %v2501 = vadd.f32 0.0, %v2500
    %v2502 = vpop.f32.mrb[0].mxu0
    %2503 = vdwg.mxu0
    %2504 = vrot.lane.b32.xlu0 %v474, 56
    %v2505 = vpop.permute.xlu0 %2504
    %2506 = vrot.lane.b32.xlu0 %v475, 56
    %v2507 = vpop.permute.xlu0 %2506
    %2508 = vrot.lane.b32.xlu0 %v476, 56
    %v2509 = vpop.permute.xlu0 %2508
    %2510 = vrot.lane.b32.xlu0 %v477, 56
    %v2511 = vpop.permute.xlu0 %2510
    %2512 = vrot.lane.b32.xlu0 %v634, 56
    %v2513 = vpop.permute.xlu0 %2512
    %2514 = vrot.lane.b32.xlu0 %v635, 56
    %v2515 = vpop.permute.xlu0 %2514
    %2516 = vrot.lane.b32.xlu0 %v636, 56
    %v2517 = vpop.permute.xlu0 %2516
    %2518 = vrot.lane.b32.xlu0 %v637, 56
    %v2519 = vpop.permute.xlu0 %2518
    %v2521 = vsel %vm802, %v2505, 0
    %v2524 = vsel %vm802, %v2507, 0
    %v2527 = vsel %vm802, %v2509, 0
    %v2530 = vsel %vm802, %v2511, 0
    %v2533 = vsel %vm802, %v2513, 0
    %v2536 = vsel %vm802, %v2515, 0
    %v2539 = vsel %vm802, %v2517, 0
    %v2542 = vsel %vm802, %v2519, 0
    %2544 = vmatprep.subr.bf16.mxu0 0
    %2545 = vmatpush1.bf16.xpose.msra.mxu0 %v2533
    %2546 = vmatprep.subr.bf16.mxu0 0
    %2547 = vmatpush1.bf16.xpose.msra.mxu0 %v2536
    %2548 = vmatprep.subr.bf16.mxu0 0
    %2549 = vmatpush1.bf16.xpose.msra.mxu0 %v2539
    %2550 = vmatprep.subr.bf16.mxu0 0
    %2551 = vmatpush1.bf16.xpose.msra.mxu0 %v2542
    %2552 = vmatprep.subr.bf16.mxu0 0
    %2553 = vmatpush1.bf16.xpose.msra.mxu0 0
    %2554 = vmatprep.subr.bf16.mxu0 0
    %2555 = vmatpush1.bf16.xpose.msra.mxu0 0
    %2556 = vmatprep.subr.bf16.mxu0 0
    %2557 = vmatpush1.bf16.xpose.msra.mxu0 0
    %2558 = vmatprep.subr.bf16.mxu0 0
    %2559 = vmatpush1.bf16.xpose.msra.mxu0 0
    %2560 = vmatprep.subr.bf16.mxu0 0
    %2561 = vmatpush1.bf16.xpose.msra.mxu0 0
    %2562 = vmatprep.subr.bf16.mxu0 0
    %2563 = vmatpush1.bf16.xpose.msra.mxu0 0
    %2564 = vmatprep.subr.bf16.mxu0 0
    %2565 = vmatpush1.bf16.xpose.msra.mxu0 0
    %2566 = vmatprep.subr.bf16.mxu0 0
    %2567 = vmatpush1.bf16.xpose.msra.mxu0 0
    %2568 = vmatprep.subr.bf16.mxu0 0
    %2569 = vmatpush1.bf16.xpose.msra.mxu0 0
    %2570 = vmatprep.subr.bf16.mxu0 0
    %2571 = vmatpush1.bf16.xpose.msra.mxu0 0
    %2572 = vmatprep.subr.bf16.mxu0 0
    %2573 = vmatpush1.bf16.xpose.msra.mxu0 0
    %2574 = vmatprep.subr.bf16.mxu0 0
    %2575 = vmatpush1.bf16.xpose.msra.mxu0 0
    %2576 = vmatprep.mubr.bf16.mxu0 0
    %2577 = vmatmul.mubr.bf16.gmra.mrb[0].mxu0 %v2521
    %v2578 = vpop.f32.mrb[0].mxu0
    %v2579 = vadd.f32 0.0, %v2578
    %v2580 = vpop.f32.mrb[0].mxu0
    %v2581 = vpop.f32.mrb[0].mxu0
    %v2582 = vadd.f32 0.0, %v2581
    %v2583 = vpop.f32.mrb[0].mxu0
    %2584 = vmatprep.mubr.bf16.mxu0 0
    %2585 = vmatmul.mubr.bf16.gmra.mrb[0].mxu0 %v2524
    %v2586 = vpop.f32.mrb[0].mxu0
    %v2587 = vadd.f32 0.0, %v2586
    %v2588 = vpop.f32.mrb[0].mxu0
    %v2589 = vpop.f32.mrb[0].mxu0
    %v2590 = vadd.f32 0.0, %v2589
    %v2591 = vpop.f32.mrb[0].mxu0
    %2592 = vmatprep.mubr.bf16.mxu0 0
    %2593 = vmatmul.mubr.bf16.gmra.mrb[0].mxu0 %v2527
    %v2594 = vpop.f32.mrb[0].mxu0
    %v2595 = vadd.f32 0.0, %v2594
    %v2596 = vpop.f32.mrb[0].mxu0
    %v2597 = vpop.f32.mrb[0].mxu0
    %v2598 = vadd.f32 0.0, %v2597
    %v2599 = vpop.f32.mrb[0].mxu0
    %2600 = vmatprep.mubr.bf16.mxu0 0
    %2601 = vmatmul.mubr.bf16.gmra.mrb[0].mxu0 %v2530
    %v2602 = vpop.f32.mrb[0].mxu0
    %v2603 = vadd.f32 0.0, %v2602
    %v2604 = vpop.f32.mrb[0].mxu0
    %v2605 = vpop.f32.mrb[0].mxu0
    %v2606 = vadd.f32 0.0, %v2605
    %v2607 = vpop.f32.mrb[0].mxu0
    %2608 = vdwg.mxu0
    %v2609 = vsel %vm892, %v2579, -inf
    %2610 = vmax.xlane.f32.xlu0 %v2609
    %v2611 = vpop.xlane.xlu0 %2610
    %v2612 = vsel %vm892, %v2582, -inf
    %2613 = vmax.xlane.f32.xlu0 %v2612
    %v2614 = vpop.xlane.xlu0 %2613
    %v2615 = vsel %vm892, %v2587, -inf
    %2616 = vmax.xlane.f32.xlu0 %v2615
    %v2617 = vpop.xlane.xlu0 %2616
    %v2618 = vsel %vm892, %v2590, -inf
    %2619 = vmax.xlane.f32.xlu0 %v2618
    %v2620 = vpop.xlane.xlu0 %2619
    %v2621 = vsel %vm892, %v2595, -inf
    %2622 = vmax.xlane.f32.xlu0 %v2621
    %v2623 = vpop.xlane.xlu0 %2622
    %v2624 = vsel %vm892, %v2598, -inf
    %2625 = vmax.xlane.f32.xlu0 %v2624
    %v2626 = vpop.xlane.xlu0 %2625
    %v2627 = vsel %vm892, %v2603, -inf
    %2628 = vmax.xlane.f32.xlu0 %v2627
    %v2629 = vpop.xlane.xlu0 %2628
    %v2630 = vsel %vm892, %v2606, -inf
    %2631 = vmax.xlane.f32.xlu0 %v2630
    %v2632 = vpop.xlane.xlu0 %2631
    %v2633 = vsub.f32 %v2579, %v2611
    %v2634 = vsub.f32 %v2582, %v2614
    %v2635 = vsub.f32 %v2587, %v2617
    %v2636 = vsub.f32 %v2590, %v2620
    %v2637 = vsub.f32 %v2595, %v2623
    %v2638 = vsub.f32 %v2598, %v2626
    %v2639 = vsub.f32 %v2603, %v2629
    %v2640 = vsub.f32 %v2606, %v2632
    %v2641 = vmul.f32 %v2633, 1.442695
    %v2642 = vpow.pop %v2641
    %v2643 = vmul.f32 %v2634, 1.442695
    %v2644 = vpow.pop %v2643
    %v2645 = vmul.f32 %v2635, 1.442695
    %v2646 = vpow.pop %v2645
    %v2647 = vmul.f32 %v2636, 1.442695
    %v2648 = vpow.pop %v2647
    %v2649 = vmul.f32 %v2637, 1.442695
    %v2650 = vpow.pop %v2649
    %v2651 = vmul.f32 %v2638, 1.442695
    %v2652 = vpow.pop %v2651
    %v2653 = vmul.f32 %v2639, 1.442695
    %v2654 = vpow.pop %v2653
    %v2655 = vmul.f32 %v2640, 1.442695
    %v2656 = vpow.pop %v2655
    %v2657 = vsel %vm892, %v2642, 0.0
    %2658 = vadd.xlane.f32.xlu0 %v2657
    %v2659 = vpop.xlane.xlu0 %2658
    %v2660 = vsel %vm892, %v2644, 0.0
    %2661 = vadd.xlane.f32.xlu0 %v2660
    %v2662 = vpop.xlane.xlu0 %2661
    %v2663 = vsel %vm892, %v2646, 0.0
    %2664 = vadd.xlane.f32.xlu0 %v2663
    %v2665 = vpop.xlane.xlu0 %2664
    %v2666 = vsel %vm892, %v2648, 0.0
    %2667 = vadd.xlane.f32.xlu0 %v2666
    %v2668 = vpop.xlane.xlu0 %2667
    %v2669 = vsel %vm892, %v2650, 0.0
    %2670 = vadd.xlane.f32.xlu0 %v2669
    %v2671 = vpop.xlane.xlu0 %2670
    %v2672 = vsel %vm892, %v2652, 0.0
    %2673 = vadd.xlane.f32.xlu0 %v2672
    %v2674 = vpop.xlane.xlu0 %2673
    %v2675 = vsel %vm892, %v2654, 0.0
    %2676 = vadd.xlane.f32.xlu0 %v2675
    %v2677 = vpop.xlane.xlu0 %2676
    %v2678 = vsel %vm892, %v2656, 0.0
    %2679 = vadd.xlane.f32.xlu0 %v2678
    %v2680 = vpop.xlane.xlu0 %2679
    %v2681 = vrcp.pop %v2659
    %v2682 = vrcp.pop %v2662
    %v2683 = vrcp.pop %v2665
    %v2684 = vrcp.pop %v2668
    %v2685 = vrcp.pop %v2671
    %v2686 = vrcp.pop %v2674
    %v2687 = vrcp.pop %v2677
    %v2688 = vrcp.pop %v2680
    %v2689 = vmul.f32 %v2642, %v2681
    %v2690 = vmul.f32 %v2644, %v2682
    %v2691 = vmul.f32 %v2646, %v2683
    %v2692 = vmul.f32 %v2648, %v2684
    %v2693 = vmul.f32 %v2650, %v2685
    %v2694 = vmul.f32 %v2652, %v2686
    %v2695 = vmul.f32 %v2654, %v2687
    %v2696 = vmul.f32 %v2656, %v2688
    %v2697 = vpack.c.bf16 %v2690, %v2689
    %v2698 = vpack.c.bf16 %v2692, %v2691
    %v2699 = vpack.c.bf16 %v2694, %v2693
    %v2700 = vpack.c.bf16 %v2696, %v2695
    %2701 = vrot.lane.b32.xlu0 %v794, 56
    %v2702 = vpop.permute.xlu0 %2701
    %2703 = vrot.lane.b32.xlu0 %v795, 56
    %v2704 = vpop.permute.xlu0 %2703
    %2705 = vrot.lane.b32.xlu0 %v796, 56
    %v2706 = vpop.permute.xlu0 %2705
    %2707 = vrot.lane.b32.xlu0 %v797, 56
    %v2708 = vpop.permute.xlu0 %2707
    %v2714 = vsel %vm892, %v2697, 0
    %v2717 = vsel %vm892, %v2698, 0
    %v2720 = vsel %vm892, %v2699, 0
    %v2723 = vsel %vm892, %v2700, 0
    %2725 = vmatprep.subr.bf16.mxu0 0
    %2726 = vmatpush1.bf16.msra.mxu0 %v2702
    %2727 = vmatprep.subr.bf16.mxu0 0
    %2728 = vmatpush1.bf16.msra.mxu0 %v2704
    %2729 = vmatprep.subr.bf16.mxu0 0
    %2730 = vmatpush1.bf16.msra.mxu0 %v2706
    %2731 = vmatprep.subr.bf16.mxu0 0
    %2732 = vmatpush1.bf16.msra.mxu0 %v2708
    %2733 = vmatprep.subr.bf16.mxu0 0
    %2734 = vmatpush1.bf16.msra.mxu0 0
    %2735 = vmatprep.subr.bf16.mxu0 0
    %2736 = vmatpush1.bf16.msra.mxu0 0
    %2737 = vmatprep.subr.bf16.mxu0 0
    %2738 = vmatpush1.bf16.msra.mxu0 0
    %2739 = vmatprep.subr.bf16.mxu0 0
    %2740 = vmatpush1.bf16.msra.mxu0 0
    %2741 = vmatprep.subr.bf16.mxu0 0
    %2742 = vmatpush1.bf16.msra.mxu0 0
    %2743 = vmatprep.subr.bf16.mxu0 0
    %2744 = vmatpush1.bf16.msra.mxu0 0
    %2745 = vmatprep.subr.bf16.mxu0 0
    %2746 = vmatpush1.bf16.msra.mxu0 0
    %2747 = vmatprep.subr.bf16.mxu0 0
    %2748 = vmatpush1.bf16.msra.mxu0 0
    %2749 = vmatprep.subr.bf16.mxu0 0
    %2750 = vmatpush1.bf16.msra.mxu0 0
    %2751 = vmatprep.subr.bf16.mxu0 0
    %2752 = vmatpush1.bf16.msra.mxu0 0
    %2753 = vmatprep.subr.bf16.mxu0 0
    %2754 = vmatpush1.bf16.msra.mxu0 0
    %2755 = vmatprep.subr.bf16.mxu0 0
    %2756 = vmatpush1.bf16.msra.mxu0 0
    %2757 = vmatprep.mubr.bf16.mxu0 0
    %2758 = vmatmul.mubr.bf16.gmra.mrb[0].mxu0 %v2714
    %v2759 = vpop.f32.mrb[0].mxu0
    %v2760 = vadd.f32 0.0, %v2759
    %v2761 = vpop.f32.mrb[0].mxu0
    %v2762 = vpop.f32.mrb[0].mxu0
    %v2763 = vadd.f32 0.0, %v2762
    %v2764 = vpop.f32.mrb[0].mxu0
    %2765 = vmatprep.mubr.bf16.mxu0 0
    %2766 = vmatmul.mubr.bf16.gmra.mrb[0].mxu0 %v2717
    %v2767 = vpop.f32.mrb[0].mxu0
    %v2768 = vadd.f32 0.0, %v2767
    %v2769 = vpop.f32.mrb[0].mxu0
    %v2770 = vpop.f32.mrb[0].mxu0
    %v2771 = vadd.f32 0.0, %v2770
    %v2772 = vpop.f32.mrb[0].mxu0
    %2773 = vmatprep.mubr.bf16.mxu0 0
    %2774 = vmatmul.mubr.bf16.gmra.mrb[0].mxu0 %v2720
    %v2775 = vpop.f32.mrb[0].mxu0
    %v2776 = vadd.f32 0.0, %v2775
    %v2777 = vpop.f32.mrb[0].mxu0
    %v2778 = vpop.f32.mrb[0].mxu0
    %v2779 = vadd.f32 0.0, %v2778
    %v2780 = vpop.f32.mrb[0].mxu0
    %2781 = vmatprep.mubr.bf16.mxu0 0
    %2782 = vmatmul.mubr.bf16.gmra.mrb[0].mxu0 %v2723
    %v2783 = vpop.f32.mrb[0].mxu0
    %v2784 = vadd.f32 0.0, %v2783
    %v2785 = vpop.f32.mrb[0].mxu0
    %v2786 = vpop.f32.mrb[0].mxu0
    %v2787 = vadd.f32 0.0, %v2786
    %v2788 = vpop.f32.mrb[0].mxu0
    %2789 = vdwg.mxu0
    %2790 = vrot.lane.b32.xlu0 %v474, 44
    %v2791 = vpop.permute.xlu0 %2790
    %2792 = vrot.lane.b32.xlu0 %v475, 44
    %v2793 = vpop.permute.xlu0 %2792
    %2794 = vrot.lane.b32.xlu0 %v476, 44
    %v2795 = vpop.permute.xlu0 %2794
    %2796 = vrot.lane.b32.xlu0 %v477, 44
    %v2797 = vpop.permute.xlu0 %2796
    %2798 = vrot.lane.b32.xlu0 %v634, 44
    %v2799 = vpop.permute.xlu0 %2798
    %2800 = vrot.lane.b32.xlu0 %v635, 44
    %v2801 = vpop.permute.xlu0 %2800
    %2802 = vrot.lane.b32.xlu0 %v636, 44
    %v2803 = vpop.permute.xlu0 %2802
    %2804 = vrot.lane.b32.xlu0 %v637, 44
    %v2805 = vpop.permute.xlu0 %2804
    %v2807 = vsel %vm802, %v2791, 0
    %v2810 = vsel %vm802, %v2793, 0
    %v2813 = vsel %vm802, %v2795, 0
    %v2816 = vsel %vm802, %v2797, 0
    %v2819 = vsel %vm802, %v2799, 0
    %v2822 = vsel %vm802, %v2801, 0
    %v2825 = vsel %vm802, %v2803, 0
    %v2828 = vsel %vm802, %v2805, 0
    %2830 = vmatprep.subr.bf16.mxu0 0
    %2831 = vmatpush1.bf16.xpose.msra.mxu0 %v2819
    %2832 = vmatprep.subr.bf16.mxu0 0
    %2833 = vmatpush1.bf16.xpose.msra.mxu0 %v2822
    %2834 = vmatprep.subr.bf16.mxu0 0
    %2835 = vmatpush1.bf16.xpose.msra.mxu0 %v2825
    %2836 = vmatprep.subr.bf16.mxu0 0
    %2837 = vmatpush1.bf16.xpose.msra.mxu0 %v2828
    %2838 = vmatprep.subr.bf16.mxu0 0
    %2839 = vmatpush1.bf16.xpose.msra.mxu0 0
    %2840 = vmatprep.subr.bf16.mxu0 0
    %2841 = vmatpush1.bf16.xpose.msra.mxu0 0
    %2842 = vmatprep.subr.bf16.mxu0 0
    %2843 = vmatpush1.bf16.xpose.msra.mxu0 0
    %2844 = vmatprep.subr.bf16.mxu0 0
    %2845 = vmatpush1.bf16.xpose.msra.mxu0 0
    %2846 = vmatprep.subr.bf16.mxu0 0
    %2847 = vmatpush1.bf16.xpose.msra.mxu0 0
    %2848 = vmatprep.subr.bf16.mxu0 0
    %2849 = vmatpush1.bf16.xpose.msra.mxu0 0
    %2850 = vmatprep.subr.bf16.mxu0 0
    %2851 = vmatpush1.bf16.xpose.msra.mxu0 0
    %2852 = vmatprep.subr.bf16.mxu0 0
    %2853 = vmatpush1.bf16.xpose.msra.mxu0 0
    %2854 = vmatprep.subr.bf16.mxu0 0
    %2855 = vmatpush1.bf16.xpose.msra.mxu0 0
    %2856 = vmatprep.subr.bf16.mxu0 0
    %2857 = vmatpush1.bf16.xpose.msra.mxu0 0
    %2858 = vmatprep.subr.bf16.mxu0 0
    %2859 = vmatpush1.bf16.xpose.msra.mxu0 0
    %2860 = vmatprep.subr.bf16.mxu0 0
    %2861 = vmatpush1.bf16.xpose.msra.mxu0 0
    %2862 = vmatprep.mubr.bf16.mxu0 0
    %2863 = vmatmul.mubr.bf16.gmra.mrb[0].mxu0 %v2807
    %v2864 = vpop.f32.mrb[0].mxu0
    %v2865 = vadd.f32 0.0, %v2864
    %v2866 = vpop.f32.mrb[0].mxu0
    %v2867 = vpop.f32.mrb[0].mxu0
    %v2868 = vadd.f32 0.0, %v2867
    %v2869 = vpop.f32.mrb[0].mxu0
    %2870 = vmatprep.mubr.bf16.mxu0 0
    %2871 = vmatmul.mubr.bf16.gmra.mrb[0].mxu0 %v2810
    %v2872 = vpop.f32.mrb[0].mxu0
    %v2873 = vadd.f32 0.0, %v2872
    %v2874 = vpop.f32.mrb[0].mxu0
    %v2875 = vpop.f32.mrb[0].mxu0
    %v2876 = vadd.f32 0.0, %v2875
    %v2877 = vpop.f32.mrb[0].mxu0
    %2878 = vmatprep.mubr.bf16.mxu0 0
    %2879 = vmatmul.mubr.bf16.gmra.mrb[0].mxu0 %v2813
    %v2880 = vpop.f32.mrb[0].mxu0
    %v2881 = vadd.f32 0.0, %v2880
    %v2882 = vpop.f32.mrb[0].mxu0
    %v2883 = vpop.f32.mrb[0].mxu0
    %v2884 = vadd.f32 0.0, %v2883
    %v2885 = vpop.f32.mrb[0].mxu0
    %2886 = vmatprep.mubr.bf16.mxu0 0
    %2887 = vmatmul.mubr.bf16.gmra.mrb[0].mxu0 %v2816
    %v2888 = vpop.f32.mrb[0].mxu0
    %v2889 = vadd.f32 0.0, %v2888
    %v2890 = vpop.f32.mrb[0].mxu0
    %v2891 = vpop.f32.mrb[0].mxu0
    %v2892 = vadd.f32 0.0, %v2891
    %v2893 = vpop.f32.mrb[0].mxu0
    %2894 = vdwg.mxu0
    %v2895 = vsel %vm892, %v2865, -inf
    %2896 = vmax.xlane.f32.xlu0 %v2895
    %v2897 = vpop.xlane.xlu0 %2896
    %v2898 = vsel %vm892, %v2868, -inf
    %2899 = vmax.xlane.f32.xlu0 %v2898
    %v2900 = vpop.xlane.xlu0 %2899
    %v2901 = vsel %vm892, %v2873, -inf
    %2902 = vmax.xlane.f32.xlu0 %v2901
    %v2903 = vpop.xlane.xlu0 %2902
    %v2904 = vsel %vm892, %v2876, -inf
    %2905 = vmax.xlane.f32.xlu0 %v2904
    %v2906 = vpop.xlane.xlu0 %2905
    %v2907 = vsel %vm892, %v2881, -inf
    %2908 = vmax.xlane.f32.xlu0 %v2907
    %v2909 = vpop.xlane.xlu0 %2908
    %v2910 = vsel %vm892, %v2884, -inf
    %2911 = vmax.xlane.f32.xlu0 %v2910
    %v2912 = vpop.xlane.xlu0 %2911
    %v2913 = vsel %vm892, %v2889, -inf
    %2914 = vmax.xlane.f32.xlu0 %v2913
    %v2915 = vpop.xlane.xlu0 %2914
    %v2916 = vsel %vm892, %v2892, -inf
    %2917 = vmax.xlane.f32.xlu0 %v2916
    %v2918 = vpop.xlane.xlu0 %2917
    %v2919 = vsub.f32 %v2865, %v2897
    %v2920 = vsub.f32 %v2868, %v2900
    %v2921 = vsub.f32 %v2873, %v2903
    %v2922 = vsub.f32 %v2876, %v2906
    %v2923 = vsub.f32 %v2881, %v2909
    %v2924 = vsub.f32 %v2884, %v2912
    %v2925 = vsub.f32 %v2889, %v2915
    %v2926 = vsub.f32 %v2892, %v2918
    %v2927 = vmul.f32 %v2919, 1.442695
    %v2928 = vpow.pop %v2927
    %v2929 = vmul.f32 %v2920, 1.442695
    %v2930 = vpow.pop %v2929
    %v2931 = vmul.f32 %v2921, 1.442695
    %v2932 = vpow.pop %v2931
    %v2933 = vmul.f32 %v2922, 1.442695
    %v2934 = vpow.pop %v2933
    %v2935 = vmul.f32 %v2923, 1.442695
    %v2936 = vpow.pop %v2935
    %v2937 = vmul.f32 %v2924, 1.442695
    %v2938 = vpow.pop %v2937
    %v2939 = vmul.f32 %v2925, 1.442695
    %v2940 = vpow.pop %v2939
    %v2941 = vmul.f32 %v2926, 1.442695
    %v2942 = vpow.pop %v2941
    %v2943 = vsel %vm892, %v2928, 0.0
    %2944 = vadd.xlane.f32.xlu0 %v2943
    %v2945 = vpop.xlane.xlu0 %2944
    %v2946 = vsel %vm892, %v2930, 0.0
    %2947 = vadd.xlane.f32.xlu0 %v2946
    %v2948 = vpop.xlane.xlu0 %2947
    %v2949 = vsel %vm892, %v2932, 0.0
    %2950 = vadd.xlane.f32.xlu0 %v2949
    %v2951 = vpop.xlane.xlu0 %2950
    %v2952 = vsel %vm892, %v2934, 0.0
    %2953 = vadd.xlane.f32.xlu0 %v2952
    %v2954 = vpop.xlane.xlu0 %2953
    %v2955 = vsel %vm892, %v2936, 0.0
    %2956 = vadd.xlane.f32.xlu0 %v2955
    %v2957 = vpop.xlane.xlu0 %2956
    %v2958 = vsel %vm892, %v2938, 0.0
    %2959 = vadd.xlane.f32.xlu0 %v2958
    %v2960 = vpop.xlane.xlu0 %2959
    %v2961 = vsel %vm892, %v2940, 0.0
    %2962 = vadd.xlane.f32.xlu0 %v2961
    %v2963 = vpop.xlane.xlu0 %2962
    %v2964 = vsel %vm892, %v2942, 0.0
    %2965 = vadd.xlane.f32.xlu0 %v2964
    %v2966 = vpop.xlane.xlu0 %2965
    %v2967 = vrcp.pop %v2945
    %v2968 = vrcp.pop %v2948
    %v2969 = vrcp.pop %v2951
    %v2970 = vrcp.pop %v2954
    %v2971 = vrcp.pop %v2957
    %v2972 = vrcp.pop %v2960
    %v2973 = vrcp.pop %v2963
    %v2974 = vrcp.pop %v2966
    %v2975 = vmul.f32 %v2928, %v2967
    %v2976 = vmul.f32 %v2930, %v2968
    %v2977 = vmul.f32 %v2932, %v2969
    %v2978 = vmul.f32 %v2934, %v2970
    %v2979 = vmul.f32 %v2936, %v2971
    %v2980 = vmul.f32 %v2938, %v2972
    %v2981 = vmul.f32 %v2940, %v2973
    %v2982 = vmul.f32 %v2942, %v2974
    %v2983 = vpack.c.bf16 %v2976, %v2975
    %v2984 = vpack.c.bf16 %v2978, %v2977
    %v2985 = vpack.c.bf16 %v2980, %v2979
    %v2986 = vpack.c.bf16 %v2982, %v2981
    %2987 = vrot.lane.b32.xlu0 %v794, 44
    %v2988 = vpop.permute.xlu0 %2987
    %2989 = vrot.lane.b32.xlu0 %v795, 44
    %v2990 = vpop.permute.xlu0 %2989
    %2991 = vrot.lane.b32.xlu0 %v796, 44
    %v2992 = vpop.permute.xlu0 %2991
    %2993 = vrot.lane.b32.xlu0 %v797, 44
    %v2994 = vpop.permute.xlu0 %2993
    %v3000 = vsel %vm892, %v2983, 0
    %v3003 = vsel %vm892, %v2984, 0
    %v3006 = vsel %vm892, %v2985, 0
    %v3009 = vsel %vm892, %v2986, 0
    %3011 = vmatprep.subr.bf16.mxu0 0
    %3012 = vmatpush1.bf16.msra.mxu0 %v2988
    %3013 = vmatprep.subr.bf16.mxu0 0
    %3014 = vmatpush1.bf16.msra.mxu0 %v2990
    %3015 = vmatprep.subr.bf16.mxu0 0
    %3016 = vmatpush1.bf16.msra.mxu0 %v2992
    %3017 = vmatprep.subr.bf16.mxu0 0
    %3018 = vmatpush1.bf16.msra.mxu0 %v2994
    %3019 = vmatprep.subr.bf16.mxu0 0
    %3020 = vmatpush1.bf16.msra.mxu0 0
    %3021 = vmatprep.subr.bf16.mxu0 0
    %3022 = vmatpush1.bf16.msra.mxu0 0
    %3023 = vmatprep.subr.bf16.mxu0 0
    %3024 = vmatpush1.bf16.msra.mxu0 0
    %3025 = vmatprep.subr.bf16.mxu0 0
    %3026 = vmatpush1.bf16.msra.mxu0 0
    %3027 = vmatprep.subr.bf16.mxu0 0
    %3028 = vmatpush1.bf16.msra.mxu0 0
    %3029 = vmatprep.subr.bf16.mxu0 0
    %3030 = vmatpush1.bf16.msra.mxu0 0
    %3031 = vmatprep.subr.bf16.mxu0 0
    %3032 = vmatpush1.bf16.msra.mxu0 0
    %3033 = vmatprep.subr.bf16.mxu0 0
    %3034 = vmatpush1.bf16.msra.mxu0 0
    %3035 = vmatprep.subr.bf16.mxu0 0
    %3036 = vmatpush1.bf16.msra.mxu0 0
    %3037 = vmatprep.subr.bf16.mxu0 0
    %3038 = vmatpush1.bf16.msra.mxu0 0
    %3039 = vmatprep.subr.bf16.mxu0 0
    %3040 = vmatpush1.bf16.msra.mxu0 0
    %3041 = vmatprep.subr.bf16.mxu0 0
    %3042 = vmatpush1.bf16.msra.mxu0 0
    %3043 = vmatprep.mubr.bf16.mxu0 0
    %3044 = vmatmul.mubr.bf16.gmra.mrb[0].mxu0 %v3000
    %v3045 = vpop.f32.mrb[0].mxu0
    %v3046 = vadd.f32 0.0, %v3045
    %v3047 = vpop.f32.mrb[0].mxu0
    %v3048 = vpop.f32.mrb[0].mxu0
    %v3049 = vadd.f32 0.0, %v3048
    %v3050 = vpop.f32.mrb[0].mxu0
    %3051 = vmatprep.mubr.bf16.mxu0 0
    %3052 = vmatmul.mubr.bf16.gmra.mrb[0].mxu0 %v3003
    %v3053 = vpop.f32.mrb[0].mxu0
    %v3054 = vadd.f32 0.0, %v3053
    %v3055 = vpop.f32.mrb[0].mxu0
    %v3056 = vpop.f32.mrb[0].mxu0
    %v3057 = vadd.f32 0.0, %v3056
    %v3058 = vpop.f32.mrb[0].mxu0
    %3059 = vmatprep.mubr.bf16.mxu0 0
    %3060 = vmatmul.mubr.bf16.gmra.mrb[0].mxu0 %v3006
    %v3061 = vpop.f32.mrb[0].mxu0
    %v3062 = vadd.f32 0.0, %v3061
    %v3063 = vpop.f32.mrb[0].mxu0
    %v3064 = vpop.f32.mrb[0].mxu0
    %v3065 = vadd.f32 0.0, %v3064
    %v3066 = vpop.f32.mrb[0].mxu0
    %3067 = vmatprep.mubr.bf16.mxu0 0
    %3068 = vmatmul.mubr.bf16.gmra.mrb[0].mxu0 %v3009
    %v3069 = vpop.f32.mrb[0].mxu0
    %v3070 = vadd.f32 0.0, %v3069
    %v3071 = vpop.f32.mrb[0].mxu0
    %v3072 = vpop.f32.mrb[0].mxu0
    %v3073 = vadd.f32 0.0, %v3072
    %v3074 = vpop.f32.mrb[0].mxu0
    %3075 = vdwg.mxu0
    %3084 = vrot.lane.b32.xlu0 %v1330, 12
    %v3085 = vpop.permute.xlu0 %3084
    %3086 = vrot.lane.b32.xlu0 %v1333, 12
    %v3087 = vpop.permute.xlu0 %3086
    %3088 = vrot.lane.b32.xlu0 %v1338, 12
    %v3089 = vpop.permute.xlu0 %3088
    %3090 = vrot.lane.b32.xlu0 %v1341, 12
    %v3091 = vpop.permute.xlu0 %3090
    %3092 = vrot.lane.b32.xlu0 %v1346, 12
    %v3093 = vpop.permute.xlu0 %3092
    %3094 = vrot.lane.b32.xlu0 %v1349, 12
    %v3095 = vpop.permute.xlu0 %3094
    %3096 = vrot.lane.b32.xlu0 %v1354, 12
    %v3097 = vpop.permute.xlu0 %3096
    %3098 = vrot.lane.b32.xlu0 %v1357, 12
    %v3099 = vpop.permute.xlu0 %3098
    %3116 = vrot.lane.b32.xlu0 %v1616, 24
    %v3117 = vpop.permute.xlu0 %3116
    %3118 = vrot.lane.b32.xlu0 %v1619, 24
    %v3119 = vpop.permute.xlu0 %3118
    %3120 = vrot.lane.b32.xlu0 %v1624, 24
    %v3121 = vpop.permute.xlu0 %3120
    %3122 = vrot.lane.b32.xlu0 %v1627, 24
    %v3123 = vpop.permute.xlu0 %3122
    %3124 = vrot.lane.b32.xlu0 %v1632, 24
    %v3125 = vpop.permute.xlu0 %3124
    %3126 = vrot.lane.b32.xlu0 %v1635, 24
    %v3127 = vpop.permute.xlu0 %3126
    %3128 = vrot.lane.b32.xlu0 %v1640, 24
    %v3129 = vpop.permute.xlu0 %3128
    %3130 = vrot.lane.b32.xlu0 %v1643, 24
    %v3131 = vpop.permute.xlu0 %3130
    %3148 = vrot.lane.b32.xlu0 %v1902, 36
    %v3149 = vpop.permute.xlu0 %3148
    %3150 = vrot.lane.b32.xlu0 %v1905, 36
    %v3151 = vpop.permute.xlu0 %3150
    %3152 = vrot.lane.b32.xlu0 %v1910, 36
    %v3153 = vpop.permute.xlu0 %3152
    %3154 = vrot.lane.b32.xlu0 %v1913, 36
    %v3155 = vpop.permute.xlu0 %3154
    %3156 = vrot.lane.b32.xlu0 %v1918, 36
    %v3157 = vpop.permute.xlu0 %3156
    %3158 = vrot.lane.b32.xlu0 %v1921, 36
    %v3159 = vpop.permute.xlu0 %3158
    %3160 = vrot.lane.b32.xlu0 %v1926, 36
    %v3161 = vpop.permute.xlu0 %3160
    %3162 = vrot.lane.b32.xlu0 %v1929, 36
    %v3163 = vpop.permute.xlu0 %3162
    %3180 = vrot.lane.b32.xlu0 %v2188, 48
    %v3181 = vpop.permute.xlu0 %3180
    %3182 = vrot.lane.b32.xlu0 %v2191, 48
    %v3183 = vpop.permute.xlu0 %3182
    %3184 = vrot.lane.b32.xlu0 %v2196, 48
    %v3185 = vpop.permute.xlu0 %3184
    %3186 = vrot.lane.b32.xlu0 %v2199, 48
    %v3187 = vpop.permute.xlu0 %3186
    %3188 = vrot.lane.b32.xlu0 %v2204, 48
    %v3189 = vpop.permute.xlu0 %3188
    %3190 = vrot.lane.b32.xlu0 %v2207, 48
    %v3191 = vpop.permute.xlu0 %3190
    %3192 = vrot.lane.b32.xlu0 %v2212, 48
    %v3193 = vpop.permute.xlu0 %3192
    %3194 = vrot.lane.b32.xlu0 %v2215, 48
    %v3195 = vpop.permute.xlu0 %3194
    %3212 = vrot.lane.b32.xlu0 %v2474, 60
    %v3213 = vpop.permute.xlu0 %3212
    %3214 = vrot.lane.b32.xlu0 %v2477, 60
    %v3215 = vpop.permute.xlu0 %3214
    %3216 = vrot.lane.b32.xlu0 %v2482, 60
    %v3217 = vpop.permute.xlu0 %3216
    %3218 = vrot.lane.b32.xlu0 %v2485, 60
    %v3219 = vpop.permute.xlu0 %3218
    %3220 = vrot.lane.b32.xlu0 %v2490, 60
    %v3221 = vpop.permute.xlu0 %3220
    %3222 = vrot.lane.b32.xlu0 %v2493, 60
    %v3223 = vpop.permute.xlu0 %3222
    %3224 = vrot.lane.b32.xlu0 %v2498, 60
    %v3225 = vpop.permute.xlu0 %3224
    %3226 = vrot.lane.b32.xlu0 %v2501, 60
    %v3227 = vpop.permute.xlu0 %3226
    %3244 = vrot.lane.b32.xlu0 %v2760, 72
    %v3245 = vpop.permute.xlu0 %3244
    %3246 = vrot.lane.b32.xlu0 %v2763, 72
    %v3247 = vpop.permute.xlu0 %3246
    %3248 = vrot.lane.b32.xlu0 %v2768, 72
    %v3249 = vpop.permute.xlu0 %3248
    %3250 = vrot.lane.b32.xlu0 %v2771, 72
    %v3251 = vpop.permute.xlu0 %3250
    %3252 = vrot.lane.b32.xlu0 %v2776, 72
    %v3253 = vpop.permute.xlu0 %3252
    %3254 = vrot.lane.b32.xlu0 %v2779, 72
    %v3255 = vpop.permute.xlu0 %3254
    %3256 = vrot.lane.b32.xlu0 %v2784, 72
    %v3257 = vpop.permute.xlu0 %3256
    %3258 = vrot.lane.b32.xlu0 %v2787, 72
    %v3259 = vpop.permute.xlu0 %3258
    %3276 = vrot.lane.b32.xlu0 %v3046, 84
    %v3277 = vpop.permute.xlu0 %3276
    %3278 = vrot.lane.b32.xlu0 %v3049, 84
    %v3279 = vpop.permute.xlu0 %3278
    %3280 = vrot.lane.b32.xlu0 %v3054, 84
    %v3281 = vpop.permute.xlu0 %3280
    %3282 = vrot.lane.b32.xlu0 %v3057, 84
    %v3283 = vpop.permute.xlu0 %3282
    %3284 = vrot.lane.b32.xlu0 %v3062, 84
    %v3285 = vpop.permute.xlu0 %3284
    %3286 = vrot.lane.b32.xlu0 %v3065, 84
    %v3287 = vpop.permute.xlu0 %3286
    %3288 = vrot.lane.b32.xlu0 %v3070, 84
    %v3289 = vpop.permute.xlu0 %3288
    %3290 = vrot.lane.b32.xlu0 %v3073, 84
    %v3291 = vpop.permute.xlu0 %3290
    %v3300 = vsel %vm802, %v1032, %v3085
    %v3301 = vsel %vm802, %v1035, %v3087
    %v3302 = vsel %vm802, %v1040, %v3089
    %v3303 = vsel %vm802, %v1043, %v3091
    %v3304 = vsel %vm802, %v1048, %v3093
    %v3305 = vsel %vm802, %v1051, %v3095
    %v3306 = vsel %vm802, %v1056, %v3097
    %v3307 = vsel %vm802, %v1059, %v3099
    %vm3308 = vcmask 195584
    %v3309 = vsel %vm3308, %v3300, %v3117
    %v3310 = vsel %vm3308, %v3301, %v3119
    %v3311 = vsel %vm3308, %v3302, %v3121
    %v3312 = vsel %vm3308, %v3303, %v3123
    %v3313 = vsel %vm3308, %v3304, %v3125
    %v3314 = vsel %vm3308, %v3305, %v3127
    %v3315 = vsel %vm3308, %v3306, %v3129
    %v3316 = vsel %vm3308, %v3307, %v3131
    %vm3317 = vcmask 293888
    %v3318 = vsel %vm3317, %v3309, %v3149
    %v3319 = vsel %vm3317, %v3310, %v3151
    %v3320 = vsel %vm3317, %v3311, %v3153
    %v3321 = vsel %vm3317, %v3312, %v3155
    %v3322 = vsel %vm3317, %v3313, %v3157
    %v3323 = vsel %vm3317, %v3314, %v3159
    %v3324 = vsel %vm3317, %v3315, %v3161
    %v3325 = vsel %vm3317, %v3316, %v3163
    %vm3326 = vcmask 392192
    %v3327 = vsel %vm3326, %v3318, %v3181
    %v3328 = vsel %vm3326, %v3319, %v3183
    %v3329 = vsel %vm3326, %v3320, %v3185
    %v3330 = vsel %vm3326, %v3321, %v3187
    %v3331 = vsel %vm3326, %v3322, %v3189
    %v3332 = vsel %vm3326, %v3323, %v3191
    %v3333 = vsel %vm3326, %v3324, %v3193
    %v3334 = vsel %vm3326, %v3325, %v3195
    %vm3335 = vcmask 490496
    %v3336 = vsel %vm3335, %v3327, %v3213
    %v3337 = vsel %vm3335, %v3328, %v3215
    %v3338 = vsel %vm3335, %v3329, %v3217
    %v3339 = vsel %vm3335, %v3330, %v3219
    %v3340 = vsel %vm3335, %v3331, %v3221
    %v3341 = vsel %vm3335, %v3332, %v3223
    %v3342 = vsel %vm3335, %v3333, %v3225
    %v3343 = vsel %vm3335, %v3334, %v3227
    %vm3344 = vcmask 588800
    %v3345 = vsel %vm3344, %v3336, %v3245
    %v3346 = vsel %vm3344, %v3337, %v3247
    %v3347 = vsel %vm3344, %v3338, %v3249
    %v3348 = vsel %vm3344, %v3339, %v3251
    %v3349 = vsel %vm3344, %v3340, %v3253
    %v3350 = vsel %vm3344, %v3341, %v3255
    %v3351 = vsel %vm3344, %v3342, %v3257
    %v3352 = vsel %vm3344, %v3343, %v3259
    %vm3353 = vcmask 687104
    %v3354 = vsel %vm3353, %v3345, %v3277
    %v3355 = vsel %vm3353, %v3346, %v3279
    %v3356 = vsel %vm3353, %v3347, %v3281
    %v3357 = vsel %vm3353, %v3348, %v3283
    %v3358 = vsel %vm3353, %v3349, %v3285
    %v3359 = vsel %vm3353, %v3350, %v3287
    %v3360 = vsel %vm3353, %v3351, %v3289
    %v3361 = vsel %vm3353, %v3352, %v3291
    %v3363 = vsel %vm802, %v478, 0
    %v3366 = vsel %vm802, %v479, 0
    %v3369 = vsel %vm802, %v480, 0
    %v3372 = vsel %vm802, %v481, 0
    %v3375 = vsel %vm802, %v638, 0
    %v3378 = vsel %vm802, %v639, 0
    %v3381 = vsel %vm802, %v640, 0
    %v3384 = vsel %vm802, %v641, 0
    %3386 = vmatprep.subr.bf16.mxu0 0
    %3387 = vmatpush1.bf16.xpose.msra.mxu0 %v3375
    %3388 = vmatprep.subr.bf16.mxu0 0
    %3389 = vmatpush1.bf16.xpose.msra.mxu0 %v3378
    %3390 = vmatprep.subr.bf16.mxu0 0
    %3391 = vmatpush1.bf16.xpose.msra.mxu0 %v3381
    %3392 = vmatprep.subr.bf16.mxu0 0
    %3393 = vmatpush1.bf16.xpose.msra.mxu0 %v3384
    %3394 = vmatprep.subr.bf16.mxu0 0
    %3395 = vmatpush1.bf16.xpose.msra.mxu0 0
    %3396 = vmatprep.subr.bf16.mxu0 0
    %3397 = vmatpush1.bf16.xpose.msra.mxu0 0
    %3398 = vmatprep.subr.bf16.mxu0 0
    %3399 = vmatpush1.bf16.xpose.msra.mxu0 0
    %3400 = vmatprep.subr.bf16.mxu0 0
    %3401 = vmatpush1.bf16.xpose.msra.mxu0 0
    %3402 = vmatprep.subr.bf16.mxu0 0
    %3403 = vmatpush1.bf16.xpose.msra.mxu0 0
    %3404 = vmatprep.subr.bf16.mxu0 0
    %3405 = vmatpush1.bf16.xpose.msra.mxu0 0
    %3406 = vmatprep.subr.bf16.mxu0 0
    %3407 = vmatpush1.bf16.xpose.msra.mxu0 0
    %3408 = vmatprep.subr.bf16.mxu0 0
    %3409 = vmatpush1.bf16.xpose.msra.mxu0 0
    %3410 = vmatprep.subr.bf16.mxu0 0
    %3411 = vmatpush1.bf16.xpose.msra.mxu0 0
    %3412 = vmatprep.subr.bf16.mxu0 0
    %3413 = vmatpush1.bf16.xpose.msra.mxu0 0
    %3414 = vmatprep.subr.bf16.mxu0 0
    %3415 = vmatpush1.bf16.xpose.msra.mxu0 0
    %3416 = vmatprep.subr.bf16.mxu0 0
    %3417 = vmatpush1.bf16.xpose.msra.mxu0 0
    %3418 = vmatprep.mubr.bf16.mxu0 0
    %3419 = vmatmul.mubr.bf16.gmra.mrb[0].mxu0 %v3363
    %v3420 = vpop.f32.mrb[0].mxu0
    %v3421 = vadd.f32 0.0, %v3420
    %v3422 = vpop.f32.mrb[0].mxu0
    %v3423 = vpop.f32.mrb[0].mxu0
    %v3424 = vadd.f32 0.0, %v3423
    %v3425 = vpop.f32.mrb[0].mxu0
    %3426 = vmatprep.mubr.bf16.mxu0 0
    %3427 = vmatmul.mubr.bf16.gmra.mrb[0].mxu0 %v3366
    %v3428 = vpop.f32.mrb[0].mxu0
    %v3429 = vadd.f32 0.0, %v3428
    %v3430 = vpop.f32.mrb[0].mxu0
    %v3431 = vpop.f32.mrb[0].mxu0
    %v3432 = vadd.f32 0.0, %v3431
    %v3433 = vpop.f32.mrb[0].mxu0
    %3434 = vmatprep.mubr.bf16.mxu0 0
    %3435 = vmatmul.mubr.bf16.gmra.mrb[0].mxu0 %v3369
    %v3436 = vpop.f32.mrb[0].mxu0
    %v3437 = vadd.f32 0.0, %v3436
    %v3438 = vpop.f32.mrb[0].mxu0
    %v3439 = vpop.f32.mrb[0].mxu0
    %v3440 = vadd.f32 0.0, %v3439
    %v3441 = vpop.f32.mrb[0].mxu0
    %3442 = vmatprep.mubr.bf16.mxu0 0
    %3443 = vmatmul.mubr.bf16.gmra.mrb[0].mxu0 %v3372
    %v3444 = vpop.f32.mrb[0].mxu0
    %v3445 = vadd.f32 0.0, %v3444
    %v3446 = vpop.f32.mrb[0].mxu0
    %v3447 = vpop.f32.mrb[0].mxu0
    %v3448 = vadd.f32 0.0, %v3447
    %v3449 = vpop.f32.mrb[0].mxu0
    %3450 = vdwg.mxu0
    %v3451 = vsel %vm892, %v3421, -inf
    %3452 = vmax.xlane.f32.xlu0 %v3451
    %v3453 = vpop.xlane.xlu0 %3452
    %v3454 = vsel %vm892, %v3424, -inf
    %3455 = vmax.xlane.f32.xlu0 %v3454
    %v3456 = vpop.xlane.xlu0 %3455
    %v3457 = vsel %vm892, %v3429, -inf
    %3458 = vmax.xlane.f32.xlu0 %v3457
    %v3459 = vpop.xlane.xlu0 %3458
    %v3460 = vsel %vm892, %v3432, -inf
    %3461 = vmax.xlane.f32.xlu0 %v3460
    %v3462 = vpop.xlane.xlu0 %3461
    %v3463 = vsel %vm892, %v3437, -inf
    %3464 = vmax.xlane.f32.xlu0 %v3463
    %v3465 = vpop.xlane.xlu0 %3464
    %v3466 = vsel %vm892, %v3440, -inf
    %3467 = vmax.xlane.f32.xlu0 %v3466
    %v3468 = vpop.xlane.xlu0 %3467
    %v3469 = vsel %vm892, %v3445, -inf
    %3470 = vmax.xlane.f32.xlu0 %v3469
    %v3471 = vpop.xlane.xlu0 %3470
    %v3472 = vsel %vm892, %v3448, -inf
    %3473 = vmax.xlane.f32.xlu0 %v3472
    %v3474 = vpop.xlane.xlu0 %3473
    %v3475 = vsub.f32 %v3421, %v3453
    %v3476 = vsub.f32 %v3424, %v3456
    %v3477 = vsub.f32 %v3429, %v3459
    %v3478 = vsub.f32 %v3432, %v3462
    %v3479 = vsub.f32 %v3437, %v3465
    %v3480 = vsub.f32 %v3440, %v3468
    %v3481 = vsub.f32 %v3445, %v3471
    %v3482 = vsub.f32 %v3448, %v3474
    %v3483 = vmul.f32 %v3475, 1.442695
    %v3484 = vpow.pop %v3483
    %v3485 = vmul.f32 %v3476, 1.442695
    %v3486 = vpow.pop %v3485
    %v3487 = vmul.f32 %v3477, 1.442695
    %v3488 = vpow.pop %v3487
    %v3489 = vmul.f32 %v3478, 1.442695
    %v3490 = vpow.pop %v3489
    %v3491 = vmul.f32 %v3479, 1.442695
    %v3492 = vpow.pop %v3491
    %v3493 = vmul.f32 %v3480, 1.442695
    %v3494 = vpow.pop %v3493
    %v3495 = vmul.f32 %v3481, 1.442695
    %v3496 = vpow.pop %v3495
    %v3497 = vmul.f32 %v3482, 1.442695
    %v3498 = vpow.pop %v3497
    %v3499 = vsel %vm892, %v3484, 0.0
    %3500 = vadd.xlane.f32.xlu0 %v3499
    %v3501 = vpop.xlane.xlu0 %3500
    %v3502 = vsel %vm892, %v3486, 0.0
    %3503 = vadd.xlane.f32.xlu0 %v3502
    %v3504 = vpop.xlane.xlu0 %3503
    %v3505 = vsel %vm892, %v3488, 0.0
    %3506 = vadd.xlane.f32.xlu0 %v3505
    %v3507 = vpop.xlane.xlu0 %3506
    %v3508 = vsel %vm892, %v3490, 0.0
    %3509 = vadd.xlane.f32.xlu0 %v3508
    %v3510 = vpop.xlane.xlu0 %3509
    %v3511 = vsel %vm892, %v3492, 0.0
    %3512 = vadd.xlane.f32.xlu0 %v3511
    %v3513 = vpop.xlane.xlu0 %3512
    %v3514 = vsel %vm892, %v3494, 0.0
    %3515 = vadd.xlane.f32.xlu0 %v3514
    %v3516 = vpop.xlane.xlu0 %3515
    %v3517 = vsel %vm892, %v3496, 0.0
    %3518 = vadd.xlane.f32.xlu0 %v3517
    %v3519 = vpop.xlane.xlu0 %3518
    %v3520 = vsel %vm892, %v3498, 0.0
    %3521 = vadd.xlane.f32.xlu0 %v3520
    %v3522 = vpop.xlane.xlu0 %3521
    %v3523 = vrcp.pop %v3501
    %v3524 = vrcp.pop %v3504
    %v3525 = vrcp.pop %v3507
    %v3526 = vrcp.pop %v3510
    %v3527 = vrcp.pop %v3513
    %v3528 = vrcp.pop %v3516
    %v3529 = vrcp.pop %v3519
    %v3530 = vrcp.pop %v3522
    %v3531 = vmul.f32 %v3484, %v3523
    %v3532 = vmul.f32 %v3486, %v3524
    %v3533 = vmul.f32 %v3488, %v3525
    %v3534 = vmul.f32 %v3490, %v3526
    %v3535 = vmul.f32 %v3492, %v3527
    %v3536 = vmul.f32 %v3494, %v3528
    %v3537 = vmul.f32 %v3496, %v3529
    %v3538 = vmul.f32 %v3498, %v3530
    %v3539 = vpack.c.bf16 %v3532, %v3531
    %v3540 = vpack.c.bf16 %v3534, %v3533
    %v3541 = vpack.c.bf16 %v3536, %v3535
    %v3542 = vpack.c.bf16 %v3538, %v3537
    %v3544 = vsel %vm892, %v3539, 0
    %v3547 = vsel %vm892, %v3540, 0
    %v3550 = vsel %vm892, %v3541, 0
    %v3553 = vsel %vm892, %v3542, 0
    %3555 = vmatprep.subr.bf16.mxu0 0
    %3556 = vmatpush1.bf16.msra.mxu0 %v798
    %3557 = vmatprep.subr.bf16.mxu0 0
    %3558 = vmatpush1.bf16.msra.mxu0 %v799
    %3559 = vmatprep.subr.bf16.mxu0 0
    %3560 = vmatpush1.bf16.msra.mxu0 %v800
    %3561 = vmatprep.subr.bf16.mxu0 0
    %3562 = vmatpush1.bf16.msra.mxu0 %v801
    %3563 = vmatprep.subr.bf16.mxu0 0
    %3564 = vmatpush1.bf16.msra.mxu0 0
    %3565 = vmatprep.subr.bf16.mxu0 0
    %3566 = vmatpush1.bf16.msra.mxu0 0
    %3567 = vmatprep.subr.bf16.mxu0 0
    %3568 = vmatpush1.bf16.msra.mxu0 0
    %3569 = vmatprep.subr.bf16.mxu0 0
    %3570 = vmatpush1.bf16.msra.mxu0 0
    %3571 = vmatprep.subr.bf16.mxu0 0
    %3572 = vmatpush1.bf16.msra.mxu0 0
    %3573 = vmatprep.subr.bf16.mxu0 0
    %3574 = vmatpush1.bf16.msra.mxu0 0
    %3575 = vmatprep.subr.bf16.mxu0 0
    %3576 = vmatpush1.bf16.msra.mxu0 0
    %3577 = vmatprep.subr.bf16.mxu0 0
    %3578 = vmatpush1.bf16.msra.mxu0 0
    %3579 = vmatprep.subr.bf16.mxu0 0
    %3580 = vmatpush1.bf16.msra.mxu0 0
    %3581 = vmatprep.subr.bf16.mxu0 0
    %3582 = vmatpush1.bf16.msra.mxu0 0
    %3583 = vmatprep.subr.bf16.mxu0 0
    %3584 = vmatpush1.bf16.msra.mxu0 0
    %3585 = vmatprep.subr.bf16.mxu0 0
    %3586 = vmatpush1.bf16.msra.mxu0 0
    %3587 = vmatprep.mubr.bf16.mxu0 0
    %3588 = vmatmul.mubr.bf16.gmra.mrb[0].mxu0 %v3544
    %v3589 = vpop.f32.mrb[0].mxu0
    %v3590 = vadd.f32 0.0, %v3589
    %v3591 = vpop.f32.mrb[0].mxu0
    %v3592 = vpop.f32.mrb[0].mxu0
    %v3593 = vadd.f32 0.0, %v3592
    %v3594 = vpop.f32.mrb[0].mxu0
    %3595 = vmatprep.mubr.bf16.mxu0 0
    %3596 = vmatmul.mubr.bf16.gmra.mrb[0].mxu0 %v3547
    %v3597 = vpop.f32.mrb[0].mxu0
    %v3598 = vadd.f32 0.0, %v3597
    %v3599 = vpop.f32.mrb[0].mxu0
    %v3600 = vpop.f32.mrb[0].mxu0
    %v3601 = vadd.f32 0.0, %v3600
    %v3602 = vpop.f32.mrb[0].mxu0
    %3603 = vmatprep.mubr.bf16.mxu0 0
    %3604 = vmatmul.mubr.bf16.gmra.mrb[0].mxu0 %v3550
    %v3605 = vpop.f32.mrb[0].mxu0
    %v3606 = vadd.f32 0.0, %v3605
    %v3607 = vpop.f32.mrb[0].mxu0
    %v3608 = vpop.f32.mrb[0].mxu0
    %v3609 = vadd.f32 0.0, %v3608
    %v3610 = vpop.f32.mrb[0].mxu0
    %3611 = vmatprep.mubr.bf16.mxu0 0
    %3612 = vmatmul.mubr.bf16.gmra.mrb[0].mxu0 %v3553
    %v3613 = vpop.f32.mrb[0].mxu0
    %v3614 = vadd.f32 0.0, %v3613
    %v3615 = vpop.f32.mrb[0].mxu0
    %v3616 = vpop.f32.mrb[0].mxu0
    %v3617 = vadd.f32 0.0, %v3616
    %v3618 = vpop.f32.mrb[0].mxu0
    %3619 = vdwg.mxu0
    %3624 = vrot.lane.b32.xlu0 %v478, 116
    %v3625 = vpop.permute.xlu0 %3624
    %3626 = vrot.lane.b32.xlu0 %v479, 116
    %v3627 = vpop.permute.xlu0 %3626
    %3628 = vrot.lane.b32.xlu0 %v480, 116
    %v3629 = vpop.permute.xlu0 %3628
    %3630 = vrot.lane.b32.xlu0 %v481, 116
    %v3631 = vpop.permute.xlu0 %3630
    %3636 = vrot.lane.b32.xlu0 %v638, 116
    %v3637 = vpop.permute.xlu0 %3636
    %3638 = vrot.lane.b32.xlu0 %v639, 116
    %v3639 = vpop.permute.xlu0 %3638
    %3640 = vrot.lane.b32.xlu0 %v640, 116
    %v3641 = vpop.permute.xlu0 %3640
    %3642 = vrot.lane.b32.xlu0 %v641, 116
    %v3643 = vpop.permute.xlu0 %3642
    %v3645 = vsel %vm802, %v3625, 0
    %v3648 = vsel %vm802, %v3627, 0
    %v3651 = vsel %vm802, %v3629, 0
    %v3654 = vsel %vm802, %v3631, 0
    %v3657 = vsel %vm802, %v3637, 0
    %v3660 = vsel %vm802, %v3639, 0
    %v3663 = vsel %vm802, %v3641, 0
    %v3666 = vsel %vm802, %v3643, 0
    %3668 = vmatprep.subr.bf16.mxu0 0
    %3669 = vmatpush1.bf16.xpose.msra.mxu0 %v3657
    %3670 = vmatprep.subr.bf16.mxu0 0
    %3671 = vmatpush1.bf16.xpose.msra.mxu0 %v3660
    %3672 = vmatprep.subr.bf16.mxu0 0
    %3673 = vmatpush1.bf16.xpose.msra.mxu0 %v3663
    %3674 = vmatprep.subr.bf16.mxu0 0
    %3675 = vmatpush1.bf16.xpose.msra.mxu0 %v3666
    %3676 = vmatprep.subr.bf16.mxu0 0
    %3677 = vmatpush1.bf16.xpose.msra.mxu0 0
    %3678 = vmatprep.subr.bf16.mxu0 0
    %3679 = vmatpush1.bf16.xpose.msra.mxu0 0
    %3680 = vmatprep.subr.bf16.mxu0 0
    %3681 = vmatpush1.bf16.xpose.msra.mxu0 0
    %3682 = vmatprep.subr.bf16.mxu0 0
    %3683 = vmatpush1.bf16.xpose.msra.mxu0 0
    %3684 = vmatprep.subr.bf16.mxu0 0
    %3685 = vmatpush1.bf16.xpose.msra.mxu0 0
    %3686 = vmatprep.subr.bf16.mxu0 0
    %3687 = vmatpush1.bf16.xpose.msra.mxu0 0
    %3688 = vmatprep.subr.bf16.mxu0 0
    %3689 = vmatpush1.bf16.xpose.msra.mxu0 0
    %3690 = vmatprep.subr.bf16.mxu0 0
    %3691 = vmatpush1.bf16.xpose.msra.mxu0 0
    %3692 = vmatprep.subr.bf16.mxu0 0
    %3693 = vmatpush1.bf16.xpose.msra.mxu0 0
    %3694 = vmatprep.subr.bf16.mxu0 0
    %3695 = vmatpush1.bf16.xpose.msra.mxu0 0
    %3696 = vmatprep.subr.bf16.mxu0 0
    %3697 = vmatpush1.bf16.xpose.msra.mxu0 0
    %3698 = vmatprep.subr.bf16.mxu0 0
    %3699 = vmatpush1.bf16.xpose.msra.mxu0 0
    %3700 = vmatprep.mubr.bf16.mxu0 0
    %3701 = vmatmul.mubr.bf16.gmra.mrb[0].mxu0 %v3645
    %v3702 = vpop.f32.mrb[0].mxu0
    %v3703 = vadd.f32 0.0, %v3702
    %v3704 = vpop.f32.mrb[0].mxu0
    %v3705 = vpop.f32.mrb[0].mxu0
    %v3706 = vadd.f32 0.0, %v3705
    %v3707 = vpop.f32.mrb[0].mxu0
    %3708 = vmatprep.mubr.bf16.mxu0 0
    %3709 = vmatmul.mubr.bf16.gmra.mrb[0].mxu0 %v3648
    %v3710 = vpop.f32.mrb[0].mxu0
    %v3711 = vadd.f32 0.0, %v3710
    %v3712 = vpop.f32.mrb[0].mxu0
    %v3713 = vpop.f32.mrb[0].mxu0
    %v3714 = vadd.f32 0.0, %v3713
    %v3715 = vpop.f32.mrb[0].mxu0
    %3716 = vmatprep.mubr.bf16.mxu0 0
    %3717 = vmatmul.mubr.bf16.gmra.mrb[0].mxu0 %v3651
    %v3718 = vpop.f32.mrb[0].mxu0
    %v3719 = vadd.f32 0.0, %v3718
    %v3720 = vpop.f32.mrb[0].mxu0
    %v3721 = vpop.f32.mrb[0].mxu0
    %v3722 = vadd.f32 0.0, %v3721
    %v3723 = vpop.f32.mrb[0].mxu0
    %3724 = vmatprep.mubr.bf16.mxu0 0
    %3725 = vmatmul.mubr.bf16.gmra.mrb[0].mxu0 %v3654
    %v3726 = vpop.f32.mrb[0].mxu0
    %v3727 = vadd.f32 0.0, %v3726
    %v3728 = vpop.f32.mrb[0].mxu0
    %v3729 = vpop.f32.mrb[0].mxu0
    %v3730 = vadd.f32 0.0, %v3729
    %v3731 = vpop.f32.mrb[0].mxu0
    %3732 = vdwg.mxu0
    %v3733 = vsel %vm892, %v3703, -inf
    %3734 = vmax.xlane.f32.xlu0 %v3733
    %v3735 = vpop.xlane.xlu0 %3734
    %v3736 = vsel %vm892, %v3706, -inf
    %3737 = vmax.xlane.f32.xlu0 %v3736
    %v3738 = vpop.xlane.xlu0 %3737
    %v3739 = vsel %vm892, %v3711, -inf
    %3740 = vmax.xlane.f32.xlu0 %v3739
    %v3741 = vpop.xlane.xlu0 %3740
    %v3742 = vsel %vm892, %v3714, -inf
    %3743 = vmax.xlane.f32.xlu0 %v3742
    %v3744 = vpop.xlane.xlu0 %3743
    %v3745 = vsel %vm892, %v3719, -inf
    %3746 = vmax.xlane.f32.xlu0 %v3745
    %v3747 = vpop.xlane.xlu0 %3746
    %v3748 = vsel %vm892, %v3722, -inf
    %3749 = vmax.xlane.f32.xlu0 %v3748
    %v3750 = vpop.xlane.xlu0 %3749
    %v3751 = vsel %vm892, %v3727, -inf
    %3752 = vmax.xlane.f32.xlu0 %v3751
    %v3753 = vpop.xlane.xlu0 %3752
    %v3754 = vsel %vm892, %v3730, -inf
    %3755 = vmax.xlane.f32.xlu0 %v3754
    %v3756 = vpop.xlane.xlu0 %3755
    %v3757 = vsub.f32 %v3703, %v3735
    %v3758 = vsub.f32 %v3706, %v3738
    %v3759 = vsub.f32 %v3711, %v3741
    %v3760 = vsub.f32 %v3714, %v3744
    %v3761 = vsub.f32 %v3719, %v3747
    %v3762 = vsub.f32 %v3722, %v3750
    %v3763 = vsub.f32 %v3727, %v3753
    %v3764 = vsub.f32 %v3730, %v3756
    %v3765 = vmul.f32 %v3757, 1.442695
    %v3766 = vpow.pop %v3765
    %v3767 = vmul.f32 %v3758, 1.442695
    %v3768 = vpow.pop %v3767
    %v3769 = vmul.f32 %v3759, 1.442695
    %v3770 = vpow.pop %v3769
    %v3771 = vmul.f32 %v3760, 1.442695
    %v3772 = vpow.pop %v3771
    %v3773 = vmul.f32 %v3761, 1.442695
    %v3774 = vpow.pop %v3773
    %v3775 = vmul.f32 %v3762, 1.442695
    %v3776 = vpow.pop %v3775
    %v3777 = vmul.f32 %v3763, 1.442695
    %v3778 = vpow.pop %v3777
    %v3779 = vmul.f32 %v3764, 1.442695
    %v3780 = vpow.pop %v3779
    %v3781 = vsel %vm892, %v3766, 0.0
    %3782 = vadd.xlane.f32.xlu0 %v3781
    %v3783 = vpop.xlane.xlu0 %3782
    %v3784 = vsel %vm892, %v3768, 0.0
    %3785 = vadd.xlane.f32.xlu0 %v3784
    %v3786 = vpop.xlane.xlu0 %3785
    %v3787 = vsel %vm892, %v3770, 0.0
    %3788 = vadd.xlane.f32.xlu0 %v3787
    %v3789 = vpop.xlane.xlu0 %3788
    %v3790 = vsel %vm892, %v3772, 0.0
    %3791 = vadd.xlane.f32.xlu0 %v3790
    %v3792 = vpop.xlane.xlu0 %3791
    %v3793 = vsel %vm892, %v3774, 0.0
    %3794 = vadd.xlane.f32.xlu0 %v3793
    %v3795 = vpop.xlane.xlu0 %3794
    %v3796 = vsel %vm892, %v3776, 0.0
    %3797 = vadd.xlane.f32.xlu0 %v3796
    %v3798 = vpop.xlane.xlu0 %3797
    %v3799 = vsel %vm892, %v3778, 0.0
    %3800 = vadd.xlane.f32.xlu0 %v3799
    %v3801 = vpop.xlane.xlu0 %3800
    %v3802 = vsel %vm892, %v3780, 0.0
    %3803 = vadd.xlane.f32.xlu0 %v3802
    %v3804 = vpop.xlane.xlu0 %3803
    %v3805 = vrcp.pop %v3783
    %v3806 = vrcp.pop %v3786
    %v3807 = vrcp.pop %v3789
    %v3808 = vrcp.pop %v3792
    %v3809 = vrcp.pop %v3795
    %v3810 = vrcp.pop %v3798
    %v3811 = vrcp.pop %v3801
    %v3812 = vrcp.pop %v3804
    %v3813 = vmul.f32 %v3766, %v3805
    %v3814 = vmul.f32 %v3768, %v3806
    %v3815 = vmul.f32 %v3770, %v3807
    %v3816 = vmul.f32 %v3772, %v3808
    %v3817 = vmul.f32 %v3774, %v3809
    %v3818 = vmul.f32 %v3776, %v3810
    %v3819 = vmul.f32 %v3778, %v3811
    %v3820 = vmul.f32 %v3780, %v3812
    %v3821 = vpack.c.bf16 %v3814, %v3813
    %v3822 = vpack.c.bf16 %v3816, %v3815
    %v3823 = vpack.c.bf16 %v3818, %v3817
    %v3824 = vpack.c.bf16 %v3820, %v3819
    %3829 = vrot.lane.b32.xlu0 %v798, 116
    %v3830 = vpop.permute.xlu0 %3829
    %3831 = vrot.lane.b32.xlu0 %v799, 116
    %v3832 = vpop.permute.xlu0 %3831
    %3833 = vrot.lane.b32.xlu0 %v800, 116
    %v3834 = vpop.permute.xlu0 %3833
    %3835 = vrot.lane.b32.xlu0 %v801, 116
    %v3836 = vpop.permute.xlu0 %3835
    %v3842 = vsel %vm892, %v3821, 0
    %v3845 = vsel %vm892, %v3822, 0
    %v3848 = vsel %vm892, %v3823, 0
    %v3851 = vsel %vm892, %v3824, 0
    %3853 = vmatprep.subr.bf16.mxu0 0
    %3854 = vmatpush1.bf16.msra.mxu0 %v3830
    %3855 = vmatprep.subr.bf16.mxu0 0
    %3856 = vmatpush1.bf16.msra.mxu0 %v3832
    %3857 = vmatprep.subr.bf16.mxu0 0
    %3858 = vmatpush1.bf16.msra.mxu0 %v3834
    %3859 = vmatprep.subr.bf16.mxu0 0
    %3860 = vmatpush1.bf16.msra.mxu0 %v3836
    %3861 = vmatprep.subr.bf16.mxu0 0
    %3862 = vmatpush1.bf16.msra.mxu0 0
    %3863 = vmatprep.subr.bf16.mxu0 0
    %3864 = vmatpush1.bf16.msra.mxu0 0
    %3865 = vmatprep.subr.bf16.mxu0 0
    %3866 = vmatpush1.bf16.msra.mxu0 0
    %3867 = vmatprep.subr.bf16.mxu0 0
    %3868 = vmatpush1.bf16.msra.mxu0 0
    %3869 = vmatprep.subr.bf16.mxu0 0
    %3870 = vmatpush1.bf16.msra.mxu0 0
    %3871 = vmatprep.subr.bf16.mxu0 0
    %3872 = vmatpush1.bf16.msra.mxu0 0
    %3873 = vmatprep.subr.bf16.mxu0 0
    %3874 = vmatpush1.bf16.msra.mxu0 0
    %3875 = vmatprep.subr.bf16.mxu0 0
    %3876 = vmatpush1.bf16.msra.mxu0 0
    %3877 = vmatprep.subr.bf16.mxu0 0
    %3878 = vmatpush1.bf16.msra.mxu0 0
    %3879 = vmatprep.subr.bf16.mxu0 0
    %3880 = vmatpush1.bf16.msra.mxu0 0
    %3881 = vmatprep.subr.bf16.mxu0 0
    %3882 = vmatpush1.bf16.msra.mxu0 0
    %3883 = vmatprep.subr.bf16.mxu0 0
    %3884 = vmatpush1.bf16.msra.mxu0 0
    %3885 = vmatprep.mubr.bf16.mxu0 0
    %3886 = vmatmul.mubr.bf16.gmra.mrb[0].mxu0 %v3842
    %v3887 = vpop.f32.mrb[0].mxu0
    %v3888 = vadd.f32 0.0, %v3887
    %v3889 = vpop.f32.mrb[0].mxu0
    %v3890 = vpop.f32.mrb[0].mxu0
    %v3891 = vadd.f32 0.0, %v3890
    %v3892 = vpop.f32.mrb[0].mxu0
    %3893 = vmatprep.mubr.bf16.mxu0 0
    %3894 = vmatmul.mubr.bf16.gmra.mrb[0].mxu0 %v3845
    %v3895 = vpop.f32.mrb[0].mxu0
    %v3896 = vadd.f32 0.0, %v3895
    %v3897 = vpop.f32.mrb[0].mxu0
    %v3898 = vpop.f32.mrb[0].mxu0
    %v3899 = vadd.f32 0.0, %v3898
    %v3900 = vpop.f32.mrb[0].mxu0
    %3901 = vmatprep.mubr.bf16.mxu0 0
    %3902 = vmatmul.mubr.bf16.gmra.mrb[0].mxu0 %v3848
    %v3903 = vpop.f32.mrb[0].mxu0
    %v3904 = vadd.f32 0.0, %v3903
    %v3905 = vpop.f32.mrb[0].mxu0
    %v3906 = vpop.f32.mrb[0].mxu0
    %v3907 = vadd.f32 0.0, %v3906
    %v3908 = vpop.f32.mrb[0].mxu0
    %3909 = vmatprep.mubr.bf16.mxu0 0
    %3910 = vmatmul.mubr.bf16.gmra.mrb[0].mxu0 %v3851
    %v3911 = vpop.f32.mrb[0].mxu0
    %v3912 = vadd.f32 0.0, %v3911
    %v3913 = vpop.f32.mrb[0].mxu0
    %v3914 = vpop.f32.mrb[0].mxu0
    %v3915 = vadd.f32 0.0, %v3914
    %v3916 = vpop.f32.mrb[0].mxu0
    %3917 = vdwg.mxu0
    %3918 = vrot.lane.b32.xlu0 %v478, 104
    %v3919 = vpop.permute.xlu0 %3918
    %3920 = vrot.lane.b32.xlu0 %v479, 104
    %v3921 = vpop.permute.xlu0 %3920
    %3922 = vrot.lane.b32.xlu0 %v480, 104
    %v3923 = vpop.permute.xlu0 %3922
    %3924 = vrot.lane.b32.xlu0 %v481, 104
    %v3925 = vpop.permute.xlu0 %3924
    %3926 = vrot.lane.b32.xlu0 %v638, 104
    %v3927 = vpop.permute.xlu0 %3926
    %3928 = vrot.lane.b32.xlu0 %v639, 104
    %v3929 = vpop.permute.xlu0 %3928
    %3930 = vrot.lane.b32.xlu0 %v640, 104
    %v3931 = vpop.permute.xlu0 %3930
    %3932 = vrot.lane.b32.xlu0 %v641, 104
    %v3933 = vpop.permute.xlu0 %3932
    %v3935 = vsel %vm802, %v3919, 0
    %v3938 = vsel %vm802, %v3921, 0
    %v3941 = vsel %vm802, %v3923, 0
    %v3944 = vsel %vm802, %v3925, 0
    %v3947 = vsel %vm802, %v3927, 0
    %v3950 = vsel %vm802, %v3929, 0
    %v3953 = vsel %vm802, %v3931, 0
    %v3956 = vsel %vm802, %v3933, 0
    %3958 = vmatprep.subr.bf16.mxu0 0
    %3959 = vmatpush1.bf16.xpose.msra.mxu0 %v3947
    %3960 = vmatprep.subr.bf16.mxu0 0
    %3961 = vmatpush1.bf16.xpose.msra.mxu0 %v3950
    %3962 = vmatprep.subr.bf16.mxu0 0
    %3963 = vmatpush1.bf16.xpose.msra.mxu0 %v3953
    %3964 = vmatprep.subr.bf16.mxu0 0
    %3965 = vmatpush1.bf16.xpose.msra.mxu0 %v3956
    %3966 = vmatprep.subr.bf16.mxu0 0
    %3967 = vmatpush1.bf16.xpose.msra.mxu0 0
    %3968 = vmatprep.subr.bf16.mxu0 0
    %3969 = vmatpush1.bf16.xpose.msra.mxu0 0
    %3970 = vmatprep.subr.bf16.mxu0 0
    %3971 = vmatpush1.bf16.xpose.msra.mxu0 0
    %3972 = vmatprep.subr.bf16.mxu0 0
    %3973 = vmatpush1.bf16.xpose.msra.mxu0 0
    %3974 = vmatprep.subr.bf16.mxu0 0
    %3975 = vmatpush1.bf16.xpose.msra.mxu0 0
    %3976 = vmatprep.subr.bf16.mxu0 0
    %3977 = vmatpush1.bf16.xpose.msra.mxu0 0
    %3978 = vmatprep.subr.bf16.mxu0 0
    %3979 = vmatpush1.bf16.xpose.msra.mxu0 0
    %3980 = vmatprep.subr.bf16.mxu0 0
    %3981 = vmatpush1.bf16.xpose.msra.mxu0 0
    %3982 = vmatprep.subr.bf16.mxu0 0
    %3983 = vmatpush1.bf16.xpose.msra.mxu0 0
    %3984 = vmatprep.subr.bf16.mxu0 0
    %3985 = vmatpush1.bf16.xpose.msra.mxu0 0
    %3986 = vmatprep.subr.bf16.mxu0 0
    %3987 = vmatpush1.bf16.xpose.msra.mxu0 0
    %3988 = vmatprep.subr.bf16.mxu0 0
    %3989 = vmatpush1.bf16.xpose.msra.mxu0 0
    %3990 = vmatprep.mubr.bf16.mxu0 0
    %3991 = vmatmul.mubr.bf16.gmra.mrb[0].mxu0 %v3935
    %v3992 = vpop.f32.mrb[0].mxu0
    %v3993 = vadd.f32 0.0, %v3992
    %v3994 = vpop.f32.mrb[0].mxu0
    %v3995 = vpop.f32.mrb[0].mxu0
    %v3996 = vadd.f32 0.0, %v3995
    %v3997 = vpop.f32.mrb[0].mxu0
    %3998 = vmatprep.mubr.bf16.mxu0 0
    %3999 = vmatmul.mubr.bf16.gmra.mrb[0].mxu0 %v3938
    %v4000 = vpop.f32.mrb[0].mxu0
    %v4001 = vadd.f32 0.0, %v4000
    %v4002 = vpop.f32.mrb[0].mxu0
    %v4003 = vpop.f32.mrb[0].mxu0
    %v4004 = vadd.f32 0.0, %v4003
    %v4005 = vpop.f32.mrb[0].mxu0
    %4006 = vmatprep.mubr.bf16.mxu0 0
    %4007 = vmatmul.mubr.bf16.gmra.mrb[0].mxu0 %v3941
    %v4008 = vpop.f32.mrb[0].mxu0
    %v4009 = vadd.f32 0.0, %v4008
    %v4010 = vpop.f32.mrb[0].mxu0
    %v4011 = vpop.f32.mrb[0].mxu0
    %v4012 = vadd.f32 0.0, %v4011
    %v4013 = vpop.f32.mrb[0].mxu0
    %4014 = vmatprep.mubr.bf16.mxu0 0
    %4015 = vmatmul.mubr.bf16.gmra.mrb[0].mxu0 %v3944
    %v4016 = vpop.f32.mrb[0].mxu0
    %v4017 = vadd.f32 0.0, %v4016
    %v4018 = vpop.f32.mrb[0].mxu0
    %v4019 = vpop.f32.mrb[0].mxu0
    %v4020 = vadd.f32 0.0, %v4019
    %v4021 = vpop.f32.mrb[0].mxu0
    %4022 = vdwg.mxu0
    %v4023 = vsel %vm892, %v3993, -inf
    %4024 = vmax.xlane.f32.xlu0 %v4023
    %v4025 = vpop.xlane.xlu0 %4024
    %v4026 = vsel %vm892, %v3996, -inf
    %4027 = vmax.xlane.f32.xlu0 %v4026
    %v4028 = vpop.xlane.xlu0 %4027
    %v4029 = vsel %vm892, %v4001, -inf
    %4030 = vmax.xlane.f32.xlu0 %v4029
    %v4031 = vpop.xlane.xlu0 %4030
    %v4032 = vsel %vm892, %v4004, -inf
    %4033 = vmax.xlane.f32.xlu0 %v4032
    %v4034 = vpop.xlane.xlu0 %4033
    %v4035 = vsel %vm892, %v4009, -inf
    %4036 = vmax.xlane.f32.xlu0 %v4035
    %v4037 = vpop.xlane.xlu0 %4036
    %v4038 = vsel %vm892, %v4012, -inf
    %4039 = vmax.xlane.f32.xlu0 %v4038
    %v4040 = vpop.xlane.xlu0 %4039
    %v4041 = vsel %vm892, %v4017, -inf
    %4042 = vmax.xlane.f32.xlu0 %v4041
    %v4043 = vpop.xlane.xlu0 %4042
    %v4044 = vsel %vm892, %v4020, -inf
    %4045 = vmax.xlane.f32.xlu0 %v4044
    %v4046 = vpop.xlane.xlu0 %4045
    %v4047 = vsub.f32 %v3993, %v4025
    %v4048 = vsub.f32 %v3996, %v4028
    %v4049 = vsub.f32 %v4001, %v4031
    %v4050 = vsub.f32 %v4004, %v4034
    %v4051 = vsub.f32 %v4009, %v4037
    %v4052 = vsub.f32 %v4012, %v4040
    %v4053 = vsub.f32 %v4017, %v4043
    %v4054 = vsub.f32 %v4020, %v4046
    %v4055 = vmul.f32 %v4047, 1.442695
    %v4056 = vpow.pop %v4055
    %v4057 = vmul.f32 %v4048, 1.442695
    %v4058 = vpow.pop %v4057
    %v4059 = vmul.f32 %v4049, 1.442695
    %v4060 = vpow.pop %v4059
    %v4061 = vmul.f32 %v4050, 1.442695
    %v4062 = vpow.pop %v4061
    %v4063 = vmul.f32 %v4051, 1.442695
    %v4064 = vpow.pop %v4063
    %v4065 = vmul.f32 %v4052, 1.442695
    %v4066 = vpow.pop %v4065
    %v4067 = vmul.f32 %v4053, 1.442695
    %v4068 = vpow.pop %v4067
    %v4069 = vmul.f32 %v4054, 1.442695
    %v4070 = vpow.pop %v4069
    %v4071 = vsel %vm892, %v4056, 0.0
    %4072 = vadd.xlane.f32.xlu0 %v4071
    %v4073 = vpop.xlane.xlu0 %4072
    %v4074 = vsel %vm892, %v4058, 0.0
    %4075 = vadd.xlane.f32.xlu0 %v4074
    %v4076 = vpop.xlane.xlu0 %4075
    %v4077 = vsel %vm892, %v4060, 0.0
    %4078 = vadd.xlane.f32.xlu0 %v4077
    %v4079 = vpop.xlane.xlu0 %4078
    %v4080 = vsel %vm892, %v4062, 0.0
    %4081 = vadd.xlane.f32.xlu0 %v4080
    %v4082 = vpop.xlane.xlu0 %4081
    %v4083 = vsel %vm892, %v4064, 0.0
    %4084 = vadd.xlane.f32.xlu0 %v4083
    %v4085 = vpop.xlane.xlu0 %4084
    %v4086 = vsel %vm892, %v4066, 0.0
    %4087 = vadd.xlane.f32.xlu0 %v4086
    %v4088 = vpop.xlane.xlu0 %4087
    %v4089 = vsel %vm892, %v4068, 0.0
    %4090 = vadd.xlane.f32.xlu0 %v4089
    %v4091 = vpop.xlane.xlu0 %4090
    %v4092 = vsel %vm892, %v4070, 0.0
    %4093 = vadd.xlane.f32.xlu0 %v4092
    %v4094 = vpop.xlane.xlu0 %4093
    %v4095 = vrcp.pop %v4073
    %v4096 = vrcp.pop %v4076
    %v4097 = vrcp.pop %v4079
    %v4098 = vrcp.pop %v4082
    %v4099 = vrcp.pop %v4085
    %v4100 = vrcp.pop %v4088
    %v4101 = vrcp.pop %v4091
    %v4102 = vrcp.pop %v4094
    %v4103 = vmul.f32 %v4056, %v4095
    %v4104 = vmul.f32 %v4058, %v4096
    %v4105 = vmul.f32 %v4060, %v4097
    %v4106 = vmul.f32 %v4062, %v4098
    %v4107 = vmul.f32 %v4064, %v4099
    %v4108 = vmul.f32 %v4066, %v4100
    %v4109 = vmul.f32 %v4068, %v4101
    %v4110 = vmul.f32 %v4070, %v4102
    %v4111 = vpack.c.bf16 %v4104, %v4103
    %v4112 = vpack.c.bf16 %v4106, %v4105
    %v4113 = vpack.c.bf16 %v4108, %v4107
    %v4114 = vpack.c.bf16 %v4110, %v4109
    %4115 = vrot.lane.b32.xlu0 %v798, 104
    %v4116 = vpop.permute.xlu0 %4115
    %4117 = vrot.lane.b32.xlu0 %v799, 104
    %v4118 = vpop.permute.xlu0 %4117
    %4119 = vrot.lane.b32.xlu0 %v800, 104
    %v4120 = vpop.permute.xlu0 %4119
    %4121 = vrot.lane.b32.xlu0 %v801, 104
    %v4122 = vpop.permute.xlu0 %4121
    %v4128 = vsel %vm892, %v4111, 0
    %v4131 = vsel %vm892, %v4112, 0
    %v4134 = vsel %vm892, %v4113, 0
    %v4137 = vsel %vm892, %v4114, 0
    %4139 = vmatprep.subr.bf16.mxu0 0
    %4140 = vmatpush1.bf16.msra.mxu0 %v4116
    %4141 = vmatprep.subr.bf16.mxu0 0
    %4142 = vmatpush1.bf16.msra.mxu0 %v4118
    %4143 = vmatprep.subr.bf16.mxu0 0
    %4144 = vmatpush1.bf16.msra.mxu0 %v4120
    %4145 = vmatprep.subr.bf16.mxu0 0
    %4146 = vmatpush1.bf16.msra.mxu0 %v4122
    %4147 = vmatprep.subr.bf16.mxu0 0
    %4148 = vmatpush1.bf16.msra.mxu0 0
    %4149 = vmatprep.subr.bf16.mxu0 0
    %4150 = vmatpush1.bf16.msra.mxu0 0
    %4151 = vmatprep.subr.bf16.mxu0 0
    %4152 = vmatpush1.bf16.msra.mxu0 0
    %4153 = vmatprep.subr.bf16.mxu0 0
    %4154 = vmatpush1.bf16.msra.mxu0 0
    %4155 = vmatprep.subr.bf16.mxu0 0
    %4156 = vmatpush1.bf16.msra.mxu0 0
    %4157 = vmatprep.subr.bf16.mxu0 0
    %4158 = vmatpush1.bf16.msra.mxu0 0
    %4159 = vmatprep.subr.bf16.mxu0 0
    %4160 = vmatpush1.bf16.msra.mxu0 0
    %4161 = vmatprep.subr.bf16.mxu0 0
    %4162 = vmatpush1.bf16.msra.mxu0 0
    %4163 = vmatprep.subr.bf16.mxu0 0
    %4164 = vmatpush1.bf16.msra.mxu0 0
    %4165 = vmatprep.subr.bf16.mxu0 0
    %4166 = vmatpush1.bf16.msra.mxu0 0
    %4167 = vmatprep.subr.bf16.mxu0 0
    %4168 = vmatpush1.bf16.msra.mxu0 0
    %4169 = vmatprep.subr.bf16.mxu0 0
    %4170 = vmatpush1.bf16.msra.mxu0 0
    %4171 = vmatprep.mubr.bf16.mxu0 0
    %4172 = vmatmul.mubr.bf16.gmra.mrb[0].mxu0 %v4128
    %v4173 = vpop.f32.mrb[0].mxu0
    %v4174 = vadd.f32 0.0, %v4173
    %v4175 = vpop.f32.mrb[0].mxu0
    %v4176 = vpop.f32.mrb[0].mxu0
    %v4177 = vadd.f32 0.0, %v4176
    %v4178 = vpop.f32.mrb[0].mxu0
    %4179 = vmatprep.mubr.bf16.mxu0 0
    %4180 = vmatmul.mubr.bf16.gmra.mrb[0].mxu0 %v4131
    %v4181 = vpop.f32.mrb[0].mxu0
    %v4182 = vadd.f32 0.0, %v4181
    %v4183 = vpop.f32.mrb[0].mxu0
    %v4184 = vpop.f32.mrb[0].mxu0
    %v4185 = vadd.f32 0.0, %v4184
    %v4186 = vpop.f32.mrb[0].mxu0
    %4187 = vmatprep.mubr.bf16.mxu0 0
    %4188 = vmatmul.mubr.bf16.gmra.mrb[0].mxu0 %v4134
    %v4189 = vpop.f32.mrb[0].mxu0
    %v4190 = vadd.f32 0.0, %v4189
    %v4191 = vpop.f32.mrb[0].mxu0
    %v4192 = vpop.f32.mrb[0].mxu0
    %v4193 = vadd.f32 0.0, %v4192
    %v4194 = vpop.f32.mrb[0].mxu0
    %4195 = vmatprep.mubr.bf16.mxu0 0
    %4196 = vmatmul.mubr.bf16.gmra.mrb[0].mxu0 %v4137
    %v4197 = vpop.f32.mrb[0].mxu0
    %v4198 = vadd.f32 0.0, %v4197
    %v4199 = vpop.f32.mrb[0].mxu0
    %v4200 = vpop.f32.mrb[0].mxu0
    %v4201 = vadd.f32 0.0, %v4200
    %v4202 = vpop.f32.mrb[0].mxu0
    %4203 = vdwg.mxu0
    %4204 = vrot.lane.b32.xlu0 %v478, 92
    %v4205 = vpop.permute.xlu0 %4204
    %4206 = vrot.lane.b32.xlu0 %v479, 92
    %v4207 = vpop.permute.xlu0 %4206
    %4208 = vrot.lane.b32.xlu0 %v480, 92
    %v4209 = vpop.permute.xlu0 %4208
    %4210 = vrot.lane.b32.xlu0 %v481, 92
    %v4211 = vpop.permute.xlu0 %4210
    %4212 = vrot.lane.b32.xlu0 %v638, 92
    %v4213 = vpop.permute.xlu0 %4212
    %4214 = vrot.lane.b32.xlu0 %v639, 92
    %v4215 = vpop.permute.xlu0 %4214
    %4216 = vrot.lane.b32.xlu0 %v640, 92
    %v4217 = vpop.permute.xlu0 %4216
    %4218 = vrot.lane.b32.xlu0 %v641, 92
    %v4219 = vpop.permute.xlu0 %4218
    %v4221 = vsel %vm802, %v4205, 0
    %v4224 = vsel %vm802, %v4207, 0
    %v4227 = vsel %vm802, %v4209, 0
    %v4230 = vsel %vm802, %v4211, 0
    %v4233 = vsel %vm802, %v4213, 0
    %v4236 = vsel %vm802, %v4215, 0
    %v4239 = vsel %vm802, %v4217, 0
    %v4242 = vsel %vm802, %v4219, 0
    %4244 = vmatprep.subr.bf16.mxu0 0
    %4245 = vmatpush1.bf16.xpose.msra.mxu0 %v4233
    %4246 = vmatprep.subr.bf16.mxu0 0
    %4247 = vmatpush1.bf16.xpose.msra.mxu0 %v4236
    %4248 = vmatprep.subr.bf16.mxu0 0
    %4249 = vmatpush1.bf16.xpose.msra.mxu0 %v4239
    %4250 = vmatprep.subr.bf16.mxu0 0
    %4251 = vmatpush1.bf16.xpose.msra.mxu0 %v4242
    %4252 = vmatprep.subr.bf16.mxu0 0
    %4253 = vmatpush1.bf16.xpose.msra.mxu0 0
    %4254 = vmatprep.subr.bf16.mxu0 0
    %4255 = vmatpush1.bf16.xpose.msra.mxu0 0
    %4256 = vmatprep.subr.bf16.mxu0 0
    %4257 = vmatpush1.bf16.xpose.msra.mxu0 0
    %4258 = vmatprep.subr.bf16.mxu0 0
    %4259 = vmatpush1.bf16.xpose.msra.mxu0 0
    %4260 = vmatprep.subr.bf16.mxu0 0
    %4261 = vmatpush1.bf16.xpose.msra.mxu0 0
    %4262 = vmatprep.subr.bf16.mxu0 0
    %4263 = vmatpush1.bf16.xpose.msra.mxu0 0
    %4264 = vmatprep.subr.bf16.mxu0 0
    %4265 = vmatpush1.bf16.xpose.msra.mxu0 0
    %4266 = vmatprep.subr.bf16.mxu0 0
    %4267 = vmatpush1.bf16.xpose.msra.mxu0 0
    %4268 = vmatprep.subr.bf16.mxu0 0
    %4269 = vmatpush1.bf16.xpose.msra.mxu0 0
    %4270 = vmatprep.subr.bf16.mxu0 0
    %4271 = vmatpush1.bf16.xpose.msra.mxu0 0
    %4272 = vmatprep.subr.bf16.mxu0 0
    %4273 = vmatpush1.bf16.xpose.msra.mxu0 0
    %4274 = vmatprep.subr.bf16.mxu0 0
    %4275 = vmatpush1.bf16.xpose.msra.mxu0 0
    %4276 = vmatprep.mubr.bf16.mxu0 0
    %4277 = vmatmul.mubr.bf16.gmra.mrb[0].mxu0 %v4221
    %v4278 = vpop.f32.mrb[0].mxu0
    %v4279 = vadd.f32 0.0, %v4278
    %v4280 = vpop.f32.mrb[0].mxu0
    %v4281 = vpop.f32.mrb[0].mxu0
    %v4282 = vadd.f32 0.0, %v4281
    %v4283 = vpop.f32.mrb[0].mxu0
    %4284 = vmatprep.mubr.bf16.mxu0 0
    %4285 = vmatmul.mubr.bf16.gmra.mrb[0].mxu0 %v4224
    %v4286 = vpop.f32.mrb[0].mxu0
    %v4287 = vadd.f32 0.0, %v4286
    %v4288 = vpop.f32.mrb[0].mxu0
    %v4289 = vpop.f32.mrb[0].mxu0
    %v4290 = vadd.f32 0.0, %v4289
    %v4291 = vpop.f32.mrb[0].mxu0
    %4292 = vmatprep.mubr.bf16.mxu0 0
    %4293 = vmatmul.mubr.bf16.gmra.mrb[0].mxu0 %v4227
    %v4294 = vpop.f32.mrb[0].mxu0
    %v4295 = vadd.f32 0.0, %v4294
    %v4296 = vpop.f32.mrb[0].mxu0
    %v4297 = vpop.f32.mrb[0].mxu0
    %v4298 = vadd.f32 0.0, %v4297
    %v4299 = vpop.f32.mrb[0].mxu0
    %4300 = vmatprep.mubr.bf16.mxu0 0
    %4301 = vmatmul.mubr.bf16.gmra.mrb[0].mxu0 %v4230
    %v4302 = vpop.f32.mrb[0].mxu0
    %v4303 = vadd.f32 0.0, %v4302
    %v4304 = vpop.f32.mrb[0].mxu0
    %v4305 = vpop.f32.mrb[0].mxu0
    %v4306 = vadd.f32 0.0, %v4305
    %v4307 = vpop.f32.mrb[0].mxu0
    %4308 = vdwg.mxu0
    %v4309 = vsel %vm892, %v4279, -inf
    %4310 = vmax.xlane.f32.xlu0 %v4309
    %v4311 = vpop.xlane.xlu0 %4310
    %v4312 = vsel %vm892, %v4282, -inf
    %4313 = vmax.xlane.f32.xlu0 %v4312
    %v4314 = vpop.xlane.xlu0 %4313
    %v4315 = vsel %vm892, %v4287, -inf
    %4316 = vmax.xlane.f32.xlu0 %v4315
    %v4317 = vpop.xlane.xlu0 %4316
    %v4318 = vsel %vm892, %v4290, -inf
    %4319 = vmax.xlane.f32.xlu0 %v4318
    %v4320 = vpop.xlane.xlu0 %4319
    %v4321 = vsel %vm892, %v4295, -inf
    %4322 = vmax.xlane.f32.xlu0 %v4321
    %v4323 = vpop.xlane.xlu0 %4322
    %v4324 = vsel %vm892, %v4298, -inf
    %4325 = vmax.xlane.f32.xlu0 %v4324
    %v4326 = vpop.xlane.xlu0 %4325
    %v4327 = vsel %vm892, %v4303, -inf
    %4328 = vmax.xlane.f32.xlu0 %v4327
    %v4329 = vpop.xlane.xlu0 %4328
    %v4330 = vsel %vm892, %v4306, -inf
    %4331 = vmax.xlane.f32.xlu0 %v4330
    %v4332 = vpop.xlane.xlu0 %4331
    %v4333 = vsub.f32 %v4279, %v4311
    %v4334 = vsub.f32 %v4282, %v4314
    %v4335 = vsub.f32 %v4287, %v4317
    %v4336 = vsub.f32 %v4290, %v4320
    %v4337 = vsub.f32 %v4295, %v4323
    %v4338 = vsub.f32 %v4298, %v4326
    %v4339 = vsub.f32 %v4303, %v4329
    %v4340 = vsub.f32 %v4306, %v4332
    %v4341 = vmul.f32 %v4333, 1.442695
    %v4342 = vpow.pop %v4341
    %v4343 = vmul.f32 %v4334, 1.442695
    %v4344 = vpow.pop %v4343
    %v4345 = vmul.f32 %v4335, 1.442695
    %v4346 = vpow.pop %v4345
    %v4347 = vmul.f32 %v4336, 1.442695
    %v4348 = vpow.pop %v4347
    %v4349 = vmul.f32 %v4337, 1.442695
    %v4350 = vpow.pop %v4349
    %v4351 = vmul.f32 %v4338, 1.442695
    %v4352 = vpow.pop %v4351
    %v4353 = vmul.f32 %v4339, 1.442695
    %v4354 = vpow.pop %v4353
    %v4355 = vmul.f32 %v4340, 1.442695
    %v4356 = vpow.pop %v4355
    %v4357 = vsel %vm892, %v4342, 0.0
    %4358 = vadd.xlane.f32.xlu0 %v4357
    %v4359 = vpop.xlane.xlu0 %4358
    %v4360 = vsel %vm892, %v4344, 0.0
    %4361 = vadd.xlane.f32.xlu0 %v4360
    %v4362 = vpop.xlane.xlu0 %4361
    %v4363 = vsel %vm892, %v4346, 0.0
    %4364 = vadd.xlane.f32.xlu0 %v4363
    %v4365 = vpop.xlane.xlu0 %4364
    %v4366 = vsel %vm892, %v4348, 0.0
    %4367 = vadd.xlane.f32.xlu0 %v4366
    %v4368 = vpop.xlane.xlu0 %4367
    %v4369 = vsel %vm892, %v4350, 0.0
    %4370 = vadd.xlane.f32.xlu0 %v4369
    %v4371 = vpop.xlane.xlu0 %4370
    %v4372 = vsel %vm892, %v4352, 0.0
    %4373 = vadd.xlane.f32.xlu0 %v4372
    %v4374 = vpop.xlane.xlu0 %4373
    %v4375 = vsel %vm892, %v4354, 0.0
    %4376 = vadd.xlane.f32.xlu0 %v4375
    %v4377 = vpop.xlane.xlu0 %4376
    %v4378 = vsel %vm892, %v4356, 0.0
    %4379 = vadd.xlane.f32.xlu0 %v4378
    %v4380 = vpop.xlane.xlu0 %4379
    %v4381 = vrcp.pop %v4359
    %v4382 = vrcp.pop %v4362
    %v4383 = vrcp.pop %v4365
    %v4384 = vrcp.pop %v4368
    %v4385 = vrcp.pop %v4371
    %v4386 = vrcp.pop %v4374
    %v4387 = vrcp.pop %v4377
    %v4388 = vrcp.pop %v4380
    %v4389 = vmul.f32 %v4342, %v4381
    %v4390 = vmul.f32 %v4344, %v4382
    %v4391 = vmul.f32 %v4346, %v4383
    %v4392 = vmul.f32 %v4348, %v4384
    %v4393 = vmul.f32 %v4350, %v4385
    %v4394 = vmul.f32 %v4352, %v4386
    %v4395 = vmul.f32 %v4354, %v4387
    %v4396 = vmul.f32 %v4356, %v4388
    %v4397 = vpack.c.bf16 %v4390, %v4389
    %v4398 = vpack.c.bf16 %v4392, %v4391
    %v4399 = vpack.c.bf16 %v4394, %v4393
    %v4400 = vpack.c.bf16 %v4396, %v4395
    %4401 = vrot.lane.b32.xlu0 %v798, 92
    %v4402 = vpop.permute.xlu0 %4401
    %4403 = vrot.lane.b32.xlu0 %v799, 92
    %v4404 = vpop.permute.xlu0 %4403
    %4405 = vrot.lane.b32.xlu0 %v800, 92
    %v4406 = vpop.permute.xlu0 %4405
    %4407 = vrot.lane.b32.xlu0 %v801, 92
    %v4408 = vpop.permute.xlu0 %4407
    %v4414 = vsel %vm892, %v4397, 0
    %v4417 = vsel %vm892, %v4398, 0
    %v4420 = vsel %vm892, %v4399, 0
    %v4423 = vsel %vm892, %v4400, 0
    %4425 = vmatprep.subr.bf16.mxu0 0
    %4426 = vmatpush1.bf16.msra.mxu0 %v4402
    %4427 = vmatprep.subr.bf16.mxu0 0
    %4428 = vmatpush1.bf16.msra.mxu0 %v4404
    %4429 = vmatprep.subr.bf16.mxu0 0
    %4430 = vmatpush1.bf16.msra.mxu0 %v4406
    %4431 = vmatprep.subr.bf16.mxu0 0
    %4432 = vmatpush1.bf16.msra.mxu0 %v4408
    %4433 = vmatprep.subr.bf16.mxu0 0
    %4434 = vmatpush1.bf16.msra.mxu0 0
    %4435 = vmatprep.subr.bf16.mxu0 0
    %4436 = vmatpush1.bf16.msra.mxu0 0
    %4437 = vmatprep.subr.bf16.mxu0 0
    %4438 = vmatpush1.bf16.msra.mxu0 0
    %4439 = vmatprep.subr.bf16.mxu0 0
    %4440 = vmatpush1.bf16.msra.mxu0 0
    %4441 = vmatprep.subr.bf16.mxu0 0
    %4442 = vmatpush1.bf16.msra.mxu0 0
    %4443 = vmatprep.subr.bf16.mxu0 0
    %4444 = vmatpush1.bf16.msra.mxu0 0
    %4445 = vmatprep.subr.bf16.mxu0 0
    %4446 = vmatpush1.bf16.msra.mxu0 0
    %4447 = vmatprep.subr.bf16.mxu0 0
    %4448 = vmatpush1.bf16.msra.mxu0 0
    %4449 = vmatprep.subr.bf16.mxu0 0
    %4450 = vmatpush1.bf16.msra.mxu0 0
    %4451 = vmatprep.subr.bf16.mxu0 0
    %4452 = vmatpush1.bf16.msra.mxu0 0
    %4453 = vmatprep.subr.bf16.mxu0 0
    %4454 = vmatpush1.bf16.msra.mxu0 0
    %4455 = vmatprep.subr.bf16.mxu0 0
    %4456 = vmatpush1.bf16.msra.mxu0 0
    %4457 = vmatprep.mubr.bf16.mxu0 0
    %4458 = vmatmul.mubr.bf16.gmra.mrb[0].mxu0 %v4414
    %v4459 = vpop.f32.mrb[0].mxu0
    %v4460 = vadd.f32 0.0, %v4459
    %v4461 = vpop.f32.mrb[0].mxu0
    %v4462 = vpop.f32.mrb[0].mxu0
    %v4463 = vadd.f32 0.0, %v4462
    %v4464 = vpop.f32.mrb[0].mxu0
    %4465 = vmatprep.mubr.bf16.mxu0 0
    %4466 = vmatmul.mubr.bf16.gmra.mrb[0].mxu0 %v4417
    %v4467 = vpop.f32.mrb[0].mxu0
    %v4468 = vadd.f32 0.0, %v4467
    %v4469 = vpop.f32.mrb[0].mxu0
    %v4470 = vpop.f32.mrb[0].mxu0
    %v4471 = vadd.f32 0.0, %v4470
    %v4472 = vpop.f32.mrb[0].mxu0
    %4473 = vmatprep.mubr.bf16.mxu0 0
    %4474 = vmatmul.mubr.bf16.gmra.mrb[0].mxu0 %v4420
    %v4475 = vpop.f32.mrb[0].mxu0
    %v4476 = vadd.f32 0.0, %v4475
    %v4477 = vpop.f32.mrb[0].mxu0
    %v4478 = vpop.f32.mrb[0].mxu0
    %v4479 = vadd.f32 0.0, %v4478
    %v4480 = vpop.f32.mrb[0].mxu0
    %4481 = vmatprep.mubr.bf16.mxu0 0
    %4482 = vmatmul.mubr.bf16.gmra.mrb[0].mxu0 %v4423
    %v4483 = vpop.f32.mrb[0].mxu0
    %v4484 = vadd.f32 0.0, %v4483
    %v4485 = vpop.f32.mrb[0].mxu0
    %v4486 = vpop.f32.mrb[0].mxu0
    %v4487 = vadd.f32 0.0, %v4486
    %v4488 = vpop.f32.mrb[0].mxu0
    %4489 = vdwg.mxu0
    %4490 = vrot.lane.b32.xlu0 %v478, 80
    %v4491 = vpop.permute.xlu0 %4490
    %4492 = vrot.lane.b32.xlu0 %v479, 80
    %v4493 = vpop.permute.xlu0 %4492
    %4494 = vrot.lane.b32.xlu0 %v480, 80
    %v4495 = vpop.permute.xlu0 %4494
    %4496 = vrot.lane.b32.xlu0 %v481, 80
    %v4497 = vpop.permute.xlu0 %4496
    %4498 = vrot.lane.b32.xlu0 %v638, 80
    %v4499 = vpop.permute.xlu0 %4498
    %4500 = vrot.lane.b32.xlu0 %v639, 80
    %v4501 = vpop.permute.xlu0 %4500
    %4502 = vrot.lane.b32.xlu0 %v640, 80
    %v4503 = vpop.permute.xlu0 %4502
    %4504 = vrot.lane.b32.xlu0 %v641, 80
    %v4505 = vpop.permute.xlu0 %4504
    %v4507 = vsel %vm802, %v4491, 0
    %v4510 = vsel %vm802, %v4493, 0
    %v4513 = vsel %vm802, %v4495, 0
    %v4516 = vsel %vm802, %v4497, 0
    %v4519 = vsel %vm802, %v4499, 0
    %v4522 = vsel %vm802, %v4501, 0
    %v4525 = vsel %vm802, %v4503, 0
    %v4528 = vsel %vm802, %v4505, 0
    %4530 = vmatprep.subr.bf16.mxu0 0
    %4531 = vmatpush1.bf16.xpose.msra.mxu0 %v4519
    %4532 = vmatprep.subr.bf16.mxu0 0
    %4533 = vmatpush1.bf16.xpose.msra.mxu0 %v4522
    %4534 = vmatprep.subr.bf16.mxu0 0
    %4535 = vmatpush1.bf16.xpose.msra.mxu0 %v4525
    %4536 = vmatprep.subr.bf16.mxu0 0
    %4537 = vmatpush1.bf16.xpose.msra.mxu0 %v4528
    %4538 = vmatprep.subr.bf16.mxu0 0
    %4539 = vmatpush1.bf16.xpose.msra.mxu0 0
    %4540 = vmatprep.subr.bf16.mxu0 0
    %4541 = vmatpush1.bf16.xpose.msra.mxu0 0
    %4542 = vmatprep.subr.bf16.mxu0 0
    %4543 = vmatpush1.bf16.xpose.msra.mxu0 0
    %4544 = vmatprep.subr.bf16.mxu0 0
    %4545 = vmatpush1.bf16.xpose.msra.mxu0 0
    %4546 = vmatprep.subr.bf16.mxu0 0
    %4547 = vmatpush1.bf16.xpose.msra.mxu0 0
    %4548 = vmatprep.subr.bf16.mxu0 0
    %4549 = vmatpush1.bf16.xpose.msra.mxu0 0
    %4550 = vmatprep.subr.bf16.mxu0 0
    %4551 = vmatpush1.bf16.xpose.msra.mxu0 0
    %4552 = vmatprep.subr.bf16.mxu0 0
    %4553 = vmatpush1.bf16.xpose.msra.mxu0 0
    %4554 = vmatprep.subr.bf16.mxu0 0
    %4555 = vmatpush1.bf16.xpose.msra.mxu0 0
    %4556 = vmatprep.subr.bf16.mxu0 0
    %4557 = vmatpush1.bf16.xpose.msra.mxu0 0
    %4558 = vmatprep.subr.bf16.mxu0 0
    %4559 = vmatpush1.bf16.xpose.msra.mxu0 0
    %4560 = vmatprep.subr.bf16.mxu0 0
    %4561 = vmatpush1.bf16.xpose.msra.mxu0 0
    %4562 = vmatprep.mubr.bf16.mxu0 0
    %4563 = vmatmul.mubr.bf16.gmra.mrb[0].mxu0 %v4507
    %v4564 = vpop.f32.mrb[0].mxu0
    %v4565 = vadd.f32 0.0, %v4564
    %v4566 = vpop.f32.mrb[0].mxu0
    %v4567 = vpop.f32.mrb[0].mxu0
    %v4568 = vadd.f32 0.0, %v4567
    %v4569 = vpop.f32.mrb[0].mxu0
    %4570 = vmatprep.mubr.bf16.mxu0 0
    %4571 = vmatmul.mubr.bf16.gmra.mrb[0].mxu0 %v4510
    %v4572 = vpop.f32.mrb[0].mxu0
    %v4573 = vadd.f32 0.0, %v4572
    %v4574 = vpop.f32.mrb[0].mxu0
    %v4575 = vpop.f32.mrb[0].mxu0
    %v4576 = vadd.f32 0.0, %v4575
    %v4577 = vpop.f32.mrb[0].mxu0
    %4578 = vmatprep.mubr.bf16.mxu0 0
    %4579 = vmatmul.mubr.bf16.gmra.mrb[0].mxu0 %v4513
    %v4580 = vpop.f32.mrb[0].mxu0
    %v4581 = vadd.f32 0.0, %v4580
    %v4582 = vpop.f32.mrb[0].mxu0
    %v4583 = vpop.f32.mrb[0].mxu0
    %v4584 = vadd.f32 0.0, %v4583
    %v4585 = vpop.f32.mrb[0].mxu0
    %4586 = vmatprep.mubr.bf16.mxu0 0
    %4587 = vmatmul.mubr.bf16.gmra.mrb[0].mxu0 %v4516
    %v4588 = vpop.f32.mrb[0].mxu0
    %v4589 = vadd.f32 0.0, %v4588
    %v4590 = vpop.f32.mrb[0].mxu0
    %v4591 = vpop.f32.mrb[0].mxu0
    %v4592 = vadd.f32 0.0, %v4591
    %v4593 = vpop.f32.mrb[0].mxu0
    %4594 = vdwg.mxu0
    %v4595 = vsel %vm892, %v4565, -inf
    %4596 = vmax.xlane.f32.xlu0 %v4595
    %v4597 = vpop.xlane.xlu0 %4596
    %v4598 = vsel %vm892, %v4568, -inf
    %4599 = vmax.xlane.f32.xlu0 %v4598
    %v4600 = vpop.xlane.xlu0 %4599
    %v4601 = vsel %vm892, %v4573, -inf
    %4602 = vmax.xlane.f32.xlu0 %v4601
    %v4603 = vpop.xlane.xlu0 %4602
    %v4604 = vsel %vm892, %v4576, -inf
    %4605 = vmax.xlane.f32.xlu0 %v4604
    %v4606 = vpop.xlane.xlu0 %4605
    %v4607 = vsel %vm892, %v4581, -inf
    %4608 = vmax.xlane.f32.xlu0 %v4607
    %v4609 = vpop.xlane.xlu0 %4608
    %v4610 = vsel %vm892, %v4584, -inf
    %4611 = vmax.xlane.f32.xlu0 %v4610
    %v4612 = vpop.xlane.xlu0 %4611
    %v4613 = vsel %vm892, %v4589, -inf
    %4614 = vmax.xlane.f32.xlu0 %v4613
    %v4615 = vpop.xlane.xlu0 %4614
    %v4616 = vsel %vm892, %v4592, -inf
    %4617 = vmax.xlane.f32.xlu0 %v4616
    %v4618 = vpop.xlane.xlu0 %4617
    %v4619 = vsub.f32 %v4565, %v4597
    %v4620 = vsub.f32 %v4568, %v4600
    %v4621 = vsub.f32 %v4573, %v4603
    %v4622 = vsub.f32 %v4576, %v4606
    %v4623 = vsub.f32 %v4581, %v4609
    %v4624 = vsub.f32 %v4584, %v4612
    %v4625 = vsub.f32 %v4589, %v4615
    %v4626 = vsub.f32 %v4592, %v4618
    %v4627 = vmul.f32 %v4619, 1.442695
    %v4628 = vpow.pop %v4627
    %v4629 = vmul.f32 %v4620, 1.442695
    %v4630 = vpow.pop %v4629
    %v4631 = vmul.f32 %v4621, 1.442695
    %v4632 = vpow.pop %v4631
    %v4633 = vmul.f32 %v4622, 1.442695
    %v4634 = vpow.pop %v4633
    %v4635 = vmul.f32 %v4623, 1.442695
    %v4636 = vpow.pop %v4635
    %v4637 = vmul.f32 %v4624, 1.442695
    %v4638 = vpow.pop %v4637
    %v4639 = vmul.f32 %v4625, 1.442695
    %v4640 = vpow.pop %v4639
    %v4641 = vmul.f32 %v4626, 1.442695
    %v4642 = vpow.pop %v4641
    %v4643 = vsel %vm892, %v4628, 0.0
    %4644 = vadd.xlane.f32.xlu0 %v4643
    %v4645 = vpop.xlane.xlu0 %4644
    %v4646 = vsel %vm892, %v4630, 0.0
    %4647 = vadd.xlane.f32.xlu0 %v4646
    %v4648 = vpop.xlane.xlu0 %4647
    %v4649 = vsel %vm892, %v4632, 0.0
    %4650 = vadd.xlane.f32.xlu0 %v4649
    %v4651 = vpop.xlane.xlu0 %4650
    %v4652 = vsel %vm892, %v4634, 0.0
    %4653 = vadd.xlane.f32.xlu0 %v4652
    %v4654 = vpop.xlane.xlu0 %4653
    %v4655 = vsel %vm892, %v4636, 0.0
    %4656 = vadd.xlane.f32.xlu0 %v4655
    %v4657 = vpop.xlane.xlu0 %4656
    %v4658 = vsel %vm892, %v4638, 0.0
    %4659 = vadd.xlane.f32.xlu0 %v4658
    %v4660 = vpop.xlane.xlu0 %4659
    %v4661 = vsel %vm892, %v4640, 0.0
    %4662 = vadd.xlane.f32.xlu0 %v4661
    %v4663 = vpop.xlane.xlu0 %4662
    %v4664 = vsel %vm892, %v4642, 0.0
    %4665 = vadd.xlane.f32.xlu0 %v4664
    %v4666 = vpop.xlane.xlu0 %4665
    %v4667 = vrcp.pop %v4645
    %v4668 = vrcp.pop %v4648
    %v4669 = vrcp.pop %v4651
    %v4670 = vrcp.pop %v4654
    %v4671 = vrcp.pop %v4657
    %v4672 = vrcp.pop %v4660
    %v4673 = vrcp.pop %v4663
    %v4674 = vrcp.pop %v4666
    %v4675 = vmul.f32 %v4628, %v4667
    %v4676 = vmul.f32 %v4630, %v4668
    %v4677 = vmul.f32 %v4632, %v4669
    %v4678 = vmul.f32 %v4634, %v4670
    %v4679 = vmul.f32 %v4636, %v4671
    %v4680 = vmul.f32 %v4638, %v4672
    %v4681 = vmul.f32 %v4640, %v4673
    %v4682 = vmul.f32 %v4642, %v4674
    %v4683 = vpack.c.bf16 %v4676, %v4675
    %v4684 = vpack.c.bf16 %v4678, %v4677
    %v4685 = vpack.c.bf16 %v4680, %v4679
    %v4686 = vpack.c.bf16 %v4682, %v4681
    %4687 = vrot.lane.b32.xlu0 %v798, 80
    %v4688 = vpop.permute.xlu0 %4687
    %4689 = vrot.lane.b32.xlu0 %v799, 80
    %v4690 = vpop.permute.xlu0 %4689
    %4691 = vrot.lane.b32.xlu0 %v800, 80
    %v4692 = vpop.permute.xlu0 %4691
    %4693 = vrot.lane.b32.xlu0 %v801, 80
    %v4694 = vpop.permute.xlu0 %4693
    %v4700 = vsel %vm892, %v4683, 0
    %v4703 = vsel %vm892, %v4684, 0
    %v4706 = vsel %vm892, %v4685, 0
    %v4709 = vsel %vm892, %v4686, 0
    %4711 = vmatprep.subr.bf16.mxu0 0
    %4712 = vmatpush1.bf16.msra.mxu0 %v4688
    %4713 = vmatprep.subr.bf16.mxu0 0
    %4714 = vmatpush1.bf16.msra.mxu0 %v4690
    %4715 = vmatprep.subr.bf16.mxu0 0
    %4716 = vmatpush1.bf16.msra.mxu0 %v4692
    %4717 = vmatprep.subr.bf16.mxu0 0
    %4718 = vmatpush1.bf16.msra.mxu0 %v4694
    %4719 = vmatprep.subr.bf16.mxu0 0
    %4720 = vmatpush1.bf16.msra.mxu0 0
    %4721 = vmatprep.subr.bf16.mxu0 0
    %4722 = vmatpush1.bf16.msra.mxu0 0
    %4723 = vmatprep.subr.bf16.mxu0 0
    %4724 = vmatpush1.bf16.msra.mxu0 0
    %4725 = vmatprep.subr.bf16.mxu0 0
    %4726 = vmatpush1.bf16.msra.mxu0 0
    %4727 = vmatprep.subr.bf16.mxu0 0
    %4728 = vmatpush1.bf16.msra.mxu0 0
    %4729 = vmatprep.subr.bf16.mxu0 0
    %4730 = vmatpush1.bf16.msra.mxu0 0
    %4731 = vmatprep.subr.bf16.mxu0 0
    %4732 = vmatpush1.bf16.msra.mxu0 0
    %4733 = vmatprep.subr.bf16.mxu0 0
    %4734 = vmatpush1.bf16.msra.mxu0 0
    %4735 = vmatprep.subr.bf16.mxu0 0
    %4736 = vmatpush1.bf16.msra.mxu0 0
    %4737 = vmatprep.subr.bf16.mxu0 0
    %4738 = vmatpush1.bf16.msra.mxu0 0
    %4739 = vmatprep.subr.bf16.mxu0 0
    %4740 = vmatpush1.bf16.msra.mxu0 0
    %4741 = vmatprep.subr.bf16.mxu0 0
    %4742 = vmatpush1.bf16.msra.mxu0 0
    %4743 = vmatprep.mubr.bf16.mxu0 0
    %4744 = vmatmul.mubr.bf16.gmra.mrb[0].mxu0 %v4700
    %v4745 = vpop.f32.mrb[0].mxu0
    %v4746 = vadd.f32 0.0, %v4745
    %v4747 = vpop.f32.mrb[0].mxu0
    %v4748 = vpop.f32.mrb[0].mxu0
    %v4749 = vadd.f32 0.0, %v4748
    %v4750 = vpop.f32.mrb[0].mxu0
    %4751 = vmatprep.mubr.bf16.mxu0 0
    %4752 = vmatmul.mubr.bf16.gmra.mrb[0].mxu0 %v4703
    %v4753 = vpop.f32.mrb[0].mxu0
    %v4754 = vadd.f32 0.0, %v4753
    %v4755 = vpop.f32.mrb[0].mxu0
    %v4756 = vpop.f32.mrb[0].mxu0
    %v4757 = vadd.f32 0.0, %v4756
    %v4758 = vpop.f32.mrb[0].mxu0
    %4759 = vmatprep.mubr.bf16.mxu0 0
    %4760 = vmatmul.mubr.bf16.gmra.mrb[0].mxu0 %v4706
    %v4761 = vpop.f32.mrb[0].mxu0
    %v4762 = vadd.f32 0.0, %v4761
    %v4763 = vpop.f32.mrb[0].mxu0
    %v4764 = vpop.f32.mrb[0].mxu0
    %v4765 = vadd.f32 0.0, %v4764
    %v4766 = vpop.f32.mrb[0].mxu0
    %4767 = vmatprep.mubr.bf16.mxu0 0
    %4768 = vmatmul.mubr.bf16.gmra.mrb[0].mxu0 %v4709
    %v4769 = vpop.f32.mrb[0].mxu0
    %v4770 = vadd.f32 0.0, %v4769
    %v4771 = vpop.f32.mrb[0].mxu0
    %v4772 = vpop.f32.mrb[0].mxu0
    %v4773 = vadd.f32 0.0, %v4772
    %v4774 = vpop.f32.mrb[0].mxu0
    %4775 = vdwg.mxu0
    %4776 = vrot.lane.b32.xlu0 %v478, 68
    %v4777 = vpop.permute.xlu0 %4776
    %4778 = vrot.lane.b32.xlu0 %v479, 68
    %v4779 = vpop.permute.xlu0 %4778
    %4780 = vrot.lane.b32.xlu0 %v480, 68
    %v4781 = vpop.permute.xlu0 %4780
    %4782 = vrot.lane.b32.xlu0 %v481, 68
    %v4783 = vpop.permute.xlu0 %4782
    %4784 = vrot.lane.b32.xlu0 %v638, 68
    %v4785 = vpop.permute.xlu0 %4784
    %4786 = vrot.lane.b32.xlu0 %v639, 68
    %v4787 = vpop.permute.xlu0 %4786
    %4788 = vrot.lane.b32.xlu0 %v640, 68
    %v4789 = vpop.permute.xlu0 %4788
    %4790 = vrot.lane.b32.xlu0 %v641, 68
    %v4791 = vpop.permute.xlu0 %4790
    %v4793 = vsel %vm802, %v4777, 0
    %v4796 = vsel %vm802, %v4779, 0
    %v4799 = vsel %vm802, %v4781, 0
    %v4802 = vsel %vm802, %v4783, 0
    %v4805 = vsel %vm802, %v4785, 0
    %v4808 = vsel %vm802, %v4787, 0
    %v4811 = vsel %vm802, %v4789, 0
    %v4814 = vsel %vm802, %v4791, 0
    %4816 = vmatprep.subr.bf16.mxu0 0
    %4817 = vmatpush1.bf16.xpose.msra.mxu0 %v4805
    %4818 = vmatprep.subr.bf16.mxu0 0
    %4819 = vmatpush1.bf16.xpose.msra.mxu0 %v4808
    %4820 = vmatprep.subr.bf16.mxu0 0
    %4821 = vmatpush1.bf16.xpose.msra.mxu0 %v4811
    %4822 = vmatprep.subr.bf16.mxu0 0
    %4823 = vmatpush1.bf16.xpose.msra.mxu0 %v4814
    %4824 = vmatprep.subr.bf16.mxu0 0
    %4825 = vmatpush1.bf16.xpose.msra.mxu0 0
    %4826 = vmatprep.subr.bf16.mxu0 0
    %4827 = vmatpush1.bf16.xpose.msra.mxu0 0
    %4828 = vmatprep.subr.bf16.mxu0 0
    %4829 = vmatpush1.bf16.xpose.msra.mxu0 0
    %4830 = vmatprep.subr.bf16.mxu0 0
    %4831 = vmatpush1.bf16.xpose.msra.mxu0 0
    %4832 = vmatprep.subr.bf16.mxu0 0
    %4833 = vmatpush1.bf16.xpose.msra.mxu0 0
    %4834 = vmatprep.subr.bf16.mxu0 0
    %4835 = vmatpush1.bf16.xpose.msra.mxu0 0
    %4836 = vmatprep.subr.bf16.mxu0 0
    %4837 = vmatpush1.bf16.xpose.msra.mxu0 0
    %4838 = vmatprep.subr.bf16.mxu0 0
    %4839 = vmatpush1.bf16.xpose.msra.mxu0 0
    %4840 = vmatprep.subr.bf16.mxu0 0
    %4841 = vmatpush1.bf16.xpose.msra.mxu0 0
    %4842 = vmatprep.subr.bf16.mxu0 0
    %4843 = vmatpush1.bf16.xpose.msra.mxu0 0
    %4844 = vmatprep.subr.bf16.mxu0 0
    %4845 = vmatpush1.bf16.xpose.msra.mxu0 0
    %4846 = vmatprep.subr.bf16.mxu0 0
    %4847 = vmatpush1.bf16.xpose.msra.mxu0 0
    %4848 = vmatprep.mubr.bf16.mxu0 0
    %4849 = vmatmul.mubr.bf16.gmra.mrb[0].mxu0 %v4793
    %v4850 = vpop.f32.mrb[0].mxu0
    %v4851 = vadd.f32 0.0, %v4850
    %v4852 = vpop.f32.mrb[0].mxu0
    %v4853 = vpop.f32.mrb[0].mxu0
    %v4854 = vadd.f32 0.0, %v4853
    %v4855 = vpop.f32.mrb[0].mxu0
    %4856 = vmatprep.mubr.bf16.mxu0 0
    %4857 = vmatmul.mubr.bf16.gmra.mrb[0].mxu0 %v4796
    %v4858 = vpop.f32.mrb[0].mxu0
    %v4859 = vadd.f32 0.0, %v4858
    %v4860 = vpop.f32.mrb[0].mxu0
    %v4861 = vpop.f32.mrb[0].mxu0
    %v4862 = vadd.f32 0.0, %v4861
    %v4863 = vpop.f32.mrb[0].mxu0
    %4864 = vmatprep.mubr.bf16.mxu0 0
    %4865 = vmatmul.mubr.bf16.gmra.mrb[0].mxu0 %v4799
    %v4866 = vpop.f32.mrb[0].mxu0
    %v4867 = vadd.f32 0.0, %v4866
    %v4868 = vpop.f32.mrb[0].mxu0
    %v4869 = vpop.f32.mrb[0].mxu0
    %v4870 = vadd.f32 0.0, %v4869
    %v4871 = vpop.f32.mrb[0].mxu0
    %4872 = vmatprep.mubr.bf16.mxu0 0
    %4873 = vmatmul.mubr.bf16.gmra.mrb[0].mxu0 %v4802
    %v4874 = vpop.f32.mrb[0].mxu0
    %v4875 = vadd.f32 0.0, %v4874
    %v4876 = vpop.f32.mrb[0].mxu0
    %v4877 = vpop.f32.mrb[0].mxu0
    %v4878 = vadd.f32 0.0, %v4877
    %v4879 = vpop.f32.mrb[0].mxu0
    %4880 = vdwg.mxu0
    %v4881 = vsel %vm892, %v4851, -inf
    %4882 = vmax.xlane.f32.xlu0 %v4881
    %v4883 = vpop.xlane.xlu0 %4882
    %v4884 = vsel %vm892, %v4854, -inf
    %4885 = vmax.xlane.f32.xlu0 %v4884
    %v4886 = vpop.xlane.xlu0 %4885
    %v4887 = vsel %vm892, %v4859, -inf
    %4888 = vmax.xlane.f32.xlu0 %v4887
    %v4889 = vpop.xlane.xlu0 %4888
    %v4890 = vsel %vm892, %v4862, -inf
    %4891 = vmax.xlane.f32.xlu0 %v4890
    %v4892 = vpop.xlane.xlu0 %4891
    %v4893 = vsel %vm892, %v4867, -inf
    %4894 = vmax.xlane.f32.xlu0 %v4893
    %v4895 = vpop.xlane.xlu0 %4894
    %v4896 = vsel %vm892, %v4870, -inf
    %4897 = vmax.xlane.f32.xlu0 %v4896
    %v4898 = vpop.xlane.xlu0 %4897
    %v4899 = vsel %vm892, %v4875, -inf
    %4900 = vmax.xlane.f32.xlu0 %v4899
    %v4901 = vpop.xlane.xlu0 %4900
    %v4902 = vsel %vm892, %v4878, -inf
    %4903 = vmax.xlane.f32.xlu0 %v4902
    %v4904 = vpop.xlane.xlu0 %4903
    %v4905 = vsub.f32 %v4851, %v4883
    %v4906 = vsub.f32 %v4854, %v4886
    %v4907 = vsub.f32 %v4859, %v4889
    %v4908 = vsub.f32 %v4862, %v4892
    %v4909 = vsub.f32 %v4867, %v4895
    %v4910 = vsub.f32 %v4870, %v4898
    %v4911 = vsub.f32 %v4875, %v4901
    %v4912 = vsub.f32 %v4878, %v4904
    %v4913 = vmul.f32 %v4905, 1.442695
    %v4914 = vpow.pop %v4913
    %v4915 = vmul.f32 %v4906, 1.442695
    %v4916 = vpow.pop %v4915
    %v4917 = vmul.f32 %v4907, 1.442695
    %v4918 = vpow.pop %v4917
    %v4919 = vmul.f32 %v4908, 1.442695
    %v4920 = vpow.pop %v4919
    %v4921 = vmul.f32 %v4909, 1.442695
    %v4922 = vpow.pop %v4921
    %v4923 = vmul.f32 %v4910, 1.442695
    %v4924 = vpow.pop %v4923
    %v4925 = vmul.f32 %v4911, 1.442695
    %v4926 = vpow.pop %v4925
    %v4927 = vmul.f32 %v4912, 1.442695
    %v4928 = vpow.pop %v4927
    %v4929 = vsel %vm892, %v4914, 0.0
    %4930 = vadd.xlane.f32.xlu0 %v4929
    %v4931 = vpop.xlane.xlu0 %4930
    %v4932 = vsel %vm892, %v4916, 0.0
    %4933 = vadd.xlane.f32.xlu0 %v4932
    %v4934 = vpop.xlane.xlu0 %4933
    %v4935 = vsel %vm892, %v4918, 0.0
    %4936 = vadd.xlane.f32.xlu0 %v4935
    %v4937 = vpop.xlane.xlu0 %4936
    %v4938 = vsel %vm892, %v4920, 0.0
    %4939 = vadd.xlane.f32.xlu0 %v4938
    %v4940 = vpop.xlane.xlu0 %4939
    %v4941 = vsel %vm892, %v4922, 0.0
    %4942 = vadd.xlane.f32.xlu0 %v4941
    %v4943 = vpop.xlane.xlu0 %4942
    %v4944 = vsel %vm892, %v4924, 0.0
    %4945 = vadd.xlane.f32.xlu0 %v4944
    %v4946 = vpop.xlane.xlu0 %4945
    %v4947 = vsel %vm892, %v4926, 0.0
    %4948 = vadd.xlane.f32.xlu0 %v4947
    %v4949 = vpop.xlane.xlu0 %4948
    %v4950 = vsel %vm892, %v4928, 0.0
    %4951 = vadd.xlane.f32.xlu0 %v4950
    %v4952 = vpop.xlane.xlu0 %4951
    %v4953 = vrcp.pop %v4931
    %v4954 = vrcp.pop %v4934
    %v4955 = vrcp.pop %v4937
    %v4956 = vrcp.pop %v4940
    %v4957 = vrcp.pop %v4943
    %v4958 = vrcp.pop %v4946
    %v4959 = vrcp.pop %v4949
    %v4960 = vrcp.pop %v4952
    %v4961 = vmul.f32 %v4914, %v4953
    %v4962 = vmul.f32 %v4916, %v4954
    %v4963 = vmul.f32 %v4918, %v4955
    %v4964 = vmul.f32 %v4920, %v4956
    %v4965 = vmul.f32 %v4922, %v4957
    %v4966 = vmul.f32 %v4924, %v4958
    %v4967 = vmul.f32 %v4926, %v4959
    %v4968 = vmul.f32 %v4928, %v4960
    %v4969 = vpack.c.bf16 %v4962, %v4961
    %v4970 = vpack.c.bf16 %v4964, %v4963
    %v4971 = vpack.c.bf16 %v4966, %v4965
    %v4972 = vpack.c.bf16 %v4968, %v4967
    %4973 = vrot.lane.b32.xlu0 %v798, 68
    %v4974 = vpop.permute.xlu0 %4973
    %4975 = vrot.lane.b32.xlu0 %v799, 68
    %v4976 = vpop.permute.xlu0 %4975
    %4977 = vrot.lane.b32.xlu0 %v800, 68
    %v4978 = vpop.permute.xlu0 %4977
    %4979 = vrot.lane.b32.xlu0 %v801, 68
    %v4980 = vpop.permute.xlu0 %4979
    %v4986 = vsel %vm892, %v4969, 0
    %v4989 = vsel %vm892, %v4970, 0
    %v4992 = vsel %vm892, %v4971, 0
    %v4995 = vsel %vm892, %v4972, 0
    %4997 = vmatprep.subr.bf16.mxu0 0
    %4998 = vmatpush1.bf16.msra.mxu0 %v4974
    %4999 = vmatprep.subr.bf16.mxu0 0
    %5000 = vmatpush1.bf16.msra.mxu0 %v4976
    %5001 = vmatprep.subr.bf16.mxu0 0
    %5002 = vmatpush1.bf16.msra.mxu0 %v4978
    %5003 = vmatprep.subr.bf16.mxu0 0
    %5004 = vmatpush1.bf16.msra.mxu0 %v4980
    %5005 = vmatprep.subr.bf16.mxu0 0
    %5006 = vmatpush1.bf16.msra.mxu0 0
    %5007 = vmatprep.subr.bf16.mxu0 0
    %5008 = vmatpush1.bf16.msra.mxu0 0
    %5009 = vmatprep.subr.bf16.mxu0 0
    %5010 = vmatpush1.bf16.msra.mxu0 0
    %5011 = vmatprep.subr.bf16.mxu0 0
    %5012 = vmatpush1.bf16.msra.mxu0 0
    %5013 = vmatprep.subr.bf16.mxu0 0
    %5014 = vmatpush1.bf16.msra.mxu0 0
    %5015 = vmatprep.subr.bf16.mxu0 0
    %5016 = vmatpush1.bf16.msra.mxu0 0
    %5017 = vmatprep.subr.bf16.mxu0 0
    %5018 = vmatpush1.bf16.msra.mxu0 0
    %5019 = vmatprep.subr.bf16.mxu0 0
    %5020 = vmatpush1.bf16.msra.mxu0 0
    %5021 = vmatprep.subr.bf16.mxu0 0
    %5022 = vmatpush1.bf16.msra.mxu0 0
    %5023 = vmatprep.subr.bf16.mxu0 0
    %5024 = vmatpush1.bf16.msra.mxu0 0
    %5025 = vmatprep.subr.bf16.mxu0 0
    %5026 = vmatpush1.bf16.msra.mxu0 0
    %5027 = vmatprep.subr.bf16.mxu0 0
    %5028 = vmatpush1.bf16.msra.mxu0 0
    %5029 = vmatprep.mubr.bf16.mxu0 0
    %5030 = vmatmul.mubr.bf16.gmra.mrb[0].mxu0 %v4986
    %v5031 = vpop.f32.mrb[0].mxu0
    %v5032 = vadd.f32 0.0, %v5031
    %v5033 = vpop.f32.mrb[0].mxu0
    %v5034 = vpop.f32.mrb[0].mxu0
    %v5035 = vadd.f32 0.0, %v5034
    %v5036 = vpop.f32.mrb[0].mxu0
    %5037 = vmatprep.mubr.bf16.mxu0 0
    %5038 = vmatmul.mubr.bf16.gmra.mrb[0].mxu0 %v4989
    %v5039 = vpop.f32.mrb[0].mxu0
    %v5040 = vadd.f32 0.0, %v5039
    %v5041 = vpop.f32.mrb[0].mxu0
    %v5042 = vpop.f32.mrb[0].mxu0
    %v5043 = vadd.f32 0.0, %v5042
    %v5044 = vpop.f32.mrb[0].mxu0
    %5045 = vmatprep.mubr.bf16.mxu0 0
    %5046 = vmatmul.mubr.bf16.gmra.mrb[0].mxu0 %v4992
    %v5047 = vpop.f32.mrb[0].mxu0
    %v5048 = vadd.f32 0.0, %v5047
    %v5049 = vpop.f32.mrb[0].mxu0
    %v5050 = vpop.f32.mrb[0].mxu0
    %v5051 = vadd.f32 0.0, %v5050
    %v5052 = vpop.f32.mrb[0].mxu0
    %5053 = vmatprep.mubr.bf16.mxu0 0
    %5054 = vmatmul.mubr.bf16.gmra.mrb[0].mxu0 %v4995
    %v5055 = vpop.f32.mrb[0].mxu0
    %v5056 = vadd.f32 0.0, %v5055
    %v5057 = vpop.f32.mrb[0].mxu0
    %v5058 = vpop.f32.mrb[0].mxu0
    %v5059 = vadd.f32 0.0, %v5058
    %v5060 = vpop.f32.mrb[0].mxu0
    %5061 = vdwg.mxu0
    %5062 = vrot.lane.b32.xlu0 %v478, 56
    %v5063 = vpop.permute.xlu0 %5062
    %5064 = vrot.lane.b32.xlu0 %v479, 56
    %v5065 = vpop.permute.xlu0 %5064
    %5066 = vrot.lane.b32.xlu0 %v480, 56
    %v5067 = vpop.permute.xlu0 %5066
    %5068 = vrot.lane.b32.xlu0 %v481, 56
    %v5069 = vpop.permute.xlu0 %5068
    %5070 = vrot.lane.b32.xlu0 %v638, 56
    %v5071 = vpop.permute.xlu0 %5070
    %5072 = vrot.lane.b32.xlu0 %v639, 56
    %v5073 = vpop.permute.xlu0 %5072
    %5074 = vrot.lane.b32.xlu0 %v640, 56
    %v5075 = vpop.permute.xlu0 %5074
    %5076 = vrot.lane.b32.xlu0 %v641, 56
    %v5077 = vpop.permute.xlu0 %5076
    %v5079 = vsel %vm802, %v5063, 0
    %v5082 = vsel %vm802, %v5065, 0
    %v5085 = vsel %vm802, %v5067, 0
    %v5088 = vsel %vm802, %v5069, 0
    %v5091 = vsel %vm802, %v5071, 0
    %v5094 = vsel %vm802, %v5073, 0
    %v5097 = vsel %vm802, %v5075, 0
    %v5100 = vsel %vm802, %v5077, 0
    %5102 = vmatprep.subr.bf16.mxu0 0
    %5103 = vmatpush1.bf16.xpose.msra.mxu0 %v5091
    %5104 = vmatprep.subr.bf16.mxu0 0
    %5105 = vmatpush1.bf16.xpose.msra.mxu0 %v5094
    %5106 = vmatprep.subr.bf16.mxu0 0
    %5107 = vmatpush1.bf16.xpose.msra.mxu0 %v5097
    %5108 = vmatprep.subr.bf16.mxu0 0
    %5109 = vmatpush1.bf16.xpose.msra.mxu0 %v5100
    %5110 = vmatprep.subr.bf16.mxu0 0
    %5111 = vmatpush1.bf16.xpose.msra.mxu0 0
    %5112 = vmatprep.subr.bf16.mxu0 0
    %5113 = vmatpush1.bf16.xpose.msra.mxu0 0
    %5114 = vmatprep.subr.bf16.mxu0 0
    %5115 = vmatpush1.bf16.xpose.msra.mxu0 0
    %5116 = vmatprep.subr.bf16.mxu0 0
    %5117 = vmatpush1.bf16.xpose.msra.mxu0 0
    %5118 = vmatprep.subr.bf16.mxu0 0
    %5119 = vmatpush1.bf16.xpose.msra.mxu0 0
    %5120 = vmatprep.subr.bf16.mxu0 0
    %5121 = vmatpush1.bf16.xpose.msra.mxu0 0
    %5122 = vmatprep.subr.bf16.mxu0 0
    %5123 = vmatpush1.bf16.xpose.msra.mxu0 0
    %5124 = vmatprep.subr.bf16.mxu0 0
    %5125 = vmatpush1.bf16.xpose.msra.mxu0 0
    %5126 = vmatprep.subr.bf16.mxu0 0
    %5127 = vmatpush1.bf16.xpose.msra.mxu0 0
    %5128 = vmatprep.subr.bf16.mxu0 0
    %5129 = vmatpush1.bf16.xpose.msra.mxu0 0
    %5130 = vmatprep.subr.bf16.mxu0 0
    %5131 = vmatpush1.bf16.xpose.msra.mxu0 0
    %5132 = vmatprep.subr.bf16.mxu0 0
    %5133 = vmatpush1.bf16.xpose.msra.mxu0 0
    %5134 = vmatprep.mubr.bf16.mxu0 0
    %5135 = vmatmul.mubr.bf16.gmra.mrb[0].mxu0 %v5079
    %v5136 = vpop.f32.mrb[0].mxu0
    %v5137 = vadd.f32 0.0, %v5136
    %v5138 = vpop.f32.mrb[0].mxu0
    %v5139 = vpop.f32.mrb[0].mxu0
    %v5140 = vadd.f32 0.0, %v5139
    %v5141 = vpop.f32.mrb[0].mxu0
    %5142 = vmatprep.mubr.bf16.mxu0 0
    %5143 = vmatmul.mubr.bf16.gmra.mrb[0].mxu0 %v5082
    %v5144 = vpop.f32.mrb[0].mxu0
    %v5145 = vadd.f32 0.0, %v5144
    %v5146 = vpop.f32.mrb[0].mxu0
    %v5147 = vpop.f32.mrb[0].mxu0
    %v5148 = vadd.f32 0.0, %v5147
    %v5149 = vpop.f32.mrb[0].mxu0
    %5150 = vmatprep.mubr.bf16.mxu0 0
    %5151 = vmatmul.mubr.bf16.gmra.mrb[0].mxu0 %v5085
    %v5152 = vpop.f32.mrb[0].mxu0
    %v5153 = vadd.f32 0.0, %v5152
    %v5154 = vpop.f32.mrb[0].mxu0
    %v5155 = vpop.f32.mrb[0].mxu0
    %v5156 = vadd.f32 0.0, %v5155
    %v5157 = vpop.f32.mrb[0].mxu0
    %5158 = vmatprep.mubr.bf16.mxu0 0
    %5159 = vmatmul.mubr.bf16.gmra.mrb[0].mxu0 %v5088
    %v5160 = vpop.f32.mrb[0].mxu0
    %v5161 = vadd.f32 0.0, %v5160
    %v5162 = vpop.f32.mrb[0].mxu0
    %v5163 = vpop.f32.mrb[0].mxu0
    %v5164 = vadd.f32 0.0, %v5163
    %v5165 = vpop.f32.mrb[0].mxu0
    %5166 = vdwg.mxu0
    %v5167 = vsel %vm892, %v5137, -inf
    %5168 = vmax.xlane.f32.xlu0 %v5167
    %v5169 = vpop.xlane.xlu0 %5168
    %v5170 = vsel %vm892, %v5140, -inf
    %5171 = vmax.xlane.f32.xlu0 %v5170
    %v5172 = vpop.xlane.xlu0 %5171
    %v5173 = vsel %vm892, %v5145, -inf
    %5174 = vmax.xlane.f32.xlu0 %v5173
    %v5175 = vpop.xlane.xlu0 %5174
    %v5176 = vsel %vm892, %v5148, -inf
    %5177 = vmax.xlane.f32.xlu0 %v5176
    %v5178 = vpop.xlane.xlu0 %5177
    %v5179 = vsel %vm892, %v5153, -inf
    %5180 = vmax.xlane.f32.xlu0 %v5179
    %v5181 = vpop.xlane.xlu0 %5180
    %v5182 = vsel %vm892, %v5156, -inf
    %5183 = vmax.xlane.f32.xlu0 %v5182
    %v5184 = vpop.xlane.xlu0 %5183
    %v5185 = vsel %vm892, %v5161, -inf
    %5186 = vmax.xlane.f32.xlu0 %v5185
    %v5187 = vpop.xlane.xlu0 %5186
    %v5188 = vsel %vm892, %v5164, -inf
    %5189 = vmax.xlane.f32.xlu0 %v5188
    %v5190 = vpop.xlane.xlu0 %5189
    %v5191 = vsub.f32 %v5137, %v5169
    %v5192 = vsub.f32 %v5140, %v5172
    %v5193 = vsub.f32 %v5145, %v5175
    %v5194 = vsub.f32 %v5148, %v5178
    %v5195 = vsub.f32 %v5153, %v5181
    %v5196 = vsub.f32 %v5156, %v5184
    %v5197 = vsub.f32 %v5161, %v5187
    %v5198 = vsub.f32 %v5164, %v5190
    %v5199 = vmul.f32 %v5191, 1.442695
    %v5200 = vpow.pop %v5199
    %v5201 = vmul.f32 %v5192, 1.442695
    %v5202 = vpow.pop %v5201
    %v5203 = vmul.f32 %v5193, 1.442695
    %v5204 = vpow.pop %v5203
    %v5205 = vmul.f32 %v5194, 1.442695
    %v5206 = vpow.pop %v5205
    %v5207 = vmul.f32 %v5195, 1.442695
    %v5208 = vpow.pop %v5207
    %v5209 = vmul.f32 %v5196, 1.442695
    %v5210 = vpow.pop %v5209
    %v5211 = vmul.f32 %v5197, 1.442695
    %v5212 = vpow.pop %v5211
    %v5213 = vmul.f32 %v5198, 1.442695
    %v5214 = vpow.pop %v5213
    %v5215 = vsel %vm892, %v5200, 0.0
    %5216 = vadd.xlane.f32.xlu0 %v5215
    %v5217 = vpop.xlane.xlu0 %5216
    %v5218 = vsel %vm892, %v5202, 0.0
    %5219 = vadd.xlane.f32.xlu0 %v5218
    %v5220 = vpop.xlane.xlu0 %5219
    %v5221 = vsel %vm892, %v5204, 0.0
    %5222 = vadd.xlane.f32.xlu0 %v5221
    %v5223 = vpop.xlane.xlu0 %5222
    %v5224 = vsel %vm892, %v5206, 0.0
    %5225 = vadd.xlane.f32.xlu0 %v5224
    %v5226 = vpop.xlane.xlu0 %5225
    %v5227 = vsel %vm892, %v5208, 0.0
    %5228 = vadd.xlane.f32.xlu0 %v5227
    %v5229 = vpop.xlane.xlu0 %5228
    %v5230 = vsel %vm892, %v5210, 0.0
    %5231 = vadd.xlane.f32.xlu0 %v5230
    %v5232 = vpop.xlane.xlu0 %5231
    %v5233 = vsel %vm892, %v5212, 0.0
    %5234 = vadd.xlane.f32.xlu0 %v5233
    %v5235 = vpop.xlane.xlu0 %5234
    %v5236 = vsel %vm892, %v5214, 0.0
    %5237 = vadd.xlane.f32.xlu0 %v5236
    %v5238 = vpop.xlane.xlu0 %5237
    %v5239 = vrcp.pop %v5217
    %v5240 = vrcp.pop %v5220
    %v5241 = vrcp.pop %v5223
    %v5242 = vrcp.pop %v5226
    %v5243 = vrcp.pop %v5229
    %v5244 = vrcp.pop %v5232
    %v5245 = vrcp.pop %v5235
    %v5246 = vrcp.pop %v5238
    %v5247 = vmul.f32 %v5200, %v5239
    %v5248 = vmul.f32 %v5202, %v5240
    %v5249 = vmul.f32 %v5204, %v5241
    %v5250 = vmul.f32 %v5206, %v5242
    %v5251 = vmul.f32 %v5208, %v5243
    %v5252 = vmul.f32 %v5210, %v5244
    %v5253 = vmul.f32 %v5212, %v5245
    %v5254 = vmul.f32 %v5214, %v5246
    %v5255 = vpack.c.bf16 %v5248, %v5247
    %v5256 = vpack.c.bf16 %v5250, %v5249
    %v5257 = vpack.c.bf16 %v5252, %v5251
    %v5258 = vpack.c.bf16 %v5254, %v5253
    %5259 = vrot.lane.b32.xlu0 %v798, 56
    %v5260 = vpop.permute.xlu0 %5259
    %5261 = vrot.lane.b32.xlu0 %v799, 56
    %v5262 = vpop.permute.xlu0 %5261
    %5263 = vrot.lane.b32.xlu0 %v800, 56
    %v5264 = vpop.permute.xlu0 %5263
    %5265 = vrot.lane.b32.xlu0 %v801, 56
    %v5266 = vpop.permute.xlu0 %5265
    %v5272 = vsel %vm892, %v5255, 0
    %v5275 = vsel %vm892, %v5256, 0
    %v5278 = vsel %vm892, %v5257, 0
    %v5281 = vsel %vm892, %v5258, 0
    %5283 = vmatprep.subr.bf16.mxu0 0
    %5284 = vmatpush1.bf16.msra.mxu0 %v5260
    %5285 = vmatprep.subr.bf16.mxu0 0
    %5286 = vmatpush1.bf16.msra.mxu0 %v5262
    %5287 = vmatprep.subr.bf16.mxu0 0
    %5288 = vmatpush1.bf16.msra.mxu0 %v5264
    %5289 = vmatprep.subr.bf16.mxu0 0
    %5290 = vmatpush1.bf16.msra.mxu0 %v5266
    %5291 = vmatprep.subr.bf16.mxu0 0
    %5292 = vmatpush1.bf16.msra.mxu0 0
    %5293 = vmatprep.subr.bf16.mxu0 0
    %5294 = vmatpush1.bf16.msra.mxu0 0
    %5295 = vmatprep.subr.bf16.mxu0 0
    %5296 = vmatpush1.bf16.msra.mxu0 0
    %5297 = vmatprep.subr.bf16.mxu0 0
    %5298 = vmatpush1.bf16.msra.mxu0 0
    %5299 = vmatprep.subr.bf16.mxu0 0
    %5300 = vmatpush1.bf16.msra.mxu0 0
    %5301 = vmatprep.subr.bf16.mxu0 0
    %5302 = vmatpush1.bf16.msra.mxu0 0
    %5303 = vmatprep.subr.bf16.mxu0 0
    %5304 = vmatpush1.bf16.msra.mxu0 0
    %5305 = vmatprep.subr.bf16.mxu0 0
    %5306 = vmatpush1.bf16.msra.mxu0 0
    %5307 = vmatprep.subr.bf16.mxu0 0
    %5308 = vmatpush1.bf16.msra.mxu0 0
    %5309 = vmatprep.subr.bf16.mxu0 0
    %5310 = vmatpush1.bf16.msra.mxu0 0
    %5311 = vmatprep.subr.bf16.mxu0 0
    %5312 = vmatpush1.bf16.msra.mxu0 0
    %5313 = vmatprep.subr.bf16.mxu0 0
    %5314 = vmatpush1.bf16.msra.mxu0 0
    %5315 = vmatprep.mubr.bf16.mxu0 0
    %5316 = vmatmul.mubr.bf16.gmra.mrb[0].mxu0 %v5272
    %v5317 = vpop.f32.mrb[0].mxu0
    %v5318 = vadd.f32 0.0, %v5317
    %v5319 = vpop.f32.mrb[0].mxu0
    %v5320 = vpop.f32.mrb[0].mxu0
    %v5321 = vadd.f32 0.0, %v5320
    %v5322 = vpop.f32.mrb[0].mxu0
    %5323 = vmatprep.mubr.bf16.mxu0 0
    %5324 = vmatmul.mubr.bf16.gmra.mrb[0].mxu0 %v5275
    %v5325 = vpop.f32.mrb[0].mxu0
    %v5326 = vadd.f32 0.0, %v5325
    %v5327 = vpop.f32.mrb[0].mxu0
    %v5328 = vpop.f32.mrb[0].mxu0
    %v5329 = vadd.f32 0.0, %v5328
    %v5330 = vpop.f32.mrb[0].mxu0
    %5331 = vmatprep.mubr.bf16.mxu0 0
    %5332 = vmatmul.mubr.bf16.gmra.mrb[0].mxu0 %v5278
    %v5333 = vpop.f32.mrb[0].mxu0
    %v5334 = vadd.f32 0.0, %v5333
    %v5335 = vpop.f32.mrb[0].mxu0
    %v5336 = vpop.f32.mrb[0].mxu0
    %v5337 = vadd.f32 0.0, %v5336
    %v5338 = vpop.f32.mrb[0].mxu0
    %5339 = vmatprep.mubr.bf16.mxu0 0
    %5340 = vmatmul.mubr.bf16.gmra.mrb[0].mxu0 %v5281
    %v5341 = vpop.f32.mrb[0].mxu0
    %v5342 = vadd.f32 0.0, %v5341
    %v5343 = vpop.f32.mrb[0].mxu0
    %v5344 = vpop.f32.mrb[0].mxu0
    %v5345 = vadd.f32 0.0, %v5344
    %v5346 = vpop.f32.mrb[0].mxu0
    %5347 = vdwg.mxu0
    %5348 = vrot.lane.b32.xlu0 %v478, 44
    %v5349 = vpop.permute.xlu0 %5348
    %5350 = vrot.lane.b32.xlu0 %v479, 44
    %v5351 = vpop.permute.xlu0 %5350
    %5352 = vrot.lane.b32.xlu0 %v480, 44
    %v5353 = vpop.permute.xlu0 %5352
    %5354 = vrot.lane.b32.xlu0 %v481, 44
    %v5355 = vpop.permute.xlu0 %5354
    %5356 = vrot.lane.b32.xlu0 %v638, 44
    %v5357 = vpop.permute.xlu0 %5356
    %5358 = vrot.lane.b32.xlu0 %v639, 44
    %v5359 = vpop.permute.xlu0 %5358
    %5360 = vrot.lane.b32.xlu0 %v640, 44
    %v5361 = vpop.permute.xlu0 %5360
    %5362 = vrot.lane.b32.xlu0 %v641, 44
    %v5363 = vpop.permute.xlu0 %5362
    %v5365 = vsel %vm802, %v5349, 0
    %v5368 = vsel %vm802, %v5351, 0
    %v5371 = vsel %vm802, %v5353, 0
    %v5374 = vsel %vm802, %v5355, 0
    %v5377 = vsel %vm802, %v5357, 0
    %v5380 = vsel %vm802, %v5359, 0
    %v5383 = vsel %vm802, %v5361, 0
    %v5386 = vsel %vm802, %v5363, 0
    %5388 = vmatprep.subr.bf16.mxu0 0
    %5389 = vmatpush1.bf16.xpose.msra.mxu0 %v5377
    %5390 = vmatprep.subr.bf16.mxu0 0
    %5391 = vmatpush1.bf16.xpose.msra.mxu0 %v5380
    %5392 = vmatprep.subr.bf16.mxu0 0
    %5393 = vmatpush1.bf16.xpose.msra.mxu0 %v5383
    %5394 = vmatprep.subr.bf16.mxu0 0
    %5395 = vmatpush1.bf16.xpose.msra.mxu0 %v5386
    %5396 = vmatprep.subr.bf16.mxu0 0
    %5397 = vmatpush1.bf16.xpose.msra.mxu0 0
    %5398 = vmatprep.subr.bf16.mxu0 0
    %5399 = vmatpush1.bf16.xpose.msra.mxu0 0
    %5400 = vmatprep.subr.bf16.mxu0 0
    %5401 = vmatpush1.bf16.xpose.msra.mxu0 0
    %5402 = vmatprep.subr.bf16.mxu0 0
    %5403 = vmatpush1.bf16.xpose.msra.mxu0 0
    %5404 = vmatprep.subr.bf16.mxu0 0
    %5405 = vmatpush1.bf16.xpose.msra.mxu0 0
    %5406 = vmatprep.subr.bf16.mxu0 0
    %5407 = vmatpush1.bf16.xpose.msra.mxu0 0
    %5408 = vmatprep.subr.bf16.mxu0 0
    %5409 = vmatpush1.bf16.xpose.msra.mxu0 0
    %5410 = vmatprep.subr.bf16.mxu0 0
    %5411 = vmatpush1.bf16.xpose.msra.mxu0 0
    %5412 = vmatprep.subr.bf16.mxu0 0
    %5413 = vmatpush1.bf16.xpose.msra.mxu0 0
    %5414 = vmatprep.subr.bf16.mxu0 0
    %5415 = vmatpush1.bf16.xpose.msra.mxu0 0
    %5416 = vmatprep.subr.bf16.mxu0 0
    %5417 = vmatpush1.bf16.xpose.msra.mxu0 0
    %5418 = vmatprep.subr.bf16.mxu0 0
    %5419 = vmatpush1.bf16.xpose.msra.mxu0 0
    %5420 = vmatprep.mubr.bf16.mxu0 0
    %5421 = vmatmul.mubr.bf16.gmra.mrb[0].mxu0 %v5365
    %v5422 = vpop.f32.mrb[0].mxu0
    %v5423 = vadd.f32 0.0, %v5422
    %v5424 = vpop.f32.mrb[0].mxu0
    %v5425 = vpop.f32.mrb[0].mxu0
    %v5426 = vadd.f32 0.0, %v5425
    %v5427 = vpop.f32.mrb[0].mxu0
    %5428 = vmatprep.mubr.bf16.mxu0 0
    %5429 = vmatmul.mubr.bf16.gmra.mrb[0].mxu0 %v5368
    %v5430 = vpop.f32.mrb[0].mxu0
    %v5431 = vadd.f32 0.0, %v5430
    %v5432 = vpop.f32.mrb[0].mxu0
    %v5433 = vpop.f32.mrb[0].mxu0
    %v5434 = vadd.f32 0.0, %v5433
    %v5435 = vpop.f32.mrb[0].mxu0
    %5436 = vmatprep.mubr.bf16.mxu0 0
    %5437 = vmatmul.mubr.bf16.gmra.mrb[0].mxu0 %v5371
    %v5438 = vpop.f32.mrb[0].mxu0
    %v5439 = vadd.f32 0.0, %v5438
    %v5440 = vpop.f32.mrb[0].mxu0
    %v5441 = vpop.f32.mrb[0].mxu0
    %v5442 = vadd.f32 0.0, %v5441
    %v5443 = vpop.f32.mrb[0].mxu0
    %5444 = vmatprep.mubr.bf16.mxu0 0
    %5445 = vmatmul.mubr.bf16.gmra.mrb[0].mxu0 %v5374
    %v5446 = vpop.f32.mrb[0].mxu0
    %v5447 = vadd.f32 0.0, %v5446
    %v5448 = vpop.f32.mrb[0].mxu0
    %v5449 = vpop.f32.mrb[0].mxu0
    %v5450 = vadd.f32 0.0, %v5449
    %v5451 = vpop.f32.mrb[0].mxu0
    %5452 = vdwg.mxu0
    %v5453 = vsel %vm892, %v5423, -inf
    %5454 = vmax.xlane.f32.xlu0 %v5453
    %v5455 = vpop.xlane.xlu0 %5454
    %v5456 = vsel %vm892, %v5426, -inf
    %5457 = vmax.xlane.f32.xlu0 %v5456
    %v5458 = vpop.xlane.xlu0 %5457
    %v5459 = vsel %vm892, %v5431, -inf
    %5460 = vmax.xlane.f32.xlu0 %v5459
    %v5461 = vpop.xlane.xlu0 %5460
    %v5462 = vsel %vm892, %v5434, -inf
    %5463 = vmax.xlane.f32.xlu0 %v5462
    %v5464 = vpop.xlane.xlu0 %5463
    %v5465 = vsel %vm892, %v5439, -inf
    %5466 = vmax.xlane.f32.xlu0 %v5465
    %v5467 = vpop.xlane.xlu0 %5466
    %v5468 = vsel %vm892, %v5442, -inf
    %5469 = vmax.xlane.f32.xlu0 %v5468
    %v5470 = vpop.xlane.xlu0 %5469
    %v5471 = vsel %vm892, %v5447, -inf
    %5472 = vmax.xlane.f32.xlu0 %v5471
    %v5473 = vpop.xlane.xlu0 %5472
    %v5474 = vsel %vm892, %v5450, -inf
    %5475 = vmax.xlane.f32.xlu0 %v5474
    %v5476 = vpop.xlane.xlu0 %5475
    %v5477 = vsub.f32 %v5423, %v5455
    %v5478 = vsub.f32 %v5426, %v5458
    %v5479 = vsub.f32 %v5431, %v5461
    %v5480 = vsub.f32 %v5434, %v5464
    %v5481 = vsub.f32 %v5439, %v5467
    %v5482 = vsub.f32 %v5442, %v5470
    %v5483 = vsub.f32 %v5447, %v5473
    %v5484 = vsub.f32 %v5450, %v5476
    %v5485 = vmul.f32 %v5477, 1.442695
    %v5486 = vpow.pop %v5485
    %v5487 = vmul.f32 %v5478, 1.442695
    %v5488 = vpow.pop %v5487
    %v5489 = vmul.f32 %v5479, 1.442695
    %v5490 = vpow.pop %v5489
    %v5491 = vmul.f32 %v5480, 1.442695
    %v5492 = vpow.pop %v5491
    %v5493 = vmul.f32 %v5481, 1.442695
    %v5494 = vpow.pop %v5493
    %v5495 = vmul.f32 %v5482, 1.442695
    %v5496 = vpow.pop %v5495
    %v5497 = vmul.f32 %v5483, 1.442695
    %v5498 = vpow.pop %v5497
    %v5499 = vmul.f32 %v5484, 1.442695
    %v5500 = vpow.pop %v5499
    %v5501 = vsel %vm892, %v5486, 0.0
    %5502 = vadd.xlane.f32.xlu0 %v5501
    %v5503 = vpop.xlane.xlu0 %5502
    %v5504 = vsel %vm892, %v5488, 0.0
    %5505 = vadd.xlane.f32.xlu0 %v5504
    %v5506 = vpop.xlane.xlu0 %5505
    %v5507 = vsel %vm892, %v5490, 0.0
    %5508 = vadd.xlane.f32.xlu0 %v5507
    %v5509 = vpop.xlane.xlu0 %5508
    %v5510 = vsel %vm892, %v5492, 0.0
    %5511 = vadd.xlane.f32.xlu0 %v5510
    %v5512 = vpop.xlane.xlu0 %5511
    %v5513 = vsel %vm892, %v5494, 0.0
    %5514 = vadd.xlane.f32.xlu0 %v5513
    %v5515 = vpop.xlane.xlu0 %5514
    %v5516 = vsel %vm892, %v5496, 0.0
    %5517 = vadd.xlane.f32.xlu0 %v5516
    %v5518 = vpop.xlane.xlu0 %5517
    %v5519 = vsel %vm892, %v5498, 0.0
    %5520 = vadd.xlane.f32.xlu0 %v5519
    %v5521 = vpop.xlane.xlu0 %5520
    %v5522 = vsel %vm892, %v5500, 0.0
    %5523 = vadd.xlane.f32.xlu0 %v5522
    %v5524 = vpop.xlane.xlu0 %5523
    %v5525 = vrcp.pop %v5503
    %v5526 = vrcp.pop %v5506
    %v5527 = vrcp.pop %v5509
    %v5528 = vrcp.pop %v5512
    %v5529 = vrcp.pop %v5515
    %v5530 = vrcp.pop %v5518
    %v5531 = vrcp.pop %v5521
    %v5532 = vrcp.pop %v5524
    %v5533 = vmul.f32 %v5486, %v5525
    %v5534 = vmul.f32 %v5488, %v5526
    %v5535 = vmul.f32 %v5490, %v5527
    %v5536 = vmul.f32 %v5492, %v5528
    %v5537 = vmul.f32 %v5494, %v5529
    %v5538 = vmul.f32 %v5496, %v5530
    %v5539 = vmul.f32 %v5498, %v5531
    %v5540 = vmul.f32 %v5500, %v5532
    %v5541 = vpack.c.bf16 %v5534, %v5533
    %v5542 = vpack.c.bf16 %v5536, %v5535
    %v5543 = vpack.c.bf16 %v5538, %v5537
    %v5544 = vpack.c.bf16 %v5540, %v5539
    %5545 = vrot.lane.b32.xlu0 %v798, 44
    %v5546 = vpop.permute.xlu0 %5545
    %5547 = vrot.lane.b32.xlu0 %v799, 44
    %v5548 = vpop.permute.xlu0 %5547
    %5549 = vrot.lane.b32.xlu0 %v800, 44
    %v5550 = vpop.permute.xlu0 %5549
    %5551 = vrot.lane.b32.xlu0 %v801, 44
    %v5552 = vpop.permute.xlu0 %5551
    %v5558 = vsel %vm892, %v5541, 0
    %v5561 = vsel %vm892, %v5542, 0
    %v5564 = vsel %vm892, %v5543, 0
    %v5567 = vsel %vm892, %v5544, 0
    %5569 = vmatprep.subr.bf16.mxu0 0
    %5570 = vmatpush1.bf16.msra.mxu0 %v5546
    %5571 = vmatprep.subr.bf16.mxu0 0
    %5572 = vmatpush1.bf16.msra.mxu0 %v5548
    %5573 = vmatprep.subr.bf16.mxu0 0
    %5574 = vmatpush1.bf16.msra.mxu0 %v5550
    %5575 = vmatprep.subr.bf16.mxu0 0
    %5576 = vmatpush1.bf16.msra.mxu0 %v5552
    %5577 = vmatprep.subr.bf16.mxu0 0
    %5578 = vmatpush1.bf16.msra.mxu0 0
    %5579 = vmatprep.subr.bf16.mxu0 0
    %5580 = vmatpush1.bf16.msra.mxu0 0
    %5581 = vmatprep.subr.bf16.mxu0 0
    %5582 = vmatpush1.bf16.msra.mxu0 0
    %5583 = vmatprep.subr.bf16.mxu0 0
    %5584 = vmatpush1.bf16.msra.mxu0 0
    %5585 = vmatprep.subr.bf16.mxu0 0
    %5586 = vmatpush1.bf16.msra.mxu0 0
    %5587 = vmatprep.subr.bf16.mxu0 0
    %5588 = vmatpush1.bf16.msra.mxu0 0
    %5589 = vmatprep.subr.bf16.mxu0 0
    %5590 = vmatpush1.bf16.msra.mxu0 0
    %5591 = vmatprep.subr.bf16.mxu0 0
    %5592 = vmatpush1.bf16.msra.mxu0 0
    %5593 = vmatprep.subr.bf16.mxu0 0
    %5594 = vmatpush1.bf16.msra.mxu0 0
    %5595 = vmatprep.subr.bf16.mxu0 0
    %5596 = vmatpush1.bf16.msra.mxu0 0
    %5597 = vmatprep.subr.bf16.mxu0 0
    %5598 = vmatpush1.bf16.msra.mxu0 0
    %5599 = vmatprep.subr.bf16.mxu0 0
    %5600 = vmatpush1.bf16.msra.mxu0 0
    %5601 = vmatprep.mubr.bf16.mxu0 0
    %5602 = vmatmul.mubr.bf16.gmra.mrb[0].mxu0 %v5558
    %v5603 = vpop.f32.mrb[0].mxu0
    %v5604 = vadd.f32 0.0, %v5603
    %v5605 = vpop.f32.mrb[0].mxu0
    %v5606 = vpop.f32.mrb[0].mxu0
    %v5607 = vadd.f32 0.0, %v5606
    %v5608 = vpop.f32.mrb[0].mxu0
    %5609 = vmatprep.mubr.bf16.mxu0 0
    %5610 = vmatmul.mubr.bf16.gmra.mrb[0].mxu0 %v5561
    %v5611 = vpop.f32.mrb[0].mxu0
    %v5612 = vadd.f32 0.0, %v5611
    %v5613 = vpop.f32.mrb[0].mxu0
    %v5614 = vpop.f32.mrb[0].mxu0
    %v5615 = vadd.f32 0.0, %v5614
    %v5616 = vpop.f32.mrb[0].mxu0
    %5617 = vmatprep.mubr.bf16.mxu0 0
    %5618 = vmatmul.mubr.bf16.gmra.mrb[0].mxu0 %v5564
    %v5619 = vpop.f32.mrb[0].mxu0
    %v5620 = vadd.f32 0.0, %v5619
    %v5621 = vpop.f32.mrb[0].mxu0
    %v5622 = vpop.f32.mrb[0].mxu0
    %v5623 = vadd.f32 0.0, %v5622
    %v5624 = vpop.f32.mrb[0].mxu0
    %5625 = vmatprep.mubr.bf16.mxu0 0
    %5626 = vmatmul.mubr.bf16.gmra.mrb[0].mxu0 %v5567
    %v5627 = vpop.f32.mrb[0].mxu0
    %v5628 = vadd.f32 0.0, %v5627
    %v5629 = vpop.f32.mrb[0].mxu0
    %v5630 = vpop.f32.mrb[0].mxu0
    %v5631 = vadd.f32 0.0, %v5630
    %v5632 = vpop.f32.mrb[0].mxu0
    %5633 = vdwg.mxu0
    %5642 = vrot.lane.b32.xlu0 %v3888, 12
    %v5643 = vpop.permute.xlu0 %5642
    %5644 = vrot.lane.b32.xlu0 %v3891, 12
    %v5645 = vpop.permute.xlu0 %5644
    %5646 = vrot.lane.b32.xlu0 %v3896, 12
    %v5647 = vpop.permute.xlu0 %5646
    %5648 = vrot.lane.b32.xlu0 %v3899, 12
    %v5649 = vpop.permute.xlu0 %5648
    %5650 = vrot.lane.b32.xlu0 %v3904, 12
    %v5651 = vpop.permute.xlu0 %5650
    %5652 = vrot.lane.b32.xlu0 %v3907, 12
    %v5653 = vpop.permute.xlu0 %5652
    %5654 = vrot.lane.b32.xlu0 %v3912, 12
    %v5655 = vpop.permute.xlu0 %5654
    %5656 = vrot.lane.b32.xlu0 %v3915, 12
    %v5657 = vpop.permute.xlu0 %5656
    %5674 = vrot.lane.b32.xlu0 %v4174, 24
    %v5675 = vpop.permute.xlu0 %5674
    %5676 = vrot.lane.b32.xlu0 %v4177, 24
    %v5677 = vpop.permute.xlu0 %5676
    %5678 = vrot.lane.b32.xlu0 %v4182, 24
    %v5679 = vpop.permute.xlu0 %5678
    %5680 = vrot.lane.b32.xlu0 %v4185, 24
    %v5681 = vpop.permute.xlu0 %5680
    %5682 = vrot.lane.b32.xlu0 %v4190, 24
    %v5683 = vpop.permute.xlu0 %5682
    %5684 = vrot.lane.b32.xlu0 %v4193, 24
    %v5685 = vpop.permute.xlu0 %5684
    %5686 = vrot.lane.b32.xlu0 %v4198, 24
    %v5687 = vpop.permute.xlu0 %5686
    %5688 = vrot.lane.b32.xlu0 %v4201, 24
    %v5689 = vpop.permute.xlu0 %5688
    %5706 = vrot.lane.b32.xlu0 %v4460, 36
    %v5707 = vpop.permute.xlu0 %5706
    %5708 = vrot.lane.b32.xlu0 %v4463, 36
    %v5709 = vpop.permute.xlu0 %5708
    %5710 = vrot.lane.b32.xlu0 %v4468, 36
    %v5711 = vpop.permute.xlu0 %5710
    %5712 = vrot.lane.b32.xlu0 %v4471, 36
    %v5713 = vpop.permute.xlu0 %5712
    %5714 = vrot.lane.b32.xlu0 %v4476, 36
    %v5715 = vpop.permute.xlu0 %5714
    %5716 = vrot.lane.b32.xlu0 %v4479, 36
    %v5717 = vpop.permute.xlu0 %5716
    %5718 = vrot.lane.b32.xlu0 %v4484, 36
    %v5719 = vpop.permute.xlu0 %5718
    %5720 = vrot.lane.b32.xlu0 %v4487, 36
    %v5721 = vpop.permute.xlu0 %5720
    %5738 = vrot.lane.b32.xlu0 %v4746, 48
    %v5739 = vpop.permute.xlu0 %5738
    %5740 = vrot.lane.b32.xlu0 %v4749, 48
    %v5741 = vpop.permute.xlu0 %5740
    %5742 = vrot.lane.b32.xlu0 %v4754, 48
    %v5743 = vpop.permute.xlu0 %5742
    %5744 = vrot.lane.b32.xlu0 %v4757, 48
    %v5745 = vpop.permute.xlu0 %5744
    %5746 = vrot.lane.b32.xlu0 %v4762, 48
    %v5747 = vpop.permute.xlu0 %5746
    %5748 = vrot.lane.b32.xlu0 %v4765, 48
    %v5749 = vpop.permute.xlu0 %5748
    %5750 = vrot.lane.b32.xlu0 %v4770, 48
    %v5751 = vpop.permute.xlu0 %5750
    %5752 = vrot.lane.b32.xlu0 %v4773, 48
    %v5753 = vpop.permute.xlu0 %5752
    %5770 = vrot.lane.b32.xlu0 %v5032, 60
    %v5771 = vpop.permute.xlu0 %5770
    %5772 = vrot.lane.b32.xlu0 %v5035, 60
    %v5773 = vpop.permute.xlu0 %5772
    %5774 = vrot.lane.b32.xlu0 %v5040, 60
    %v5775 = vpop.permute.xlu0 %5774
    %5776 = vrot.lane.b32.xlu0 %v5043, 60
    %v5777 = vpop.permute.xlu0 %5776
    %5778 = vrot.lane.b32.xlu0 %v5048, 60
    %v5779 = vpop.permute.xlu0 %5778
    %5780 = vrot.lane.b32.xlu0 %v5051, 60
    %v5781 = vpop.permute.xlu0 %5780
    %5782 = vrot.lane.b32.xlu0 %v5056, 60
    %v5783 = vpop.permute.xlu0 %5782
    %5784 = vrot.lane.b32.xlu0 %v5059, 60
    %v5785 = vpop.permute.xlu0 %5784
    %5802 = vrot.lane.b32.xlu0 %v5318, 72
    %v5803 = vpop.permute.xlu0 %5802
    %5804 = vrot.lane.b32.xlu0 %v5321, 72
    %v5805 = vpop.permute.xlu0 %5804
    %5806 = vrot.lane.b32.xlu0 %v5326, 72
    %v5807 = vpop.permute.xlu0 %5806
    %5808 = vrot.lane.b32.xlu0 %v5329, 72
    %v5809 = vpop.permute.xlu0 %5808
    %5810 = vrot.lane.b32.xlu0 %v5334, 72
    %v5811 = vpop.permute.xlu0 %5810
    %5812 = vrot.lane.b32.xlu0 %v5337, 72
    %v5813 = vpop.permute.xlu0 %5812
    %5814 = vrot.lane.b32.xlu0 %v5342, 72
    %v5815 = vpop.permute.xlu0 %5814
    %5816 = vrot.lane.b32.xlu0 %v5345, 72
    %v5817 = vpop.permute.xlu0 %5816
    %5834 = vrot.lane.b32.xlu0 %v5604, 84
    %v5835 = vpop.permute.xlu0 %5834
    %5836 = vrot.lane.b32.xlu0 %v5607, 84
    %v5837 = vpop.permute.xlu0 %5836
    %5838 = vrot.lane.b32.xlu0 %v5612, 84
    %v5839 = vpop.permute.xlu0 %5838
    %5840 = vrot.lane.b32.xlu0 %v5615, 84
    %v5841 = vpop.permute.xlu0 %5840
    %5842 = vrot.lane.b32.xlu0 %v5620, 84
    %v5843 = vpop.permute.xlu0 %5842
    %5844 = vrot.lane.b32.xlu0 %v5623, 84
    %v5845 = vpop.permute.xlu0 %5844
    %5846 = vrot.lane.b32.xlu0 %v5628, 84
    %v5847 = vpop.permute.xlu0 %5846
    %5848 = vrot.lane.b32.xlu0 %v5631, 84
    %v5849 = vpop.permute.xlu0 %5848
    %v5858 = vsel %vm802, %v3590, %v5643
    %v5859 = vsel %vm802, %v3593, %v5645
    %v5860 = vsel %vm802, %v3598, %v5647
    %v5861 = vsel %vm802, %v3601, %v5649
    %v5862 = vsel %vm802, %v3606, %v5651
    %v5863 = vsel %vm802, %v3609, %v5653
    %v5864 = vsel %vm802, %v3614, %v5655
    %v5865 = vsel %vm802, %v3617, %v5657
    %v5866 = vsel %vm3308, %v5858, %v5675
    %v5867 = vsel %vm3308, %v5859, %v5677
    %v5868 = vsel %vm3308, %v5860, %v5679
    %v5869 = vsel %vm3308, %v5861, %v5681
    %v5870 = vsel %vm3308, %v5862, %v5683
    %v5871 = vsel %vm3308, %v5863, %v5685
    %v5872 = vsel %vm3308, %v5864, %v5687
    %v5873 = vsel %vm3308, %v5865, %v5689
    %v5874 = vsel %vm3317, %v5866, %v5707
    %v5875 = vsel %vm3317, %v5867, %v5709
    %v5876 = vsel %vm3317, %v5868, %v5711
    %v5877 = vsel %vm3317, %v5869, %v5713
    %v5878 = vsel %vm3317, %v5870, %v5715
    %v5879 = vsel %vm3317, %v5871, %v5717
    %v5880 = vsel %vm3317, %v5872, %v5719
    %v5881 = vsel %vm3317, %v5873, %v5721
    %v5882 = vsel %vm3326, %v5874, %v5739
    %v5883 = vsel %vm3326, %v5875, %v5741
    %v5884 = vsel %vm3326, %v5876, %v5743
    %v5885 = vsel %vm3326, %v5877, %v5745
    %v5886 = vsel %vm3326, %v5878, %v5747
    %v5887 = vsel %vm3326, %v5879, %v5749
    %v5888 = vsel %vm3326, %v5880, %v5751
    %v5889 = vsel %vm3326, %v5881, %v5753
    %v5890 = vsel %vm3335, %v5882, %v5771
    %v5891 = vsel %vm3335, %v5883, %v5773
    %v5892 = vsel %vm3335, %v5884, %v5775
    %v5893 = vsel %vm3335, %v5885, %v5777
    %v5894 = vsel %vm3335, %v5886, %v5779
    %v5895 = vsel %vm3335, %v5887, %v5781
    %v5896 = vsel %vm3335, %v5888, %v5783
    %v5897 = vsel %vm3335, %v5889, %v5785
    %v5898 = vsel %vm3344, %v5890, %v5803
    %v5899 = vsel %vm3344, %v5891, %v5805
    %v5900 = vsel %vm3344, %v5892, %v5807
    %v5901 = vsel %vm3344, %v5893, %v5809
    %v5902 = vsel %vm3344, %v5894, %v5811
    %v5903 = vsel %vm3344, %v5895, %v5813
    %v5904 = vsel %vm3344, %v5896, %v5815
    %v5905 = vsel %vm3344, %v5897, %v5817
    %v5906 = vsel %vm3353, %v5898, %v5835
    %v5907 = vsel %vm3353, %v5899, %v5837
    %v5908 = vsel %vm3353, %v5900, %v5839
    %v5909 = vsel %vm3353, %v5901, %v5841
    %v5910 = vsel %vm3353, %v5902, %v5843
    %v5911 = vsel %vm3353, %v5903, %v5845
    %v5912 = vsel %vm3353, %v5904, %v5847
    %v5913 = vsel %vm3353, %v5905, %v5849
    %v5914 = vld [vmem:[%s9] sm:$0xf]
    %v5915 = vld [vmem:[%s9 + $0x4] sm:$0xf]
    %v5916 = vld [vmem:[%s9 + $0x8] sm:$0xf]
    %v5917 = vld [vmem:[%s9 + $0xc] sm:$0xf]
    %v5918 = vld [vmem:[%s9 + $0x10] sm:$0xf]
    %v5919 = vld [vmem:[%s9 + $0x14] sm:$0xf]
    %v5920 = vld [vmem:[%s9 + $0x18] sm:$0xf]
    %v5921 = vld [vmem:[%s9 + $0x1c] sm:$0xf]
    %v5922 = vld [vmem:[%s9 + $0x20] sm:$0xf]
    %v5923 = vld [vmem:[%s9 + $0x24] sm:$0xf]
    %v5924 = vld [vmem:[%s9 + $0x28] sm:$0xf]
    %v5925 = vld [vmem:[%s9 + $0x2c] sm:$0xf]
    %v5926 = vld [vmem:[%s10] sm:$0x1]
    %v5927 = vpack.c.bf16 %v3355, %v3354
    %v5928 = vpack.c.bf16 %v3357, %v3356
    %v5929 = vpack.c.bf16 %v3359, %v3358
    %v5930 = vpack.c.bf16 %v3361, %v3360
    %v5931 = vpack.c.bf16 %v5907, %v5906
    %v5932 = vpack.c.bf16 %v5909, %v5908
    %v5933 = vpack.c.bf16 %v5911, %v5910
    %v5934 = vpack.c.bf16 %v5913, %v5912
    %v5936 = vlaneseq
    %v5937 = vshrl.u32 %v5936, 7
    %v5938 = vsub.s32 0, %v5937
    %v5939 = vrot.slane %v5926, %v5938
    %v5953 = vunpack.c.l.b16 %v5914
    %v5954 = vunpack.c.l.b16 %v5915
    %v5955 = vunpack.c.l.b16 %v5916
    %v5956 = vunpack.c.l.b16 %v5917
    %v5957 = vunpack.c.l.b16 %v5918
    %v5958 = vunpack.c.l.b16 %v5919
    %v5959 = vunpack.c.l.b16 %v5920
    %v5960 = vunpack.c.l.b16 %v5921
    %v5961 = vunpack.c.l.b16 %v5922
    %v5962 = vunpack.c.l.b16 %v5923
    %v5963 = vunpack.c.l.b16 %v5924
    %v5964 = vunpack.c.l.b16 %v5925
    %v5965 = vpack.c.b16 %v5954, %v5953
    %v5966 = vpack.c.b16 %v5956, %v5955
    %v5967 = vpack.c.b16 %v5958, %v5957
    %v5968 = vpack.c.b16 %v5960, %v5959
    %v5969 = vpack.c.b16 %v5962, %v5961
    %v5970 = vpack.c.b16 %v5964, %v5963
    %v5978 = vsel %vm352, %v5927, 0
    %v5981 = vsel %vm352, %v5928, 0
    %v5984 = vsel %vm352, %v5929, 0
    %v5987 = vsel %vm352, %v5930, 0
    %v5990 = vsel %vm352, %v5931, 0
    %v5993 = vsel %vm352, %v5932, 0
    %v5996 = vsel %vm352, %v5933, 0
    %v5999 = vsel %vm352, %v5934, 0
    %6001 = vmatprep.subr.bf16.mxu0 0
    %6002 = vmatpush1.bf16.msra.mxu0 %v5965
    %6003 = vmatprep.subr.bf16.mxu0 0
    %6004 = vmatpush1.bf16.msra.mxu0 %v5966
    %6005 = vmatprep.subr.bf16.mxu0 0
    %6006 = vmatpush1.bf16.msra.mxu0 %v5967
    %6007 = vmatprep.subr.bf16.mxu0 0
    %6008 = vmatpush1.bf16.msra.mxu0 %v5968
    %6009 = vmatprep.subr.bf16.mxu0 0
    %6010 = vmatpush1.bf16.msra.mxu0 %v5969
    %6011 = vmatprep.subr.bf16.mxu0 0
    %6012 = vmatpush1.bf16.msra.mxu0 %v5970
    %6013 = vmatprep.subr.bf16.mxu0 0
    %6014 = vmatpush1.bf16.msra.mxu0 0
    %6015 = vmatprep.subr.bf16.mxu0 0
    %6016 = vmatpush1.bf16.msra.mxu0 0
    %6017 = vmatprep.subr.bf16.mxu0 0
    %6018 = vmatpush1.bf16.msra.mxu0 0
    %6019 = vmatprep.subr.bf16.mxu0 0
    %6020 = vmatpush1.bf16.msra.mxu0 0
    %6021 = vmatprep.subr.bf16.mxu0 0
    %6022 = vmatpush1.bf16.msra.mxu0 0
    %6023 = vmatprep.subr.bf16.mxu0 0
    %6024 = vmatpush1.bf16.msra.mxu0 0
    %6025 = vmatprep.subr.bf16.mxu0 0
    %6026 = vmatpush1.bf16.msra.mxu0 0
    %6027 = vmatprep.subr.bf16.mxu0 0
    %6028 = vmatpush1.bf16.msra.mxu0 0
    %6029 = vmatprep.subr.bf16.mxu0 0
    %6030 = vmatpush1.bf16.msra.mxu0 0
    %6031 = vmatprep.subr.bf16.mxu0 0
    %6032 = vmatpush1.bf16.msra.mxu0 0
    %6033 = vmatprep.mubr.bf16.mxu0 0
    %6034 = vmatmul.mubr.bf16.gmra.mrb[0].mxu0 %v5978
    %v6035 = vpop.f32.mrb[0].mxu0
    %v6036 = vadd.f32 %v5939, %v6035
    %v6037 = vpop.f32.mrb[0].mxu0
    %v6038 = vpop.f32.mrb[0].mxu0
    %v6039 = vadd.f32 %v5939, %v6038
    %v6040 = vpop.f32.mrb[0].mxu0
    %6041 = vmatprep.mubr.bf16.mxu0 0
    %6042 = vmatmul.mubr.bf16.gmra.mrb[0].mxu0 %v5981
    %v6043 = vpop.f32.mrb[0].mxu0
    %v6044 = vadd.f32 %v5939, %v6043
    %v6045 = vpop.f32.mrb[0].mxu0
    %v6046 = vpop.f32.mrb[0].mxu0
    %v6047 = vadd.f32 %v5939, %v6046
    %v6048 = vpop.f32.mrb[0].mxu0
    %6049 = vmatprep.mubr.bf16.mxu0 0
    %6050 = vmatmul.mubr.bf16.gmra.mrb[0].mxu0 %v5984
    %v6051 = vpop.f32.mrb[0].mxu0
    %v6052 = vadd.f32 %v5939, %v6051
    %v6053 = vpop.f32.mrb[0].mxu0
    %v6054 = vpop.f32.mrb[0].mxu0
    %v6055 = vadd.f32 %v5939, %v6054
    %v6056 = vpop.f32.mrb[0].mxu0
    %6057 = vmatprep.mubr.bf16.mxu0 0
    %6058 = vmatmul.mubr.bf16.gmra.mrb[0].mxu0 %v5987
    %v6059 = vpop.f32.mrb[0].mxu0
    %v6060 = vadd.f32 %v5939, %v6059
    %v6061 = vpop.f32.mrb[0].mxu0
    %v6062 = vpop.f32.mrb[0].mxu0
    %v6063 = vadd.f32 %v5939, %v6062
    %v6064 = vpop.f32.mrb[0].mxu0
    %6065 = vmatprep.mubr.bf16.mxu0 0
    %6066 = vmatmul.mubr.bf16.gmra.mrb[0].mxu0 %v5990
    %v6067 = vpop.f32.mrb[0].mxu0
    %v6068 = vadd.f32 %v5939, %v6067
    %v6069 = vpop.f32.mrb[0].mxu0
    %v6070 = vpop.f32.mrb[0].mxu0
    %v6071 = vadd.f32 %v5939, %v6070
    %v6072 = vpop.f32.mrb[0].mxu0
    %6073 = vmatprep.mubr.bf16.mxu0 0
    %6074 = vmatmul.mubr.bf16.gmra.mrb[0].mxu0 %v5993
    %v6075 = vpop.f32.mrb[0].mxu0
    %v6076 = vadd.f32 %v5939, %v6075
    %v6077 = vpop.f32.mrb[0].mxu0
    %v6078 = vpop.f32.mrb[0].mxu0
    %v6079 = vadd.f32 %v5939, %v6078
    %v6080 = vpop.f32.mrb[0].mxu0
    %6081 = vmatprep.mubr.bf16.mxu0 0
    %6082 = vmatmul.mubr.bf16.gmra.mrb[0].mxu0 %v5996
    %v6083 = vpop.f32.mrb[0].mxu0
    %v6084 = vadd.f32 %v5939, %v6083
    %v6085 = vpop.f32.mrb[0].mxu0
    %v6086 = vpop.f32.mrb[0].mxu0
    %v6087 = vadd.f32 %v5939, %v6086
    %v6088 = vpop.f32.mrb[0].mxu0
    %6089 = vmatprep.mubr.bf16.mxu0 0
    %6090 = vmatmul.mubr.bf16.gmra.mrb[0].mxu0 %v5999
    %v6091 = vpop.f32.mrb[0].mxu0
    %v6092 = vadd.f32 %v5939, %v6091
    %v6093 = vpop.f32.mrb[0].mxu0
    %v6094 = vpop.f32.mrb[0].mxu0
    %v6095 = vadd.f32 %v5939, %v6094
    %v6096 = vpop.f32.mrb[0].mxu0
    %6097 = vdwg.mxu0
    %v6098 = vadd.f32 %v227, %v6036
    %v6099 = vadd.f32 %v230, %v6039
    %v6100 = vadd.f32 %v235, %v6044
    %v6101 = vadd.f32 %v238, %v6047
    %v6102 = vadd.f32 %v243, %v6052
    %v6103 = vadd.f32 %v246, %v6055
    %v6104 = vadd.f32 %v251, %v6060
    %v6105 = vadd.f32 %v254, %v6063
    %v6106 = vadd.f32 %v259, %v6068
    %v6107 = vadd.f32 %v262, %v6071
    %v6108 = vadd.f32 %v267, %v6076
    %v6109 = vadd.f32 %v270, %v6079
    %v6110 = vadd.f32 %v275, %v6084
    %v6111 = vadd.f32 %v278, %v6087
    %v6112 = vadd.f32 %v283, %v6092
    %v6113 = vadd.f32 %v286, %v6095
    %v6114 = vld [vmem:[%s11] sm:$0xf]
    %v6115 = vld [vmem:[%s11 + $0x4] sm:$0xf]
    %v6116 = vld [vmem:[%s11 + $0x8] sm:$0xf]
    %v6117 = vld [vmem:[%s11 + $0xc] sm:$0xf]
    %v6118 = vld [vmem:[%s11 + $0x10] sm:$0xf]
    %v6119 = vld [vmem:[%s11 + $0x14] sm:$0xf]
    %v6120 = vld [vmem:[%s11 + $0x18] sm:$0xf]
    %v6121 = vld [vmem:[%s11 + $0x1c] sm:$0xf]
    %v6122 = vld [vmem:[%s11 + $0x20] sm:$0xf]
    %v6123 = vld [vmem:[%s11 + $0x24] sm:$0xf]
    %v6124 = vld [vmem:[%s11 + $0x28] sm:$0xf]
    %v6125 = vld [vmem:[%s11 + $0x2c] sm:$0xf]
    %v6126 = vld [vmem:[%s12] sm:$0x1]
    %v6127 = vpack.c.bf16 %v6099, %v6098
    %v6128 = vpack.c.bf16 %v6101, %v6100
    %v6129 = vpack.c.bf16 %v6103, %v6102
    %v6130 = vpack.c.bf16 %v6105, %v6104
    %v6131 = vpack.c.bf16 %v6107, %v6106
    %v6132 = vpack.c.bf16 %v6109, %v6108
    %v6133 = vpack.c.bf16 %v6111, %v6110
    %v6134 = vpack.c.bf16 %v6113, %v6112
    %v6136 = vlaneseq
    %v6137 = vshrl.u32 %v6136, 7
    %v6138 = vsub.s32 0, %v6137
    %v6139 = vrot.slane %v6126, %v6138
    %v6153 = vunpack.c.l.b16 %v6114
    %v6154 = vunpack.c.l.b16 %v6115
    %v6155 = vunpack.c.l.b16 %v6116
    %v6156 = vunpack.c.l.b16 %v6117
    %v6157 = vunpack.c.l.b16 %v6118
    %v6158 = vunpack.c.l.b16 %v6119
    %v6159 = vunpack.c.l.b16 %v6120
    %v6160 = vunpack.c.l.b16 %v6121
    %v6161 = vunpack.c.l.b16 %v6122
    %v6162 = vunpack.c.l.b16 %v6123
    %v6163 = vunpack.c.l.b16 %v6124
    %v6164 = vunpack.c.l.b16 %v6125
    %v6165 = vpack.c.b16 %v6154, %v6153
    %v6166 = vpack.c.b16 %v6156, %v6155
    %v6167 = vpack.c.b16 %v6158, %v6157
    %v6168 = vpack.c.b16 %v6160, %v6159
    %v6169 = vpack.c.b16 %v6162, %v6161
    %v6170 = vpack.c.b16 %v6164, %v6163
    %v6178 = vsel %vm352, %v6127, 0
    %v6181 = vsel %vm352, %v6128, 0
    %v6184 = vsel %vm352, %v6129, 0
    %v6187 = vsel %vm352, %v6130, 0
    %v6190 = vsel %vm352, %v6131, 0
    %v6193 = vsel %vm352, %v6132, 0
    %v6196 = vsel %vm352, %v6133, 0
    %v6199 = vsel %vm352, %v6134, 0
    %6201 = vmatprep.subr.bf16.mxu0 0
    %6202 = vmatpush1.bf16.msra.mxu0 %v6165
    %6203 = vmatprep.subr.bf16.mxu0 0
    %6204 = vmatpush1.bf16.msra.mxu0 %v6166
    %6205 = vmatprep.subr.bf16.mxu0 0
    %6206 = vmatpush1.bf16.msra.mxu0 %v6167
    %6207 = vmatprep.subr.bf16.mxu0 0
    %6208 = vmatpush1.bf16.msra.mxu0 %v6168
    %6209 = vmatprep.subr.bf16.mxu0 0
    %6210 = vmatpush1.bf16.msra.mxu0 %v6169
    %6211 = vmatprep.subr.bf16.mxu0 0
    %6212 = vmatpush1.bf16.msra.mxu0 %v6170
    %6213 = vmatprep.subr.bf16.mxu0 0
    %6214 = vmatpush1.bf16.msra.mxu0 0
    %6215 = vmatprep.subr.bf16.mxu0 0
    %6216 = vmatpush1.bf16.msra.mxu0 0
    %6217 = vmatprep.subr.bf16.mxu0 0
    %6218 = vmatpush1.bf16.msra.mxu0 0
    %6219 = vmatprep.subr.bf16.mxu0 0
    %6220 = vmatpush1.bf16.msra.mxu0 0
    %6221 = vmatprep.subr.bf16.mxu0 0
    %6222 = vmatpush1.bf16.msra.mxu0 0
    %6223 = vmatprep.subr.bf16.mxu0 0
    %6224 = vmatpush1.bf16.msra.mxu0 0
    %6225 = vmatprep.subr.bf16.mxu0 0
    %6226 = vmatpush1.bf16.msra.mxu0 0
    %6227 = vmatprep.subr.bf16.mxu0 0
    %6228 = vmatpush1.bf16.msra.mxu0 0
    %6229 = vmatprep.subr.bf16.mxu0 0
    %6230 = vmatpush1.bf16.msra.mxu0 0
    %6231 = vmatprep.subr.bf16.mxu0 0
    %6232 = vmatpush1.bf16.msra.mxu0 0
    %6233 = vmatprep.mubr.bf16.mxu0 0
    %6234 = vmatmul.mubr.bf16.gmra.mrb[0].mxu0 %v6178
    %v6235 = vpop.f32.mrb[0].mxu0
    %v6236 = vadd.f32 %v6139, %v6235
    %v6237 = vpop.f32.mrb[0].mxu0
    %v6238 = vpop.f32.mrb[0].mxu0
    %v6239 = vadd.f32 %v6139, %v6238
    %v6240 = vpop.f32.mrb[0].mxu0
    %6241 = vmatprep.mubr.bf16.mxu0 0
    %6242 = vmatmul.mubr.bf16.gmra.mrb[0].mxu0 %v6181
    %v6243 = vpop.f32.mrb[0].mxu0
    %v6244 = vadd.f32 %v6139, %v6243
    %v6245 = vpop.f32.mrb[0].mxu0
    %v6246 = vpop.f32.mrb[0].mxu0
    %v6247 = vadd.f32 %v6139, %v6246
    %v6248 = vpop.f32.mrb[0].mxu0
    %6249 = vmatprep.mubr.bf16.mxu0 0
    %6250 = vmatmul.mubr.bf16.gmra.mrb[0].mxu0 %v6184
    %v6251 = vpop.f32.mrb[0].mxu0
    %v6252 = vadd.f32 %v6139, %v6251
    %v6253 = vpop.f32.mrb[0].mxu0
    %v6254 = vpop.f32.mrb[0].mxu0
    %v6255 = vadd.f32 %v6139, %v6254
    %v6256 = vpop.f32.mrb[0].mxu0
    %6257 = vmatprep.mubr.bf16.mxu0 0
    %6258 = vmatmul.mubr.bf16.gmra.mrb[0].mxu0 %v6187
    %v6259 = vpop.f32.mrb[0].mxu0
    %v6260 = vadd.f32 %v6139, %v6259
    %v6261 = vpop.f32.mrb[0].mxu0
    %v6262 = vpop.f32.mrb[0].mxu0
    %v6263 = vadd.f32 %v6139, %v6262
    %v6264 = vpop.f32.mrb[0].mxu0
    %6265 = vmatprep.mubr.bf16.mxu0 0
    %6266 = vmatmul.mubr.bf16.gmra.mrb[0].mxu0 %v6190
    %v6267 = vpop.f32.mrb[0].mxu0
    %v6268 = vadd.f32 %v6139, %v6267
    %v6269 = vpop.f32.mrb[0].mxu0
    %v6270 = vpop.f32.mrb[0].mxu0
    %v6271 = vadd.f32 %v6139, %v6270
    %v6272 = vpop.f32.mrb[0].mxu0
    %6273 = vmatprep.mubr.bf16.mxu0 0
    %6274 = vmatmul.mubr.bf16.gmra.mrb[0].mxu0 %v6193
    %v6275 = vpop.f32.mrb[0].mxu0
    %v6276 = vadd.f32 %v6139, %v6275
    %v6277 = vpop.f32.mrb[0].mxu0
    %v6278 = vpop.f32.mrb[0].mxu0
    %v6279 = vadd.f32 %v6139, %v6278
    %v6280 = vpop.f32.mrb[0].mxu0
    %6281 = vmatprep.mubr.bf16.mxu0 0
    %6282 = vmatmul.mubr.bf16.gmra.mrb[0].mxu0 %v6196
    %v6283 = vpop.f32.mrb[0].mxu0
    %v6284 = vadd.f32 %v6139, %v6283
    %v6285 = vpop.f32.mrb[0].mxu0
    %v6286 = vpop.f32.mrb[0].mxu0
    %v6287 = vadd.f32 %v6139, %v6286
    %v6288 = vpop.f32.mrb[0].mxu0
    %6289 = vmatprep.mubr.bf16.mxu0 0
    %6290 = vmatmul.mubr.bf16.gmra.mrb[0].mxu0 %v6199
    %v6291 = vpop.f32.mrb[0].mxu0
    %v6292 = vadd.f32 %v6139, %v6291
    %v6293 = vpop.f32.mrb[0].mxu0
    %v6294 = vpop.f32.mrb[0].mxu0
    %v6295 = vadd.f32 %v6139, %v6294
    %v6296 = vpop.f32.mrb[0].mxu0
    %6297 = vdwg.mxu0
    %v6298 = vrot.slane %v6236, 7
    %v6299 = vrot.slane %v6239, 7
    %v6300 = vrot.slane %v6244, 7
    %v6301 = vrot.slane %v6247, 7
    %v6302 = vrot.slane %v6252, 7
    %v6303 = vrot.slane %v6255, 7
    %v6304 = vrot.slane %v6260, 7
    %v6305 = vrot.slane %v6263, 7
    %v6306 = vrot.slane %v6268, 7
    %v6307 = vrot.slane %v6271, 7
    %v6308 = vrot.slane %v6276, 7
    %v6309 = vrot.slane %v6279, 7
    %v6310 = vrot.slane %v6284, 7
    %v6311 = vrot.slane %v6287, 7
    %v6312 = vrot.slane %v6292, 7
    %v6313 = vrot.slane %v6295, 7
    %v6314 = vlaneseq
    %v6315 = vshrl.u32 %v6314, 7
    %vm6316 = vcmp.lt.s32.totalorder %v6315, 1
    %v6317 = vsel %vm6316, %v6312, %v6313
    %v6318 = vsel %vm6316, %v6311, %v6312
    %v6319 = vsel %vm6316, %v6310, %v6311
    %v6320 = vsel %vm6316, %v6309, %v6310
    %v6321 = vsel %vm6316, %v6308, %v6309
    %v6322 = vsel %vm6316, %v6307, %v6308
    %v6323 = vsel %vm6316, %v6306, %v6307
    %v6324 = vsel %vm6316, %v6305, %v6306
    %v6325 = vsel %vm6316, %v6304, %v6305
    %v6326 = vsel %vm6316, %v6303, %v6304
    %v6327 = vsel %vm6316, %v6302, %v6303
    %v6328 = vsel %vm6316, %v6301, %v6302
    %v6329 = vsel %vm6316, %v6300, %v6301
    %v6330 = vsel %vm6316, %v6299, %v6300
    %v6331 = vsel %vm6316, %v6298, %v6299
    %v6332 = vsel %vm6316, %v6313, %v6298
    %v6333 = vld [vmem:[%s13] sm:$0xff]
    %v6334 = vld [vmem:[%s13 + $0x8] sm:$0xff]
    %v6335 = vld [vmem:[%s13 + $0x10] sm:$0xff]
    %v6336 = vld [vmem:[%s13 + $0x18] sm:$0xff]
    %v6337 = vld [vmem:[%s13 + $0x20] sm:$0xff]
    %v6338 = vld [vmem:[%s13 + $0x28] sm:$0xff]
    %v6339 = vld [vmem:[%s13 + $0x30] sm:$0xff]
    %v6340 = vld [vmem:[%s13 + $0x38] sm:$0xff]
    %v6341 = vld [vmem:[%s13 + $0x40] sm:$0xff]
    %v6342 = vld [vmem:[%s13 + $0x48] sm:$0xff]
    %v6343 = vld [vmem:[%s13 + $0x50] sm:$0xff]
    %v6344 = vld [vmem:[%s13 + $0x58] sm:$0xff]
    %v6345 = vld [vmem:[%s13 + $0x60] sm:$0xff]
    %v6346 = vld [vmem:[%s13 + $0x68] sm:$0xff]
    %v6347 = vld [vmem:[%s13 + $0x70] sm:$0xff]
    %v6348 = vld [vmem:[%s13 + $0x78] sm:$0xff]
    %6350 = vset.pattern.permute.xlu0 0
    %6351 = vperm.xlu0 %6350, %v6333
    %v6352 = vpop.permute.xlu0 %6351
    %6355 = vset.pattern.permute.xlu0 0
    %6356 = vperm.xlu0 %6355, %v6334
    %v6357 = vpop.permute.xlu0 %6356
    %6360 = vset.pattern.permute.xlu0 0
    %6361 = vperm.xlu0 %6360, %v6335
    %v6362 = vpop.permute.xlu0 %6361
    %6365 = vset.pattern.permute.xlu0 0
    %6366 = vperm.xlu0 %6365, %v6336
    %v6367 = vpop.permute.xlu0 %6366
    %6370 = vset.pattern.permute.xlu0 0
    %6371 = vperm.xlu0 %6370, %v6337
    %v6372 = vpop.permute.xlu0 %6371
    %6375 = vset.pattern.permute.xlu0 0
    %6376 = vperm.xlu0 %6375, %v6338
    %v6377 = vpop.permute.xlu0 %6376
    %6380 = vset.pattern.permute.xlu0 0
    %6381 = vperm.xlu0 %6380, %v6339
    %v6382 = vpop.permute.xlu0 %6381
    %6385 = vset.pattern.permute.xlu0 0
    %6386 = vperm.xlu0 %6385, %v6340
    %v6387 = vpop.permute.xlu0 %6386
    %6390 = vset.pattern.permute.xlu0 0
    %6391 = vperm.xlu0 %6390, %v6341
    %v6392 = vpop.permute.xlu0 %6391
    %6395 = vset.pattern.permute.xlu0 0
    %6396 = vperm.xlu0 %6395, %v6342
    %v6397 = vpop.permute.xlu0 %6396
    %6400 = vset.pattern.permute.xlu0 0
    %6401 = vperm.xlu0 %6400, %v6343
    %v6402 = vpop.permute.xlu0 %6401
    %6405 = vset.pattern.permute.xlu0 0
    %6406 = vperm.xlu0 %6405, %v6344
    %v6407 = vpop.permute.xlu0 %6406
    %6410 = vset.pattern.permute.xlu0 0
    %6411 = vperm.xlu0 %6410, %v6345
    %v6412 = vpop.permute.xlu0 %6411
    %6415 = vset.pattern.permute.xlu0 0
    %6416 = vperm.xlu0 %6415, %v6346
    %v6417 = vpop.permute.xlu0 %6416
    %6420 = vset.pattern.permute.xlu0 0
    %6421 = vperm.xlu0 %6420, %v6347
    %v6422 = vpop.permute.xlu0 %6421
    %6425 = vset.pattern.permute.xlu0 0
    %6426 = vperm.xlu0 %6425, %v6348
    %v6427 = vpop.permute.xlu0 %6426
    %v6429 = vmul.f32 %v6317, %v6352
    %v6430 = vmul.f32 %v6332, %v6357
    %v6431 = vmul.f32 %v6331, %v6362
    %v6432 = vmul.f32 %v6330, %v6367
    %v6433 = vmul.f32 %v6329, %v6372
    %v6434 = vmul.f32 %v6328, %v6377
    %v6435 = vmul.f32 %v6327, %v6382
    %v6436 = vmul.f32 %v6326, %v6387
    %v6437 = vmul.f32 %v6325, %v6392
    %v6438 = vmul.f32 %v6324, %v6397
    %v6439 = vmul.f32 %v6323, %v6402
    %v6440 = vmul.f32 %v6322, %v6407
    %v6441 = vmul.f32 %v6321, %v6412
    %v6442 = vmul.f32 %v6320, %v6417
    %v6443 = vmul.f32 %v6319, %v6422
    %v6444 = vmul.f32 %v6318, %v6427
    %s6445 = scalar_lea.vmem %s13, 128
    %v6446 = vld [vmem:[%s6445] sm:$0xff]
    %v6447 = vld [vmem:[%s6445 + $0x8] sm:$0xff]
    %v6448 = vld [vmem:[%s6445 + $0x10] sm:$0xff]
    %v6449 = vld [vmem:[%s6445 + $0x18] sm:$0xff]
    %v6450 = vld [vmem:[%s6445 + $0x20] sm:$0xff]
    %v6451 = vld [vmem:[%s6445 + $0x28] sm:$0xff]
    %v6452 = vld [vmem:[%s6445 + $0x30] sm:$0xff]
    %v6453 = vld [vmem:[%s6445 + $0x38] sm:$0xff]
    %v6454 = vld [vmem:[%s6445 + $0x40] sm:$0xff]
    %v6455 = vld [vmem:[%s6445 + $0x48] sm:$0xff]
    %v6456 = vld [vmem:[%s6445 + $0x50] sm:$0xff]
    %v6457 = vld [vmem:[%s6445 + $0x58] sm:$0xff]
    %v6458 = vld [vmem:[%s6445 + $0x60] sm:$0xff]
    %v6459 = vld [vmem:[%s6445 + $0x68] sm:$0xff]
    %v6460 = vld [vmem:[%s6445 + $0x70] sm:$0xff]
    %v6461 = vld [vmem:[%s6445 + $0x78] sm:$0xff]
    %6463 = vset.pattern.permute.xlu0 0
    %6464 = vperm.xlu0 %6463, %v6446
    %v6465 = vpop.permute.xlu0 %6464
    %6468 = vset.pattern.permute.xlu0 0
    %6469 = vperm.xlu0 %6468, %v6447
    %v6470 = vpop.permute.xlu0 %6469
    %6473 = vset.pattern.permute.xlu0 0
    %6474 = vperm.xlu0 %6473, %v6448
    %v6475 = vpop.permute.xlu0 %6474
    %6478 = vset.pattern.permute.xlu0 0
    %6479 = vperm.xlu0 %6478, %v6449
    %v6480 = vpop.permute.xlu0 %6479
    %6483 = vset.pattern.permute.xlu0 0
    %6484 = vperm.xlu0 %6483, %v6450
    %v6485 = vpop.permute.xlu0 %6484
    %6488 = vset.pattern.permute.xlu0 0
    %6489 = vperm.xlu0 %6488, %v6451
    %v6490 = vpop.permute.xlu0 %6489
    %6493 = vset.pattern.permute.xlu0 0
    %6494 = vperm.xlu0 %6493, %v6452
    %v6495 = vpop.permute.xlu0 %6494
    %6498 = vset.pattern.permute.xlu0 0
    %6499 = vperm.xlu0 %6498, %v6453
    %v6500 = vpop.permute.xlu0 %6499
    %6503 = vset.pattern.permute.xlu0 0
    %6504 = vperm.xlu0 %6503, %v6454
    %v6505 = vpop.permute.xlu0 %6504
    %6508 = vset.pattern.permute.xlu0 0
    %6509 = vperm.xlu0 %6508, %v6455
    %v6510 = vpop.permute.xlu0 %6509
    %6513 = vset.pattern.permute.xlu0 0
    %6514 = vperm.xlu0 %6513, %v6456
    %v6515 = vpop.permute.xlu0 %6514
    %6518 = vset.pattern.permute.xlu0 0
    %6519 = vperm.xlu0 %6518, %v6457
    %v6520 = vpop.permute.xlu0 %6519
    %6523 = vset.pattern.permute.xlu0 0
    %6524 = vperm.xlu0 %6523, %v6458
    %v6525 = vpop.permute.xlu0 %6524
    %6528 = vset.pattern.permute.xlu0 0
    %6529 = vperm.xlu0 %6528, %v6459
    %v6530 = vpop.permute.xlu0 %6529
    %6533 = vset.pattern.permute.xlu0 0
    %6534 = vperm.xlu0 %6533, %v6460
    %v6535 = vpop.permute.xlu0 %6534
    %6538 = vset.pattern.permute.xlu0 0
    %6539 = vperm.xlu0 %6538, %v6461
    %v6540 = vpop.permute.xlu0 %6539
    %v6542 = vmul.f32 %v6295, %v6465
    %v6543 = vmul.f32 %v6236, %v6470
    %v6544 = vmul.f32 %v6239, %v6475
    %v6545 = vmul.f32 %v6244, %v6480
    %v6546 = vmul.f32 %v6247, %v6485
    %v6547 = vmul.f32 %v6252, %v6490
    %v6548 = vmul.f32 %v6255, %v6495
    %v6549 = vmul.f32 %v6260, %v6500
    %v6550 = vmul.f32 %v6263, %v6505
    %v6551 = vmul.f32 %v6268, %v6510
    %v6552 = vmul.f32 %v6271, %v6515
    %v6553 = vmul.f32 %v6276, %v6520
    %v6554 = vmul.f32 %v6279, %v6525
    %v6555 = vmul.f32 %v6284, %v6530
    %v6556 = vmul.f32 %v6287, %v6535
    %v6557 = vmul.f32 %v6292, %v6540
    %v6558 = vrot.slane %v6236, 1
    %v6559 = vrot.slane %v6239, 1
    %v6560 = vrot.slane %v6244, 1
    %v6561 = vrot.slane %v6247, 1
    %v6562 = vrot.slane %v6252, 1
    %v6563 = vrot.slane %v6255, 1
    %v6564 = vrot.slane %v6260, 1
    %v6565 = vrot.slane %v6263, 1
    %v6566 = vrot.slane %v6268, 1
    %v6567 = vrot.slane %v6271, 1
    %v6568 = vrot.slane %v6276, 1
    %v6569 = vrot.slane %v6279, 1
    %v6570 = vrot.slane %v6284, 1
    %v6571 = vrot.slane %v6287, 1
    %v6572 = vrot.slane %v6292, 1
    %v6573 = vrot.slane %v6295, 1
    %vm6574 = vcmp.lt.s32.totalorder %v6315, 7
    %v6575 = vsel %vm6574, %v6572, %v6573
    %v6576 = vsel %vm6574, %v6571, %v6572
    %v6577 = vsel %vm6574, %v6570, %v6571
    %v6578 = vsel %vm6574, %v6569, %v6570
    %v6579 = vsel %vm6574, %v6568, %v6569
    %v6580 = vsel %vm6574, %v6567, %v6568
    %v6581 = vsel %vm6574, %v6566, %v6567
    %v6582 = vsel %vm6574, %v6565, %v6566
    %v6583 = vsel %vm6574, %v6564, %v6565
    %v6584 = vsel %vm6574, %v6563, %v6564
    %v6585 = vsel %vm6574, %v6562, %v6563
    %v6586 = vsel %vm6574, %v6561, %v6562
    %v6587 = vsel %vm6574, %v6560, %v6561
    %v6588 = vsel %vm6574, %v6559, %v6560
    %v6589 = vsel %vm6574, %v6558, %v6559
    %v6590 = vsel %vm6574, %v6573, %v6558
    %s6591 = scalar_lea.vmem %s13, 256
    %v6592 = vld [vmem:[%s6591] sm:$0xff]
    %v6593 = vld [vmem:[%s6591 + $0x8] sm:$0xff]
    %v6594 = vld [vmem:[%s6591 + $0x10] sm:$0xff]
    %v6595 = vld [vmem:[%s6591 + $0x18] sm:$0xff]
    %v6596 = vld [vmem:[%s6591 + $0x20] sm:$0xff]
    %v6597 = vld [vmem:[%s6591 + $0x28] sm:$0xff]
    %v6598 = vld [vmem:[%s6591 + $0x30] sm:$0xff]
    %v6599 = vld [vmem:[%s6591 + $0x38] sm:$0xff]
    %v6600 = vld [vmem:[%s6591 + $0x40] sm:$0xff]
    %v6601 = vld [vmem:[%s6591 + $0x48] sm:$0xff]
    %v6602 = vld [vmem:[%s6591 + $0x50] sm:$0xff]
    %v6603 = vld [vmem:[%s6591 + $0x58] sm:$0xff]
    %v6604 = vld [vmem:[%s6591 + $0x60] sm:$0xff]
    %v6605 = vld [vmem:[%s6591 + $0x68] sm:$0xff]
    %v6606 = vld [vmem:[%s6591 + $0x70] sm:$0xff]
    %v6607 = vld [vmem:[%s6591 + $0x78] sm:$0xff]
    %6609 = vset.pattern.permute.xlu0 0
    %6610 = vperm.xlu0 %6609, %v6592
    %v6611 = vpop.permute.xlu0 %6610
    %6614 = vset.pattern.permute.xlu0 0
    %6615 = vperm.xlu0 %6614, %v6593
    %v6616 = vpop.permute.xlu0 %6615
    %6619 = vset.pattern.permute.xlu0 0
    %6620 = vperm.xlu0 %6619, %v6594
    %v6621 = vpop.permute.xlu0 %6620
    %6624 = vset.pattern.permute.xlu0 0
    %6625 = vperm.xlu0 %6624, %v6595
    %v6626 = vpop.permute.xlu0 %6625
    %6629 = vset.pattern.permute.xlu0 0
    %6630 = vperm.xlu0 %6629, %v6596
    %v6631 = vpop.permute.xlu0 %6630
    %6634 = vset.pattern.permute.xlu0 0
    %6635 = vperm.xlu0 %6634, %v6597
    %v6636 = vpop.permute.xlu0 %6635
    %6639 = vset.pattern.permute.xlu0 0
    %6640 = vperm.xlu0 %6639, %v6598
    %v6641 = vpop.permute.xlu0 %6640
    %6644 = vset.pattern.permute.xlu0 0
    %6645 = vperm.xlu0 %6644, %v6599
    %v6646 = vpop.permute.xlu0 %6645
    %6649 = vset.pattern.permute.xlu0 0
    %6650 = vperm.xlu0 %6649, %v6600
    %v6651 = vpop.permute.xlu0 %6650
    %6654 = vset.pattern.permute.xlu0 0
    %6655 = vperm.xlu0 %6654, %v6601
    %v6656 = vpop.permute.xlu0 %6655
    %6659 = vset.pattern.permute.xlu0 0
    %6660 = vperm.xlu0 %6659, %v6602
    %v6661 = vpop.permute.xlu0 %6660
    %6664 = vset.pattern.permute.xlu0 0
    %6665 = vperm.xlu0 %6664, %v6603
    %v6666 = vpop.permute.xlu0 %6665
    %6669 = vset.pattern.permute.xlu0 0
    %6670 = vperm.xlu0 %6669, %v6604
    %v6671 = vpop.permute.xlu0 %6670
    %6674 = vset.pattern.permute.xlu0 0
    %6675 = vperm.xlu0 %6674, %v6605
    %v6676 = vpop.permute.xlu0 %6675
    %6679 = vset.pattern.permute.xlu0 0
    %6680 = vperm.xlu0 %6679, %v6606
    %v6681 = vpop.permute.xlu0 %6680
    %6684 = vset.pattern.permute.xlu0 0
    %6685 = vperm.xlu0 %6684, %v6607
    %v6686 = vpop.permute.xlu0 %6685
    %v6688 = vmul.f32 %v6590, %v6611
    %v6689 = vmul.f32 %v6589, %v6616
    %v6690 = vmul.f32 %v6588, %v6621
    %v6691 = vmul.f32 %v6587, %v6626
    %v6692 = vmul.f32 %v6586, %v6631
    %v6693 = vmul.f32 %v6585, %v6636
    %v6694 = vmul.f32 %v6584, %v6641
    %v6695 = vmul.f32 %v6583, %v6646
    %v6696 = vmul.f32 %v6582, %v6651
    %v6697 = vmul.f32 %v6581, %v6656
    %v6698 = vmul.f32 %v6580, %v6661
    %v6699 = vmul.f32 %v6579, %v6666
    %v6700 = vmul.f32 %v6578, %v6671
    %v6701 = vmul.f32 %v6577, %v6676
    %v6702 = vmul.f32 %v6576, %v6681
    %v6703 = vmul.f32 %v6575, %v6686
    %s6704 = scalar_lea.vmem %s13, 384
    %v6705 = vld [vmem:[%s6704] sm:$0xff]
    %v6706 = vld [vmem:[%s6704 + $0x8] sm:$0xff]
    %v6707 = vld [vmem:[%s6704 + $0x10] sm:$0xff]
    %v6708 = vld [vmem:[%s6704 + $0x18] sm:$0xff]
    %v6709 = vld [vmem:[%s6704 + $0x20] sm:$0xff]
    %v6710 = vld [vmem:[%s6704 + $0x28] sm:$0xff]
    %v6711 = vld [vmem:[%s6704 + $0x30] sm:$0xff]
    %v6712 = vld [vmem:[%s6704 + $0x38] sm:$0xff]
    %v6713 = vld [vmem:[%s6704 + $0x40] sm:$0xff]
    %v6714 = vld [vmem:[%s6704 + $0x48] sm:$0xff]
    %v6715 = vld [vmem:[%s6704 + $0x50] sm:$0xff]
    %v6716 = vld [vmem:[%s6704 + $0x58] sm:$0xff]
    %v6717 = vld [vmem:[%s6704 + $0x60] sm:$0xff]
    %v6718 = vld [vmem:[%s6704 + $0x68] sm:$0xff]
    %v6719 = vld [vmem:[%s6704 + $0x70] sm:$0xff]
    %v6720 = vld [vmem:[%s6704 + $0x78] sm:$0xff]
    %6722 = vset.pattern.permute.xlu0 0
    %6723 = vperm.xlu0 %6722, %v6705
    %v6724 = vpop.permute.xlu0 %6723
    %6727 = vset.pattern.permute.xlu0 0
    %6728 = vperm.xlu0 %6727, %v6706
    %v6729 = vpop.permute.xlu0 %6728
    %6732 = vset.pattern.permute.xlu0 0
    %6733 = vperm.xlu0 %6732, %v6707
    %v6734 = vpop.permute.xlu0 %6733
    %6737 = vset.pattern.permute.xlu0 0
    %6738 = vperm.xlu0 %6737, %v6708
    %v6739 = vpop.permute.xlu0 %6738
    %6742 = vset.pattern.permute.xlu0 0
    %6743 = vperm.xlu0 %6742, %v6709
    %v6744 = vpop.permute.xlu0 %6743
    %6747 = vset.pattern.permute.xlu0 0
    %6748 = vperm.xlu0 %6747, %v6710
    %v6749 = vpop.permute.xlu0 %6748
    %6752 = vset.pattern.permute.xlu0 0
    %6753 = vperm.xlu0 %6752, %v6711
    %v6754 = vpop.permute.xlu0 %6753
    %6757 = vset.pattern.permute.xlu0 0
    %6758 = vperm.xlu0 %6757, %v6712
    %v6759 = vpop.permute.xlu0 %6758
    %6762 = vset.pattern.permute.xlu0 0
    %6763 = vperm.xlu0 %6762, %v6713
    %v6764 = vpop.permute.xlu0 %6763
    %6767 = vset.pattern.permute.xlu0 0
    %6768 = vperm.xlu0 %6767, %v6714
    %v6769 = vpop.permute.xlu0 %6768
    %6772 = vset.pattern.permute.xlu0 0
    %6773 = vperm.xlu0 %6772, %v6715
    %v6774 = vpop.permute.xlu0 %6773
    %6777 = vset.pattern.permute.xlu0 0
    %6778 = vperm.xlu0 %6777, %v6716
    %v6779 = vpop.permute.xlu0 %6778
    %6782 = vset.pattern.permute.xlu0 0
    %6783 = vperm.xlu0 %6782, %v6717
    %v6784 = vpop.permute.xlu0 %6783
    %6787 = vset.pattern.permute.xlu0 0
    %6788 = vperm.xlu0 %6787, %v6718
    %v6789 = vpop.permute.xlu0 %6788
    %6792 = vset.pattern.permute.xlu0 0
    %6793 = vperm.xlu0 %6792, %v6719
    %v6794 = vpop.permute.xlu0 %6793
    %6797 = vset.pattern.permute.xlu0 0
    %6798 = vperm.xlu0 %6797, %v6720
    %v6799 = vpop.permute.xlu0 %6798
    %v6801 = vmul.f32 %v6332, %v6724
    %v6802 = vmul.f32 %v6331, %v6729
    %v6803 = vmul.f32 %v6330, %v6734
    %v6804 = vmul.f32 %v6329, %v6739
    %v6805 = vmul.f32 %v6328, %v6744
    %v6806 = vmul.f32 %v6327, %v6749
    %v6807 = vmul.f32 %v6326, %v6754
    %v6808 = vmul.f32 %v6325, %v6759
    %v6809 = vmul.f32 %v6324, %v6764
    %v6810 = vmul.f32 %v6323, %v6769
    %v6811 = vmul.f32 %v6322, %v6774
    %v6812 = vmul.f32 %v6321, %v6779
    %v6813 = vmul.f32 %v6320, %v6784
    %v6814 = vmul.f32 %v6319, %v6789
    %v6815 = vmul.f32 %v6318, %v6794
    %v6816 = vmul.f32 %v6317, %v6799
    %s6817 = scalar_lea.vmem %s13, 640
    %v6818 = vld [vmem:[%s6817] sm:$0xff]
    %v6819 = vld [vmem:[%s6817 + $0x8] sm:$0xff]
    %v6820 = vld [vmem:[%s6817 + $0x10] sm:$0xff]
    %v6821 = vld [vmem:[%s6817 + $0x18] sm:$0xff]
    %v6822 = vld [vmem:[%s6817 + $0x20] sm:$0xff]
    %v6823 = vld [vmem:[%s6817 + $0x28] sm:$0xff]
    %v6824 = vld [vmem:[%s6817 + $0x30] sm:$0xff]
    %v6825 = vld [vmem:[%s6817 + $0x38] sm:$0xff]
    %v6826 = vld [vmem:[%s6817 + $0x40] sm:$0xff]
    %v6827 = vld [vmem:[%s6817 + $0x48] sm:$0xff]
    %v6828 = vld [vmem:[%s6817 + $0x50] sm:$0xff]
    %v6829 = vld [vmem:[%s6817 + $0x58] sm:$0xff]
    %v6830 = vld [vmem:[%s6817 + $0x60] sm:$0xff]
    %v6831 = vld [vmem:[%s6817 + $0x68] sm:$0xff]
    %v6832 = vld [vmem:[%s6817 + $0x70] sm:$0xff]
    %v6833 = vld [vmem:[%s6817 + $0x78] sm:$0xff]
    %6835 = vset.pattern.permute.xlu0 0
    %6836 = vperm.xlu0 %6835, %v6818
    %v6837 = vpop.permute.xlu0 %6836
    %6840 = vset.pattern.permute.xlu0 0
    %6841 = vperm.xlu0 %6840, %v6819
    %v6842 = vpop.permute.xlu0 %6841
    %6845 = vset.pattern.permute.xlu0 0
    %6846 = vperm.xlu0 %6845, %v6820
    %v6847 = vpop.permute.xlu0 %6846
    %6850 = vset.pattern.permute.xlu0 0
    %6851 = vperm.xlu0 %6850, %v6821
    %v6852 = vpop.permute.xlu0 %6851
    %6855 = vset.pattern.permute.xlu0 0
    %6856 = vperm.xlu0 %6855, %v6822
    %v6857 = vpop.permute.xlu0 %6856
    %6860 = vset.pattern.permute.xlu0 0
    %6861 = vperm.xlu0 %6860, %v6823
    %v6862 = vpop.permute.xlu0 %6861
    %6865 = vset.pattern.permute.xlu0 0
    %6866 = vperm.xlu0 %6865, %v6824
    %v6867 = vpop.permute.xlu0 %6866
    %6870 = vset.pattern.permute.xlu0 0
    %6871 = vperm.xlu0 %6870, %v6825
    %v6872 = vpop.permute.xlu0 %6871
    %6875 = vset.pattern.permute.xlu0 0
    %6876 = vperm.xlu0 %6875, %v6826
    %v6877 = vpop.permute.xlu0 %6876
    %6880 = vset.pattern.permute.xlu0 0
    %6881 = vperm.xlu0 %6880, %v6827
    %v6882 = vpop.permute.xlu0 %6881
    %6885 = vset.pattern.permute.xlu0 0
    %6886 = vperm.xlu0 %6885, %v6828
    %v6887 = vpop.permute.xlu0 %6886
    %6890 = vset.pattern.permute.xlu0 0
    %6891 = vperm.xlu0 %6890, %v6829
    %v6892 = vpop.permute.xlu0 %6891
    %6895 = vset.pattern.permute.xlu0 0
    %6896 = vperm.xlu0 %6895, %v6830
    %v6897 = vpop.permute.xlu0 %6896
    %6900 = vset.pattern.permute.xlu0 0
    %6901 = vperm.xlu0 %6900, %v6831
    %v6902 = vpop.permute.xlu0 %6901
    %6905 = vset.pattern.permute.xlu0 0
    %6906 = vperm.xlu0 %6905, %v6832
    %v6907 = vpop.permute.xlu0 %6906
    %6910 = vset.pattern.permute.xlu0 0
    %6911 = vperm.xlu0 %6910, %v6833
    %v6912 = vpop.permute.xlu0 %6911
    %v6914 = vmul.f32 %v6589, %v6837
    %v6915 = vmul.f32 %v6588, %v6842
    %v6916 = vmul.f32 %v6587, %v6847
    %v6917 = vmul.f32 %v6586, %v6852
    %v6918 = vmul.f32 %v6585, %v6857
    %v6919 = vmul.f32 %v6584, %v6862
    %v6920 = vmul.f32 %v6583, %v6867
    %v6921 = vmul.f32 %v6582, %v6872
    %v6922 = vmul.f32 %v6581, %v6877
    %v6923 = vmul.f32 %v6580, %v6882
    %v6924 = vmul.f32 %v6579, %v6887
    %v6925 = vmul.f32 %v6578, %v6892
    %v6926 = vmul.f32 %v6577, %v6897
    %v6927 = vmul.f32 %v6576, %v6902
    %v6928 = vmul.f32 %v6575, %v6907
    %v6929 = vmul.f32 %v6590, %v6912
    %s6930 = scalar_lea.vmem %s13, 768
    %v6931 = vld [vmem:[%s6930] sm:$0xff]
    %v6932 = vld [vmem:[%s6930 + $0x8] sm:$0xff]
    %v6933 = vld [vmem:[%s6930 + $0x10] sm:$0xff]
    %v6934 = vld [vmem:[%s6930 + $0x18] sm:$0xff]
    %v6935 = vld [vmem:[%s6930 + $0x20] sm:$0xff]
    %v6936 = vld [vmem:[%s6930 + $0x28] sm:$0xff]
    %v6937 = vld [vmem:[%s6930 + $0x30] sm:$0xff]
    %v6938 = vld [vmem:[%s6930 + $0x38] sm:$0xff]
    %v6939 = vld [vmem:[%s6930 + $0x40] sm:$0xff]
    %v6940 = vld [vmem:[%s6930 + $0x48] sm:$0xff]
    %v6941 = vld [vmem:[%s6930 + $0x50] sm:$0xff]
    %v6942 = vld [vmem:[%s6930 + $0x58] sm:$0xff]
    %v6943 = vld [vmem:[%s6930 + $0x60] sm:$0xff]
    %v6944 = vld [vmem:[%s6930 + $0x68] sm:$0xff]
    %v6945 = vld [vmem:[%s6930 + $0x70] sm:$0xff]
    %v6946 = vld [vmem:[%s6930 + $0x78] sm:$0xff]
    %6948 = vset.pattern.permute.xlu0 0
    %6949 = vperm.xlu0 %6948, %v6931
    %v6950 = vpop.permute.xlu0 %6949
    %6953 = vset.pattern.permute.xlu0 0
    %6954 = vperm.xlu0 %6953, %v6932
    %v6955 = vpop.permute.xlu0 %6954
    %6958 = vset.pattern.permute.xlu0 0
    %6959 = vperm.xlu0 %6958, %v6933
    %v6960 = vpop.permute.xlu0 %6959
    %6963 = vset.pattern.permute.xlu0 0
    %6964 = vperm.xlu0 %6963, %v6934
    %v6965 = vpop.permute.xlu0 %6964
    %6968 = vset.pattern.permute.xlu0 0
    %6969 = vperm.xlu0 %6968, %v6935
    %v6970 = vpop.permute.xlu0 %6969
    %6973 = vset.pattern.permute.xlu0 0
    %6974 = vperm.xlu0 %6973, %v6936
    %v6975 = vpop.permute.xlu0 %6974
    %6978 = vset.pattern.permute.xlu0 0
    %6979 = vperm.xlu0 %6978, %v6937
    %v6980 = vpop.permute.xlu0 %6979
    %6983 = vset.pattern.permute.xlu0 0
    %6984 = vperm.xlu0 %6983, %v6938
    %v6985 = vpop.permute.xlu0 %6984
    %6988 = vset.pattern.permute.xlu0 0
    %6989 = vperm.xlu0 %6988, %v6939
    %v6990 = vpop.permute.xlu0 %6989
    %6993 = vset.pattern.permute.xlu0 0
    %6994 = vperm.xlu0 %6993, %v6940
    %v6995 = vpop.permute.xlu0 %6994
    %6998 = vset.pattern.permute.xlu0 0
    %6999 = vperm.xlu0 %6998, %v6941
    %v7000 = vpop.permute.xlu0 %6999
    %7003 = vset.pattern.permute.xlu0 0
    %7004 = vperm.xlu0 %7003, %v6942
    %v7005 = vpop.permute.xlu0 %7004
    %7008 = vset.pattern.permute.xlu0 0
    %7009 = vperm.xlu0 %7008, %v6943
    %v7010 = vpop.permute.xlu0 %7009
    %7013 = vset.pattern.permute.xlu0 0
    %7014 = vperm.xlu0 %7013, %v6944
    %v7015 = vpop.permute.xlu0 %7014
    %7018 = vset.pattern.permute.xlu0 0
    %7019 = vperm.xlu0 %7018, %v6945
    %v7020 = vpop.permute.xlu0 %7019
    %7023 = vset.pattern.permute.xlu0 0
    %7024 = vperm.xlu0 %7023, %v6946
    %v7025 = vpop.permute.xlu0 %7024
    %v7027 = vmul.f32 %v6331, %v6950
    %v7028 = vmul.f32 %v6330, %v6955
    %v7029 = vmul.f32 %v6329, %v6960
    %v7030 = vmul.f32 %v6328, %v6965
    %v7031 = vmul.f32 %v6327, %v6970
    %v7032 = vmul.f32 %v6326, %v6975
    %v7033 = vmul.f32 %v6325, %v6980
    %v7034 = vmul.f32 %v6324, %v6985
    %v7035 = vmul.f32 %v6323, %v6990
    %v7036 = vmul.f32 %v6322, %v6995
    %v7037 = vmul.f32 %v6321, %v7000
    %v7038 = vmul.f32 %v6320, %v7005
    %v7039 = vmul.f32 %v6319, %v7010
    %v7040 = vmul.f32 %v6318, %v7015
    %v7041 = vmul.f32 %v6317, %v7020
    %v7042 = vmul.f32 %v6332, %v7025
    %s7043 = scalar_lea.vmem %s13, 896
    %v7044 = vld [vmem:[%s7043] sm:$0xff]
    %v7045 = vld [vmem:[%s7043 + $0x8] sm:$0xff]
    %v7046 = vld [vmem:[%s7043 + $0x10] sm:$0xff]
    %v7047 = vld [vmem:[%s7043 + $0x18] sm:$0xff]
    %v7048 = vld [vmem:[%s7043 + $0x20] sm:$0xff]
    %v7049 = vld [vmem:[%s7043 + $0x28] sm:$0xff]
    %v7050 = vld [vmem:[%s7043 + $0x30] sm:$0xff]
    %v7051 = vld [vmem:[%s7043 + $0x38] sm:$0xff]
    %v7052 = vld [vmem:[%s7043 + $0x40] sm:$0xff]
    %v7053 = vld [vmem:[%s7043 + $0x48] sm:$0xff]
    %v7054 = vld [vmem:[%s7043 + $0x50] sm:$0xff]
    %v7055 = vld [vmem:[%s7043 + $0x58] sm:$0xff]
    %v7056 = vld [vmem:[%s7043 + $0x60] sm:$0xff]
    %v7057 = vld [vmem:[%s7043 + $0x68] sm:$0xff]
    %v7058 = vld [vmem:[%s7043 + $0x70] sm:$0xff]
    %v7059 = vld [vmem:[%s7043 + $0x78] sm:$0xff]
    %7061 = vset.pattern.permute.xlu0 0
    %7062 = vperm.xlu0 %7061, %v7044
    %v7063 = vpop.permute.xlu0 %7062
    %7066 = vset.pattern.permute.xlu0 0
    %7067 = vperm.xlu0 %7066, %v7045
    %v7068 = vpop.permute.xlu0 %7067
    %7071 = vset.pattern.permute.xlu0 0
    %7072 = vperm.xlu0 %7071, %v7046
    %v7073 = vpop.permute.xlu0 %7072
    %7076 = vset.pattern.permute.xlu0 0
    %7077 = vperm.xlu0 %7076, %v7047
    %v7078 = vpop.permute.xlu0 %7077
    %7081 = vset.pattern.permute.xlu0 0
    %7082 = vperm.xlu0 %7081, %v7048
    %v7083 = vpop.permute.xlu0 %7082
    %7086 = vset.pattern.permute.xlu0 0
    %7087 = vperm.xlu0 %7086, %v7049
    %v7088 = vpop.permute.xlu0 %7087
    %7091 = vset.pattern.permute.xlu0 0
    %7092 = vperm.xlu0 %7091, %v7050
    %v7093 = vpop.permute.xlu0 %7092
    %7096 = vset.pattern.permute.xlu0 0
    %7097 = vperm.xlu0 %7096, %v7051
    %v7098 = vpop.permute.xlu0 %7097
    %7101 = vset.pattern.permute.xlu0 0
    %7102 = vperm.xlu0 %7101, %v7052
    %v7103 = vpop.permute.xlu0 %7102
    %7106 = vset.pattern.permute.xlu0 0
    %7107 = vperm.xlu0 %7106, %v7053
    %v7108 = vpop.permute.xlu0 %7107
    %7111 = vset.pattern.permute.xlu0 0
    %7112 = vperm.xlu0 %7111, %v7054
    %v7113 = vpop.permute.xlu0 %7112
    %7116 = vset.pattern.permute.xlu0 0
    %7117 = vperm.xlu0 %7116, %v7055
    %v7118 = vpop.permute.xlu0 %7117
    %7121 = vset.pattern.permute.xlu0 0
    %7122 = vperm.xlu0 %7121, %v7056
    %v7123 = vpop.permute.xlu0 %7122
    %7126 = vset.pattern.permute.xlu0 0
    %7127 = vperm.xlu0 %7126, %v7057
    %v7128 = vpop.permute.xlu0 %7127
    %7131 = vset.pattern.permute.xlu0 0
    %7132 = vperm.xlu0 %7131, %v7058
    %v7133 = vpop.permute.xlu0 %7132
    %7136 = vset.pattern.permute.xlu0 0
    %7137 = vperm.xlu0 %7136, %v7059
    %v7138 = vpop.permute.xlu0 %7137
    %v7140 = vmul.f32 %v6239, %v7063
    %v7141 = vmul.f32 %v6244, %v7068
    %v7142 = vmul.f32 %v6247, %v7073
    %v7143 = vmul.f32 %v6252, %v7078
    %v7144 = vmul.f32 %v6255, %v7083
    %v7145 = vmul.f32 %v6260, %v7088
    %v7146 = vmul.f32 %v6263, %v7093
    %v7147 = vmul.f32 %v6268, %v7098
    %v7148 = vmul.f32 %v6271, %v7103
    %v7149 = vmul.f32 %v6276, %v7108
    %v7150 = vmul.f32 %v6279, %v7113
    %v7151 = vmul.f32 %v6284, %v7118
    %v7152 = vmul.f32 %v6287, %v7123
    %v7153 = vmul.f32 %v6292, %v7128
    %v7154 = vmul.f32 %v6295, %v7133
    %v7155 = vmul.f32 %v6236, %v7138
    %s7156 = scalar_lea.vmem %s13, 1024
    %v7157 = vld [vmem:[%s7156] sm:$0xff]
    %v7158 = vld [vmem:[%s7156 + $0x8] sm:$0xff]
    %v7159 = vld [vmem:[%s7156 + $0x10] sm:$0xff]
    %v7160 = vld [vmem:[%s7156 + $0x18] sm:$0xff]
    %v7161 = vld [vmem:[%s7156 + $0x20] sm:$0xff]
    %v7162 = vld [vmem:[%s7156 + $0x28] sm:$0xff]
    %v7163 = vld [vmem:[%s7156 + $0x30] sm:$0xff]
    %v7164 = vld [vmem:[%s7156 + $0x38] sm:$0xff]
    %v7165 = vld [vmem:[%s7156 + $0x40] sm:$0xff]
    %v7166 = vld [vmem:[%s7156 + $0x48] sm:$0xff]
    %v7167 = vld [vmem:[%s7156 + $0x50] sm:$0xff]
    %v7168 = vld [vmem:[%s7156 + $0x58] sm:$0xff]
    %v7169 = vld [vmem:[%s7156 + $0x60] sm:$0xff]
    %v7170 = vld [vmem:[%s7156 + $0x68] sm:$0xff]
    %v7171 = vld [vmem:[%s7156 + $0x70] sm:$0xff]
    %v7172 = vld [vmem:[%s7156 + $0x78] sm:$0xff]
    %7174 = vset.pattern.permute.xlu0 0
    %7175 = vperm.xlu0 %7174, %v7157
    %v7176 = vpop.permute.xlu0 %7175
    %7179 = vset.pattern.permute.xlu0 0
    %7180 = vperm.xlu0 %7179, %v7158
    %v7181 = vpop.permute.xlu0 %7180
    %7184 = vset.pattern.permute.xlu0 0
    %7185 = vperm.xlu0 %7184, %v7159
    %v7186 = vpop.permute.xlu0 %7185
    %7189 = vset.pattern.permute.xlu0 0
    %7190 = vperm.xlu0 %7189, %v7160
    %v7191 = vpop.permute.xlu0 %7190
    %7194 = vset.pattern.permute.xlu0 0
    %7195 = vperm.xlu0 %7194, %v7161
    %v7196 = vpop.permute.xlu0 %7195
    %7199 = vset.pattern.permute.xlu0 0
    %7200 = vperm.xlu0 %7199, %v7162
    %v7201 = vpop.permute.xlu0 %7200
    %7204 = vset.pattern.permute.xlu0 0
    %7205 = vperm.xlu0 %7204, %v7163
    %v7206 = vpop.permute.xlu0 %7205
    %7209 = vset.pattern.permute.xlu0 0
    %7210 = vperm.xlu0 %7209, %v7164
    %v7211 = vpop.permute.xlu0 %7210
    %7214 = vset.pattern.permute.xlu0 0
    %7215 = vperm.xlu0 %7214, %v7165
    %v7216 = vpop.permute.xlu0 %7215
    %7219 = vset.pattern.permute.xlu0 0
    %7220 = vperm.xlu0 %7219, %v7166
    %v7221 = vpop.permute.xlu0 %7220
    %7224 = vset.pattern.permute.xlu0 0
    %7225 = vperm.xlu0 %7224, %v7167
    %v7226 = vpop.permute.xlu0 %7225
    %7229 = vset.pattern.permute.xlu0 0
    %7230 = vperm.xlu0 %7229, %v7168
    %v7231 = vpop.permute.xlu0 %7230
    %7234 = vset.pattern.permute.xlu0 0
    %7235 = vperm.xlu0 %7234, %v7169
    %v7236 = vpop.permute.xlu0 %7235
    %7239 = vset.pattern.permute.xlu0 0
    %7240 = vperm.xlu0 %7239, %v7170
    %v7241 = vpop.permute.xlu0 %7240
    %7244 = vset.pattern.permute.xlu0 0
    %7245 = vperm.xlu0 %7244, %v7171
    %v7246 = vpop.permute.xlu0 %7245
    %7249 = vset.pattern.permute.xlu0 0
    %7250 = vperm.xlu0 %7249, %v7172
    %v7251 = vpop.permute.xlu0 %7250
    %v7253 = vmul.f32 %v6588, %v7176
    %v7254 = vmul.f32 %v6587, %v7181
    %v7255 = vmul.f32 %v6586, %v7186
    %v7256 = vmul.f32 %v6585, %v7191
    %v7257 = vmul.f32 %v6584, %v7196
    %v7258 = vmul.f32 %v6583, %v7201
    %v7259 = vmul.f32 %v6582, %v7206
    %v7260 = vmul.f32 %v6581, %v7211
    %v7261 = vmul.f32 %v6580, %v7216
    %v7262 = vmul.f32 %v6579, %v7221
    %v7263 = vmul.f32 %v6578, %v7226
    %v7264 = vmul.f32 %v6577, %v7231
    %v7265 = vmul.f32 %v6576, %v7236
    %v7266 = vmul.f32 %v6575, %v7241
    %v7267 = vmul.f32 %v6590, %v7246
    %v7268 = vmul.f32 %v6589, %v7251
    %7285 = vrot.lane.b32.xlu0 %v6542, 32
    %v7286 = vpop.permute.xlu0 %7285
    %7287 = vrot.lane.b32.xlu0 %v6543, 32
    %v7288 = vpop.permute.xlu0 %7287
    %7289 = vrot.lane.b32.xlu0 %v6544, 32
    %v7290 = vpop.permute.xlu0 %7289
    %7291 = vrot.lane.b32.xlu0 %v6545, 32
    %v7292 = vpop.permute.xlu0 %7291
    %7293 = vrot.lane.b32.xlu0 %v6546, 32
    %v7294 = vpop.permute.xlu0 %7293
    %7295 = vrot.lane.b32.xlu0 %v6547, 32
    %v7296 = vpop.permute.xlu0 %7295
    %7297 = vrot.lane.b32.xlu0 %v6548, 32
    %v7298 = vpop.permute.xlu0 %7297
    %7299 = vrot.lane.b32.xlu0 %v6549, 32
    %v7300 = vpop.permute.xlu0 %7299
    %7301 = vrot.lane.b32.xlu0 %v6550, 32
    %v7302 = vpop.permute.xlu0 %7301
    %7303 = vrot.lane.b32.xlu0 %v6551, 32
    %v7304 = vpop.permute.xlu0 %7303
    %7305 = vrot.lane.b32.xlu0 %v6552, 32
    %v7306 = vpop.permute.xlu0 %7305
    %7307 = vrot.lane.b32.xlu0 %v6553, 32
    %v7308 = vpop.permute.xlu0 %7307
    %7309 = vrot.lane.b32.xlu0 %v6554, 32
    %v7310 = vpop.permute.xlu0 %7309
    %7311 = vrot.lane.b32.xlu0 %v6555, 32
    %v7312 = vpop.permute.xlu0 %7311
    %7313 = vrot.lane.b32.xlu0 %v6556, 32
    %v7314 = vpop.permute.xlu0 %7313
    %7315 = vrot.lane.b32.xlu0 %v6557, 32
    %v7316 = vpop.permute.xlu0 %7315
    %7349 = vrot.lane.b32.xlu0 %v6688, 64
    %v7350 = vpop.permute.xlu0 %7349
    %7351 = vrot.lane.b32.xlu0 %v6689, 64
    %v7352 = vpop.permute.xlu0 %7351
    %7353 = vrot.lane.b32.xlu0 %v6690, 64
    %v7354 = vpop.permute.xlu0 %7353
    %7355 = vrot.lane.b32.xlu0 %v6691, 64
    %v7356 = vpop.permute.xlu0 %7355
    %7357 = vrot.lane.b32.xlu0 %v6692, 64
    %v7358 = vpop.permute.xlu0 %7357
    %7359 = vrot.lane.b32.xlu0 %v6693, 64
    %v7360 = vpop.permute.xlu0 %7359
    %7361 = vrot.lane.b32.xlu0 %v6694, 64
    %v7362 = vpop.permute.xlu0 %7361
    %7363 = vrot.lane.b32.xlu0 %v6695, 64
    %v7364 = vpop.permute.xlu0 %7363
    %7365 = vrot.lane.b32.xlu0 %v6696, 64
    %v7366 = vpop.permute.xlu0 %7365
    %7367 = vrot.lane.b32.xlu0 %v6697, 64
    %v7368 = vpop.permute.xlu0 %7367
    %7369 = vrot.lane.b32.xlu0 %v6698, 64
    %v7370 = vpop.permute.xlu0 %7369
    %7371 = vrot.lane.b32.xlu0 %v6699, 64
    %v7372 = vpop.permute.xlu0 %7371
    %7373 = vrot.lane.b32.xlu0 %v6700, 64
    %v7374 = vpop.permute.xlu0 %7373
    %7375 = vrot.lane.b32.xlu0 %v6701, 64
    %v7376 = vpop.permute.xlu0 %7375
    %7377 = vrot.lane.b32.xlu0 %v6702, 64
    %v7378 = vpop.permute.xlu0 %7377
    %7379 = vrot.lane.b32.xlu0 %v6703, 64
    %v7380 = vpop.permute.xlu0 %7379
    %7413 = vrot.lane.b32.xlu0 %v6801, 96
    %v7414 = vpop.permute.xlu0 %7413
    %7415 = vrot.lane.b32.xlu0 %v6802, 96
    %v7416 = vpop.permute.xlu0 %7415
    %7417 = vrot.lane.b32.xlu0 %v6803, 96
    %v7418 = vpop.permute.xlu0 %7417
    %7419 = vrot.lane.b32.xlu0 %v6804, 96
    %v7420 = vpop.permute.xlu0 %7419
    %7421 = vrot.lane.b32.xlu0 %v6805, 96
    %v7422 = vpop.permute.xlu0 %7421
    %7423 = vrot.lane.b32.xlu0 %v6806, 96
    %v7424 = vpop.permute.xlu0 %7423
    %7425 = vrot.lane.b32.xlu0 %v6807, 96
    %v7426 = vpop.permute.xlu0 %7425
    %7427 = vrot.lane.b32.xlu0 %v6808, 96
    %v7428 = vpop.permute.xlu0 %7427
    %7429 = vrot.lane.b32.xlu0 %v6809, 96
    %v7430 = vpop.permute.xlu0 %7429
    %7431 = vrot.lane.b32.xlu0 %v6810, 96
    %v7432 = vpop.permute.xlu0 %7431
    %7433 = vrot.lane.b32.xlu0 %v6811, 96
    %v7434 = vpop.permute.xlu0 %7433
    %7435 = vrot.lane.b32.xlu0 %v6812, 96
    %v7436 = vpop.permute.xlu0 %7435
    %7437 = vrot.lane.b32.xlu0 %v6813, 96
    %v7438 = vpop.permute.xlu0 %7437
    %7439 = vrot.lane.b32.xlu0 %v6814, 96
    %v7440 = vpop.permute.xlu0 %7439
    %7441 = vrot.lane.b32.xlu0 %v6815, 96
    %v7442 = vpop.permute.xlu0 %7441
    %7443 = vrot.lane.b32.xlu0 %v6816, 96
    %v7444 = vpop.permute.xlu0 %7443
    %7477 = vrot.lane.b32.xlu0 %v6914, 32
    %v7478 = vpop.permute.xlu0 %7477
    %7479 = vrot.lane.b32.xlu0 %v6915, 32
    %v7480 = vpop.permute.xlu0 %7479
    %7481 = vrot.lane.b32.xlu0 %v6916, 32
    %v7482 = vpop.permute.xlu0 %7481
    %7483 = vrot.lane.b32.xlu0 %v6917, 32
    %v7484 = vpop.permute.xlu0 %7483
    %7485 = vrot.lane.b32.xlu0 %v6918, 32
    %v7486 = vpop.permute.xlu0 %7485
    %7487 = vrot.lane.b32.xlu0 %v6919, 32
    %v7488 = vpop.permute.xlu0 %7487
    %7489 = vrot.lane.b32.xlu0 %v6920, 32
    %v7490 = vpop.permute.xlu0 %7489
    %7491 = vrot.lane.b32.xlu0 %v6921, 32
    %v7492 = vpop.permute.xlu0 %7491
    %7493 = vrot.lane.b32.xlu0 %v6922, 32
    %v7494 = vpop.permute.xlu0 %7493
    %7495 = vrot.lane.b32.xlu0 %v6923, 32
    %v7496 = vpop.permute.xlu0 %7495
    %7497 = vrot.lane.b32.xlu0 %v6924, 32
    %v7498 = vpop.permute.xlu0 %7497
    %7499 = vrot.lane.b32.xlu0 %v6925, 32
    %v7500 = vpop.permute.xlu0 %7499
    %7501 = vrot.lane.b32.xlu0 %v6926, 32
    %v7502 = vpop.permute.xlu0 %7501
    %7503 = vrot.lane.b32.xlu0 %v6927, 32
    %v7504 = vpop.permute.xlu0 %7503
    %7505 = vrot.lane.b32.xlu0 %v6928, 32
    %v7506 = vpop.permute.xlu0 %7505
    %7507 = vrot.lane.b32.xlu0 %v6929, 32
    %v7508 = vpop.permute.xlu0 %7507
    %7541 = vrot.lane.b32.xlu0 %v7027, 64
    %v7542 = vpop.permute.xlu0 %7541
    %7543 = vrot.lane.b32.xlu0 %v7028, 64
    %v7544 = vpop.permute.xlu0 %7543
    %7545 = vrot.lane.b32.xlu0 %v7029, 64
    %v7546 = vpop.permute.xlu0 %7545
    %7547 = vrot.lane.b32.xlu0 %v7030, 64
    %v7548 = vpop.permute.xlu0 %7547
    %7549 = vrot.lane.b32.xlu0 %v7031, 64
    %v7550 = vpop.permute.xlu0 %7549
    %7551 = vrot.lane.b32.xlu0 %v7032, 64
    %v7552 = vpop.permute.xlu0 %7551
    %7553 = vrot.lane.b32.xlu0 %v7033, 64
    %v7554 = vpop.permute.xlu0 %7553
    %7555 = vrot.lane.b32.xlu0 %v7034, 64
    %v7556 = vpop.permute.xlu0 %7555
    %7557 = vrot.lane.b32.xlu0 %v7035, 64
    %v7558 = vpop.permute.xlu0 %7557
    %7559 = vrot.lane.b32.xlu0 %v7036, 64
    %v7560 = vpop.permute.xlu0 %7559
    %7561 = vrot.lane.b32.xlu0 %v7037, 64
    %v7562 = vpop.permute.xlu0 %7561
    %7563 = vrot.lane.b32.xlu0 %v7038, 64
    %v7564 = vpop.permute.xlu0 %7563
    %7565 = vrot.lane.b32.xlu0 %v7039, 64
    %v7566 = vpop.permute.xlu0 %7565
    %7567 = vrot.lane.b32.xlu0 %v7040, 64
    %v7568 = vpop.permute.xlu0 %7567
    %7569 = vrot.lane.b32.xlu0 %v7041, 64
    %v7570 = vpop.permute.xlu0 %7569
    %7571 = vrot.lane.b32.xlu0 %v7042, 64
    %v7572 = vpop.permute.xlu0 %7571
    %7605 = vrot.lane.b32.xlu0 %v7140, 96
    %v7606 = vpop.permute.xlu0 %7605
    %7607 = vrot.lane.b32.xlu0 %v7141, 96
    %v7608 = vpop.permute.xlu0 %7607
    %7609 = vrot.lane.b32.xlu0 %v7142, 96
    %v7610 = vpop.permute.xlu0 %7609
    %7611 = vrot.lane.b32.xlu0 %v7143, 96
    %v7612 = vpop.permute.xlu0 %7611
    %7613 = vrot.lane.b32.xlu0 %v7144, 96
    %v7614 = vpop.permute.xlu0 %7613
    %7615 = vrot.lane.b32.xlu0 %v7145, 96
    %v7616 = vpop.permute.xlu0 %7615
    %7617 = vrot.lane.b32.xlu0 %v7146, 96
    %v7618 = vpop.permute.xlu0 %7617
    %7619 = vrot.lane.b32.xlu0 %v7147, 96
    %v7620 = vpop.permute.xlu0 %7619
    %7621 = vrot.lane.b32.xlu0 %v7148, 96
    %v7622 = vpop.permute.xlu0 %7621
    %7623 = vrot.lane.b32.xlu0 %v7149, 96
    %v7624 = vpop.permute.xlu0 %7623
    %7625 = vrot.lane.b32.xlu0 %v7150, 96
    %v7626 = vpop.permute.xlu0 %7625
    %7627 = vrot.lane.b32.xlu0 %v7151, 96
    %v7628 = vpop.permute.xlu0 %7627
    %7629 = vrot.lane.b32.xlu0 %v7152, 96
    %v7630 = vpop.permute.xlu0 %7629
    %7631 = vrot.lane.b32.xlu0 %v7153, 96
    %v7632 = vpop.permute.xlu0 %7631
    %7633 = vrot.lane.b32.xlu0 %v7154, 96
    %v7634 = vpop.permute.xlu0 %7633
    %7635 = vrot.lane.b32.xlu0 %v7155, 96
    %v7636 = vpop.permute.xlu0 %7635
    %v7653 = vsel %vm167, %v6429, %v7286
    %v7654 = vsel %vm167, %v6430, %v7288
    %v7655 = vsel %vm167, %v6431, %v7290
    %v7656 = vsel %vm167, %v6432, %v7292
    %v7657 = vsel %vm167, %v6433, %v7294
    %v7658 = vsel %vm167, %v6434, %v7296
    %v7659 = vsel %vm167, %v6435, %v7298
    %v7660 = vsel %vm167, %v6436, %v7300
    %v7661 = vsel %vm167, %v6437, %v7302
    %v7662 = vsel %vm167, %v6438, %v7304
    %v7663 = vsel %vm167, %v6439, %v7306
    %v7664 = vsel %vm167, %v6440, %v7308
    %v7665 = vsel %vm167, %v6441, %v7310
    %v7666 = vsel %vm167, %v6442, %v7312
    %v7667 = vsel %vm167, %v6443, %v7314
    %v7668 = vsel %vm167, %v6444, %v7316
    %v7669 = vsel %vm892, %v7653, %v7350
    %v7670 = vsel %vm892, %v7654, %v7352
    %v7671 = vsel %vm892, %v7655, %v7354
    %v7672 = vsel %vm892, %v7656, %v7356
    %v7673 = vsel %vm892, %v7657, %v7358
    %v7674 = vsel %vm892, %v7658, %v7360
    %v7675 = vsel %vm892, %v7659, %v7362
    %v7676 = vsel %vm892, %v7660, %v7364
    %v7677 = vsel %vm892, %v7661, %v7366
    %v7678 = vsel %vm892, %v7662, %v7368
    %v7679 = vsel %vm892, %v7663, %v7370
    %v7680 = vsel %vm892, %v7664, %v7372
    %v7681 = vsel %vm892, %v7665, %v7374
    %v7682 = vsel %vm892, %v7666, %v7376
    %v7683 = vsel %vm892, %v7667, %v7378
    %v7684 = vsel %vm892, %v7668, %v7380
    %v7685 = vsel %vm352, %v7669, %v7414
    %v7686 = vsel %vm352, %v7670, %v7416
    %v7687 = vsel %vm352, %v7671, %v7418
    %v7688 = vsel %vm352, %v7672, %v7420
    %v7689 = vsel %vm352, %v7673, %v7422
    %v7690 = vsel %vm352, %v7674, %v7424
    %v7691 = vsel %vm352, %v7675, %v7426
    %v7692 = vsel %vm352, %v7676, %v7428
    %v7693 = vsel %vm352, %v7677, %v7430
    %v7694 = vsel %vm352, %v7678, %v7432
    %v7695 = vsel %vm352, %v7679, %v7434
    %v7696 = vsel %vm352, %v7680, %v7436
    %v7697 = vsel %vm352, %v7681, %v7438
    %v7698 = vsel %vm352, %v7682, %v7440
    %v7699 = vsel %vm352, %v7683, %v7442
    %v7700 = vsel %vm352, %v7684, %v7444
    %v7701 = vsel %vm167, %v6236, %v7478
    %v7702 = vsel %vm167, %v6239, %v7480
    %v7703 = vsel %vm167, %v6244, %v7482
    %v7704 = vsel %vm167, %v6247, %v7484
    %v7705 = vsel %vm167, %v6252, %v7486
    %v7706 = vsel %vm167, %v6255, %v7488
    %v7707 = vsel %vm167, %v6260, %v7490
    %v7708 = vsel %vm167, %v6263, %v7492
    %v7709 = vsel %vm167, %v6268, %v7494
    %v7710 = vsel %vm167, %v6271, %v7496
    %v7711 = vsel %vm167, %v6276, %v7498
    %v7712 = vsel %vm167, %v6279, %v7500
    %v7713 = vsel %vm167, %v6284, %v7502
    %v7714 = vsel %vm167, %v6287, %v7504
    %v7715 = vsel %vm167, %v6292, %v7506
    %v7716 = vsel %vm167, %v6295, %v7508
    %v7717 = vsel %vm892, %v7701, %v7542
    %v7718 = vsel %vm892, %v7702, %v7544
    %v7719 = vsel %vm892, %v7703, %v7546
    %v7720 = vsel %vm892, %v7704, %v7548
    %v7721 = vsel %vm892, %v7705, %v7550
    %v7722 = vsel %vm892, %v7706, %v7552
    %v7723 = vsel %vm892, %v7707, %v7554
    %v7724 = vsel %vm892, %v7708, %v7556
    %v7725 = vsel %vm892, %v7709, %v7558
    %v7726 = vsel %vm892, %v7710, %v7560
    %v7727 = vsel %vm892, %v7711, %v7562
    %v7728 = vsel %vm892, %v7712, %v7564
    %v7729 = vsel %vm892, %v7713, %v7566
    %v7730 = vsel %vm892, %v7714, %v7568
    %v7731 = vsel %vm892, %v7715, %v7570
    %v7732 = vsel %vm892, %v7716, %v7572
    %v7733 = vsel %vm352, %v7717, %v7606
    %v7734 = vsel %vm352, %v7718, %v7608
    %v7735 = vsel %vm352, %v7719, %v7610
    %v7736 = vsel %vm352, %v7720, %v7612
    %v7737 = vsel %vm352, %v7721, %v7614
    %v7738 = vsel %vm352, %v7722, %v7616
    %v7739 = vsel %vm352, %v7723, %v7618
    %v7740 = vsel %vm352, %v7724, %v7620
    %v7741 = vsel %vm352, %v7725, %v7622
    %v7742 = vsel %vm352, %v7726, %v7624
    %v7743 = vsel %vm352, %v7727, %v7626
    %v7744 = vsel %vm352, %v7728, %v7628
    %v7745 = vsel %vm352, %v7729, %v7630
    %v7746 = vsel %vm352, %v7730, %v7632
    %v7747 = vsel %vm352, %v7731, %v7634
    %v7748 = vsel %vm352, %v7732, %v7636
    %v7749 = vpack.c.bf16 %v7686, %v7685
    %v7750 = vpack.c.bf16 %v7734, %v7733
    %v7751 = vpack.c.bf16 %v7254, %v7253
    %v7752 = vpack.c.bf16 %v7688, %v7687
    %v7753 = vpack.c.bf16 %v7736, %v7735
    %v7754 = vpack.c.bf16 %v7256, %v7255
    %v7755 = vpack.c.bf16 %v7690, %v7689
    %v7756 = vpack.c.bf16 %v7738, %v7737
    %v7757 = vpack.c.bf16 %v7258, %v7257
    %v7758 = vpack.c.bf16 %v7692, %v7691
    %v7759 = vpack.c.bf16 %v7740, %v7739
    %v7760 = vpack.c.bf16 %v7260, %v7259
    %v7761 = vpack.c.bf16 %v7694, %v7693
    %v7762 = vpack.c.bf16 %v7742, %v7741
    %v7763 = vpack.c.bf16 %v7262, %v7261
    %v7764 = vpack.c.bf16 %v7696, %v7695
    %v7765 = vpack.c.bf16 %v7744, %v7743
    %v7766 = vpack.c.bf16 %v7264, %v7263
    %v7767 = vpack.c.bf16 %v7698, %v7697
    %v7768 = vpack.c.bf16 %v7746, %v7745
    %v7769 = vpack.c.bf16 %v7266, %v7265
    %v7770 = vpack.c.bf16 %v7700, %v7699
    %v7771 = vpack.c.bf16 %v7748, %v7747
    %v7772 = vpack.c.bf16 %v7268, %v7267
    %v7773 = vld [vmem:[%s14] sm:$0xf]
    %v7774 = vld [vmem:[%s14 + $0x4] sm:$0xf]
    %v7775 = vld [vmem:[%s14 + $0x8] sm:$0xf]
    %v7776 = vld [vmem:[%s14 + $0xc] sm:$0xf]
    %v7777 = vld [vmem:[%s14 + $0x10] sm:$0xf]
    %v7778 = vld [vmem:[%s14 + $0x14] sm:$0xf]
    %v7779 = vld [vmem:[%s14 + $0x18] sm:$0xf]
    %v7780 = vld [vmem:[%s14 + $0x1c] sm:$0xf]
    %v7781 = vld [vmem:[%s14 + $0x20] sm:$0xf]
    %v7782 = vld [vmem:[%s14 + $0x24] sm:$0xf]
    %v7783 = vld [vmem:[%s14 + $0x28] sm:$0xf]
    %v7784 = vld [vmem:[%s14 + $0x2c] sm:$0xf]
    %v7785 = vld [vmem:[%s14 + $0x30] sm:$0xf]
    %v7786 = vld [vmem:[%s14 + $0x34] sm:$0xf]
    %v7787 = vld [vmem:[%s14 + $0x38] sm:$0xf]
    %v7788 = vld [vmem:[%s14 + $0x3c] sm:$0xf]
    %v7789 = vld [vmem:[%s14 + $0x40] sm:$0xf]
    %v7790 = vld [vmem:[%s14 + $0x44] sm:$0xf]
    %v7791 = vld [vmem:[%s14 + $0x48] sm:$0xf]
    %v7792 = vld [vmem:[%s14 + $0x4c] sm:$0xf]
    %v7793 = vld [vmem:[%s14 + $0x50] sm:$0xf]
    %v7794 = vld [vmem:[%s14 + $0x54] sm:$0xf]
    %v7795 = vld [vmem:[%s14 + $0x58] sm:$0xf]
    %v7796 = vld [vmem:[%s14 + $0x5c] sm:$0xf]
    %v7797 = vld [vmem:[%s14 + $0x60] sm:$0xf]
    %v7798 = vld [vmem:[%s14 + $0x64] sm:$0xf]
    %v7799 = vld [vmem:[%s14 + $0x68] sm:$0xf]
    %v7800 = vld [vmem:[%s14 + $0x6c] sm:$0xf]
    %v7801 = vld [vmem:[%s14 + $0x70] sm:$0xf]
    %v7802 = vld [vmem:[%s14 + $0x74] sm:$0xf]
    %v7803 = vld [vmem:[%s14 + $0x78] sm:$0xf]
    %v7804 = vld [vmem:[%s14 + $0x7c] sm:$0xf]
    %v7805 = vld [vmem:[%s14 + $0x80] sm:$0xf]
    %v7806 = vld [vmem:[%s14 + $0x84] sm:$0xf]
    %v7807 = vld [vmem:[%s14 + $0x88] sm:$0xf]
    %v7808 = vld [vmem:[%s14 + $0x8c] sm:$0xf]
    %v7809 = vld [vmem:[%s15] sm:$0x1]
    %v7811 = vlaneseq
    %v7812 = vshrl.u32 %v7811, 7
    %v7813 = vsub.s32 0, %v7812
    %v7814 = vrot.slane %v7809, %v7813
    %v7852 = vunpack.c.l.b16 %v7773
    %v7853 = vunpack.c.l.b16 %v7774
    %v7854 = vunpack.c.l.b16 %v7775
    %v7855 = vunpack.c.l.b16 %v7776
    %v7856 = vunpack.c.l.b16 %v7777
    %v7857 = vunpack.c.l.b16 %v7778
    %v7858 = vunpack.c.l.b16 %v7779
    %v7859 = vunpack.c.l.b16 %v7780
    %v7860 = vunpack.c.l.b16 %v7781
    %v7861 = vunpack.c.l.b16 %v7782
    %v7862 = vunpack.c.l.b16 %v7783
    %v7863 = vunpack.c.l.b16 %v7784
    %v7864 = vunpack.c.l.b16 %v7785
    %v7865 = vunpack.c.l.b16 %v7786
    %v7866 = vunpack.c.l.b16 %v7787
    %v7867 = vunpack.c.l.b16 %v7788
    %v7868 = vunpack.c.l.b16 %v7789
    %v7869 = vunpack.c.l.b16 %v7790
    %v7870 = vunpack.c.l.b16 %v7791
    %v7871 = vunpack.c.l.b16 %v7792
    %v7872 = vunpack.c.l.b16 %v7793
    %v7873 = vunpack.c.l.b16 %v7794
    %v7874 = vunpack.c.l.b16 %v7795
    %v7875 = vunpack.c.l.b16 %v7796
    %v7876 = vunpack.c.l.b16 %v7797
    %v7877 = vunpack.c.l.b16 %v7798
    %v7878 = vunpack.c.l.b16 %v7799
    %v7879 = vunpack.c.l.b16 %v7800
    %v7880 = vunpack.c.l.b16 %v7801
    %v7881 = vunpack.c.l.b16 %v7802
    %v7882 = vunpack.c.l.b16 %v7803
    %v7883 = vunpack.c.l.b16 %v7804
    %v7884 = vunpack.c.l.b16 %v7805
    %v7885 = vunpack.c.l.b16 %v7806
    %v7886 = vunpack.c.l.b16 %v7807
    %v7887 = vunpack.c.l.b16 %v7808
    %v7888 = vpack.c.b16 %v7853, %v7852
    %v7889 = vpack.c.b16 %v7855, %v7854
    %v7890 = vpack.c.b16 %v7857, %v7856
    %v7891 = vpack.c.b16 %v7859, %v7858
    %v7892 = vpack.c.b16 %v7861, %v7860
    %v7893 = vpack.c.b16 %v7863, %v7862
    %v7894 = vpack.c.b16 %v7865, %v7864
    %v7895 = vpack.c.b16 %v7867, %v7866
    %v7896 = vpack.c.b16 %v7869, %v7868
    %v7897 = vpack.c.b16 %v7871, %v7870
    %v7898 = vpack.c.b16 %v7873, %v7872
    %v7899 = vpack.c.b16 %v7875, %v7874
    %v7900 = vpack.c.b16 %v7877, %v7876
    %v7901 = vpack.c.b16 %v7879, %v7878
    %v7902 = vpack.c.b16 %v7881, %v7880
    %v7903 = vpack.c.b16 %v7883, %v7882
    %v7904 = vpack.c.b16 %v7885, %v7884
    %v7905 = vpack.c.b16 %v7887, %v7886
    %v7925 = vsel %vm167, %v7751, 0
    %v7928 = vsel %vm167, %v7754, 0
    %v7931 = vsel %vm167, %v7757, 0
    %v7934 = vsel %vm167, %v7760, 0
    %v7937 = vsel %vm167, %v7763, 0
    %v7940 = vsel %vm167, %v7766, 0
    %v7943 = vsel %vm167, %v7769, 0
    %v7946 = vsel %vm167, %v7772, 0
    %7948 = vmatprep.subr.bf16.mxu0 0
    %7949 = vmatpush1.bf16.msra.mxu0 %v7888
    %7950 = vmatprep.subr.bf16.mxu0 0
    %7951 = vmatpush1.bf16.msra.mxu0 %v7889
    %7952 = vmatprep.subr.bf16.mxu0 0
    %7953 = vmatpush1.bf16.msra.mxu0 %v7890
    %7954 = vmatprep.subr.bf16.mxu0 0
    %7955 = vmatpush1.bf16.msra.mxu0 %v7891
    %7956 = vmatprep.subr.bf16.mxu0 0
    %7957 = vmatpush1.bf16.msra.mxu0 %v7892
    %7958 = vmatprep.subr.bf16.mxu0 0
    %7959 = vmatpush1.bf16.msra.mxu0 %v7893
    %7960 = vmatprep.subr.bf16.mxu0 0
    %7961 = vmatpush1.bf16.msra.mxu0 %v7894
    %7962 = vmatprep.subr.bf16.mxu0 0
    %7963 = vmatpush1.bf16.msra.mxu0 %v7895
    %7964 = vmatprep.subr.bf16.mxu0 0
    %7965 = vmatpush1.bf16.msra.mxu0 %v7896
    %7966 = vmatprep.subr.bf16.mxu0 0
    %7967 = vmatpush1.bf16.msra.mxu0 %v7897
    %7968 = vmatprep.subr.bf16.mxu0 0
    %7969 = vmatpush1.bf16.msra.mxu0 %v7898
    %7970 = vmatprep.subr.bf16.mxu0 0
    %7971 = vmatpush1.bf16.msra.mxu0 %v7899
    %7972 = vmatprep.subr.bf16.mxu0 0
    %7973 = vmatpush1.bf16.msra.mxu0 %v7900
    %7974 = vmatprep.subr.bf16.mxu0 0
    %7975 = vmatpush1.bf16.msra.mxu0 %v7901
    %7976 = vmatprep.subr.bf16.mxu0 0
    %7977 = vmatpush1.bf16.msra.mxu0 %v7902
    %7978 = vmatprep.subr.bf16.mxu0 0
    %7979 = vmatpush1.bf16.msra.mxu0 %v7903
    %7980 = vmatprep.mubr.bf16.mxu0 %v7750
    %7981 = vmatmul.mubr.bf16.gmra.mrb[0].mxu0 %v7749
    %v7982 = vpop.f32.mrb[0].mxu0
    %v7983 = vadd.f32 %v7814, %v7982
    %v7984 = vpop.f32.mrb[0].mxu0
    %v7985 = vpop.f32.mrb[0].mxu0
    %v7986 = vadd.f32 %v7814, %v7985
    %v7987 = vpop.f32.mrb[0].mxu0
    %7988 = vmatprep.mubr.bf16.mxu0 %v7753
    %7989 = vmatmul.mubr.bf16.gmra.mrb[0].mxu0 %v7752
    %v7990 = vpop.f32.mrb[0].mxu0
    %v7991 = vadd.f32 %v7814, %v7990
    %v7992 = vpop.f32.mrb[0].mxu0
    %v7993 = vpop.f32.mrb[0].mxu0
    %v7994 = vadd.f32 %v7814, %v7993
    %v7995 = vpop.f32.mrb[0].mxu0
    %7996 = vmatprep.mubr.bf16.mxu0 %v7756
    %7997 = vmatmul.mubr.bf16.gmra.mrb[0].mxu0 %v7755
    %v7998 = vpop.f32.mrb[0].mxu0
    %v7999 = vadd.f32 %v7814, %v7998
    %v8000 = vpop.f32.mrb[0].mxu0
    %v8001 = vpop.f32.mrb[0].mxu0
    %v8002 = vadd.f32 %v7814, %v8001
    %v8003 = vpop.f32.mrb[0].mxu0
    %8004 = vmatprep.mubr.bf16.mxu0 %v7759
    %8005 = vmatmul.mubr.bf16.gmra.mrb[0].mxu0 %v7758
    %v8006 = vpop.f32.mrb[0].mxu0
    %v8007 = vadd.f32 %v7814, %v8006
    %v8008 = vpop.f32.mrb[0].mxu0
    %v8009 = vpop.f32.mrb[0].mxu0
    %v8010 = vadd.f32 %v7814, %v8009
    %v8011 = vpop.f32.mrb[0].mxu0
    %8012 = vmatprep.mubr.bf16.mxu0 %v7762
    %8013 = vmatmul.mubr.bf16.gmra.mrb[0].mxu0 %v7761
    %v8014 = vpop.f32.mrb[0].mxu0
    %v8015 = vadd.f32 %v7814, %v8014
    %v8016 = vpop.f32.mrb[0].mxu0
    %v8017 = vpop.f32.mrb[0].mxu0
    %v8018 = vadd.f32 %v7814, %v8017
    %v8019 = vpop.f32.mrb[0].mxu0
    %8020 = vmatprep.mubr.bf16.mxu0 %v7765
    %8021 = vmatmul.mubr.bf16.gmra.mrb[0].mxu0 %v7764
    %v8022 = vpop.f32.mrb[0].mxu0
    %v8023 = vadd.f32 %v7814, %v8022
    %v8024 = vpop.f32.mrb[0].mxu0
    %v8025 = vpop.f32.mrb[0].mxu0
    %v8026 = vadd.f32 %v7814, %v8025
    %v8027 = vpop.f32.mrb[0].mxu0
    %8028 = vmatprep.mubr.bf16.mxu0 %v7768
    %8029 = vmatmul.mubr.bf16.gmra.mrb[0].mxu0 %v7767
    %v8030 = vpop.f32.mrb[0].mxu0
    %v8031 = vadd.f32 %v7814, %v8030
    %v8032 = vpop.f32.mrb[0].mxu0
    %v8033 = vpop.f32.mrb[0].mxu0
    %v8034 = vadd.f32 %v7814, %v8033
    %v8035 = vpop.f32.mrb[0].mxu0
    %8036 = vmatprep.mubr.bf16.mxu0 %v7771
    %8037 = vmatmul.mubr.bf16.gmra.mrb[0].mxu0 %v7770
    %v8038 = vpop.f32.mrb[0].mxu0
    %v8039 = vadd.f32 %v7814, %v8038
    %v8040 = vpop.f32.mrb[0].mxu0
    %v8041 = vpop.f32.mrb[0].mxu0
    %v8042 = vadd.f32 %v7814, %v8041
    %v8043 = vpop.f32.mrb[0].mxu0
    %8044 = vdwg.mxu0
    %8045 = vmatprep.subr.bf16.mxu0 0
    %8046 = vmatpush1.bf16.msra.mxu0 %v7904
    %8047 = vmatprep.subr.bf16.mxu0 0
    %8048 = vmatpush1.bf16.msra.mxu0 %v7905
    %8049 = vmatprep.subr.bf16.mxu0 0
    %8050 = vmatpush1.bf16.msra.mxu0 0
    %8051 = vmatprep.subr.bf16.mxu0 0
    %8052 = vmatpush1.bf16.msra.mxu0 0
    %8053 = vmatprep.subr.bf16.mxu0 0
    %8054 = vmatpush1.bf16.msra.mxu0 0
    %8055 = vmatprep.subr.bf16.mxu0 0
    %8056 = vmatpush1.bf16.msra.mxu0 0
    %8057 = vmatprep.subr.bf16.mxu0 0
    %8058 = vmatpush1.bf16.msra.mxu0 0
    %8059 = vmatprep.subr.bf16.mxu0 0
    %8060 = vmatpush1.bf16.msra.mxu0 0
    %8061 = vmatprep.subr.bf16.mxu0 0
    %8062 = vmatpush1.bf16.msra.mxu0 0
    %8063 = vmatprep.subr.bf16.mxu0 0
    %8064 = vmatpush1.bf16.msra.mxu0 0
    %8065 = vmatprep.subr.bf16.mxu0 0
    %8066 = vmatpush1.bf16.msra.mxu0 0
    %8067 = vmatprep.subr.bf16.mxu0 0
    %8068 = vmatpush1.bf16.msra.mxu0 0
    %8069 = vmatprep.subr.bf16.mxu0 0
    %8070 = vmatpush1.bf16.msra.mxu0 0
    %8071 = vmatprep.subr.bf16.mxu0 0
    %8072 = vmatpush1.bf16.msra.mxu0 0
    %8073 = vmatprep.subr.bf16.mxu0 0
    %8074 = vmatpush1.bf16.msra.mxu0 0
    %8075 = vmatprep.subr.bf16.mxu0 0
    %8076 = vmatpush1.bf16.msra.mxu0 0
    %8077 = vmatprep.mubr.bf16.mxu0 0
    %8078 = vmatmul.mubr.bf16.gmra.mrb[0].mxu0 %v7925
    %v8079 = vpop.f32.mrb[0].mxu0
    %v8080 = vadd.f32 %v7983, %v8079
    %v8081 = vpop.f32.mrb[0].mxu0
    %v8082 = vpop.f32.mrb[0].mxu0
    %v8083 = vadd.f32 %v7986, %v8082
    %v8084 = vpop.f32.mrb[0].mxu0
    %8085 = vmatprep.mubr.bf16.mxu0 0
    %8086 = vmatmul.mubr.bf16.gmra.mrb[0].mxu0 %v7928
    %v8087 = vpop.f32.mrb[0].mxu0
    %v8088 = vadd.f32 %v7991, %v8087
    %v8089 = vpop.f32.mrb[0].mxu0
    %v8090 = vpop.f32.mrb[0].mxu0
    %v8091 = vadd.f32 %v7994, %v8090
    %v8092 = vpop.f32.mrb[0].mxu0
    %8093 = vmatprep.mubr.bf16.mxu0 0
    %8094 = vmatmul.mubr.bf16.gmra.mrb[0].mxu0 %v7931
    %v8095 = vpop.f32.mrb[0].mxu0
    %v8096 = vadd.f32 %v7999, %v8095
    %v8097 = vpop.f32.mrb[0].mxu0
    %v8098 = vpop.f32.mrb[0].mxu0
    %v8099 = vadd.f32 %v8002, %v8098
    %v8100 = vpop.f32.mrb[0].mxu0
    %8101 = vmatprep.mubr.bf16.mxu0 0
    %8102 = vmatmul.mubr.bf16.gmra.mrb[0].mxu0 %v7934
    %v8103 = vpop.f32.mrb[0].mxu0
    %v8104 = vadd.f32 %v8007, %v8103
    %v8105 = vpop.f32.mrb[0].mxu0
    %v8106 = vpop.f32.mrb[0].mxu0
    %v8107 = vadd.f32 %v8010, %v8106
    %v8108 = vpop.f32.mrb[0].mxu0
    %8109 = vmatprep.mubr.bf16.mxu0 0
    %8110 = vmatmul.mubr.bf16.gmra.mrb[0].mxu0 %v7937
    %v8111 = vpop.f32.mrb[0].mxu0
    %v8112 = vadd.f32 %v8015, %v8111
    %v8113 = vpop.f32.mrb[0].mxu0
    %v8114 = vpop.f32.mrb[0].mxu0
    %v8115 = vadd.f32 %v8018, %v8114
    %v8116 = vpop.f32.mrb[0].mxu0
    %8117 = vmatprep.mubr.bf16.mxu0 0
    %8118 = vmatmul.mubr.bf16.gmra.mrb[0].mxu0 %v7940
    %v8119 = vpop.f32.mrb[0].mxu0
    %v8120 = vadd.f32 %v8023, %v8119
    %v8121 = vpop.f32.mrb[0].mxu0
    %v8122 = vpop.f32.mrb[0].mxu0
    %v8123 = vadd.f32 %v8026, %v8122
    %v8124 = vpop.f32.mrb[0].mxu0
    %8125 = vmatprep.mubr.bf16.mxu0 0
    %8126 = vmatmul.mubr.bf16.gmra.mrb[0].mxu0 %v7943
    %v8127 = vpop.f32.mrb[0].mxu0
    %v8128 = vadd.f32 %v8031, %v8127
    %v8129 = vpop.f32.mrb[0].mxu0
    %v8130 = vpop.f32.mrb[0].mxu0
    %v8131 = vadd.f32 %v8034, %v8130
    %v8132 = vpop.f32.mrb[0].mxu0
    %8133 = vmatprep.mubr.bf16.mxu0 0
    %8134 = vmatmul.mubr.bf16.gmra.mrb[0].mxu0 %v7946
    %v8135 = vpop.f32.mrb[0].mxu0
    %v8136 = vadd.f32 %v8039, %v8135
    %v8137 = vpop.f32.mrb[0].mxu0
    %v8138 = vpop.f32.mrb[0].mxu0
    %v8139 = vadd.f32 %v8042, %v8138
    %v8140 = vpop.f32.mrb[0].mxu0
    %8141 = vdwg.mxu0
    %v8142 = vmax.f32 %v8080, 0.0
    %v8143 = vmax.f32 %v8083, 0.0
    %v8144 = vmax.f32 %v8088, 0.0
    %v8145 = vmax.f32 %v8091, 0.0
    %v8146 = vmax.f32 %v8096, 0.0
    %v8147 = vmax.f32 %v8099, 0.0
    %v8148 = vmax.f32 %v8104, 0.0
    %v8149 = vmax.f32 %v8107, 0.0
    %v8150 = vmax.f32 %v8112, 0.0
    %v8151 = vmax.f32 %v8115, 0.0
    %v8152 = vmax.f32 %v8120, 0.0
    %v8153 = vmax.f32 %v8123, 0.0
    %v8154 = vmax.f32 %v8128, 0.0
    %v8155 = vmax.f32 %v8131, 0.0
    %v8156 = vmax.f32 %v8136, 0.0
    %v8157 = vmax.f32 %v8139, 0.0
    %v8158 = vld [vmem:[%s16] sm:$0xf]
    %v8159 = vld [vmem:[%s16 + $0x4] sm:$0xf]
    %v8160 = vld [vmem:[%s16 + $0x8] sm:$0xf]
    %v8161 = vld [vmem:[%s16 + $0xc] sm:$0xf]
    %v8162 = vpack.c.bf16 %v8143, %v8142
    %v8163 = vpack.c.bf16 %v8145, %v8144
    %v8164 = vpack.c.bf16 %v8147, %v8146
    %v8165 = vpack.c.bf16 %v8149, %v8148
    %v8166 = vpack.c.bf16 %v8151, %v8150
    %v8167 = vpack.c.bf16 %v8153, %v8152
    %v8168 = vpack.c.bf16 %v8155, %v8154
    %v8169 = vpack.c.bf16 %v8157, %v8156
    %v8174 = vunpack.c.l.b16 %v8158
    %v8175 = vunpack.c.l.b16 %v8159
    %v8176 = vunpack.c.l.b16 %v8160
    %v8177 = vunpack.c.l.b16 %v8161
    %v8178 = vpack.c.b16 %v8175, %v8174
    %v8179 = vpack.c.b16 %v8177, %v8176
    %v8183 = vsel %vm167, %v8162, 0
    %v8186 = vsel %vm167, %v8163, 0
    %v8189 = vsel %vm167, %v8164, 0
    %v8192 = vsel %vm167, %v8165, 0
    %v8195 = vsel %vm167, %v8166, 0
    %v8198 = vsel %vm167, %v8167, 0
    %v8201 = vsel %vm167, %v8168, 0
    %v8204 = vsel %vm167, %v8169, 0
    %8206 = vmatprep.subr.bf16.mxu0 0
    %8207 = vmatpush1.bf16.msra.mxu0 %v8178
    %8208 = vmatprep.subr.bf16.mxu0 0
    %8209 = vmatpush1.bf16.msra.mxu0 %v8179
    %8210 = vmatprep.subr.bf16.mxu0 0
    %8211 = vmatpush1.bf16.msra.mxu0 0
    %8212 = vmatprep.subr.bf16.mxu0 0
    %8213 = vmatpush1.bf16.msra.mxu0 0
    %8214 = vmatprep.subr.bf16.mxu0 0
    %8215 = vmatpush1.bf16.msra.mxu0 0
    %8216 = vmatprep.subr.bf16.mxu0 0
    %8217 = vmatpush1.bf16.msra.mxu0 0
    %8218 = vmatprep.subr.bf16.mxu0 0
    %8219 = vmatpush1.bf16.msra.mxu0 0
    %8220 = vmatprep.subr.bf16.mxu0 0
    %8221 = vmatpush1.bf16.msra.mxu0 0
    %8222 = vmatprep.subr.bf16.mxu0 0
    %8223 = vmatpush1.bf16.msra.mxu0 0
    %8224 = vmatprep.subr.bf16.mxu0 0
    %8225 = vmatpush1.bf16.msra.mxu0 0
    %8226 = vmatprep.subr.bf16.mxu0 0
    %8227 = vmatpush1.bf16.msra.mxu0 0
    %8228 = vmatprep.subr.bf16.mxu0 0
    %8229 = vmatpush1.bf16.msra.mxu0 0
    %8230 = vmatprep.subr.bf16.mxu0 0
    %8231 = vmatpush1.bf16.msra.mxu0 0
    %8232 = vmatprep.subr.bf16.mxu0 0
    %8233 = vmatpush1.bf16.msra.mxu0 0
    %8234 = vmatprep.subr.bf16.mxu0 0
    %8235 = vmatpush1.bf16.msra.mxu0 0
    %8236 = vmatprep.subr.bf16.mxu0 0
    %8237 = vmatpush1.bf16.msra.mxu0 0
    %8238 = vmatprep.mubr.bf16.mxu0 0
    %8239 = vmatmul.mubr.bf16.gmra.mrb[0].mxu0 %v8183
    %v8240 = vpop.f32.mrb[0].mxu0
    %v8241 = vadd.f32 0.0, %v8240
    %v8242 = vpop.f32.mrb[0].mxu0
    %v8243 = vpop.f32.mrb[0].mxu0
    %v8244 = vadd.f32 0.0, %v8243
    %v8245 = vpop.f32.mrb[0].mxu0
    %8246 = vmatprep.mubr.bf16.mxu0 0
    %8247 = vmatmul.mubr.bf16.gmra.mrb[0].mxu0 %v8186
    %v8248 = vpop.f32.mrb[0].mxu0
    %v8249 = vadd.f32 0.0, %v8248
    %v8250 = vpop.f32.mrb[0].mxu0
    %v8251 = vpop.f32.mrb[0].mxu0
    %v8252 = vadd.f32 0.0, %v8251
    %v8253 = vpop.f32.mrb[0].mxu0
    %8254 = vmatprep.mubr.bf16.mxu0 0
    %8255 = vmatmul.mubr.bf16.gmra.mrb[0].mxu0 %v8189
    %v8256 = vpop.f32.mrb[0].mxu0
    %v8257 = vadd.f32 0.0, %v8256
    %v8258 = vpop.f32.mrb[0].mxu0
    %v8259 = vpop.f32.mrb[0].mxu0
    %v8260 = vadd.f32 0.0, %v8259
    %v8261 = vpop.f32.mrb[0].mxu0
    %8262 = vmatprep.mubr.bf16.mxu0 0
    %8263 = vmatmul.mubr.bf16.gmra.mrb[0].mxu0 %v8192
    %v8264 = vpop.f32.mrb[0].mxu0
    %v8265 = vadd.f32 0.0, %v8264
    %v8266 = vpop.f32.mrb[0].mxu0
    %v8267 = vpop.f32.mrb[0].mxu0
    %v8268 = vadd.f32 0.0, %v8267
    %v8269 = vpop.f32.mrb[0].mxu0
    %8270 = vmatprep.mubr.bf16.mxu0 0
    %8271 = vmatmul.mubr.bf16.gmra.mrb[0].mxu0 %v8195
    %v8272 = vpop.f32.mrb[0].mxu0
    %v8273 = vadd.f32 0.0, %v8272
    %v8274 = vpop.f32.mrb[0].mxu0
    %v8275 = vpop.f32.mrb[0].mxu0
    %v8276 = vadd.f32 0.0, %v8275
    %v8277 = vpop.f32.mrb[0].mxu0
    %8278 = vmatprep.mubr.bf16.mxu0 0
    %8279 = vmatmul.mubr.bf16.gmra.mrb[0].mxu0 %v8198
    %v8280 = vpop.f32.mrb[0].mxu0
    %v8281 = vadd.f32 0.0, %v8280
    %v8282 = vpop.f32.mrb[0].mxu0
    %v8283 = vpop.f32.mrb[0].mxu0
    %v8284 = vadd.f32 0.0, %v8283
    %v8285 = vpop.f32.mrb[0].mxu0
    %8286 = vmatprep.mubr.bf16.mxu0 0
    %8287 = vmatmul.mubr.bf16.gmra.mrb[0].mxu0 %v8201
    %v8288 = vpop.f32.mrb[0].mxu0
    %v8289 = vadd.f32 0.0, %v8288
    %v8290 = vpop.f32.mrb[0].mxu0
    %v8291 = vpop.f32.mrb[0].mxu0
    %v8292 = vadd.f32 0.0, %v8291
    %v8293 = vpop.f32.mrb[0].mxu0
    %8294 = vmatprep.mubr.bf16.mxu0 0
    %8295 = vmatmul.mubr.bf16.gmra.mrb[0].mxu0 %v8204
    %v8296 = vpop.f32.mrb[0].mxu0
    %v8297 = vadd.f32 0.0, %v8296
    %v8298 = vpop.f32.mrb[0].mxu0
    %v8299 = vpop.f32.mrb[0].mxu0
    %v8300 = vadd.f32 0.0, %v8299
    %v8301 = vpop.f32.mrb[0].mxu0
    %8302 = vdwg.mxu0
    %v8303 = vadd.f32 %v6236, %v8241
    %v8304 = vadd.f32 %v6239, %v8244
    %v8305 = vadd.f32 %v6244, %v8249
    %v8306 = vadd.f32 %v6247, %v8252
    %v8307 = vadd.f32 %v6252, %v8257
    %v8308 = vadd.f32 %v6255, %v8260
    %v8309 = vadd.f32 %v6260, %v8265
    %v8310 = vadd.f32 %v6263, %v8268
    %v8311 = vadd.f32 %v6268, %v8273
    %v8312 = vadd.f32 %v6271, %v8276
    %v8313 = vadd.f32 %v6276, %v8281
    %v8314 = vadd.f32 %v6279, %v8284
    %v8315 = vadd.f32 %v6284, %v8289
    %v8316 = vadd.f32 %v6287, %v8292
    %v8317 = vadd.f32 %v6292, %v8297
    %v8318 = vadd.f32 %v6295, %v8300
    %8335 = vrot.lane.b32.xlu0 %v8303, 96
    %v8336 = vpop.permute.xlu0 %8335
    %8337 = vrot.lane.b32.xlu0 %v8304, 96
    %v8338 = vpop.permute.xlu0 %8337
    %8339 = vrot.lane.b32.xlu0 %v8305, 96
    %v8340 = vpop.permute.xlu0 %8339
    %8341 = vrot.lane.b32.xlu0 %v8306, 96
    %v8342 = vpop.permute.xlu0 %8341
    %8343 = vrot.lane.b32.xlu0 %v8307, 96
    %v8344 = vpop.permute.xlu0 %8343
    %8345 = vrot.lane.b32.xlu0 %v8308, 96
    %v8346 = vpop.permute.xlu0 %8345
    %8347 = vrot.lane.b32.xlu0 %v8309, 96
    %v8348 = vpop.permute.xlu0 %8347
    %8349 = vrot.lane.b32.xlu0 %v8310, 96
    %v8350 = vpop.permute.xlu0 %8349
    %8351 = vrot.lane.b32.xlu0 %v8311, 96
    %v8352 = vpop.permute.xlu0 %8351
    %8353 = vrot.lane.b32.xlu0 %v8312, 96
    %v8354 = vpop.permute.xlu0 %8353
    %8355 = vrot.lane.b32.xlu0 %v8313, 96
    %v8356 = vpop.permute.xlu0 %8355
    %8357 = vrot.lane.b32.xlu0 %v8314, 96
    %v8358 = vpop.permute.xlu0 %8357
    %8359 = vrot.lane.b32.xlu0 %v8315, 96
    %v8360 = vpop.permute.xlu0 %8359
    %8361 = vrot.lane.b32.xlu0 %v8316, 96
    %v8362 = vpop.permute.xlu0 %8361
    %8363 = vrot.lane.b32.xlu0 %v8317, 96
    %v8364 = vpop.permute.xlu0 %8363
    %8365 = vrot.lane.b32.xlu0 %v8318, 96
    %v8366 = vpop.permute.xlu0 %8365
    %v8383 = vsel %vm352, %v6098, %v8336
    %v8384 = vsel %vm352, %v6099, %v8338
    %v8385 = vsel %vm352, %v6100, %v8340
    %v8386 = vsel %vm352, %v6101, %v8342
    %v8387 = vsel %vm352, %v6102, %v8344
    %v8388 = vsel %vm352, %v6103, %v8346
    %v8389 = vsel %vm352, %v6104, %v8348
    %v8390 = vsel %vm352, %v6105, %v8350
    %v8391 = vsel %vm352, %v6106, %v8352
    %v8392 = vsel %vm352, %v6107, %v8354
    %v8393 = vsel %vm352, %v6108, %v8356
    %v8394 = vsel %vm352, %v6109, %v8358
    %v8395 = vsel %vm352, %v6110, %v8360
    %v8396 = vsel %vm352, %v6111, %v8362
    %v8397 = vsel %vm352, %v6112, %v8364
    %v8398 = vsel %vm352, %v6113, %v8366
    %8399 = vst [vmem:[#allocation2] sm:$0xff] %v8383
    %8400 = vst [vmem:[#allocation2 + $0x8] sm:$0xff] %v8384
    %8401 = vst [vmem:[#allocation2 + $0x10] sm:$0xff] %v8385
    %8402 = vst [vmem:[#allocation2 + $0x18] sm:$0xff] %v8386
    %8403 = vst [vmem:[#allocation2 + $0x20] sm:$0xff] %v8387
    %8404 = vst [vmem:[#allocation2 + $0x28] sm:$0xff] %v8388
    %8405 = vst [vmem:[#allocation2 + $0x30] sm:$0xff] %v8389
    %8406 = vst [vmem:[#allocation2 + $0x38] sm:$0xff] %v8390
    %8407 = vst [vmem:[#allocation2 + $0x40] sm:$0xff] %v8391
    %8408 = vst [vmem:[#allocation2 + $0x48] sm:$0xff] %v8392
    %8409 = vst [vmem:[#allocation2 + $0x50] sm:$0xff] %v8393
    %8410 = vst [vmem:[#allocation2 + $0x58] sm:$0xff] %v8394
    %8411 = vst [vmem:[#allocation2 + $0x60] sm:$0xff] %v8395
    %8412 = vst [vmem:[#allocation2 + $0x68] sm:$0xff] %v8396
    %8413 = vst [vmem:[#allocation2 + $0x70] sm:$0xff] %v8397
    %8414 = vst [vmem:[#allocation2 + $0x78] sm:$0xff] %v8398
    %v8415 = vpack.c.bf16 %v8384, %v8383
    %v8416 = vpack.c.bf16 %v8386, %v8385
    %v8417 = vpack.c.bf16 %v8388, %v8387
    %v8418 = vpack.c.bf16 %v8390, %v8389
    %v8419 = vpack.c.bf16 %v8392, %v8391
    %v8420 = vpack.c.bf16 %v8394, %v8393
    %v8421 = vpack.c.bf16 %v8396, %v8395
    %v8422 = vpack.c.bf16 %v8398, %v8397
    %v8423 = vld [vmem:[%s17] sm:$0xff]
    %v8424 = vld [vmem:[%s17 + $0x8] sm:$0xff]
    %v8425 = vld [vmem:[%s17 + $0x10] sm:$0xff]
    %v8426 = vld [vmem:[%s17 + $0x18] sm:$0xff]
    %v8427 = vld [vmem:[%s17 + $0x20] sm:$0xff]
    %v8428 = vld [vmem:[%s17 + $0x28] sm:$0xff]
    %v8429 = vld [vmem:[%s17 + $0x30] sm:$0xff]
    %v8430 = vld [vmem:[%s17 + $0x38] sm:$0xff]
    %v8431 = vld [vmem:[%s17 + $0x40] sm:$0xff]
    %v8432 = vld [vmem:[%s17 + $0x48] sm:$0xff]
    %v8433 = vld [vmem:[%s17 + $0x50] sm:$0xff]
    %v8434 = vld [vmem:[%s17 + $0x58] sm:$0xff]
    %v8435 = vld [vmem:[%s17 + $0x60] sm:$0xff]
    %v8436 = vld [vmem:[%s17 + $0x68] sm:$0xff]
    %v8437 = vld [vmem:[%s17 + $0x70] sm:$0xff]
    %v8438 = vld [vmem:[%s17 + $0x78] sm:$0xff]
    %v8439 = vld [vmem:[%s18] sm:$0x3]
    %v8441 = vlaneseq
    %v8442 = vshrl.u32 %v8441, 7
    %v8443 = vsub.s32 0, %v8442
    %v8444 = vrot.slane %v8439, %v8443
    %v8445 = vlaneseq
    %v8446 = vshrl.u32 %v8445, 7
    %v8447 = vsub.s32 1, %v8446
    %v8448 = vrot.slane %v8439, %v8447
    %v8467 = vunpack.c.l.b16 %v8423
    %v8468 = vunpack.c.h.b16 %v8423
    %v8469 = vunpack.c.l.b16 %v8424
    %v8470 = vunpack.c.h.b16 %v8424
    %v8471 = vunpack.c.l.b16 %v8425
    %v8472 = vunpack.c.h.b16 %v8425
    %v8473 = vunpack.c.l.b16 %v8426
    %v8474 = vunpack.c.h.b16 %v8426
    %v8475 = vunpack.c.l.b16 %v8427
    %v8476 = vunpack.c.h.b16 %v8427
    %v8477 = vunpack.c.l.b16 %v8428
    %v8478 = vunpack.c.h.b16 %v8428
    %v8479 = vunpack.c.l.b16 %v8429
    %v8480 = vunpack.c.h.b16 %v8429
    %v8481 = vunpack.c.l.b16 %v8430
    %v8482 = vunpack.c.h.b16 %v8430
    %v8483 = vunpack.c.l.b16 %v8431
    %v8484 = vunpack.c.h.b16 %v8431
    %v8485 = vunpack.c.l.b16 %v8432
    %v8486 = vunpack.c.h.b16 %v8432
    %v8487 = vunpack.c.l.b16 %v8433
    %v8488 = vunpack.c.h.b16 %v8433
    %v8489 = vunpack.c.l.b16 %v8434
    %v8490 = vunpack.c.h.b16 %v8434
    %v8491 = vunpack.c.l.b16 %v8435
    %v8492 = vunpack.c.h.b16 %v8435
    %v8493 = vunpack.c.l.b16 %v8436
    %v8494 = vunpack.c.h.b16 %v8436
    %v8495 = vunpack.c.l.b16 %v8437
    %v8496 = vunpack.c.h.b16 %v8437
    %v8497 = vunpack.c.l.b16 %v8438
    %v8498 = vunpack.c.h.b16 %v8438
    %v8499 = vpack.c.b16 %v8469, %v8467
    %v8500 = vpack.c.b16 %v8470, %v8468
    %v8501 = vpack.c.b16 %v8473, %v8471
    %v8502 = vpack.c.b16 %v8474, %v8472
    %v8503 = vpack.c.b16 %v8477, %v8475
    %v8504 = vpack.c.b16 %v8478, %v8476
    %v8505 = vpack.c.b16 %v8481, %v8479
    %v8506 = vpack.c.b16 %v8482, %v8480
    %v8507 = vpack.c.b16 %v8485, %v8483
    %v8508 = vpack.c.b16 %v8486, %v8484
    %v8509 = vpack.c.b16 %v8489, %v8487
    %v8510 = vpack.c.b16 %v8490, %v8488
    %v8511 = vpack.c.b16 %v8493, %v8491
    %v8512 = vpack.c.b16 %v8494, %v8492
    %v8513 = vpack.c.b16 %v8497, %v8495
    %v8514 = vpack.c.b16 %v8498, %v8496
    %8531 = vmatprep.subr.bf16.mxu0 %v8500
    %8532 = vmatpush1.bf16.msra.mxu0 %v8499
    %8533 = vmatprep.subr.bf16.mxu0 %v8502
    %8534 = vmatpush1.bf16.msra.mxu0 %v8501
    %8535 = vmatprep.subr.bf16.mxu0 %v8504
    %8536 = vmatpush1.bf16.msra.mxu0 %v8503
    %8537 = vmatprep.subr.bf16.mxu0 %v8506
    %8538 = vmatpush1.bf16.msra.mxu0 %v8505
    %8539 = vmatprep.subr.bf16.mxu0 %v8508
    %8540 = vmatpush1.bf16.msra.mxu0 %v8507
    %8541 = vmatprep.subr.bf16.mxu0 %v8510
    %8542 = vmatpush1.bf16.msra.mxu0 %v8509
    %8543 = vmatprep.subr.bf16.mxu0 %v8512
    %8544 = vmatpush1.bf16.msra.mxu0 %v8511
    %8545 = vmatprep.subr.bf16.mxu0 %v8514
    %8546 = vmatpush1.bf16.msra.mxu0 %v8513
    %8547 = vmatprep.subr.bf16.mxu0 0
    %8548 = vmatpush1.bf16.msra.mxu0 0
    %8549 = vmatprep.subr.bf16.mxu0 0
    %8550 = vmatpush1.bf16.msra.mxu0 0
    %8551 = vmatprep.subr.bf16.mxu0 0
    %8552 = vmatpush1.bf16.msra.mxu0 0
    %8553 = vmatprep.subr.bf16.mxu0 0
    %8554 = vmatpush1.bf16.msra.mxu0 0
    %8555 = vmatprep.subr.bf16.mxu0 0
    %8556 = vmatpush1.bf16.msra.mxu0 0
    %8557 = vmatprep.subr.bf16.mxu0 0
    %8558 = vmatpush1.bf16.msra.mxu0 0
    %8559 = vmatprep.subr.bf16.mxu0 0
    %8560 = vmatpush1.bf16.msra.mxu0 0
    %8561 = vmatprep.subr.bf16.mxu0 0
    %8562 = vmatpush1.bf16.msra.mxu0 0
    %8563 = vmatprep.mubr.bf16.mxu0 0
    %8564 = vmatmul.mubr.bf16.gmra.mrb[0].mxu0 %v8415
    %v8565 = vpop.f32.mrb[0].mxu0
    %v8566 = vadd.f32 %v8444, %v8565
    %v8567 = vpop.f32.mrb[0].mxu0
    %v8568 = vadd.f32 %v8448, %v8567
    %v8569 = vpop.f32.mrb[0].mxu0
    %v8570 = vadd.f32 %v8444, %v8569
    %v8571 = vpop.f32.mrb[0].mxu0
    %v8572 = vadd.f32 %v8448, %v8571
    %8573 = vmatprep.mubr.bf16.mxu0 0
    %8574 = vmatmul.mubr.bf16.gmra.mrb[0].mxu0 %v8416
    %v8575 = vpop.f32.mrb[0].mxu0
    %v8576 = vadd.f32 %v8444, %v8575
    %v8577 = vpop.f32.mrb[0].mxu0
    %v8578 = vadd.f32 %v8448, %v8577
    %v8579 = vpop.f32.mrb[0].mxu0
    %v8580 = vadd.f32 %v8444, %v8579
    %v8581 = vpop.f32.mrb[0].mxu0
    %v8582 = vadd.f32 %v8448, %v8581
    %8583 = vmatprep.mubr.bf16.mxu0 0
    %8584 = vmatmul.mubr.bf16.gmra.mrb[0].mxu0 %v8417
    %v8585 = vpop.f32.mrb[0].mxu0
    %v8586 = vadd.f32 %v8444, %v8585
    %v8587 = vpop.f32.mrb[0].mxu0
    %v8588 = vadd.f32 %v8448, %v8587
    %v8589 = vpop.f32.mrb[0].mxu0
    %v8590 = vadd.f32 %v8444, %v8589
    %v8591 = vpop.f32.mrb[0].mxu0
    %v8592 = vadd.f32 %v8448, %v8591
    %8593 = vmatprep.mubr.bf16.mxu0 0
    %8594 = vmatmul.mubr.bf16.gmra.mrb[0].mxu0 %v8418
    %v8595 = vpop.f32.mrb[0].mxu0
    %v8596 = vadd.f32 %v8444, %v8595
    %v8597 = vpop.f32.mrb[0].mxu0
    %v8598 = vadd.f32 %v8448, %v8597
    %v8599 = vpop.f32.mrb[0].mxu0
    %v8600 = vadd.f32 %v8444, %v8599
    %v8601 = vpop.f32.mrb[0].mxu0
    %v8602 = vadd.f32 %v8448, %v8601
    %8603 = vmatprep.mubr.bf16.mxu0 0
    %8604 = vmatmul.mubr.bf16.gmra.mrb[0].mxu0 %v8419
    %v8605 = vpop.f32.mrb[0].mxu0
    %v8606 = vadd.f32 %v8444, %v8605
    %v8607 = vpop.f32.mrb[0].mxu0
    %v8608 = vadd.f32 %v8448, %v8607
    %v8609 = vpop.f32.mrb[0].mxu0
    %v8610 = vadd.f32 %v8444, %v8609
    %v8611 = vpop.f32.mrb[0].mxu0
    %v8612 = vadd.f32 %v8448, %v8611
    %8613 = vmatprep.mubr.bf16.mxu0 0
    %8614 = vmatmul.mubr.bf16.gmra.mrb[0].mxu0 %v8420
    %v8615 = vpop.f32.mrb[0].mxu0
    %v8616 = vadd.f32 %v8444, %v8615
    %v8617 = vpop.f32.mrb[0].mxu0
    %v8618 = vadd.f32 %v8448, %v8617
    %v8619 = vpop.f32.mrb[0].mxu0
    %v8620 = vadd.f32 %v8444, %v8619
    %v8621 = vpop.f32.mrb[0].mxu0
    %v8622 = vadd.f32 %v8448, %v8621
    %8623 = vmatprep.mubr.bf16.mxu0 0
    %8624 = vmatmul.mubr.bf16.gmra.mrb[0].mxu0 %v8421
    %v8625 = vpop.f32.mrb[0].mxu0
    %v8626 = vadd.f32 %v8444, %v8625
    %v8627 = vpop.f32.mrb[0].mxu0
    %v8628 = vadd.f32 %v8448, %v8627
    %v8629 = vpop.f32.mrb[0].mxu0
    %v8630 = vadd.f32 %v8444, %v8629
    %v8631 = vpop.f32.mrb[0].mxu0
    %v8632 = vadd.f32 %v8448, %v8631
    %8633 = vmatprep.mubr.bf16.mxu0 0
    %8634 = vmatmul.mubr.bf16.gmra.mrb[0].mxu0 %v8422
    %v8635 = vpop.f32.mrb[0].mxu0
    %v8636 = vadd.f32 %v8444, %v8635
    %v8637 = vpop.f32.mrb[0].mxu0
    %v8638 = vadd.f32 %v8448, %v8637
    %v8639 = vpop.f32.mrb[0].mxu0
    %v8640 = vadd.f32 %v8444, %v8639
    %v8641 = vpop.f32.mrb[0].mxu0
    %v8642 = vadd.f32 %v8448, %v8641
    %8643 = vdwg.mxu0
    %v8644 = vadd.f32 %v8566, 3.0
    %v8645 = vadd.f32 %v8568, 3.0
    %v8646 = vadd.f32 %v8570, 3.0
    %v8647 = vadd.f32 %v8572, 3.0
    %v8648 = vadd.f32 %v8576, 3.0
    %v8649 = vadd.f32 %v8578, 3.0
    %v8650 = vadd.f32 %v8580, 3.0
    %v8651 = vadd.f32 %v8582, 3.0
    %v8652 = vadd.f32 %v8586, 3.0
    %v8653 = vadd.f32 %v8588, 3.0
    %v8654 = vadd.f32 %v8590, 3.0
    %v8655 = vadd.f32 %v8592, 3.0
    %v8656 = vadd.f32 %v8596, 3.0
    %v8657 = vadd.f32 %v8598, 3.0
    %v8658 = vadd.f32 %v8600, 3.0
    %v8659 = vadd.f32 %v8602, 3.0
    %v8660 = vadd.f32 %v8606, 3.0
    %v8661 = vadd.f32 %v8608, 3.0
    %v8662 = vadd.f32 %v8610, 3.0
    %v8663 = vadd.f32 %v8612, 3.0
    %v8664 = vadd.f32 %v8616, 3.0
    %v8665 = vadd.f32 %v8618, 3.0
    %v8666 = vadd.f32 %v8620, 3.0
    %v8667 = vadd.f32 %v8622, 3.0
    %v8668 = vadd.f32 %v8626, 3.0
    %v8669 = vadd.f32 %v8628, 3.0
    %v8670 = vadd.f32 %v8630, 3.0
    %v8671 = vadd.f32 %v8632, 3.0
    %v8672 = vadd.f32 %v8636, 3.0
    %v8673 = vadd.f32 %v8638, 3.0
    %v8674 = vadd.f32 %v8640, 3.0
    %v8675 = vadd.f32 %v8642, 3.0
    %v8676 = vmax.f32 %v8644, 0.0
    %v8677 = vmax.f32 %v8645, 0.0
    %v8678 = vmax.f32 %v8646, 0.0
    %v8679 = vmax.f32 %v8647, 0.0
    %v8680 = vmax.f32 %v8648, 0.0
    %v8681 = vmax.f32 %v8649, 0.0
    %v8682 = vmax.f32 %v8650, 0.0
    %v8683 = vmax.f32 %v8651, 0.0
    %v8684 = vmax.f32 %v8652, 0.0
    %v8685 = vmax.f32 %v8653, 0.0
    %v8686 = vmax.f32 %v8654, 0.0
    %v8687 = vmax.f32 %v8655, 0.0
    %v8688 = vmax.f32 %v8656, 0.0
    %v8689 = vmax.f32 %v8657, 0.0
    %v8690 = vmax.f32 %v8658, 0.0
    %v8691 = vmax.f32 %v8659, 0.0
    %v8692 = vmax.f32 %v8660, 0.0
    %v8693 = vmax.f32 %v8661, 0.0
    %v8694 = vmax.f32 %v8662, 0.0
    %v8695 = vmax.f32 %v8663, 0.0
    %v8696 = vmax.f32 %v8664, 0.0
    %v8697 = vmax.f32 %v8665, 0.0
    %v8698 = vmax.f32 %v8666, 0.0
    %v8699 = vmax.f32 %v8667, 0.0
    %v8700 = vmax.f32 %v8668, 0.0
    %v8701 = vmax.f32 %v8669, 0.0
    %v8702 = vmax.f32 %v8670, 0.0
    %v8703 = vmax.f32 %v8671, 0.0
    %v8704 = vmax.f32 %v8672, 0.0
    %v8705 = vmax.f32 %v8673, 0.0
    %v8706 = vmax.f32 %v8674, 0.0
    %v8707 = vmax.f32 %v8675, 0.0
    %v8708 = vmin.f32 %v8676, 6.0
    %v8709 = vmin.f32 %v8677, 6.0
    %v8710 = vmin.f32 %v8678, 6.0
    %v8711 = vmin.f32 %v8679, 6.0
    %v8712 = vmin.f32 %v8680, 6.0
    %v8713 = vmin.f32 %v8681, 6.0
    %v8714 = vmin.f32 %v8682, 6.0
    %v8715 = vmin.f32 %v8683, 6.0
    %v8716 = vmin.f32 %v8684, 6.0
    %v8717 = vmin.f32 %v8685, 6.0
    %v8718 = vmin.f32 %v8686, 6.0
    %v8719 = vmin.f32 %v8687, 6.0
    %v8720 = vmin.f32 %v8688, 6.0
    %v8721 = vmin.f32 %v8689, 6.0
    %v8722 = vmin.f32 %v8690, 6.0
    %v8723 = vmin.f32 %v8691, 6.0
    %v8724 = vmin.f32 %v8692, 6.0
    %v8725 = vmin.f32 %v8693, 6.0
    %v8726 = vmin.f32 %v8694, 6.0
    %v8727 = vmin.f32 %v8695, 6.0
    %v8728 = vmin.f32 %v8696, 6.0
    %v8729 = vmin.f32 %v8697, 6.0
    %v8730 = vmin.f32 %v8698, 6.0
    %v8731 = vmin.f32 %v8699, 6.0
    %v8732 = vmin.f32 %v8700, 6.0
    %v8733 = vmin.f32 %v8701, 6.0
    %v8734 = vmin.f32 %v8702, 6.0
    %v8735 = vmin.f32 %v8703, 6.0
    %v8736 = vmin.f32 %v8704, 6.0
    %v8737 = vmin.f32 %v8705, 6.0
    %v8738 = vmin.f32 %v8706, 6.0
    %v8739 = vmin.f32 %v8707, 6.0
    %v8740 = vmul.f32 %v8708, 0.16666667
    %v8741 = vmul.f32 %v8709, 0.16666667
    %v8742 = vmul.f32 %v8710, 0.16666667
    %v8743 = vmul.f32 %v8711, 0.16666667
    %v8744 = vmul.f32 %v8712, 0.16666667
    %v8745 = vmul.f32 %v8713, 0.16666667
    %v8746 = vmul.f32 %v8714, 0.16666667
    %v8747 = vmul.f32 %v8715, 0.16666667
    %v8748 = vmul.f32 %v8716, 0.16666667
    %v8749 = vmul.f32 %v8717, 0.16666667
    %v8750 = vmul.f32 %v8718, 0.16666667
    %v8751 = vmul.f32 %v8719, 0.16666667
    %v8752 = vmul.f32 %v8720, 0.16666667
    %v8753 = vmul.f32 %v8721, 0.16666667
    %v8754 = vmul.f32 %v8722, 0.16666667
    %v8755 = vmul.f32 %v8723, 0.16666667
    %v8756 = vmul.f32 %v8724, 0.16666667
    %v8757 = vmul.f32 %v8725, 0.16666667
    %v8758 = vmul.f32 %v8726, 0.16666667
    %v8759 = vmul.f32 %v8727, 0.16666667
    %v8760 = vmul.f32 %v8728, 0.16666667
    %v8761 = vmul.f32 %v8729, 0.16666667
    %v8762 = vmul.f32 %v8730, 0.16666667
    %v8763 = vmul.f32 %v8731, 0.16666667
    %v8764 = vmul.f32 %v8732, 0.16666667
    %v8765 = vmul.f32 %v8733, 0.16666667
    %v8766 = vmul.f32 %v8734, 0.16666667
    %v8767 = vmul.f32 %v8735, 0.16666667
    %v8768 = vmul.f32 %v8736, 0.16666667
    %v8769 = vmul.f32 %v8737, 0.16666667
    %v8770 = vmul.f32 %v8738, 0.16666667
    %v8771 = vmul.f32 %v8739, 0.16666667
    %v8772 = vmul.f32 %v8566, %v8740
    %v8773 = vmul.f32 %v8568, %v8741
    %v8774 = vmul.f32 %v8570, %v8742
    %v8775 = vmul.f32 %v8572, %v8743
    %v8776 = vmul.f32 %v8576, %v8744
    %v8777 = vmul.f32 %v8578, %v8745
    %v8778 = vmul.f32 %v8580, %v8746
    %v8779 = vmul.f32 %v8582, %v8747
    %v8780 = vmul.f32 %v8586, %v8748
    %v8781 = vmul.f32 %v8588, %v8749
    %v8782 = vmul.f32 %v8590, %v8750
    %v8783 = vmul.f32 %v8592, %v8751
    %v8784 = vmul.f32 %v8596, %v8752
    %v8785 = vmul.f32 %v8598, %v8753
    %v8786 = vmul.f32 %v8600, %v8754
    %v8787 = vmul.f32 %v8602, %v8755
    %v8788 = vmul.f32 %v8606, %v8756
    %v8789 = vmul.f32 %v8608, %v8757
    %v8790 = vmul.f32 %v8610, %v8758
    %v8791 = vmul.f32 %v8612, %v8759
    %v8792 = vmul.f32 %v8616, %v8760
    %v8793 = vmul.f32 %v8618, %v8761
    %v8794 = vmul.f32 %v8620, %v8762
    %v8795 = vmul.f32 %v8622, %v8763
    %v8796 = vmul.f32 %v8626, %v8764
    %v8797 = vmul.f32 %v8628, %v8765
    %v8798 = vmul.f32 %v8630, %v8766
    %v8799 = vmul.f32 %v8632, %v8767
    %v8800 = vmul.f32 %v8636, %v8768
    %v8801 = vmul.f32 %v8638, %v8769
    %v8802 = vmul.f32 %v8640, %v8770
    %v8803 = vmul.f32 %v8642, %v8771
    %v8804 = vrot.slane %v8772, 7
    %v8805 = vrot.slane %v8773, 7
    %v8806 = vrot.slane %v8774, 7
    %v8807 = vrot.slane %v8775, 7
    %v8808 = vrot.slane %v8776, 7
    %v8809 = vrot.slane %v8777, 7
    %v8810 = vrot.slane %v8778, 7
    %v8811 = vrot.slane %v8779, 7
    %v8812 = vrot.slane %v8780, 7
    %v8813 = vrot.slane %v8781, 7
    %v8814 = vrot.slane %v8782, 7
    %v8815 = vrot.slane %v8783, 7
    %v8816 = vrot.slane %v8784, 7
    %v8817 = vrot.slane %v8785, 7
    %v8818 = vrot.slane %v8786, 7
    %v8819 = vrot.slane %v8787, 7
    %v8820 = vrot.slane %v8788, 7
    %v8821 = vrot.slane %v8789, 7
    %v8822 = vrot.slane %v8790, 7
    %v8823 = vrot.slane %v8791, 7
    %v8824 = vrot.slane %v8792, 7
    %v8825 = vrot.slane %v8793, 7
    %v8826 = vrot.slane %v8794, 7
    %v8827 = vrot.slane %v8795, 7
    %v8828 = vrot.slane %v8796, 7
    %v8829 = vrot.slane %v8797, 7
    %v8830 = vrot.slane %v8798, 7
    %v8831 = vrot.slane %v8799, 7
    %v8832 = vrot.slane %v8800, 7
    %v8833 = vrot.slane %v8801, 7
    %v8834 = vrot.slane %v8802, 7
    %v8835 = vrot.slane %v8803, 7
    %v8836 = vsel %vm6316, %v8832, %v8834
    %v8837 = vsel %vm6316, %v8833, %v8835
    %v8838 = vsel %vm6316, %v8830, %v8832
    %v8839 = vsel %vm6316, %v8831, %v8833
    %v8840 = vsel %vm6316, %v8828, %v8830
    %v8841 = vsel %vm6316, %v8829, %v8831
    %v8842 = vsel %vm6316, %v8826, %v8828
    %v8843 = vsel %vm6316, %v8827, %v8829
    %v8844 = vsel %vm6316, %v8824, %v8826
    %v8845 = vsel %vm6316, %v8825, %v8827
    %v8846 = vsel %vm6316, %v8822, %v8824
    %v8847 = vsel %vm6316, %v8823, %v8825
    %v8848 = vsel %vm6316, %v8820, %v8822
    %v8849 = vsel %vm6316, %v8821, %v8823
    %v8850 = vsel %vm6316, %v8818, %v8820
    %v8851 = vsel %vm6316, %v8819, %v8821
    %v8852 = vsel %vm6316, %v8816, %v8818
    %v8853 = vsel %vm6316, %v8817, %v8819
    %v8854 = vsel %vm6316, %v8814, %v8816
    %v8855 = vsel %vm6316, %v8815, %v8817
    %v8856 = vsel %vm6316, %v8812, %v8814
    %v8857 = vsel %vm6316, %v8813, %v8815
    %v8858 = vsel %vm6316, %v8810, %v8812
    %v8859 = vsel %vm6316, %v8811, %v8813
    %v8860 = vsel %vm6316, %v8808, %v8810
    %v8861 = vsel %vm6316, %v8809, %v8811
    %v8862 = vsel %vm6316, %v8806, %v8808
    %v8863 = vsel %vm6316, %v8807, %v8809
    %v8864 = vsel %vm6316, %v8804, %v8806
    %v8865 = vsel %vm6316, %v8805, %v8807
    %v8866 = vsel %vm6316, %v8834, %v8804
    %v8867 = vsel %vm6316, %v8835, %v8805
    %v8868 = vld [vmem:[%s13] sm:$0xff]
    %v8869 = vld [vmem:[%s13 + $0x8] sm:$0xff]
    %v8870 = vld [vmem:[%s13 + $0x10] sm:$0xff]
    %v8871 = vld [vmem:[%s13 + $0x18] sm:$0xff]
    %v8872 = vld [vmem:[%s13 + $0x20] sm:$0xff]
    %v8873 = vld [vmem:[%s13 + $0x28] sm:$0xff]
    %v8874 = vld [vmem:[%s13 + $0x30] sm:$0xff]
    %v8875 = vld [vmem:[%s13 + $0x38] sm:$0xff]
    %v8876 = vld [vmem:[%s13 + $0x40] sm:$0xff]
    %v8877 = vld [vmem:[%s13 + $0x48] sm:$0xff]
    %v8878 = vld [vmem:[%s13 + $0x50] sm:$0xff]
    %v8879 = vld [vmem:[%s13 + $0x58] sm:$0xff]
    %v8880 = vld [vmem:[%s13 + $0x60] sm:$0xff]
    %v8881 = vld [vmem:[%s13 + $0x68] sm:$0xff]
    %v8882 = vld [vmem:[%s13 + $0x70] sm:$0xff]
    %v8883 = vld [vmem:[%s13 + $0x78] sm:$0xff]
    %8885 = vset.pattern.permute.xlu0 0
    %8886 = vperm.xlu0 %8885, %v8868
    %v8887 = vpop.permute.xlu0 %8886
    %8890 = vset.pattern.permute.xlu0 0
    %8891 = vperm.xlu0 %8890, %v8869
    %v8892 = vpop.permute.xlu0 %8891
    %8895 = vset.pattern.permute.xlu0 0
    %8896 = vperm.xlu0 %8895, %v8870
    %v8897 = vpop.permute.xlu0 %8896
    %8900 = vset.pattern.permute.xlu0 0
    %8901 = vperm.xlu0 %8900, %v8871
    %v8902 = vpop.permute.xlu0 %8901
    %8905 = vset.pattern.permute.xlu0 0
    %8906 = vperm.xlu0 %8905, %v8872
    %v8907 = vpop.permute.xlu0 %8906
    %8910 = vset.pattern.permute.xlu0 0
    %8911 = vperm.xlu0 %8910, %v8873
    %v8912 = vpop.permute.xlu0 %8911
    %8915 = vset.pattern.permute.xlu0 0
    %8916 = vperm.xlu0 %8915, %v8874
    %v8917 = vpop.permute.xlu0 %8916
    %8920 = vset.pattern.permute.xlu0 0
    %8921 = vperm.xlu0 %8920, %v8875
    %v8922 = vpop.permute.xlu0 %8921
    %8925 = vset.pattern.permute.xlu0 0
    %8926 = vperm.xlu0 %8925, %v8876
    %v8927 = vpop.permute.xlu0 %8926
    %8930 = vset.pattern.permute.xlu0 0
    %8931 = vperm.xlu0 %8930, %v8877
    %v8932 = vpop.permute.xlu0 %8931
    %8935 = vset.pattern.permute.xlu0 0
    %8936 = vperm.xlu0 %8935, %v8878
    %v8937 = vpop.permute.xlu0 %8936
    %8940 = vset.pattern.permute.xlu0 0
    %8941 = vperm.xlu0 %8940, %v8879
    %v8942 = vpop.permute.xlu0 %8941
    %8945 = vset.pattern.permute.xlu0 0
    %8946 = vperm.xlu0 %8945, %v8880
    %v8947 = vpop.permute.xlu0 %8946
    %8950 = vset.pattern.permute.xlu0 0
    %8951 = vperm.xlu0 %8950, %v8881
    %v8952 = vpop.permute.xlu0 %8951
    %8955 = vset.pattern.permute.xlu0 0
    %8956 = vperm.xlu0 %8955, %v8882
    %v8957 = vpop.permute.xlu0 %8956
    %8960 = vset.pattern.permute.xlu0 0
    %8961 = vperm.xlu0 %8960, %v8883
    %v8962 = vpop.permute.xlu0 %8961
    %v8964 = vmul.f32 %v8836, %v8887
    %v8965 = vmul.f32 %v8837, %v8887
    %v8966 = vmul.f32 %v8866, %v8892
    %v8967 = vmul.f32 %v8867, %v8892
    %v8968 = vmul.f32 %v8864, %v8897
    %v8969 = vmul.f32 %v8865, %v8897
    %v8970 = vmul.f32 %v8862, %v8902
    %v8971 = vmul.f32 %v8863, %v8902
    %v8972 = vmul.f32 %v8860, %v8907
    %v8973 = vmul.f32 %v8861, %v8907
    %v8974 = vmul.f32 %v8858, %v8912
    %v8975 = vmul.f32 %v8859, %v8912
    %v8976 = vmul.f32 %v8856, %v8917
    %v8977 = vmul.f32 %v8857, %v8917
    %v8978 = vmul.f32 %v8854, %v8922
    %v8979 = vmul.f32 %v8855, %v8922
    %v8980 = vmul.f32 %v8852, %v8927
    %v8981 = vmul.f32 %v8853, %v8927
    %v8982 = vmul.f32 %v8850, %v8932
    %v8983 = vmul.f32 %v8851, %v8932
    %v8984 = vmul.f32 %v8848, %v8937
    %v8985 = vmul.f32 %v8849, %v8937
    %v8986 = vmul.f32 %v8846, %v8942
    %v8987 = vmul.f32 %v8847, %v8942
    %v8988 = vmul.f32 %v8844, %v8947
    %v8989 = vmul.f32 %v8845, %v8947
    %v8990 = vmul.f32 %v8842, %v8952
    %v8991 = vmul.f32 %v8843, %v8952
    %v8992 = vmul.f32 %v8840, %v8957
    %v8993 = vmul.f32 %v8841, %v8957
    %v8994 = vmul.f32 %v8838, %v8962
    %v8995 = vmul.f32 %v8839, %v8962
    %v8996 = vld [vmem:[%s19] sm:$0x3]
    %v8998 = vlaneseq
    %v8999 = vshrl.u32 %v8998, 7
    %v9000 = vsub.s32 0, %v8999
    %v9001 = vrot.slane %v8996, %v9000
    %v9002 = vlaneseq
    %v9003 = vshrl.u32 %v9002, 7
    %v9004 = vsub.s32 1, %v9003
    %v9005 = vrot.slane %v8996, %v9004
    %v9008 = vmul.f32 %v8964, %v9001
    %v9009 = vmul.f32 %v8965, %v9005
    %v9010 = vmul.f32 %v8966, %v9001
    %v9011 = vmul.f32 %v8967, %v9005
    %v9012 = vmul.f32 %v8968, %v9001
    %v9013 = vmul.f32 %v8969, %v9005
    %v9014 = vmul.f32 %v8970, %v9001
    %v9015 = vmul.f32 %v8971, %v9005
    %v9016 = vmul.f32 %v8972, %v9001
    %v9017 = vmul.f32 %v8973, %v9005
    %v9018 = vmul.f32 %v8974, %v9001
    %v9019 = vmul.f32 %v8975, %v9005
    %v9020 = vmul.f32 %v8976, %v9001
    %v9021 = vmul.f32 %v8977, %v9005
    %v9022 = vmul.f32 %v8978, %v9001
    %v9023 = vmul.f32 %v8979, %v9005
    %v9024 = vmul.f32 %v8980, %v9001
    %v9025 = vmul.f32 %v8981, %v9005
    %v9026 = vmul.f32 %v8982, %v9001
    %v9027 = vmul.f32 %v8983, %v9005
    %v9028 = vmul.f32 %v8984, %v9001
    %v9029 = vmul.f32 %v8985, %v9005
    %v9030 = vmul.f32 %v8986, %v9001
    %v9031 = vmul.f32 %v8987, %v9005
    %v9032 = vmul.f32 %v8988, %v9001
    %v9033 = vmul.f32 %v8989, %v9005
    %v9034 = vmul.f32 %v8990, %v9001
    %v9035 = vmul.f32 %v8991, %v9005
    %v9036 = vmul.f32 %v8992, %v9001
    %v9037 = vmul.f32 %v8993, %v9005
    %v9038 = vmul.f32 %v8994, %v9001
    %v9039 = vmul.f32 %v8995, %v9005
    %v9040 = vadd.f32 %v9008, 0.0
    %v9041 = vadd.f32 %v9009, 0.0
    %v9042 = vadd.f32 %v9010, 0.0
    %v9043 = vadd.f32 %v9011, 0.0
    %v9044 = vadd.f32 %v9012, 0.0
    %v9045 = vadd.f32 %v9013, 0.0
    %v9046 = vadd.f32 %v9014, 0.0
    %v9047 = vadd.f32 %v9015, 0.0
    %v9048 = vadd.f32 %v9016, 0.0
    %v9049 = vadd.f32 %v9017, 0.0
    %v9050 = vadd.f32 %v9018, 0.0
    %v9051 = vadd.f32 %v9019, 0.0
    %v9052 = vadd.f32 %v9020, 0.0
    %v9053 = vadd.f32 %v9021, 0.0
    %v9054 = vadd.f32 %v9022, 0.0
    %v9055 = vadd.f32 %v9023, 0.0
    %v9056 = vadd.f32 %v9024, 0.0
    %v9057 = vadd.f32 %v9025, 0.0
    %v9058 = vadd.f32 %v9026, 0.0
    %v9059 = vadd.f32 %v9027, 0.0
    %v9060 = vadd.f32 %v9028, 0.0
    %v9061 = vadd.f32 %v9029, 0.0
    %v9062 = vadd.f32 %v9030, 0.0
    %v9063 = vadd.f32 %v9031, 0.0
    %v9064 = vadd.f32 %v9032, 0.0
    %v9065 = vadd.f32 %v9033, 0.0
    %v9066 = vadd.f32 %v9034, 0.0
    %v9067 = vadd.f32 %v9035, 0.0
    %v9068 = vadd.f32 %v9036, 0.0
    %v9069 = vadd.f32 %v9037, 0.0
    %v9070 = vadd.f32 %v9038, 0.0
    %v9071 = vadd.f32 %v9039, 0.0
    %v9072 = vld [vmem:[%s6445] sm:$0xff]
    %v9073 = vld [vmem:[%s6445 + $0x8] sm:$0xff]
    %v9074 = vld [vmem:[%s6445 + $0x10] sm:$0xff]
    %v9075 = vld [vmem:[%s6445 + $0x18] sm:$0xff]
    %v9076 = vld [vmem:[%s6445 + $0x20] sm:$0xff]
    %v9077 = vld [vmem:[%s6445 + $0x28] sm:$0xff]
    %v9078 = vld [vmem:[%s6445 + $0x30] sm:$0xff]
    %v9079 = vld [vmem:[%s6445 + $0x38] sm:$0xff]
    %v9080 = vld [vmem:[%s6445 + $0x40] sm:$0xff]
    %v9081 = vld [vmem:[%s6445 + $0x48] sm:$0xff]
    %v9082 = vld [vmem:[%s6445 + $0x50] sm:$0xff]
    %v9083 = vld [vmem:[%s6445 + $0x58] sm:$0xff]
    %v9084 = vld [vmem:[%s6445 + $0x60] sm:$0xff]
    %v9085 = vld [vmem:[%s6445 + $0x68] sm:$0xff]
    %v9086 = vld [vmem:[%s6445 + $0x70] sm:$0xff]
    %v9087 = vld [vmem:[%s6445 + $0x78] sm:$0xff]
    %9089 = vset.pattern.permute.xlu0 0
    %9090 = vperm.xlu0 %9089, %v9072
    %v9091 = vpop.permute.xlu0 %9090
    %9094 = vset.pattern.permute.xlu0 0
    %9095 = vperm.xlu0 %9094, %v9073
    %v9096 = vpop.permute.xlu0 %9095
    %9099 = vset.pattern.permute.xlu0 0
    %9100 = vperm.xlu0 %9099, %v9074
    %v9101 = vpop.permute.xlu0 %9100
    %9104 = vset.pattern.permute.xlu0 0
    %9105 = vperm.xlu0 %9104, %v9075
    %v9106 = vpop.permute.xlu0 %9105
    %9109 = vset.pattern.permute.xlu0 0
    %9110 = vperm.xlu0 %9109, %v9076
    %v9111 = vpop.permute.xlu0 %9110
    %9114 = vset.pattern.permute.xlu0 0
    %9115 = vperm.xlu0 %9114, %v9077
    %v9116 = vpop.permute.xlu0 %9115
    %9119 = vset.pattern.permute.xlu0 0
    %9120 = vperm.xlu0 %9119, %v9078
    %v9121 = vpop.permute.xlu0 %9120
    %9124 = vset.pattern.permute.xlu0 0
    %9125 = vperm.xlu0 %9124, %v9079
    %v9126 = vpop.permute.xlu0 %9125
    %9129 = vset.pattern.permute.xlu0 0
    %9130 = vperm.xlu0 %9129, %v9080
    %v9131 = vpop.permute.xlu0 %9130
    %9134 = vset.pattern.permute.xlu0 0
    %9135 = vperm.xlu0 %9134, %v9081
    %v9136 = vpop.permute.xlu0 %9135
    %9139 = vset.pattern.permute.xlu0 0
    %9140 = vperm.xlu0 %9139, %v9082
    %v9141 = vpop.permute.xlu0 %9140
    %9144 = vset.pattern.permute.xlu0 0
    %9145 = vperm.xlu0 %9144, %v9083
    %v9146 = vpop.permute.xlu0 %9145
    %9149 = vset.pattern.permute.xlu0 0
    %9150 = vperm.xlu0 %9149, %v9084
    %v9151 = vpop.permute.xlu0 %9150
    %9154 = vset.pattern.permute.xlu0 0
    %9155 = vperm.xlu0 %9154, %v9085
    %v9156 = vpop.permute.xlu0 %9155
    %9159 = vset.pattern.permute.xlu0 0
    %9160 = vperm.xlu0 %9159, %v9086
    %v9161 = vpop.permute.xlu0 %9160
    %9164 = vset.pattern.permute.xlu0 0
    %9165 = vperm.xlu0 %9164, %v9087
    %v9166 = vpop.permute.xlu0 %9165
    %v9168 = vmul.f32 %v8802, %v9091
    %v9169 = vmul.f32 %v8803, %v9091
    %v9170 = vmul.f32 %v8772, %v9096
    %v9171 = vmul.f32 %v8773, %v9096
    %v9172 = vmul.f32 %v8774, %v9101
    %v9173 = vmul.f32 %v8775, %v9101
    %v9174 = vmul.f32 %v8776, %v9106
    %v9175 = vmul.f32 %v8777, %v9106
    %v9176 = vmul.f32 %v8778, %v9111
    %v9177 = vmul.f32 %v8779, %v9111
    %v9178 = vmul.f32 %v8780, %v9116
    %v9179 = vmul.f32 %v8781, %v9116
    %v9180 = vmul.f32 %v8782, %v9121
    %v9181 = vmul.f32 %v8783, %v9121
    %v9182 = vmul.f32 %v8784, %v9126
    %v9183 = vmul.f32 %v8785, %v9126
    %v9184 = vmul.f32 %v8786, %v9131
    %v9185 = vmul.f32 %v8787, %v9131
    %v9186 = vmul.f32 %v8788, %v9136
    %v9187 = vmul.f32 %v8789, %v9136
    %v9188 = vmul.f32 %v8790, %v9141
    %v9189 = vmul.f32 %v8791, %v9141
    %v9190 = vmul.f32 %v8792, %v9146
    %v9191 = vmul.f32 %v8793, %v9146
    %v9192 = vmul.f32 %v8794, %v9151
    %v9193 = vmul.f32 %v8795, %v9151
    %v9194 = vmul.f32 %v8796, %v9156
    %v9195 = vmul.f32 %v8797, %v9156
    %v9196 = vmul.f32 %v8798, %v9161
    %v9197 = vmul.f32 %v8799, %v9161
    %v9198 = vmul.f32 %v8800, %v9166
    %v9199 = vmul.f32 %v8801, %v9166
    %s9200 = scalar_lea.vmem %s19, 2
    %v9201 = vld [vmem:[%s9200] sm:$0x3]
    %v9203 = vlaneseq
    %v9204 = vshrl.u32 %v9203, 7
    %v9205 = vsub.s32 0, %v9204
    %v9206 = vrot.slane %v9201, %v9205
    %v9207 = vlaneseq
    %v9208 = vshrl.u32 %v9207, 7
    %v9209 = vsub.s32 1, %v9208
    %v9210 = vrot.slane %v9201, %v9209
    %v9213 = vmul.f32 %v9168, %v9206
    %v9214 = vmul.f32 %v9169, %v9210
    %v9215 = vmul.f32 %v9170, %v9206
    %v9216 = vmul.f32 %v9171, %v9210
    %v9217 = vmul.f32 %v9172, %v9206
    %v9218 = vmul.f32 %v9173, %v9210
    %v9219 = vmul.f32 %v9174, %v9206
    %v9220 = vmul.f32 %v9175, %v9210
    %v9221 = vmul.f32 %v9176, %v9206
    %v9222 = vmul.f32 %v9177, %v9210
    %v9223 = vmul.f32 %v9178, %v9206
    %v9224 = vmul.f32 %v9179, %v9210
    %v9225 = vmul.f32 %v9180, %v9206
    %v9226 = vmul.f32 %v9181, %v9210
    %v9227 = vmul.f32 %v9182, %v9206
    %v9228 = vmul.f32 %v9183, %v9210
    %v9229 = vmul.f32 %v9184, %v9206
    %v9230 = vmul.f32 %v9185, %v9210
    %v9231 = vmul.f32 %v9186, %v9206
    %v9232 = vmul.f32 %v9187, %v9210
    %v9233 = vmul.f32 %v9188, %v9206
    %v9234 = vmul.f32 %v9189, %v9210
    %v9235 = vmul.f32 %v9190, %v9206
    %v9236 = vmul.f32 %v9191, %v9210
    %v9237 = vmul.f32 %v9192, %v9206
    %v9238 = vmul.f32 %v9193, %v9210
    %v9239 = vmul.f32 %v9194, %v9206
    %v9240 = vmul.f32 %v9195, %v9210
    %v9241 = vmul.f32 %v9196, %v9206
    %v9242 = vmul.f32 %v9197, %v9210
    %v9243 = vmul.f32 %v9198, %v9206
    %v9244 = vmul.f32 %v9199, %v9210
    %v9245 = vadd.f32 %v9213, 0.0
    %v9246 = vadd.f32 %v9214, 0.0
    %v9247 = vadd.f32 %v9215, 0.0
    %v9248 = vadd.f32 %v9216, 0.0
    %v9249 = vadd.f32 %v9217, 0.0
    %v9250 = vadd.f32 %v9218, 0.0
    %v9251 = vadd.f32 %v9219, 0.0
    %v9252 = vadd.f32 %v9220, 0.0
    %v9253 = vadd.f32 %v9221, 0.0
    %v9254 = vadd.f32 %v9222, 0.0
    %v9255 = vadd.f32 %v9223, 0.0
    %v9256 = vadd.f32 %v9224, 0.0
    %v9257 = vadd.f32 %v9225, 0.0
    %v9258 = vadd.f32 %v9226, 0.0
    %v9259 = vadd.f32 %v9227, 0.0
    %v9260 = vadd.f32 %v9228, 0.0
    %v9261 = vadd.f32 %v9229, 0.0
    %v9262 = vadd.f32 %v9230, 0.0
    %v9263 = vadd.f32 %v9231, 0.0
    %v9264 = vadd.f32 %v9232, 0.0
    %v9265 = vadd.f32 %v9233, 0.0
    %v9266 = vadd.f32 %v9234, 0.0
    %v9267 = vadd.f32 %v9235, 0.0
    %v9268 = vadd.f32 %v9236, 0.0
    %v9269 = vadd.f32 %v9237, 0.0
    %v9270 = vadd.f32 %v9238, 0.0
    %v9271 = vadd.f32 %v9239, 0.0
    %v9272 = vadd.f32 %v9240, 0.0
    %v9273 = vadd.f32 %v9241, 0.0
    %v9274 = vadd.f32 %v9242, 0.0
    %v9275 = vadd.f32 %v9243, 0.0
    %v9276 = vadd.f32 %v9244, 0.0
    %v9277 = vrot.slane %v8772, 1
    %v9278 = vrot.slane %v8773, 1
    %v9279 = vrot.slane %v8774, 1
    %v9280 = vrot.slane %v8775, 1
    %v9281 = vrot.slane %v8776, 1
    %v9282 = vrot.slane %v8777, 1
    %v9283 = vrot.slane %v8778, 1
    %v9284 = vrot.slane %v8779, 1
    %v9285 = vrot.slane %v8780, 1
    %v9286 = vrot.slane %v8781, 1
    %v9287 = vrot.slane %v8782, 1
    %v9288 = vrot.slane %v8783, 1
    %v9289 = vrot.slane %v8784, 1
    %v9290 = vrot.slane %v8785, 1
    %v9291 = vrot.slane %v8786, 1
    %v9292 = vrot.slane %v8787, 1
    %v9293 = vrot.slane %v8788, 1
    %v9294 = vrot.slane %v8789, 1
    %v9295 = vrot.slane %v8790, 1
    %v9296 = vrot.slane %v8791, 1
    %v9297 = vrot.slane %v8792, 1
    %v9298 = vrot.slane %v8793, 1
    %v9299 = vrot.slane %v8794, 1
    %v9300 = vrot.slane %v8795, 1
    %v9301 = vrot.slane %v8796, 1
    %v9302 = vrot.slane %v8797, 1
    %v9303 = vrot.slane %v8798, 1
    %v9304 = vrot.slane %v8799, 1
    %v9305 = vrot.slane %v8800, 1
    %v9306 = vrot.slane %v8801, 1
    %v9307 = vrot.slane %v8802, 1
    %v9308 = vrot.slane %v8803, 1
    %v9309 = vsel %vm6574, %v9305, %v9307
    %v9310 = vsel %vm6574, %v9306, %v9308
    %v9311 = vsel %vm6574, %v9303, %v9305
    %v9312 = vsel %vm6574, %v9304, %v9306
    %v9313 = vsel %vm6574, %v9301, %v9303
    %v9314 = vsel %vm6574, %v9302, %v9304
    %v9315 = vsel %vm6574, %v9299, %v9301
    %v9316 = vsel %vm6574, %v9300, %v9302
    %v9317 = vsel %vm6574, %v9297, %v9299
    %v9318 = vsel %vm6574, %v9298, %v9300
    %v9319 = vsel %vm6574, %v9295, %v9297
    %v9320 = vsel %vm6574, %v9296, %v9298
    %v9321 = vsel %vm6574, %v9293, %v9295
    %v9322 = vsel %vm6574, %v9294, %v9296
    %v9323 = vsel %vm6574, %v9291, %v9293
    %v9324 = vsel %vm6574, %v9292, %v9294
    %v9325 = vsel %vm6574, %v9289, %v9291
    %v9326 = vsel %vm6574, %v9290, %v9292
    %v9327 = vsel %vm6574, %v9287, %v9289
    %v9328 = vsel %vm6574, %v9288, %v9290
    %v9329 = vsel %vm6574, %v9285, %v9287
    %v9330 = vsel %vm6574, %v9286, %v9288
    %v9331 = vsel %vm6574, %v9283, %v9285
    %v9332 = vsel %vm6574, %v9284, %v9286
    %v9333 = vsel %vm6574, %v9281, %v9283
    %v9334 = vsel %vm6574, %v9282, %v9284
    %v9335 = vsel %vm6574, %v9279, %v9281
    %v9336 = vsel %vm6574, %v9280, %v9282
    %v9337 = vsel %vm6574, %v9277, %v9279
    %v9338 = vsel %vm6574, %v9278, %v9280
    %v9339 = vsel %vm6574, %v9307, %v9277
    %v9340 = vsel %vm6574, %v9308, %v9278
    %v9341 = vld [vmem:[%s6591] sm:$0xff]
    %v9342 = vld [vmem:[%s6591 + $0x8] sm:$0xff]
    %v9343 = vld [vmem:[%s6591 + $0x10] sm:$0xff]
    %v9344 = vld [vmem:[%s6591 + $0x18] sm:$0xff]
    %v9345 = vld [vmem:[%s6591 + $0x20] sm:$0xff]
    %v9346 = vld [vmem:[%s6591 + $0x28] sm:$0xff]
    %v9347 = vld [vmem:[%s6591 + $0x30] sm:$0xff]
    %v9348 = vld [vmem:[%s6591 + $0x38] sm:$0xff]
    %v9349 = vld [vmem:[%s6591 + $0x40] sm:$0xff]
    %v9350 = vld [vmem:[%s6591 + $0x48] sm:$0xff]
    %v9351 = vld [vmem:[%s6591 + $0x50] sm:$0xff]
    %v9352 = vld [vmem:[%s6591 + $0x58] sm:$0xff]
    %v9353 = vld [vmem:[%s6591 + $0x60] sm:$0xff]
    %v9354 = vld [vmem:[%s6591 + $0x68] sm:$0xff]
    %v9355 = vld [vmem:[%s6591 + $0x70] sm:$0xff]
    %v9356 = vld [vmem:[%s6591 + $0x78] sm:$0xff]
    %9358 = vset.pattern.permute.xlu0 0
    %9359 = vperm.xlu0 %9358, %v9341
    %v9360 = vpop.permute.xlu0 %9359
    %9363 = vset.pattern.permute.xlu0 0
    %9364 = vperm.xlu0 %9363, %v9342
    %v9365 = vpop.permute.xlu0 %9364
    %9368 = vset.pattern.permute.xlu0 0
    %9369 = vperm.xlu0 %9368, %v9343
    %v9370 = vpop.permute.xlu0 %9369
    %9373 = vset.pattern.permute.xlu0 0
    %9374 = vperm.xlu0 %9373, %v9344
    %v9375 = vpop.permute.xlu0 %9374
    %9378 = vset.pattern.permute.xlu0 0
    %9379 = vperm.xlu0 %9378, %v9345
    %v9380 = vpop.permute.xlu0 %9379
    %9383 = vset.pattern.permute.xlu0 0
    %9384 = vperm.xlu0 %9383, %v9346
    %v9385 = vpop.permute.xlu0 %9384
    %9388 = vset.pattern.permute.xlu0 0
    %9389 = vperm.xlu0 %9388, %v9347
    %v9390 = vpop.permute.xlu0 %9389
    %9393 = vset.pattern.permute.xlu0 0
    %9394 = vperm.xlu0 %9393, %v9348
    %v9395 = vpop.permute.xlu0 %9394
    %9398 = vset.pattern.permute.xlu0 0
    %9399 = vperm.xlu0 %9398, %v9349
    %v9400 = vpop.permute.xlu0 %9399
    %9403 = vset.pattern.permute.xlu0 0
    %9404 = vperm.xlu0 %9403, %v9350
    %v9405 = vpop.permute.xlu0 %9404
    %9408 = vset.pattern.permute.xlu0 0
    %9409 = vperm.xlu0 %9408, %v9351
    %v9410 = vpop.permute.xlu0 %9409
    %9413 = vset.pattern.permute.xlu0 0
    %9414 = vperm.xlu0 %9413, %v9352
    %v9415 = vpop.permute.xlu0 %9414
    %9418 = vset.pattern.permute.xlu0 0
    %9419 = vperm.xlu0 %9418, %v9353
    %v9420 = vpop.permute.xlu0 %9419
    %9423 = vset.pattern.permute.xlu0 0
    %9424 = vperm.xlu0 %9423, %v9354
    %v9425 = vpop.permute.xlu0 %9424
    %9428 = vset.pattern.permute.xlu0 0
    %9429 = vperm.xlu0 %9428, %v9355
    %v9430 = vpop.permute.xlu0 %9429
    %9433 = vset.pattern.permute.xlu0 0
    %9434 = vperm.xlu0 %9433, %v9356
    %v9435 = vpop.permute.xlu0 %9434
    %v9437 = vmul.f32 %v9339, %v9360
    %v9438 = vmul.f32 %v9340, %v9360
    %v9439 = vmul.f32 %v9337, %v9365
    %v9440 = vmul.f32 %v9338, %v9365
    %v9441 = vmul.f32 %v9335, %v9370
    %v9442 = vmul.f32 %v9336, %v9370
    %v9443 = vmul.f32 %v9333, %v9375
    %v9444 = vmul.f32 %v9334, %v9375
    %v9445 = vmul.f32 %v9331, %v9380
    %v9446 = vmul.f32 %v9332, %v9380
    %v9447 = vmul.f32 %v9329, %v9385
    %v9448 = vmul.f32 %v9330, %v9385
    %v9449 = vmul.f32 %v9327, %v9390
    %v9450 = vmul.f32 %v9328, %v9390
    %v9451 = vmul.f32 %v9325, %v9395
    %v9452 = vmul.f32 %v9326, %v9395
    %v9453 = vmul.f32 %v9323, %v9400
    %v9454 = vmul.f32 %v9324, %v9400
    %v9455 = vmul.f32 %v9321, %v9405
    %v9456 = vmul.f32 %v9322, %v9405
    %v9457 = vmul.f32 %v9319, %v9410
    %v9458 = vmul.f32 %v9320, %v9410
    %v9459 = vmul.f32 %v9317, %v9415
    %v9460 = vmul.f32 %v9318, %v9415
    %v9461 = vmul.f32 %v9315, %v9420
    %v9462 = vmul.f32 %v9316, %v9420
    %v9463 = vmul.f32 %v9313, %v9425
    %v9464 = vmul.f32 %v9314, %v9425
    %v9465 = vmul.f32 %v9311, %v9430
    %v9466 = vmul.f32 %v9312, %v9430
    %v9467 = vmul.f32 %v9309, %v9435
    %v9468 = vmul.f32 %v9310, %v9435
    %s9469 = scalar_lea.vmem %s19, 4
    %v9470 = vld [vmem:[%s9469] sm:$0x3]
    %v9472 = vlaneseq
    %v9473 = vshrl.u32 %v9472, 7
    %v9474 = vsub.s32 0, %v9473
    %v9475 = vrot.slane %v9470, %v9474
    %v9476 = vlaneseq
    %v9477 = vshrl.u32 %v9476, 7
    %v9478 = vsub.s32 1, %v9477
    %v9479 = vrot.slane %v9470, %v9478
    %v9482 = vmul.f32 %v9437, %v9475
    %v9483 = vmul.f32 %v9438, %v9479
    %v9484 = vmul.f32 %v9439, %v9475
    %v9485 = vmul.f32 %v9440, %v9479
    %v9486 = vmul.f32 %v9441, %v9475
    %v9487 = vmul.f32 %v9442, %v9479
    %v9488 = vmul.f32 %v9443, %v9475
    %v9489 = vmul.f32 %v9444, %v9479
    %v9490 = vmul.f32 %v9445, %v9475
    %v9491 = vmul.f32 %v9446, %v9479
    %v9492 = vmul.f32 %v9447, %v9475
    %v9493 = vmul.f32 %v9448, %v9479
    %v9494 = vmul.f32 %v9449, %v9475
    %v9495 = vmul.f32 %v9450, %v9479
    %v9496 = vmul.f32 %v9451, %v9475
    %v9497 = vmul.f32 %v9452, %v9479
    %v9498 = vmul.f32 %v9453, %v9475
    %v9499 = vmul.f32 %v9454, %v9479
    %v9500 = vmul.f32 %v9455, %v9475
    %v9501 = vmul.f32 %v9456, %v9479
    %v9502 = vmul.f32 %v9457, %v9475
    %v9503 = vmul.f32 %v9458, %v9479
    %v9504 = vmul.f32 %v9459, %v9475
    %v9505 = vmul.f32 %v9460, %v9479
    %v9506 = vmul.f32 %v9461, %v9475
    %v9507 = vmul.f32 %v9462, %v9479
    %v9508 = vmul.f32 %v9463, %v9475
    %v9509 = vmul.f32 %v9464, %v9479
    %v9510 = vmul.f32 %v9465, %v9475
    %v9511 = vmul.f32 %v9466, %v9479
    %v9512 = vmul.f32 %v9467, %v9475
    %v9513 = vmul.f32 %v9468, %v9479
    %v9514 = vadd.f32 %v9040, %v9482
    %v9515 = vadd.f32 %v9041, %v9483
    %v9516 = vadd.f32 %v9042, %v9484
    %v9517 = vadd.f32 %v9043, %v9485
    %v9518 = vadd.f32 %v9044, %v9486
    %v9519 = vadd.f32 %v9045, %v9487
    %v9520 = vadd.f32 %v9046, %v9488
    %v9521 = vadd.f32 %v9047, %v9489
    %v9522 = vadd.f32 %v9048, %v9490
    %v9523 = vadd.f32 %v9049, %v9491
    %v9524 = vadd.f32 %v9050, %v9492
    %v9525 = vadd.f32 %v9051, %v9493
    %v9526 = vadd.f32 %v9052, %v9494
    %v9527 = vadd.f32 %v9053, %v9495
    %v9528 = vadd.f32 %v9054, %v9496
    %v9529 = vadd.f32 %v9055, %v9497
    %v9530 = vadd.f32 %v9056, %v9498
    %v9531 = vadd.f32 %v9057, %v9499
    %v9532 = vadd.f32 %v9058, %v9500
    %v9533 = vadd.f32 %v9059, %v9501
    %v9534 = vadd.f32 %v9060, %v9502
    %v9535 = vadd.f32 %v9061, %v9503
    %v9536 = vadd.f32 %v9062, %v9504
    %v9537 = vadd.f32 %v9063, %v9505
    %v9538 = vadd.f32 %v9064, %v9506
    %v9539 = vadd.f32 %v9065, %v9507
    %v9540 = vadd.f32 %v9066, %v9508
    %v9541 = vadd.f32 %v9067, %v9509
    %v9542 = vadd.f32 %v9068, %v9510
    %v9543 = vadd.f32 %v9069, %v9511
    %v9544 = vadd.f32 %v9070, %v9512
    %v9545 = vadd.f32 %v9071, %v9513
    %v9546 = vld [vmem:[%s6704] sm:$0xff]
    %v9547 = vld [vmem:[%s6704 + $0x8] sm:$0xff]
    %v9548 = vld [vmem:[%s6704 + $0x10] sm:$0xff]
    %v9549 = vld [vmem:[%s6704 + $0x18] sm:$0xff]
    %v9550 = vld [vmem:[%s6704 + $0x20] sm:$0xff]
    %v9551 = vld [vmem:[%s6704 + $0x28] sm:$0xff]
    %v9552 = vld [vmem:[%s6704 + $0x30] sm:$0xff]
    %v9553 = vld [vmem:[%s6704 + $0x38] sm:$0xff]
    %v9554 = vld [vmem:[%s6704 + $0x40] sm:$0xff]
    %v9555 = vld [vmem:[%s6704 + $0x48] sm:$0xff]
    %v9556 = vld [vmem:[%s6704 + $0x50] sm:$0xff]
    %v9557 = vld [vmem:[%s6704 + $0x58] sm:$0xff]
    %v9558 = vld [vmem:[%s6704 + $0x60] sm:$0xff]
    %v9559 = vld [vmem:[%s6704 + $0x68] sm:$0xff]
    %v9560 = vld [vmem:[%s6704 + $0x70] sm:$0xff]
    %v9561 = vld [vmem:[%s6704 + $0x78] sm:$0xff]
    %9563 = vset.pattern.permute.xlu0 0
    %9564 = vperm.xlu0 %9563, %v9546
    %v9565 = vpop.permute.xlu0 %9564
    %9568 = vset.pattern.permute.xlu0 0
    %9569 = vperm.xlu0 %9568, %v9547
    %v9570 = vpop.permute.xlu0 %9569
    %9573 = vset.pattern.permute.xlu0 0
    %9574 = vperm.xlu0 %9573, %v9548
    %v9575 = vpop.permute.xlu0 %9574
    %9578 = vset.pattern.permute.xlu0 0
    %9579 = vperm.xlu0 %9578, %v9549
    %v9580 = vpop.permute.xlu0 %9579
    %9583 = vset.pattern.permute.xlu0 0
    %9584 = vperm.xlu0 %9583, %v9550
    %v9585 = vpop.permute.xlu0 %9584
    %9588 = vset.pattern.permute.xlu0 0
    %9589 = vperm.xlu0 %9588, %v9551
    %v9590 = vpop.permute.xlu0 %9589
    %9593 = vset.pattern.permute.xlu0 0
    %9594 = vperm.xlu0 %9593, %v9552
    %v9595 = vpop.permute.xlu0 %9594
    %9598 = vset.pattern.permute.xlu0 0
    %9599 = vperm.xlu0 %9598, %v9553
    %v9600 = vpop.permute.xlu0 %9599
    %9603 = vset.pattern.permute.xlu0 0
    %9604 = vperm.xlu0 %9603, %v9554
    %v9605 = vpop.permute.xlu0 %9604
    %9608 = vset.pattern.permute.xlu0 0
    %9609 = vperm.xlu0 %9608, %v9555
    %v9610 = vpop.permute.xlu0 %9609
    %9613 = vset.pattern.permute.xlu0 0
    %9614 = vperm.xlu0 %9613, %v9556
    %v9615 = vpop.permute.xlu0 %9614
    %9618 = vset.pattern.permute.xlu0 0
    %9619 = vperm.xlu0 %9618, %v9557
    %v9620 = vpop.permute.xlu0 %9619
    %9623 = vset.pattern.permute.xlu0 0
    %9624 = vperm.xlu0 %9623, %v9558
    %v9625 = vpop.permute.xlu0 %9624
    %9628 = vset.pattern.permute.xlu0 0
    %9629 = vperm.xlu0 %9628, %v9559
    %v9630 = vpop.permute.xlu0 %9629
    %9633 = vset.pattern.permute.xlu0 0
    %9634 = vperm.xlu0 %9633, %v9560
    %v9635 = vpop.permute.xlu0 %9634
    %9638 = vset.pattern.permute.xlu0 0
    %9639 = vperm.xlu0 %9638, %v9561
    %v9640 = vpop.permute.xlu0 %9639
    %v9642 = vmul.f32 %v8866, %v9565
    %v9643 = vmul.f32 %v8867, %v9565
    %v9644 = vmul.f32 %v8864, %v9570
    %v9645 = vmul.f32 %v8865, %v9570
    %v9646 = vmul.f32 %v8862, %v9575
    %v9647 = vmul.f32 %v8863, %v9575
    %v9648 = vmul.f32 %v8860, %v9580
    %v9649 = vmul.f32 %v8861, %v9580
    %v9650 = vmul.f32 %v8858, %v9585
    %v9651 = vmul.f32 %v8859, %v9585
    %v9652 = vmul.f32 %v8856, %v9590
    %v9653 = vmul.f32 %v8857, %v9590
    %v9654 = vmul.f32 %v8854, %v9595
    %v9655 = vmul.f32 %v8855, %v9595
    %v9656 = vmul.f32 %v8852, %v9600
    %v9657 = vmul.f32 %v8853, %v9600
    %v9658 = vmul.f32 %v8850, %v9605
    %v9659 = vmul.f32 %v8851, %v9605
    %v9660 = vmul.f32 %v8848, %v9610
    %v9661 = vmul.f32 %v8849, %v9610
    %v9662 = vmul.f32 %v8846, %v9615
    %v9663 = vmul.f32 %v8847, %v9615
    %v9664 = vmul.f32 %v8844, %v9620
    %v9665 = vmul.f32 %v8845, %v9620
    %v9666 = vmul.f32 %v8842, %v9625
    %v9667 = vmul.f32 %v8843, %v9625
    %v9668 = vmul.f32 %v8840, %v9630
    %v9669 = vmul.f32 %v8841, %v9630
    %v9670 = vmul.f32 %v8838, %v9635
    %v9671 = vmul.f32 %v8839, %v9635
    %v9672 = vmul.f32 %v8836, %v9640
    %v9673 = vmul.f32 %v8837, %v9640
    %s9674 = scalar_lea.vmem %s19, 6
    %v9675 = vld [vmem:[%s9674] sm:$0x3]
    %v9677 = vlaneseq
    %v9678 = vshrl.u32 %v9677, 7
    %v9679 = vsub.s32 0, %v9678
    %v9680 = vrot.slane %v9675, %v9679
    %v9681 = vlaneseq
    %v9682 = vshrl.u32 %v9681, 7
    %v9683 = vsub.s32 1, %v9682
    %v9684 = vrot.slane %v9675, %v9683
    %v9687 = vmul.f32 %v9642, %v9680
    %v9688 = vmul.f32 %v9643, %v9684
    %v9689 = vmul.f32 %v9644, %v9680
    %v9690 = vmul.f32 %v9645, %v9684
    %v9691 = vmul.f32 %v9646, %v9680
    %v9692 = vmul.f32 %v9647, %v9684
    %v9693 = vmul.f32 %v9648, %v9680
    %v9694 = vmul.f32 %v9649, %v9684
    %v9695 = vmul.f32 %v9650, %v9680
    %v9696 = vmul.f32 %v9651, %v9684
    %v9697 = vmul.f32 %v9652, %v9680
    %v9698 = vmul.f32 %v9653, %v9684
    %v9699 = vmul.f32 %v9654, %v9680
    %v9700 = vmul.f32 %v9655, %v9684
    %v9701 = vmul.f32 %v9656, %v9680
    %v9702 = vmul.f32 %v9657, %v9684
    %v9703 = vmul.f32 %v9658, %v9680
    %v9704 = vmul.f32 %v9659, %v9684
    %v9705 = vmul.f32 %v9660, %v9680
    %v9706 = vmul.f32 %v9661, %v9684
    %v9707 = vmul.f32 %v9662, %v9680
    %v9708 = vmul.f32 %v9663, %v9684
    %v9709 = vmul.f32 %v9664, %v9680
    %v9710 = vmul.f32 %v9665, %v9684
    %v9711 = vmul.f32 %v9666, %v9680
    %v9712 = vmul.f32 %v9667, %v9684
    %v9713 = vmul.f32 %v9668, %v9680
    %v9714 = vmul.f32 %v9669, %v9684
    %v9715 = vmul.f32 %v9670, %v9680
    %v9716 = vmul.f32 %v9671, %v9684
    %v9717 = vmul.f32 %v9672, %v9680
    %v9718 = vmul.f32 %v9673, %v9684
    %v9719 = vadd.f32 %v9245, %v9687
    %v9720 = vadd.f32 %v9246, %v9688
    %v9721 = vadd.f32 %v9247, %v9689
    %v9722 = vadd.f32 %v9248, %v9690
    %v9723 = vadd.f32 %v9249, %v9691
    %v9724 = vadd.f32 %v9250, %v9692
    %v9725 = vadd.f32 %v9251, %v9693
    %v9726 = vadd.f32 %v9252, %v9694
    %v9727 = vadd.f32 %v9253, %v9695
    %v9728 = vadd.f32 %v9254, %v9696
    %v9729 = vadd.f32 %v9255, %v9697
    %v9730 = vadd.f32 %v9256, %v9698
    %v9731 = vadd.f32 %v9257, %v9699
    %v9732 = vadd.f32 %v9258, %v9700
    %v9733 = vadd.f32 %v9259, %v9701
    %v9734 = vadd.f32 %v9260, %v9702
    %v9735 = vadd.f32 %v9261, %v9703
    %v9736 = vadd.f32 %v9262, %v9704
    %v9737 = vadd.f32 %v9263, %v9705
    %v9738 = vadd.f32 %v9264, %v9706
    %v9739 = vadd.f32 %v9265, %v9707
    %v9740 = vadd.f32 %v9266, %v9708
    %v9741 = vadd.f32 %v9267, %v9709
    %v9742 = vadd.f32 %v9268, %v9710
    %v9743 = vadd.f32 %v9269, %v9711
    %v9744 = vadd.f32 %v9270, %v9712
    %v9745 = vadd.f32 %v9271, %v9713
    %v9746 = vadd.f32 %v9272, %v9714
    %v9747 = vadd.f32 %v9273, %v9715
    %v9748 = vadd.f32 %v9274, %v9716
    %v9749 = vadd.f32 %v9275, %v9717
    %v9750 = vadd.f32 %v9276, %v9718
    %s9751 = scalar_lea.vmem %s19, 8
    %v9752 = vld [vmem:[%s9751] sm:$0x3]
    %v9754 = vlaneseq
    %v9755 = vshrl.u32 %v9754, 7
    %v9756 = vsub.s32 0, %v9755
    %v9757 = vrot.slane %v9752, %v9756
    %v9758 = vlaneseq
    %v9759 = vshrl.u32 %v9758, 7
    %v9760 = vsub.s32 1, %v9759
    %v9761 = vrot.slane %v9752, %v9760
    %v9764 = vmul.f32 %v8772, %v9757
    %v9765 = vmul.f32 %v8773, %v9761
    %v9766 = vmul.f32 %v8774, %v9757
    %v9767 = vmul.f32 %v8775, %v9761
    %v9768 = vmul.f32 %v8776, %v9757
    %v9769 = vmul.f32 %v8777, %v9761
    %v9770 = vmul.f32 %v8778, %v9757
    %v9771 = vmul.f32 %v8779, %v9761
    %v9772 = vmul.f32 %v8780, %v9757
    %v9773 = vmul.f32 %v8781, %v9761
    %v9774 = vmul.f32 %v8782, %v9757
    %v9775 = vmul.f32 %v8783, %v9761
    %v9776 = vmul.f32 %v8784, %v9757
    %v9777 = vmul.f32 %v8785, %v9761
    %v9778 = vmul.f32 %v8786, %v9757
    %v9779 = vmul.f32 %v8787, %v9761
    %v9780 = vmul.f32 %v8788, %v9757
    %v9781 = vmul.f32 %v8789, %v9761
    %v9782 = vmul.f32 %v8790, %v9757
    %v9783 = vmul.f32 %v8791, %v9761
    %v9784 = vmul.f32 %v8792, %v9757
    %v9785 = vmul.f32 %v8793, %v9761
    %v9786 = vmul.f32 %v8794, %v9757
    %v9787 = vmul.f32 %v8795, %v9761
    %v9788 = vmul.f32 %v8796, %v9757
    %v9789 = vmul.f32 %v8797, %v9761
    %v9790 = vmul.f32 %v8798, %v9757
    %v9791 = vmul.f32 %v8799, %v9761
    %v9792 = vmul.f32 %v8800, %v9757
    %v9793 = vmul.f32 %v8801, %v9761
    %v9794 = vmul.f32 %v8802, %v9757
    %v9795 = vmul.f32 %v8803, %v9761
    %v9796 = vadd.f32 %v9514, %v9764
    %v9797 = vadd.f32 %v9515, %v9765
    %v9798 = vadd.f32 %v9516, %v9766
    %v9799 = vadd.f32 %v9517, %v9767
    %v9800 = vadd.f32 %v9518, %v9768
    %v9801 = vadd.f32 %v9519, %v9769
    %v9802 = vadd.f32 %v9520, %v9770
    %v9803 = vadd.f32 %v9521, %v9771
    %v9804 = vadd.f32 %v9522, %v9772
    %v9805 = vadd.f32 %v9523, %v9773
    %v9806 = vadd.f32 %v9524, %v9774
    %v9807 = vadd.f32 %v9525, %v9775
    %v9808 = vadd.f32 %v9526, %v9776
    %v9809 = vadd.f32 %v9527, %v9777
    %v9810 = vadd.f32 %v9528, %v9778
    %v9811 = vadd.f32 %v9529, %v9779
    %v9812 = vadd.f32 %v9530, %v9780
    %v9813 = vadd.f32 %v9531, %v9781
    %v9814 = vadd.f32 %v9532, %v9782
    %v9815 = vadd.f32 %v9533, %v9783
    %v9816 = vadd.f32 %v9534, %v9784
    %v9817 = vadd.f32 %v9535, %v9785
    %v9818 = vadd.f32 %v9536, %v9786
    %v9819 = vadd.f32 %v9537, %v9787
    %v9820 = vadd.f32 %v9538, %v9788
    %v9821 = vadd.f32 %v9539, %v9789
    %v9822 = vadd.f32 %v9540, %v9790
    %v9823 = vadd.f32 %v9541, %v9791
    %v9824 = vadd.f32 %v9542, %v9792
    %v9825 = vadd.f32 %v9543, %v9793
    %v9826 = vadd.f32 %v9544, %v9794
    %v9827 = vadd.f32 %v9545, %v9795
    %v9828 = vld [vmem:[%s6817] sm:$0xff]
    %v9829 = vld [vmem:[%s6817 + $0x8] sm:$0xff]
    %v9830 = vld [vmem:[%s6817 + $0x10] sm:$0xff]
    %v9831 = vld [vmem:[%s6817 + $0x18] sm:$0xff]
    %v9832 = vld [vmem:[%s6817 + $0x20] sm:$0xff]
    %v9833 = vld [vmem:[%s6817 + $0x28] sm:$0xff]
    %v9834 = vld [vmem:[%s6817 + $0x30] sm:$0xff]
    %v9835 = vld [vmem:[%s6817 + $0x38] sm:$0xff]
    %v9836 = vld [vmem:[%s6817 + $0x40] sm:$0xff]
    %v9837 = vld [vmem:[%s6817 + $0x48] sm:$0xff]
    %v9838 = vld [vmem:[%s6817 + $0x50] sm:$0xff]
    %v9839 = vld [vmem:[%s6817 + $0x58] sm:$0xff]
    %v9840 = vld [vmem:[%s6817 + $0x60] sm:$0xff]
    %v9841 = vld [vmem:[%s6817 + $0x68] sm:$0xff]
    %v9842 = vld [vmem:[%s6817 + $0x70] sm:$0xff]
    %v9843 = vld [vmem:[%s6817 + $0x78] sm:$0xff]
    %9845 = vset.pattern.permute.xlu0 0
    %9846 = vperm.xlu0 %9845, %v9828
    %v9847 = vpop.permute.xlu0 %9846
    %9850 = vset.pattern.permute.xlu0 0
    %9851 = vperm.xlu0 %9850, %v9829
    %v9852 = vpop.permute.xlu0 %9851
    %9855 = vset.pattern.permute.xlu0 0
    %9856 = vperm.xlu0 %9855, %v9830
    %v9857 = vpop.permute.xlu0 %9856
    %9860 = vset.pattern.permute.xlu0 0
    %9861 = vperm.xlu0 %9860, %v9831
    %v9862 = vpop.permute.xlu0 %9861
    %9865 = vset.pattern.permute.xlu0 0
    %9866 = vperm.xlu0 %9865, %v9832
    %v9867 = vpop.permute.xlu0 %9866
    %9870 = vset.pattern.permute.xlu0 0
    %9871 = vperm.xlu0 %9870, %v9833
    %v9872 = vpop.permute.xlu0 %9871
    %9875 = vset.pattern.permute.xlu0 0
    %9876 = vperm.xlu0 %9875, %v9834
    %v9877 = vpop.permute.xlu0 %9876
    %9880 = vset.pattern.permute.xlu0 0
    %9881 = vperm.xlu0 %9880, %v9835
    %v9882 = vpop.permute.xlu0 %9881
    %9885 = vset.pattern.permute.xlu0 0
    %9886 = vperm.xlu0 %9885, %v9836
    %v9887 = vpop.permute.xlu0 %9886
    %9890 = vset.pattern.permute.xlu0 0
    %9891 = vperm.xlu0 %9890, %v9837
    %v9892 = vpop.permute.xlu0 %9891
    %9895 = vset.pattern.permute.xlu0 0
    %9896 = vperm.xlu0 %9895, %v9838
    %v9897 = vpop.permute.xlu0 %9896
    %9900 = vset.pattern.permute.xlu0 0
    %9901 = vperm.xlu0 %9900, %v9839
    %v9902 = vpop.permute.xlu0 %9901
    %9905 = vset.pattern.permute.xlu0 0
    %9906 = vperm.xlu0 %9905, %v9840
    %v9907 = vpop.permute.xlu0 %9906
    %9910 = vset.pattern.permute.xlu0 0
    %9911 = vperm.xlu0 %9910, %v9841
    %v9912 = vpop.permute.xlu0 %9911
    %9915 = vset.pattern.permute.xlu0 0
    %9916 = vperm.xlu0 %9915, %v9842
    %v9917 = vpop.permute.xlu0 %9916
    %9920 = vset.pattern.permute.xlu0 0
    %9921 = vperm.xlu0 %9920, %v9843
    %v9922 = vpop.permute.xlu0 %9921
    %v9924 = vmul.f32 %v9337, %v9847
    %v9925 = vmul.f32 %v9338, %v9847
    %v9926 = vmul.f32 %v9335, %v9852
    %v9927 = vmul.f32 %v9336, %v9852
    %v9928 = vmul.f32 %v9333, %v9857
    %v9929 = vmul.f32 %v9334, %v9857
    %v9930 = vmul.f32 %v9331, %v9862
    %v9931 = vmul.f32 %v9332, %v9862
    %v9932 = vmul.f32 %v9329, %v9867
    %v9933 = vmul.f32 %v9330, %v9867
    %v9934 = vmul.f32 %v9327, %v9872
    %v9935 = vmul.f32 %v9328, %v9872
    %v9936 = vmul.f32 %v9325, %v9877
    %v9937 = vmul.f32 %v9326, %v9877
    %v9938 = vmul.f32 %v9323, %v9882
    %v9939 = vmul.f32 %v9324, %v9882
    %v9940 = vmul.f32 %v9321, %v9887
    %v9941 = vmul.f32 %v9322, %v9887
    %v9942 = vmul.f32 %v9319, %v9892
    %v9943 = vmul.f32 %v9320, %v9892
    %v9944 = vmul.f32 %v9317, %v9897
    %v9945 = vmul.f32 %v9318, %v9897
    %v9946 = vmul.f32 %v9315, %v9902
    %v9947 = vmul.f32 %v9316, %v9902
    %v9948 = vmul.f32 %v9313, %v9907
    %v9949 = vmul.f32 %v9314, %v9907
    %v9950 = vmul.f32 %v9311, %v9912
    %v9951 = vmul.f32 %v9312, %v9912
    %v9952 = vmul.f32 %v9309, %v9917
    %v9953 = vmul.f32 %v9310, %v9917
    %v9954 = vmul.f32 %v9339, %v9922
    %v9955 = vmul.f32 %v9340, %v9922
    %s9956 = scalar_lea.vmem %s19, 10
    %v9957 = vld [vmem:[%s9956] sm:$0x3]
    %v9959 = vlaneseq
    %v9960 = vshrl.u32 %v9959, 7
    %v9961 = vsub.s32 0, %v9960
    %v9962 = vrot.slane %v9957, %v9961
    %v9963 = vlaneseq
    %v9964 = vshrl.u32 %v9963, 7
    %v9965 = vsub.s32 1, %v9964
    %v9966 = vrot.slane %v9957, %v9965
    %v9969 = vmul.f32 %v9924, %v9962
    %v9970 = vmul.f32 %v9925, %v9966
    %v9971 = vmul.f32 %v9926, %v9962
    %v9972 = vmul.f32 %v9927, %v9966
    %v9973 = vmul.f32 %v9928, %v9962
    %v9974 = vmul.f32 %v9929, %v9966
    %v9975 = vmul.f32 %v9930, %v9962
    %v9976 = vmul.f32 %v9931, %v9966
    %v9977 = vmul.f32 %v9932, %v9962
    %v9978 = vmul.f32 %v9933, %v9966
    %v9979 = vmul.f32 %v9934, %v9962
    %v9980 = vmul.f32 %v9935, %v9966
    %v9981 = vmul.f32 %v9936, %v9962
    %v9982 = vmul.f32 %v9937, %v9966
    %v9983 = vmul.f32 %v9938, %v9962
    %v9984 = vmul.f32 %v9939, %v9966
    %v9985 = vmul.f32 %v9940, %v9962
    %v9986 = vmul.f32 %v9941, %v9966
    %v9987 = vmul.f32 %v9942, %v9962
    %v9988 = vmul.f32 %v9943, %v9966
    %v9989 = vmul.f32 %v9944, %v9962
    %v9990 = vmul.f32 %v9945, %v9966
    %v9991 = vmul.f32 %v9946, %v9962
    %v9992 = vmul.f32 %v9947, %v9966
    %v9993 = vmul.f32 %v9948, %v9962
    %v9994 = vmul.f32 %v9949, %v9966
    %v9995 = vmul.f32 %v9950, %v9962
    %v9996 = vmul.f32 %v9951, %v9966
    %v9997 = vmul.f32 %v9952, %v9962
    %v9998 = vmul.f32 %v9953, %v9966
    %v9999 = vmul.f32 %v9954, %v9962
    %v10000 = vmul.f32 %v9955, %v9966
    %v10001 = vadd.f32 %v9719, %v9969
    %v10002 = vadd.f32 %v9720, %v9970
    %v10003 = vadd.f32 %v9721, %v9971
    %v10004 = vadd.f32 %v9722, %v9972
    %v10005 = vadd.f32 %v9723, %v9973
    %v10006 = vadd.f32 %v9724, %v9974
    %v10007 = vadd.f32 %v9725, %v9975
    %v10008 = vadd.f32 %v9726, %v9976
    %v10009 = vadd.f32 %v9727, %v9977
    %v10010 = vadd.f32 %v9728, %v9978
    %v10011 = vadd.f32 %v9729, %v9979
    %v10012 = vadd.f32 %v9730, %v9980
    %v10013 = vadd.f32 %v9731, %v9981
    %v10014 = vadd.f32 %v9732, %v9982
    %v10015 = vadd.f32 %v9733, %v9983
    %v10016 = vadd.f32 %v9734, %v9984
    %v10017 = vadd.f32 %v9735, %v9985
    %v10018 = vadd.f32 %v9736, %v9986
    %v10019 = vadd.f32 %v9737, %v9987
    %v10020 = vadd.f32 %v9738, %v9988
    %v10021 = vadd.f32 %v9739, %v9989
    %v10022 = vadd.f32 %v9740, %v9990
    %v10023 = vadd.f32 %v9741, %v9991
    %v10024 = vadd.f32 %v9742, %v9992
    %v10025 = vadd.f32 %v9743, %v9993
    %v10026 = vadd.f32 %v9744, %v9994
    %v10027 = vadd.f32 %v9745, %v9995
    %v10028 = vadd.f32 %v9746, %v9996
    %v10029 = vadd.f32 %v9747, %v9997
    %v10030 = vadd.f32 %v9748, %v9998
    %v10031 = vadd.f32 %v9749, %v9999
    %v10032 = vadd.f32 %v9750, %v10000
    %v10033 = vld [vmem:[%s6930] sm:$0xff]
    %v10034 = vld [vmem:[%s6930 + $0x8] sm:$0xff]
    %v10035 = vld [vmem:[%s6930 + $0x10] sm:$0xff]
    %v10036 = vld [vmem:[%s6930 + $0x18] sm:$0xff]
    %v10037 = vld [vmem:[%s6930 + $0x20] sm:$0xff]
    %v10038 = vld [vmem:[%s6930 + $0x28] sm:$0xff]
    %v10039 = vld [vmem:[%s6930 + $0x30] sm:$0xff]
    %v10040 = vld [vmem:[%s6930 + $0x38] sm:$0xff]
    %v10041 = vld [vmem:[%s6930 + $0x40] sm:$0xff]
    %v10042 = vld [vmem:[%s6930 + $0x48] sm:$0xff]
    %v10043 = vld [vmem:[%s6930 + $0x50] sm:$0xff]
    %v10044 = vld [vmem:[%s6930 + $0x58] sm:$0xff]
    %v10045 = vld [vmem:[%s6930 + $0x60] sm:$0xff]
    %v10046 = vld [vmem:[%s6930 + $0x68] sm:$0xff]
    %v10047 = vld [vmem:[%s6930 + $0x70] sm:$0xff]
    %v10048 = vld [vmem:[%s6930 + $0x78] sm:$0xff]
    %10050 = vset.pattern.permute.xlu0 0
    %10051 = vperm.xlu0 %10050, %v10033
    %v10052 = vpop.permute.xlu0 %10051
    %10055 = vset.pattern.permute.xlu0 0
    %10056 = vperm.xlu0 %10055, %v10034
    %v10057 = vpop.permute.xlu0 %10056
    %10060 = vset.pattern.permute.xlu0 0
    %10061 = vperm.xlu0 %10060, %v10035
    %v10062 = vpop.permute.xlu0 %10061
    %10065 = vset.pattern.permute.xlu0 0
    %10066 = vperm.xlu0 %10065, %v10036
    %v10067 = vpop.permute.xlu0 %10066
    %10070 = vset.pattern.permute.xlu0 0
    %10071 = vperm.xlu0 %10070, %v10037
    %v10072 = vpop.permute.xlu0 %10071
    %10075 = vset.pattern.permute.xlu0 0
    %10076 = vperm.xlu0 %10075, %v10038
    %v10077 = vpop.permute.xlu0 %10076
    %10080 = vset.pattern.permute.xlu0 0
    %10081 = vperm.xlu0 %10080, %v10039
    %v10082 = vpop.permute.xlu0 %10081
    %10085 = vset.pattern.permute.xlu0 0
    %10086 = vperm.xlu0 %10085, %v10040
    %v10087 = vpop.permute.xlu0 %10086
    %10090 = vset.pattern.permute.xlu0 0
    %10091 = vperm.xlu0 %10090, %v10041
    %v10092 = vpop.permute.xlu0 %10091
    %10095 = vset.pattern.permute.xlu0 0
    %10096 = vperm.xlu0 %10095, %v10042
    %v10097 = vpop.permute.xlu0 %10096
    %10100 = vset.pattern.permute.xlu0 0
    %10101 = vperm.xlu0 %10100, %v10043
    %v10102 = vpop.permute.xlu0 %10101
    %10105 = vset.pattern.permute.xlu0 0
    %10106 = vperm.xlu0 %10105, %v10044
    %v10107 = vpop.permute.xlu0 %10106
    %10110 = vset.pattern.permute.xlu0 0
    %10111 = vperm.xlu0 %10110, %v10045
    %v10112 = vpop.permute.xlu0 %10111
    %10115 = vset.pattern.permute.xlu0 0
    %10116 = vperm.xlu0 %10115, %v10046
    %v10117 = vpop.permute.xlu0 %10116
    %10120 = vset.pattern.permute.xlu0 0
    %10121 = vperm.xlu0 %10120, %v10047
    %v10122 = vpop.permute.xlu0 %10121
    %10125 = vset.pattern.permute.xlu0 0
    %10126 = vperm.xlu0 %10125, %v10048
    %v10127 = vpop.permute.xlu0 %10126
    %v10129 = vmul.f32 %v8864, %v10052
    %v10130 = vmul.f32 %v8865, %v10052
    %v10131 = vmul.f32 %v8862, %v10057
    %v10132 = vmul.f32 %v8863, %v10057
    %v10133 = vmul.f32 %v8860, %v10062
    %v10134 = vmul.f32 %v8861, %v10062
    %v10135 = vmul.f32 %v8858, %v10067
    %v10136 = vmul.f32 %v8859, %v10067
    %v10137 = vmul.f32 %v8856, %v10072
    %v10138 = vmul.f32 %v8857, %v10072
    %v10139 = vmul.f32 %v8854, %v10077
    %v10140 = vmul.f32 %v8855, %v10077
    %v10141 = vmul.f32 %v8852, %v10082
    %v10142 = vmul.f32 %v8853, %v10082
    %v10143 = vmul.f32 %v8850, %v10087
    %v10144 = vmul.f32 %v8851, %v10087
    %v10145 = vmul.f32 %v8848, %v10092
    %v10146 = vmul.f32 %v8849, %v10092
    %v10147 = vmul.f32 %v8846, %v10097
    %v10148 = vmul.f32 %v8847, %v10097
    %v10149 = vmul.f32 %v8844, %v10102
    %v10150 = vmul.f32 %v8845, %v10102
    %v10151 = vmul.f32 %v8842, %v10107
    %v10152 = vmul.f32 %v8843, %v10107
    %v10153 = vmul.f32 %v8840, %v10112
    %v10154 = vmul.f32 %v8841, %v10112
    %v10155 = vmul.f32 %v8838, %v10117
    %v10156 = vmul.f32 %v8839, %v10117
    %v10157 = vmul.f32 %v8836, %v10122
    %v10158 = vmul.f32 %v8837, %v10122
    %v10159 = vmul.f32 %v8866, %v10127
    %v10160 = vmul.f32 %v8867, %v10127
    %s10161 = scalar_lea.vmem %s19, 12
    %v10162 = vld [vmem:[%s10161] sm:$0x3]
    %v10164 = vlaneseq
    %v10165 = vshrl.u32 %v10164, 7
    %v10166 = vsub.s32 0, %v10165
    %v10167 = vrot.slane %v10162, %v10166
    %v10168 = vlaneseq
    %v10169 = vshrl.u32 %v10168, 7
    %v10170 = vsub.s32 1, %v10169
    %v10171 = vrot.slane %v10162, %v10170
    %v10174 = vmul.f32 %v10129, %v10167
    %v10175 = vmul.f32 %v10130, %v10171
    %v10176 = vmul.f32 %v10131, %v10167
    %v10177 = vmul.f32 %v10132, %v10171
    %v10178 = vmul.f32 %v10133, %v10167
    %v10179 = vmul.f32 %v10134, %v10171
    %v10180 = vmul.f32 %v10135, %v10167
    %v10181 = vmul.f32 %v10136, %v10171
    %v10182 = vmul.f32 %v10137, %v10167
    %v10183 = vmul.f32 %v10138, %v10171
    %v10184 = vmul.f32 %v10139, %v10167
    %v10185 = vmul.f32 %v10140, %v10171
    %v10186 = vmul.f32 %v10141, %v10167
    %v10187 = vmul.f32 %v10142, %v10171
    %v10188 = vmul.f32 %v10143, %v10167
    %v10189 = vmul.f32 %v10144, %v10171
    %v10190 = vmul.f32 %v10145, %v10167
    %v10191 = vmul.f32 %v10146, %v10171
    %v10192 = vmul.f32 %v10147, %v10167
    %v10193 = vmul.f32 %v10148, %v10171
    %v10194 = vmul.f32 %v10149, %v10167
    %v10195 = vmul.f32 %v10150, %v10171
    %v10196 = vmul.f32 %v10151, %v10167
    %v10197 = vmul.f32 %v10152, %v10171
    %v10198 = vmul.f32 %v10153, %v10167
    %v10199 = vmul.f32 %v10154, %v10171
    %v10200 = vmul.f32 %v10155, %v10167
    %v10201 = vmul.f32 %v10156, %v10171
    %v10202 = vmul.f32 %v10157, %v10167
    %v10203 = vmul.f32 %v10158, %v10171
    %v10204 = vmul.f32 %v10159, %v10167
    %v10205 = vmul.f32 %v10160, %v10171
    %v10206 = vadd.f32 %v9796, %v10174
    %v10207 = vadd.f32 %v9797, %v10175
    %v10208 = vadd.f32 %v9798, %v10176
    %v10209 = vadd.f32 %v9799, %v10177
    %v10210 = vadd.f32 %v9800, %v10178
    %v10211 = vadd.f32 %v9801, %v10179
    %v10212 = vadd.f32 %v9802, %v10180
    %v10213 = vadd.f32 %v9803, %v10181
    %v10214 = vadd.f32 %v9804, %v10182
    %v10215 = vadd.f32 %v9805, %v10183
    %v10216 = vadd.f32 %v9806, %v10184
    %v10217 = vadd.f32 %v9807, %v10185
    %v10218 = vadd.f32 %v9808, %v10186
    %v10219 = vadd.f32 %v9809, %v10187
    %v10220 = vadd.f32 %v9810, %v10188
    %v10221 = vadd.f32 %v9811, %v10189
    %v10222 = vadd.f32 %v9812, %v10190
    %v10223 = vadd.f32 %v9813, %v10191
    %v10224 = vadd.f32 %v9814, %v10192
    %v10225 = vadd.f32 %v9815, %v10193
    %v10226 = vadd.f32 %v9816, %v10194
    %v10227 = vadd.f32 %v9817, %v10195
    %v10228 = vadd.f32 %v9818, %v10196
    %v10229 = vadd.f32 %v9819, %v10197
    %v10230 = vadd.f32 %v9820, %v10198
    %v10231 = vadd.f32 %v9821, %v10199
    %v10232 = vadd.f32 %v9822, %v10200
    %v10233 = vadd.f32 %v9823, %v10201
    %v10234 = vadd.f32 %v9824, %v10202
    %v10235 = vadd.f32 %v9825, %v10203
    %v10236 = vadd.f32 %v9826, %v10204
    %v10237 = vadd.f32 %v9827, %v10205
    %v10238 = vld [vmem:[%s7043] sm:$0xff]
    %v10239 = vld [vmem:[%s7043 + $0x8] sm:$0xff]
    %v10240 = vld [vmem:[%s7043 + $0x10] sm:$0xff]
    %v10241 = vld [vmem:[%s7043 + $0x18] sm:$0xff]
    %v10242 = vld [vmem:[%s7043 + $0x20] sm:$0xff]
    %v10243 = vld [vmem:[%s7043 + $0x28] sm:$0xff]
    %v10244 = vld [vmem:[%s7043 + $0x30] sm:$0xff]
    %v10245 = vld [vmem:[%s7043 + $0x38] sm:$0xff]
    %v10246 = vld [vmem:[%s7043 + $0x40] sm:$0xff]
    %v10247 = vld [vmem:[%s7043 + $0x48] sm:$0xff]
    %v10248 = vld [vmem:[%s7043 + $0x50] sm:$0xff]
    %v10249 = vld [vmem:[%s7043 + $0x58] sm:$0xff]
    %v10250 = vld [vmem:[%s7043 + $0x60] sm:$0xff]
    %v10251 = vld [vmem:[%s7043 + $0x68] sm:$0xff]
    %v10252 = vld [vmem:[%s7043 + $0x70] sm:$0xff]
    %v10253 = vld [vmem:[%s7043 + $0x78] sm:$0xff]
    %10255 = vset.pattern.permute.xlu0 0
    %10256 = vperm.xlu0 %10255, %v10238
    %v10257 = vpop.permute.xlu0 %10256
    %10260 = vset.pattern.permute.xlu0 0
    %10261 = vperm.xlu0 %10260, %v10239
    %v10262 = vpop.permute.xlu0 %10261
    %10265 = vset.pattern.permute.xlu0 0
    %10266 = vperm.xlu0 %10265, %v10240
    %v10267 = vpop.permute.xlu0 %10266
    %10270 = vset.pattern.permute.xlu0 0
    %10271 = vperm.xlu0 %10270, %v10241
    %v10272 = vpop.permute.xlu0 %10271
    %10275 = vset.pattern.permute.xlu0 0
    %10276 = vperm.xlu0 %10275, %v10242
    %v10277 = vpop.permute.xlu0 %10276
    %10280 = vset.pattern.permute.xlu0 0
    %10281 = vperm.xlu0 %10280, %v10243
    %v10282 = vpop.permute.xlu0 %10281
    %10285 = vset.pattern.permute.xlu0 0
    %10286 = vperm.xlu0 %10285, %v10244
    %v10287 = vpop.permute.xlu0 %10286
    %10290 = vset.pattern.permute.xlu0 0
    %10291 = vperm.xlu0 %10290, %v10245
    %v10292 = vpop.permute.xlu0 %10291
    %10295 = vset.pattern.permute.xlu0 0
    %10296 = vperm.xlu0 %10295, %v10246
    %v10297 = vpop.permute.xlu0 %10296
    %10300 = vset.pattern.permute.xlu0 0
    %10301 = vperm.xlu0 %10300, %v10247
    %v10302 = vpop.permute.xlu0 %10301
    %10305 = vset.pattern.permute.xlu0 0
    %10306 = vperm.xlu0 %10305, %v10248
    %v10307 = vpop.permute.xlu0 %10306
    %10310 = vset.pattern.permute.xlu0 0
    %10311 = vperm.xlu0 %10310, %v10249
    %v10312 = vpop.permute.xlu0 %10311
    %10315 = vset.pattern.permute.xlu0 0
    %10316 = vperm.xlu0 %10315, %v10250
    %v10317 = vpop.permute.xlu0 %10316
    %10320 = vset.pattern.permute.xlu0 0
    %10321 = vperm.xlu0 %10320, %v10251
    %v10322 = vpop.permute.xlu0 %10321
    %10325 = vset.pattern.permute.xlu0 0
    %10326 = vperm.xlu0 %10325, %v10252
    %v10327 = vpop.permute.xlu0 %10326
    %10330 = vset.pattern.permute.xlu0 0
    %10331 = vperm.xlu0 %10330, %v10253
    %v10332 = vpop.permute.xlu0 %10331
    %v10334 = vmul.f32 %v8774, %v10257
    %v10335 = vmul.f32 %v8775, %v10257
    %v10336 = vmul.f32 %v8776, %v10262
    %v10337 = vmul.f32 %v8777, %v10262
    %v10338 = vmul.f32 %v8778, %v10267
    %v10339 = vmul.f32 %v8779, %v10267
    %v10340 = vmul.f32 %v8780, %v10272
    %v10341 = vmul.f32 %v8781, %v10272
    %v10342 = vmul.f32 %v8782, %v10277
    %v10343 = vmul.f32 %v8783, %v10277
    %v10344 = vmul.f32 %v8784, %v10282
    %v10345 = vmul.f32 %v8785, %v10282
    %v10346 = vmul.f32 %v8786, %v10287
    %v10347 = vmul.f32 %v8787, %v10287
    %v10348 = vmul.f32 %v8788, %v10292
    %v10349 = vmul.f32 %v8789, %v10292
    %v10350 = vmul.f32 %v8790, %v10297
    %v10351 = vmul.f32 %v8791, %v10297
    %v10352 = vmul.f32 %v8792, %v10302
    %v10353 = vmul.f32 %v8793, %v10302
    %v10354 = vmul.f32 %v8794, %v10307
    %v10355 = vmul.f32 %v8795, %v10307
    %v10356 = vmul.f32 %v8796, %v10312
    %v10357 = vmul.f32 %v8797, %v10312
    %v10358 = vmul.f32 %v8798, %v10317
    %v10359 = vmul.f32 %v8799, %v10317
    %v10360 = vmul.f32 %v8800, %v10322
    %v10361 = vmul.f32 %v8801, %v10322
    %v10362 = vmul.f32 %v8802, %v10327
    %v10363 = vmul.f32 %v8803, %v10327
    %v10364 = vmul.f32 %v8772, %v10332
    %v10365 = vmul.f32 %v8773, %v10332
    %s10366 = scalar_lea.vmem %s19, 14
    %v10367 = vld [vmem:[%s10366] sm:$0x3]
    %v10369 = vlaneseq
    %v10370 = vshrl.u32 %v10369, 7
    %v10371 = vsub.s32 0, %v10370
    %v10372 = vrot.slane %v10367, %v10371
    %v10373 = vlaneseq
    %v10374 = vshrl.u32 %v10373, 7
    %v10375 = vsub.s32 1, %v10374
    %v10376 = vrot.slane %v10367, %v10375
    %v10379 = vmul.f32 %v10334, %v10372
    %v10380 = vmul.f32 %v10335, %v10376
    %v10381 = vmul.f32 %v10336, %v10372
    %v10382 = vmul.f32 %v10337, %v10376
    %v10383 = vmul.f32 %v10338, %v10372
    %v10384 = vmul.f32 %v10339, %v10376
    %v10385 = vmul.f32 %v10340, %v10372
    %v10386 = vmul.f32 %v10341, %v10376
    %v10387 = vmul.f32 %v10342, %v10372
    %v10388 = vmul.f32 %v10343, %v10376
    %v10389 = vmul.f32 %v10344, %v10372
    %v10390 = vmul.f32 %v10345, %v10376
    %v10391 = vmul.f32 %v10346, %v10372
    %v10392 = vmul.f32 %v10347, %v10376
    %v10393 = vmul.f32 %v10348, %v10372
    %v10394 = vmul.f32 %v10349, %v10376
    %v10395 = vmul.f32 %v10350, %v10372
    %v10396 = vmul.f32 %v10351, %v10376
    %v10397 = vmul.f32 %v10352, %v10372
    %v10398 = vmul.f32 %v10353, %v10376
    %v10399 = vmul.f32 %v10354, %v10372
    %v10400 = vmul.f32 %v10355, %v10376
    %v10401 = vmul.f32 %v10356, %v10372
    %v10402 = vmul.f32 %v10357, %v10376
    %v10403 = vmul.f32 %v10358, %v10372
    %v10404 = vmul.f32 %v10359, %v10376
    %v10405 = vmul.f32 %v10360, %v10372
    %v10406 = vmul.f32 %v10361, %v10376
    %v10407 = vmul.f32 %v10362, %v10372
    %v10408 = vmul.f32 %v10363, %v10376
    %v10409 = vmul.f32 %v10364, %v10372
    %v10410 = vmul.f32 %v10365, %v10376
    %v10411 = vadd.f32 %v10001, %v10379
    %v10412 = vadd.f32 %v10002, %v10380
    %v10413 = vadd.f32 %v10003, %v10381
    %v10414 = vadd.f32 %v10004, %v10382
    %v10415 = vadd.f32 %v10005, %v10383
    %v10416 = vadd.f32 %v10006, %v10384
    %v10417 = vadd.f32 %v10007, %v10385
    %v10418 = vadd.f32 %v10008, %v10386
    %v10419 = vadd.f32 %v10009, %v10387
    %v10420 = vadd.f32 %v10010, %v10388
    %v10421 = vadd.f32 %v10011, %v10389
    %v10422 = vadd.f32 %v10012, %v10390
    %v10423 = vadd.f32 %v10013, %v10391
    %v10424 = vadd.f32 %v10014, %v10392
    %v10425 = vadd.f32 %v10015, %v10393
    %v10426 = vadd.f32 %v10016, %v10394
    %v10427 = vadd.f32 %v10017, %v10395
    %v10428 = vadd.f32 %v10018, %v10396
    %v10429 = vadd.f32 %v10019, %v10397
    %v10430 = vadd.f32 %v10020, %v10398
    %v10431 = vadd.f32 %v10021, %v10399
    %v10432 = vadd.f32 %v10022, %v10400
    %v10433 = vadd.f32 %v10023, %v10401
    %v10434 = vadd.f32 %v10024, %v10402
    %v10435 = vadd.f32 %v10025, %v10403
    %v10436 = vadd.f32 %v10026, %v10404
    %v10437 = vadd.f32 %v10027, %v10405
    %v10438 = vadd.f32 %v10028, %v10406
    %v10439 = vadd.f32 %v10029, %v10407
    %v10440 = vadd.f32 %v10030, %v10408
    %v10441 = vadd.f32 %v10031, %v10409
    %v10442 = vadd.f32 %v10032, %v10410
    %v10443 = vld [vmem:[%s7156] sm:$0xff]
    %v10444 = vld [vmem:[%s7156 + $0x8] sm:$0xff]
    %v10445 = vld [vmem:[%s7156 + $0x10] sm:$0xff]
    %v10446 = vld [vmem:[%s7156 + $0x18] sm:$0xff]
    %v10447 = vld [vmem:[%s7156 + $0x20] sm:$0xff]
    %v10448 = vld [vmem:[%s7156 + $0x28] sm:$0xff]
    %v10449 = vld [vmem:[%s7156 + $0x30] sm:$0xff]
    %v10450 = vld [vmem:[%s7156 + $0x38] sm:$0xff]
    %v10451 = vld [vmem:[%s7156 + $0x40] sm:$0xff]
    %v10452 = vld [vmem:[%s7156 + $0x48] sm:$0xff]
    %v10453 = vld [vmem:[%s7156 + $0x50] sm:$0xff]
    %v10454 = vld [vmem:[%s7156 + $0x58] sm:$0xff]
    %v10455 = vld [vmem:[%s7156 + $0x60] sm:$0xff]
    %v10456 = vld [vmem:[%s7156 + $0x68] sm:$0xff]
    %v10457 = vld [vmem:[%s7156 + $0x70] sm:$0xff]
    %v10458 = vld [vmem:[%s7156 + $0x78] sm:$0xff]
    %10460 = vset.pattern.permute.xlu0 0
    %10461 = vperm.xlu0 %10460, %v10443
    %v10462 = vpop.permute.xlu0 %10461
    %10465 = vset.pattern.permute.xlu0 0
    %10466 = vperm.xlu0 %10465, %v10444
    %v10467 = vpop.permute.xlu0 %10466
    %10470 = vset.pattern.permute.xlu0 0
    %10471 = vperm.xlu0 %10470, %v10445
    %v10472 = vpop.permute.xlu0 %10471
    %10475 = vset.pattern.permute.xlu0 0
    %10476 = vperm.xlu0 %10475, %v10446
    %v10477 = vpop.permute.xlu0 %10476
    %10480 = vset.pattern.permute.xlu0 0
    %10481 = vperm.xlu0 %10480, %v10447
    %v10482 = vpop.permute.xlu0 %10481
    %10485 = vset.pattern.permute.xlu0 0
    %10486 = vperm.xlu0 %10485, %v10448
    %v10487 = vpop.permute.xlu0 %10486
    %10490 = vset.pattern.permute.xlu0 0
    %10491 = vperm.xlu0 %10490, %v10449
    %v10492 = vpop.permute.xlu0 %10491
    %10495 = vset.pattern.permute.xlu0 0
    %10496 = vperm.xlu0 %10495, %v10450
    %v10497 = vpop.permute.xlu0 %10496
    %10500 = vset.pattern.permute.xlu0 0
    %10501 = vperm.xlu0 %10500, %v10451
    %v10502 = vpop.permute.xlu0 %10501
    %10505 = vset.pattern.permute.xlu0 0
    %10506 = vperm.xlu0 %10505, %v10452
    %v10507 = vpop.permute.xlu0 %10506
    %10510 = vset.pattern.permute.xlu0 0
    %10511 = vperm.xlu0 %10510, %v10453
    %v10512 = vpop.permute.xlu0 %10511
    %10515 = vset.pattern.permute.xlu0 0
    %10516 = vperm.xlu0 %10515, %v10454
    %v10517 = vpop.permute.xlu0 %10516
    %10520 = vset.pattern.permute.xlu0 0
    %10521 = vperm.xlu0 %10520, %v10455
    %v10522 = vpop.permute.xlu0 %10521
    %10525 = vset.pattern.permute.xlu0 0
    %10526 = vperm.xlu0 %10525, %v10456
    %v10527 = vpop.permute.xlu0 %10526
    %10530 = vset.pattern.permute.xlu0 0
    %10531 = vperm.xlu0 %10530, %v10457
    %v10532 = vpop.permute.xlu0 %10531
    %10535 = vset.pattern.permute.xlu0 0
    %10536 = vperm.xlu0 %10535, %v10458
    %v10537 = vpop.permute.xlu0 %10536
    %v10539 = vmul.f32 %v9335, %v10462
    %v10540 = vmul.f32 %v9336, %v10462
    %v10541 = vmul.f32 %v9333, %v10467
    %v10542 = vmul.f32 %v9334, %v10467
    %v10543 = vmul.f32 %v9331, %v10472
    %v10544 = vmul.f32 %v9332, %v10472
    %v10545 = vmul.f32 %v9329, %v10477
    %v10546 = vmul.f32 %v9330, %v10477
    %v10547 = vmul.f32 %v9327, %v10482
    %v10548 = vmul.f32 %v9328, %v10482
    %v10549 = vmul.f32 %v9325, %v10487
    %v10550 = vmul.f32 %v9326, %v10487
    %v10551 = vmul.f32 %v9323, %v10492
    %v10552 = vmul.f32 %v9324, %v10492
    %v10553 = vmul.f32 %v9321, %v10497
    %v10554 = vmul.f32 %v9322, %v10497
    %v10555 = vmul.f32 %v9319, %v10502
    %v10556 = vmul.f32 %v9320, %v10502
    %v10557 = vmul.f32 %v9317, %v10507
    %v10558 = vmul.f32 %v9318, %v10507
    %v10559 = vmul.f32 %v9315, %v10512
    %v10560 = vmul.f32 %v9316, %v10512
    %v10561 = vmul.f32 %v9313, %v10517
    %v10562 = vmul.f32 %v9314, %v10517
    %v10563 = vmul.f32 %v9311, %v10522
    %v10564 = vmul.f32 %v9312, %v10522
    %v10565 = vmul.f32 %v9309, %v10527
    %v10566 = vmul.f32 %v9310, %v10527
    %v10567 = vmul.f32 %v9339, %v10532
    %v10568 = vmul.f32 %v9340, %v10532
    %v10569 = vmul.f32 %v9337, %v10537
    %v10570 = vmul.f32 %v9338, %v10537
    %s10571 = scalar_lea.vmem %s19, 16
    %v10572 = vld [vmem:[%s10571] sm:$0x3]
    %v10574 = vlaneseq
    %v10575 = vshrl.u32 %v10574, 7
    %v10576 = vsub.s32 0, %v10575
    %v10577 = vrot.slane %v10572, %v10576
    %v10578 = vlaneseq
    %v10579 = vshrl.u32 %v10578, 7
    %v10580 = vsub.s32 1, %v10579
    %v10581 = vrot.slane %v10572, %v10580
    %v10584 = vmul.f32 %v10539, %v10577
    %v10585 = vmul.f32 %v10540, %v10581
    %v10586 = vmul.f32 %v10541, %v10577
    %v10587 = vmul.f32 %v10542, %v10581
    %v10588 = vmul.f32 %v10543, %v10577
    %v10589 = vmul.f32 %v10544, %v10581
    %v10590 = vmul.f32 %v10545, %v10577
    %v10591 = vmul.f32 %v10546, %v10581
    %v10592 = vmul.f32 %v10547, %v10577
    %v10593 = vmul.f32 %v10548, %v10581
    %v10594 = vmul.f32 %v10549, %v10577
    %v10595 = vmul.f32 %v10550, %v10581
    %v10596 = vmul.f32 %v10551, %v10577
    %v10597 = vmul.f32 %v10552, %v10581
    %v10598 = vmul.f32 %v10553, %v10577
    %v10599 = vmul.f32 %v10554, %v10581
    %v10600 = vmul.f32 %v10555, %v10577
    %v10601 = vmul.f32 %v10556, %v10581
    %v10602 = vmul.f32 %v10557, %v10577
    %v10603 = vmul.f32 %v10558, %v10581
    %v10604 = vmul.f32 %v10559, %v10577
    %v10605 = vmul.f32 %v10560, %v10581
    %v10606 = vmul.f32 %v10561, %v10577
    %v10607 = vmul.f32 %v10562, %v10581
    %v10608 = vmul.f32 %v10563, %v10577
    %v10609 = vmul.f32 %v10564, %v10581
    %v10610 = vmul.f32 %v10565, %v10577
    %v10611 = vmul.f32 %v10566, %v10581
    %v10612 = vmul.f32 %v10567, %v10577
    %v10613 = vmul.f32 %v10568, %v10581
    %v10614 = vmul.f32 %v10569, %v10577
    %v10615 = vmul.f32 %v10570, %v10581
    %v10616 = vadd.f32 %v10206, %v10584
    %v10617 = vadd.f32 %v10207, %v10585
    %v10618 = vadd.f32 %v10208, %v10586
    %v10619 = vadd.f32 %v10209, %v10587
    %v10620 = vadd.f32 %v10210, %v10588
    %v10621 = vadd.f32 %v10211, %v10589
    %v10622 = vadd.f32 %v10212, %v10590
    %v10623 = vadd.f32 %v10213, %v10591
    %v10624 = vadd.f32 %v10214, %v10592
    %v10625 = vadd.f32 %v10215, %v10593
    %v10626 = vadd.f32 %v10216, %v10594
    %v10627 = vadd.f32 %v10217, %v10595
    %v10628 = vadd.f32 %v10218, %v10596
    %v10629 = vadd.f32 %v10219, %v10597
    %v10630 = vadd.f32 %v10220, %v10598
    %v10631 = vadd.f32 %v10221, %v10599
    %v10632 = vadd.f32 %v10222, %v10600
    %v10633 = vadd.f32 %v10223, %v10601
    %v10634 = vadd.f32 %v10224, %v10602
    %v10635 = vadd.f32 %v10225, %v10603
    %v10636 = vadd.f32 %v10226, %v10604
    %v10637 = vadd.f32 %v10227, %v10605
    %v10638 = vadd.f32 %v10228, %v10606
    %v10639 = vadd.f32 %v10229, %v10607
    %v10640 = vadd.f32 %v10230, %v10608
    %v10641 = vadd.f32 %v10231, %v10609
    %v10642 = vadd.f32 %v10232, %v10610
    %v10643 = vadd.f32 %v10233, %v10611
    %v10644 = vadd.f32 %v10234, %v10612
    %v10645 = vadd.f32 %v10235, %v10613
    %v10646 = vadd.f32 %v10236, %v10614
    %v10647 = vadd.f32 %v10237, %v10615
    %v10648 = vadd.f32 %v10616, %v10411
    %v10649 = vadd.f32 %v10617, %v10412
    %v10650 = vadd.f32 %v10618, %v10413
    %v10651 = vadd.f32 %v10619, %v10414
    %v10652 = vadd.f32 %v10620, %v10415
    %v10653 = vadd.f32 %v10621, %v10416
    %v10654 = vadd.f32 %v10622, %v10417
    %v10655 = vadd.f32 %v10623, %v10418
    %v10656 = vadd.f32 %v10624, %v10419
    %v10657 = vadd.f32 %v10625, %v10420
    %v10658 = vadd.f32 %v10626, %v10421
    %v10659 = vadd.f32 %v10627, %v10422
    %v10660 = vadd.f32 %v10628, %v10423
    %v10661 = vadd.f32 %v10629, %v10424
    %v10662 = vadd.f32 %v10630, %v10425
    %v10663 = vadd.f32 %v10631, %v10426
    %v10664 = vadd.f32 %v10632, %v10427
    %v10665 = vadd.f32 %v10633, %v10428
    %v10666 = vadd.f32 %v10634, %v10429
    %v10667 = vadd.f32 %v10635, %v10430
    %v10668 = vadd.f32 %v10636, %v10431
    %v10669 = vadd.f32 %v10637, %v10432
    %v10670 = vadd.f32 %v10638, %v10433
    %v10671 = vadd.f32 %v10639, %v10434
    %v10672 = vadd.f32 %v10640, %v10435
    %v10673 = vadd.f32 %v10641, %v10436
    %v10674 = vadd.f32 %v10642, %v10437
    %v10675 = vadd.f32 %v10643, %v10438
    %v10676 = vadd.f32 %v10644, %v10439
    %v10677 = vadd.f32 %v10645, %v10440
    %v10678 = vadd.f32 %v10646, %v10441
    %v10679 = vadd.f32 %v10647, %v10442
    %v10680 = vld [vmem:[%s20] sm:$0x3]
    %v10682 = vlaneseq
    %v10683 = vshrl.u32 %v10682, 7
    %v10684 = vsub.s32 0, %v10683
    %v10685 = vrot.slane %v10680, %v10684
    %v10686 = vlaneseq
    %v10687 = vshrl.u32 %v10686, 7
    %v10688 = vsub.s32 1, %v10687
    %v10689 = vrot.slane %v10680, %v10688
    %v10692 = vadd.f32 %v10648, %v10685
    %v10693 = vadd.f32 %v10649, %v10689
    %v10694 = vadd.f32 %v10650, %v10685
    %v10695 = vadd.f32 %v10651, %v10689
    %v10696 = vadd.f32 %v10652, %v10685
    %v10697 = vadd.f32 %v10653, %v10689
    %v10698 = vadd.f32 %v10654, %v10685
    %v10699 = vadd.f32 %v10655, %v10689
    %v10700 = vadd.f32 %v10656, %v10685
    %v10701 = vadd.f32 %v10657, %v10689
    %v10702 = vadd.f32 %v10658, %v10685
    %v10703 = vadd.f32 %v10659, %v10689
    %v10704 = vadd.f32 %v10660, %v10685
    %v10705 = vadd.f32 %v10661, %v10689
    %v10706 = vadd.f32 %v10662, %v10685
    %v10707 = vadd.f32 %v10663, %v10689
    %v10708 = vadd.f32 %v10664, %v10685
    %v10709 = vadd.f32 %v10665, %v10689
    %v10710 = vadd.f32 %v10666, %v10685
    %v10711 = vadd.f32 %v10667, %v10689
    %v10712 = vadd.f32 %v10668, %v10685
    %v10713 = vadd.f32 %v10669, %v10689
    %v10714 = vadd.f32 %v10670, %v10685
    %v10715 = vadd.f32 %v10671, %v10689
    %v10716 = vadd.f32 %v10672, %v10685
    %v10717 = vadd.f32 %v10673, %v10689
    %v10718 = vadd.f32 %v10674, %v10685
    %v10719 = vadd.f32 %v10675, %v10689
    %v10720 = vadd.f32 %v10676, %v10685
    %v10721 = vadd.f32 %v10677, %v10689
    %v10722 = vadd.f32 %v10678, %v10685
    %v10723 = vadd.f32 %v10679, %v10689
    %v10724 = vadd.f32 %v10692, 3.0
    %v10725 = vadd.f32 %v10693, 3.0
    %v10726 = vadd.f32 %v10694, 3.0
    %v10727 = vadd.f32 %v10695, 3.0
    %v10728 = vadd.f32 %v10696, 3.0
    %v10729 = vadd.f32 %v10697, 3.0
    %v10730 = vadd.f32 %v10698, 3.0
    %v10731 = vadd.f32 %v10699, 3.0
    %v10732 = vadd.f32 %v10700, 3.0
    %v10733 = vadd.f32 %v10701, 3.0
    %v10734 = vadd.f32 %v10702, 3.0
    %v10735 = vadd.f32 %v10703, 3.0
    %v10736 = vadd.f32 %v10704, 3.0
    %v10737 = vadd.f32 %v10705, 3.0
    %v10738 = vadd.f32 %v10706, 3.0
    %v10739 = vadd.f32 %v10707, 3.0
    %v10740 = vadd.f32 %v10708, 3.0
    %v10741 = vadd.f32 %v10709, 3.0
    %v10742 = vadd.f32 %v10710, 3.0
    %v10743 = vadd.f32 %v10711, 3.0
    %v10744 = vadd.f32 %v10712, 3.0
    %v10745 = vadd.f32 %v10713, 3.0
    %v10746 = vadd.f32 %v10714, 3.0
    %v10747 = vadd.f32 %v10715, 3.0
    %v10748 = vadd.f32 %v10716, 3.0
    %v10749 = vadd.f32 %v10717, 3.0
    %v10750 = vadd.f32 %v10718, 3.0
    %v10751 = vadd.f32 %v10719, 3.0
    %v10752 = vadd.f32 %v10720, 3.0
    %v10753 = vadd.f32 %v10721, 3.0
    %v10754 = vadd.f32 %v10722, 3.0
    %v10755 = vadd.f32 %v10723, 3.0
    %v10756 = vmax.f32 %v10724, 0.0
    %v10757 = vmax.f32 %v10725, 0.0
    %v10758 = vmax.f32 %v10726, 0.0
    %v10759 = vmax.f32 %v10727, 0.0
    %v10760 = vmax.f32 %v10728, 0.0
    %v10761 = vmax.f32 %v10729, 0.0
    %v10762 = vmax.f32 %v10730, 0.0
    %v10763 = vmax.f32 %v10731, 0.0
    %v10764 = vmax.f32 %v10732, 0.0
    %v10765 = vmax.f32 %v10733, 0.0
    %v10766 = vmax.f32 %v10734, 0.0
    %v10767 = vmax.f32 %v10735, 0.0
    %v10768 = vmax.f32 %v10736, 0.0
    %v10769 = vmax.f32 %v10737, 0.0
    %v10770 = vmax.f32 %v10738, 0.0
    %v10771 = vmax.f32 %v10739, 0.0
    %v10772 = vmax.f32 %v10740, 0.0
    %v10773 = vmax.f32 %v10741, 0.0
    %v10774 = vmax.f32 %v10742, 0.0
    %v10775 = vmax.f32 %v10743, 0.0
    %v10776 = vmax.f32 %v10744, 0.0
    %v10777 = vmax.f32 %v10745, 0.0
    %v10778 = vmax.f32 %v10746, 0.0
    %v10779 = vmax.f32 %v10747, 0.0
    %v10780 = vmax.f32 %v10748, 0.0
    %v10781 = vmax.f32 %v10749, 0.0
    %v10782 = vmax.f32 %v10750, 0.0
    %v10783 = vmax.f32 %v10751, 0.0
    %v10784 = vmax.f32 %v10752, 0.0
    %v10785 = vmax.f32 %v10753, 0.0
    %v10786 = vmax.f32 %v10754, 0.0
    %v10787 = vmax.f32 %v10755, 0.0
    %v10788 = vmin.f32 %v10756, 6.0
    %v10789 = vmin.f32 %v10757, 6.0
    %v10790 = vmin.f32 %v10758, 6.0
    %v10791 = vmin.f32 %v10759, 6.0
    %v10792 = vmin.f32 %v10760, 6.0
    %v10793 = vmin.f32 %v10761, 6.0
    %v10794 = vmin.f32 %v10762, 6.0
    %v10795 = vmin.f32 %v10763, 6.0
    %v10796 = vmin.f32 %v10764, 6.0
    %v10797 = vmin.f32 %v10765, 6.0
    %v10798 = vmin.f32 %v10766, 6.0
    %v10799 = vmin.f32 %v10767, 6.0
    %v10800 = vmin.f32 %v10768, 6.0
    %v10801 = vmin.f32 %v10769, 6.0
    %v10802 = vmin.f32 %v10770, 6.0
    %v10803 = vmin.f32 %v10771, 6.0
    %v10804 = vmin.f32 %v10772, 6.0
    %v10805 = vmin.f32 %v10773, 6.0
    %v10806 = vmin.f32 %v10774, 6.0
    %v10807 = vmin.f32 %v10775, 6.0
    %v10808 = vmin.f32 %v10776, 6.0
    %v10809 = vmin.f32 %v10777, 6.0
    %v10810 = vmin.f32 %v10778, 6.0
    %v10811 = vmin.f32 %v10779, 6.0
    %v10812 = vmin.f32 %v10780, 6.0
    %v10813 = vmin.f32 %v10781, 6.0
    %v10814 = vmin.f32 %v10782, 6.0
    %v10815 = vmin.f32 %v10783, 6.0
    %v10816 = vmin.f32 %v10784, 6.0
    %v10817 = vmin.f32 %v10785, 6.0
    %v10818 = vmin.f32 %v10786, 6.0
    %v10819 = vmin.f32 %v10787, 6.0
    %v10820 = vmul.f32 %v10788, 0.16666667
    %v10821 = vmul.f32 %v10789, 0.16666667
    %v10822 = vmul.f32 %v10790, 0.16666667
    %v10823 = vmul.f32 %v10791, 0.16666667
    %v10824 = vmul.f32 %v10792, 0.16666667
    %v10825 = vmul.f32 %v10793, 0.16666667
    %v10826 = vmul.f32 %v10794, 0.16666667
    %v10827 = vmul.f32 %v10795, 0.16666667
    %v10828 = vmul.f32 %v10796, 0.16666667
    %v10829 = vmul.f32 %v10797, 0.16666667
    %v10830 = vmul.f32 %v10798, 0.16666667
    %v10831 = vmul.f32 %v10799, 0.16666667
    %v10832 = vmul.f32 %v10800, 0.16666667
    %v10833 = vmul.f32 %v10801, 0.16666667
    %v10834 = vmul.f32 %v10802, 0.16666667
    %v10835 = vmul.f32 %v10803, 0.16666667
    %v10836 = vmul.f32 %v10804, 0.16666667
    %v10837 = vmul.f32 %v10805, 0.16666667
    %v10838 = vmul.f32 %v10806, 0.16666667
    %v10839 = vmul.f32 %v10807, 0.16666667
    %v10840 = vmul.f32 %v10808, 0.16666667
    %v10841 = vmul.f32 %v10809, 0.16666667
    %v10842 = vmul.f32 %v10810, 0.16666667
    %v10843 = vmul.f32 %v10811, 0.16666667
    %v10844 = vmul.f32 %v10812, 0.16666667
    %v10845 = vmul.f32 %v10813, 0.16666667
    %v10846 = vmul.f32 %v10814, 0.16666667
    %v10847 = vmul.f32 %v10815, 0.16666667
    %v10848 = vmul.f32 %v10816, 0.16666667
    %v10849 = vmul.f32 %v10817, 0.16666667
    %v10850 = vmul.f32 %v10818, 0.16666667
    %v10851 = vmul.f32 %v10819, 0.16666667
    %v10852 = vmul.f32 %v10692, %v10820
    %v10853 = vmul.f32 %v10693, %v10821
    %v10854 = vmul.f32 %v10694, %v10822
    %v10855 = vmul.f32 %v10695, %v10823
    %v10856 = vmul.f32 %v10696, %v10824
    %v10857 = vmul.f32 %v10697, %v10825
    %v10858 = vmul.f32 %v10698, %v10826
    %v10859 = vmul.f32 %v10699, %v10827
    %v10860 = vmul.f32 %v10700, %v10828
    %v10861 = vmul.f32 %v10701, %v10829
    %v10862 = vmul.f32 %v10702, %v10830
    %v10863 = vmul.f32 %v10703, %v10831
    %v10864 = vmul.f32 %v10704, %v10832
    %v10865 = vmul.f32 %v10705, %v10833
    %v10866 = vmul.f32 %v10706, %v10834
    %v10867 = vmul.f32 %v10707, %v10835
    %v10868 = vmul.f32 %v10708, %v10836
    %v10869 = vmul.f32 %v10709, %v10837
    %v10870 = vmul.f32 %v10710, %v10838
    %v10871 = vmul.f32 %v10711, %v10839
    %v10872 = vmul.f32 %v10712, %v10840
    %v10873 = vmul.f32 %v10713, %v10841
    %v10874 = vmul.f32 %v10714, %v10842
    %v10875 = vmul.f32 %v10715, %v10843
    %v10876 = vmul.f32 %v10716, %v10844
    %v10877 = vmul.f32 %v10717, %v10845
    %v10878 = vmul.f32 %v10718, %v10846
    %v10879 = vmul.f32 %v10719, %v10847
    %v10880 = vmul.f32 %v10720, %v10848
    %v10881 = vmul.f32 %v10721, %v10849
    %v10882 = vmul.f32 %v10722, %v10850
    %v10883 = vmul.f32 %v10723, %v10851
    %v10884 = vadd.f32 %v10852, %v10854
    %v10885 = vadd.f32 %v10884, %v10856
    %v10886 = vadd.f32 %v10885, %v10858
    %v10887 = vadd.f32 %v10886, %v10860
    %v10888 = vadd.f32 %v10887, %v10862
    %v10889 = vadd.f32 %v10888, %v10864
    %v10890 = vadd.f32 %v10889, %v10866
    %v10891 = vrot.slane %v10890, 4
    %v10892 = vadd.f32 %v10890, %v10891
    %v10893 = vrot.slane %v10892, 2
    %v10894 = vadd.f32 %v10892, %v10893
    %v10895 = vrot.slane %v10894, 1
    %v10896 = vadd.f32 %v10894, %v10895
    %v10897 = vadd.f32 %v10853, %v10855
    %v10898 = vadd.f32 %v10897, %v10857
    %v10899 = vadd.f32 %v10898, %v10859
    %v10900 = vadd.f32 %v10899, %v10861
    %v10901 = vadd.f32 %v10900, %v10863
    %v10902 = vadd.f32 %v10901, %v10865
    %v10903 = vadd.f32 %v10902, %v10867
    %v10904 = vrot.slane %v10903, 4
    %v10905 = vadd.f32 %v10903, %v10904
    %v10906 = vrot.slane %v10905, 2
    %v10907 = vadd.f32 %v10905, %v10906
    %v10908 = vrot.slane %v10907, 1
    %v10909 = vadd.f32 %v10907, %v10908
    %v10910 = vadd.f32 %v10868, %v10870
    %v10911 = vadd.f32 %v10910, %v10872
    %v10912 = vadd.f32 %v10911, %v10874
    %v10913 = vadd.f32 %v10912, %v10876
    %v10914 = vadd.f32 %v10913, %v10878
    %v10915 = vadd.f32 %v10914, %v10880
    %v10916 = vadd.f32 %v10915, %v10882
    %v10917 = vrot.slane %v10916, 4
    %v10918 = vadd.f32 %v10916, %v10917
    %v10919 = vrot.slane %v10918, 2
    %v10920 = vadd.f32 %v10918, %v10919
    %v10921 = vrot.slane %v10920, 1
    %v10922 = vadd.f32 %v10920, %v10921
    %v10923 = vadd.f32 %v10869, %v10871
    %v10924 = vadd.f32 %v10923, %v10873
    %v10925 = vadd.f32 %v10924, %v10875
    %v10926 = vadd.f32 %v10925, %v10877
    %v10927 = vadd.f32 %v10926, %v10879
    %v10928 = vadd.f32 %v10927, %v10881
    %v10929 = vadd.f32 %v10928, %v10883
    %v10930 = vrot.slane %v10929, 4
    %v10931 = vadd.f32 %v10929, %v10930
    %v10932 = vrot.slane %v10931, 2
    %v10933 = vadd.f32 %v10931, %v10932
    %v10934 = vrot.slane %v10933, 1
    %v10935 = vadd.f32 %v10933, %v10934
    %v10936 = vrcp.pop 64.0
    %v10937 = vmul.f32 %v10896, %v10936
    %v10938 = vmul.f32 %v10909, %v10936
    %v10939 = vmul.f32 %v10922, %v10936
    %v10940 = vmul.f32 %v10935, %v10936
    %v10941 = vld [vmem:[%s21] sm:$0x3]
    %v10943 = vlaneseq
    %v10944 = vshrl.u32 %v10943, 7
    %v10945 = vsub.s32 0, %v10944
    %v10946 = vrot.slane %v10941, %v10945
    %v10947 = vlaneseq
    %v10948 = vshrl.u32 %v10947, 7
    %v10949 = vsub.s32 1, %v10948
    %v10950 = vrot.slane %v10941, %v10949
    %v10953 = vmul.f32 %v10937, %v10946
    %v10954 = vmul.f32 %v10938, %v10950
    %v10955 = vmul.f32 %v10939, %v10946
    %v10956 = vmul.f32 %v10940, %v10950
    %v10961 = vrot.slane %v10955, 7
    %vm10962 = vcmask 1041409
    %v10963 = vsel %vm10962, %v10961, %v10953
    %v10964 = vrot.slane %v10956, 7
    %v10965 = vsel %vm10962, %v10964, %v10954
    %vm10968 = vcmask 1041408
    %v10969 = vsel %vm10968, %v10963, 0.0
    %v10970 = vsel %vm10968, %v10965, 0.0
    %v10971 = vadd.f32 %v10969, %v10970
    %10972 = vadd.xlane.f32.xlu0 %v10971
    %v10973 = vpop.xlane.xlu0 %10972
    %v10974 = vld [vmem:[%s22] sm:$0x1]
    %v10976 = vlaneseq
    %v10977 = vshrl.u32 %v10976, 7
    %v10978 = vsub.s32 0, %v10977
    %v10979 = vrot.slane %v10974, %v10978
    %v10981 = vadd.f32 %v10973, %v10979
    %v10982 = vmax.f32 %v10981, 0.0
    %v10983 = vld [vmem:[%s23] sm:$0x3]
    %10985 = vset.pattern.permute.xlu0 0
    %10986 = vperm.xlu0 %10985, %v10982
    %v10987 = vpop.permute.xlu0 %10986
    %v10990 = vlaneseq
    %v10991 = vshrl.u32 %v10990, 7
    %v10992 = vsub.s32 0, %v10991
    %v10993 = vrot.slane %v10983, %v10992
    %v10994 = vlaneseq
    %v10995 = vshrl.u32 %v10994, 7
    %v10996 = vsub.s32 1, %v10995
    %v10997 = vrot.slane %v10983, %v10996
    %v11000 = vmul.f32 %v10987, %v10993
    %v11001 = vmul.f32 %v10987, %v10997
    %v11002 = vadd.f32 %v11000, 0.0
    %v11003 = vadd.f32 %v11001, 0.0
    %s11004 = scalar_lea.vmem %s21, 2
    %v11005 = vld [vmem:[%s11004] sm:$0x3]
    %v11007 = vlaneseq
    %v11008 = vshrl.u32 %v11007, 7
    %v11009 = vsub.s32 0, %v11008
    %v11010 = vrot.slane %v11005, %v11009
    %v11011 = vlaneseq
    %v11012 = vshrl.u32 %v11011, 7
    %v11013 = vsub.s32 1, %v11012
    %v11014 = vrot.slane %v11005, %v11013
    %v11017 = vmul.f32 %v10937, %v11010
    %v11018 = vmul.f32 %v10938, %v11014
    %v11019 = vmul.f32 %v10939, %v11010
    %v11020 = vmul.f32 %v10940, %v11014
    %v11025 = vrot.slane %v11019, 7
    %v11026 = vsel %vm10962, %v11025, %v11017
    %v11027 = vrot.slane %v11020, 7
    %v11028 = vsel %vm10962, %v11027, %v11018
    %v11031 = vsel %vm10968, %v11026, 0.0
    %v11032 = vsel %vm10968, %v11028, 0.0
    %v11033 = vadd.f32 %v11031, %v11032
    %11034 = vadd.xlane.f32.xlu0 %v11033
    %v11035 = vpop.xlane.xlu0 %11034
    %s11036 = scalar_lea.vmem %s22, 1
    %v11037 = vld [vmem:[%s11036] sm:$0x1]
    %v11039 = vlaneseq
    %v11040 = vshrl.u32 %v11039, 7
    %v11041 = vsub.s32 0, %v11040
    %v11042 = vrot.slane %v11037, %v11041
    %v11044 = vadd.f32 %v11035, %v11042
    %v11045 = vmax.f32 %v11044, 0.0
    %s11046 = scalar_lea.vmem %s23, 2
    %v11047 = vld [vmem:[%s11046] sm:$0x3]
    %11049 = vset.pattern.permute.xlu0 0
    %11050 = vperm.xlu0 %11049, %v11045
    %v11051 = vpop.permute.xlu0 %11050
    %v11054 = vlaneseq
    %v11055 = vshrl.u32 %v11054, 7
    %v11056 = vsub.s32 0, %v11055
    %v11057 = vrot.slane %v11047, %v11056
    %v11058 = vlaneseq
    %v11059 = vshrl.u32 %v11058, 7
    %v11060 = vsub.s32 1, %v11059
    %v11061 = vrot.slane %v11047, %v11060
    %v11064 = vmul.f32 %v11051, %v11057
    %v11065 = vmul.f32 %v11051, %v11061
    %v11066 = vadd.f32 %v11002, %v11064
    %v11067 = vadd.f32 %v11003, %v11065
    %v11068 = vld [vmem:[%s24] sm:$0x3]
    %v11070 = vlaneseq
    %v11071 = vshrl.u32 %v11070, 7
    %v11072 = vsub.s32 0, %v11071
    %v11073 = vrot.slane %v11068, %v11072
    %v11074 = vlaneseq
    %v11075 = vshrl.u32 %v11074, 7
    %v11076 = vsub.s32 1, %v11075
    %v11077 = vrot.slane %v11068, %v11076
    %v11080 = vadd.f32 %v11066, %v11073
    %v11081 = vadd.f32 %v11067, %v11077
    %v11082 = vadd.f32 %v11080, 3.0
    %v11083 = vadd.f32 %v11081, 3.0
    %v11084 = vmax.f32 %v11082, 0.0
    %v11085 = vmax.f32 %v11083, 0.0
    %v11086 = vmin.f32 %v11084, 6.0
    %v11087 = vmin.f32 %v11085, 6.0
    %v11088 = vmul.f32 %v11086, 0.16666667
    %v11089 = vmul.f32 %v11087, 0.16666667
    %v11092 = vcombine.low %v11088, %v11089
    %v11094 = vunpack.c.l.s4 1966171168
    %v11095 = vunpack.c.0.s8 %v11094
    %v11096 = vlaneseq
    %v11097 = vshrl.u32 %v11096, 7
    %v11098 = vsub.s32 %v11095, %v11097
    %v11099 = vrot.slane %v11092, %v11098
    %v11100 = vcombine.high %v11099, %v11099
    %v11102 = vunpack.c.l.s4 1966171168
    %v11103 = vunpack.c.0.s8 %v11102
    %v11104 = vlaneseq
    %v11105 = vshrl.u32 %v11104, 7
    %v11106 = vsub.s32 %v11103, %v11105
    %v11107 = vrot.slane %v11099, %v11106
    %v11109 = vunpack.c.l.s4 1966171168
    %v11110 = vunpack.c.0.s8 %v11109
    %v11111 = vlaneseq
    %v11112 = vshrl.u32 %v11111, 7
    %v11113 = vsub.s32 %v11110, %v11112
    %v11114 = vrot.slane %v11100, %v11113
    %v11115 = vlaneseq
    %v11116 = vshrl.u32 %v11115, 7
    %v11117 = vsub.s32 0, %v11116
    %v11118 = vrot.slane %v11107, %v11117
    %v11119 = vlaneseq
    %v11120 = vshrl.u32 %v11119, 7
    %v11121 = vsub.s32 1, %v11120
    %v11122 = vrot.slane %v11107, %v11121
    %v11123 = vlaneseq
    %v11124 = vshrl.u32 %v11123, 7
    %v11125 = vsub.s32 0, %v11124
    %v11126 = vrot.slane %v11114, %v11125
    %v11127 = vlaneseq
    %v11128 = vshrl.u32 %v11127, 7
    %v11129 = vsub.s32 1, %v11128
    %v11130 = vrot.slane %v11114, %v11129
    %v11135 = vmul.f32 %v10852, %v11118
    %v11136 = vmul.f32 %v10853, %v11122
    %v11137 = vmul.f32 %v10854, %v11118
    %v11138 = vmul.f32 %v10855, %v11122
    %v11139 = vmul.f32 %v10856, %v11118
    %v11140 = vmul.f32 %v10857, %v11122
    %v11141 = vmul.f32 %v10858, %v11118
    %v11142 = vmul.f32 %v10859, %v11122
    %v11143 = vmul.f32 %v10860, %v11118
    %v11144 = vmul.f32 %v10861, %v11122
    %v11145 = vmul.f32 %v10862, %v11118
    %v11146 = vmul.f32 %v10863, %v11122
    %v11147 = vmul.f32 %v10864, %v11118
    %v11148 = vmul.f32 %v10865, %v11122
    %v11149 = vmul.f32 %v10866, %v11118
    %v11150 = vmul.f32 %v10867, %v11122
    %v11151 = vmul.f32 %v10868, %v11126
    %v11152 = vmul.f32 %v10869, %v11130
    %v11153 = vmul.f32 %v10870, %v11126
    %v11154 = vmul.f32 %v10871, %v11130
    %v11155 = vmul.f32 %v10872, %v11126
    %v11156 = vmul.f32 %v10873, %v11130
    %v11157 = vmul.f32 %v10874, %v11126
    %v11158 = vmul.f32 %v10875, %v11130
    %v11159 = vmul.f32 %v10876, %v11126
    %v11160 = vmul.f32 %v10877, %v11130
    %v11161 = vmul.f32 %v10878, %v11126
    %v11162 = vmul.f32 %v10879, %v11130
    %v11163 = vmul.f32 %v10880, %v11126
    %v11164 = vmul.f32 %v10881, %v11130
    %v11165 = vmul.f32 %v10882, %v11126
    %v11166 = vmul.f32 %v10883, %v11130
    %v11167 = vpack.c.bf16 %v11137, %v11135
    %v11168 = vpack.c.bf16 %v11138, %v11136
    %v11169 = vpack.c.bf16 %v11141, %v11139
    %v11170 = vpack.c.bf16 %v11142, %v11140
    %v11171 = vpack.c.bf16 %v11145, %v11143
    %v11172 = vpack.c.bf16 %v11146, %v11144
    %v11173 = vpack.c.bf16 %v11149, %v11147
    %v11174 = vpack.c.bf16 %v11150, %v11148
    %v11175 = vpack.c.bf16 %v11153, %v11151
    %v11176 = vpack.c.bf16 %v11154, %v11152
    %v11177 = vpack.c.bf16 %v11157, %v11155
    %v11178 = vpack.c.bf16 %v11158, %v11156
    %v11179 = vpack.c.bf16 %v11161, %v11159
    %v11180 = vpack.c.bf16 %v11162, %v11160
    %v11181 = vpack.c.bf16 %v11165, %v11163
    %v11182 = vpack.c.bf16 %v11166, %v11164
    %v11183 = vld [vmem:[%s25] sm:$0xf]
    %v11184 = vld [vmem:[%s25 + $0x4] sm:$0xf]
    %v11185 = vld [vmem:[%s25 + $0x8] sm:$0xf]
    %v11186 = vld [vmem:[%s25 + $0xc] sm:$0xf]
    %v11187 = vld [vmem:[%s25 + $0x10] sm:$0xf]
    %v11188 = vld [vmem:[%s25 + $0x14] sm:$0xf]
    %v11189 = vld [vmem:[%s25 + $0x18] sm:$0xf]
    %v11190 = vld [vmem:[%s25 + $0x1c] sm:$0xf]
    %v11191 = vld [vmem:[%s25 + $0x20] sm:$0xf]
    %v11192 = vld [vmem:[%s25 + $0x24] sm:$0xf]
    %v11193 = vld [vmem:[%s25 + $0x28] sm:$0xf]
    %v11194 = vld [vmem:[%s25 + $0x2c] sm:$0xf]
    %v11195 = vld [vmem:[%s25 + $0x30] sm:$0xf]
    %v11196 = vld [vmem:[%s25 + $0x34] sm:$0xf]
    %v11197 = vld [vmem:[%s25 + $0x38] sm:$0xf]
    %v11198 = vld [vmem:[%s25 + $0x3c] sm:$0xf]
    %v11199 = vld [vmem:[%s25 + $0x40] sm:$0xf]
    %v11200 = vld [vmem:[%s25 + $0x44] sm:$0xf]
    %v11201 = vld [vmem:[%s25 + $0x48] sm:$0xf]
    %v11202 = vld [vmem:[%s25 + $0x4c] sm:$0xf]
    %v11203 = vld [vmem:[%s25 + $0x50] sm:$0xf]
    %v11204 = vld [vmem:[%s25 + $0x54] sm:$0xf]
    %v11205 = vld [vmem:[%s25 + $0x58] sm:$0xf]
    %v11206 = vld [vmem:[%s25 + $0x5c] sm:$0xf]
    %v11207 = vld [vmem:[%s25 + $0x60] sm:$0xf]
    %v11208 = vld [vmem:[%s25 + $0x64] sm:$0xf]
    %v11209 = vld [vmem:[%s25 + $0x68] sm:$0xf]
    %v11210 = vld [vmem:[%s25 + $0x6c] sm:$0xf]
    %v11211 = vld [vmem:[%s25 + $0x70] sm:$0xf]
    %v11212 = vld [vmem:[%s25 + $0x74] sm:$0xf]
    %v11213 = vld [vmem:[%s25 + $0x78] sm:$0xf]
    %v11214 = vld [vmem:[%s25 + $0x7c] sm:$0xf]
    %v11215 = vld [vmem:[%s26] sm:$0x1]
    %v11217 = vlaneseq
    %v11218 = vshrl.u32 %v11217, 7
    %v11219 = vsub.s32 0, %v11218
    %v11220 = vrot.slane %v11215, %v11219
    %v11254 = vunpack.c.l.b16 %v11183
    %v11255 = vunpack.c.l.b16 %v11184
    %v11256 = vunpack.c.l.b16 %v11185
    %v11257 = vunpack.c.l.b16 %v11186
    %v11258 = vunpack.c.l.b16 %v11187
    %v11259 = vunpack.c.l.b16 %v11188
    %v11260 = vunpack.c.l.b16 %v11189
    %v11261 = vunpack.c.l.b16 %v11190
    %v11262 = vunpack.c.l.b16 %v11191
    %v11263 = vunpack.c.l.b16 %v11192
    %v11264 = vunpack.c.l.b16 %v11193
    %v11265 = vunpack.c.l.b16 %v11194
    %v11266 = vunpack.c.l.b16 %v11195
    %v11267 = vunpack.c.l.b16 %v11196
    %v11268 = vunpack.c.l.b16 %v11197
    %v11269 = vunpack.c.l.b16 %v11198
    %v11270 = vunpack.c.l.b16 %v11199
    %v11271 = vunpack.c.l.b16 %v11200
    %v11272 = vunpack.c.l.b16 %v11201
    %v11273 = vunpack.c.l.b16 %v11202
    %v11274 = vunpack.c.l.b16 %v11203
    %v11275 = vunpack.c.l.b16 %v11204
    %v11276 = vunpack.c.l.b16 %v11205
    %v11277 = vunpack.c.l.b16 %v11206
    %v11278 = vunpack.c.l.b16 %v11207
    %v11279 = vunpack.c.l.b16 %v11208
    %v11280 = vunpack.c.l.b16 %v11209
    %v11281 = vunpack.c.l.b16 %v11210
    %v11282 = vunpack.c.l.b16 %v11211
    %v11283 = vunpack.c.l.b16 %v11212
    %v11284 = vunpack.c.l.b16 %v11213
    %v11285 = vunpack.c.l.b16 %v11214
    %v11286 = vpack.c.b16 %v11255, %v11254
    %v11287 = vpack.c.b16 %v11257, %v11256
    %v11288 = vpack.c.b16 %v11259, %v11258
    %v11289 = vpack.c.b16 %v11261, %v11260
    %v11290 = vpack.c.b16 %v11263, %v11262
    %v11291 = vpack.c.b16 %v11265, %v11264
    %v11292 = vpack.c.b16 %v11267, %v11266
    %v11293 = vpack.c.b16 %v11269, %v11268
    %v11294 = vpack.c.b16 %v11271, %v11270
    %v11295 = vpack.c.b16 %v11273, %v11272
    %v11296 = vpack.c.b16 %v11275, %v11274
    %v11297 = vpack.c.b16 %v11277, %v11276
    %v11298 = vpack.c.b16 %v11279, %v11278
    %v11299 = vpack.c.b16 %v11281, %v11280
    %v11300 = vpack.c.b16 %v11283, %v11282
    %v11301 = vpack.c.b16 %v11285, %v11284
    %11318 = vmatprep.subr.bf16.mxu0 0
    %11319 = vmatpush1.bf16.msra.mxu0 %v11286
    %11320 = vmatprep.subr.bf16.mxu0 0
    %11321 = vmatpush1.bf16.msra.mxu0 %v11287
    %11322 = vmatprep.subr.bf16.mxu0 0
    %11323 = vmatpush1.bf16.msra.mxu0 %v11288
    %11324 = vmatprep.subr.bf16.mxu0 0
    %11325 = vmatpush1.bf16.msra.mxu0 %v11289
    %11326 = vmatprep.subr.bf16.mxu0 0
    %11327 = vmatpush1.bf16.msra.mxu0 %v11290
    %11328 = vmatprep.subr.bf16.mxu0 0
    %11329 = vmatpush1.bf16.msra.mxu0 %v11291
    %11330 = vmatprep.subr.bf16.mxu0 0
    %11331 = vmatpush1.bf16.msra.mxu0 %v11292
    %11332 = vmatprep.subr.bf16.mxu0 0
    %11333 = vmatpush1.bf16.msra.mxu0 %v11293
    %11334 = vmatprep.subr.bf16.mxu0 0
    %11335 = vmatpush1.bf16.msra.mxu0 %v11294
    %11336 = vmatprep.subr.bf16.mxu0 0
    %11337 = vmatpush1.bf16.msra.mxu0 %v11295
    %11338 = vmatprep.subr.bf16.mxu0 0
    %11339 = vmatpush1.bf16.msra.mxu0 %v11296
    %11340 = vmatprep.subr.bf16.mxu0 0
    %11341 = vmatpush1.bf16.msra.mxu0 %v11297
    %11342 = vmatprep.subr.bf16.mxu0 0
    %11343 = vmatpush1.bf16.msra.mxu0 %v11298
    %11344 = vmatprep.subr.bf16.mxu0 0
    %11345 = vmatpush1.bf16.msra.mxu0 %v11299
    %11346 = vmatprep.subr.bf16.mxu0 0
    %11347 = vmatpush1.bf16.msra.mxu0 %v11300
    %11348 = vmatprep.subr.bf16.mxu0 0
    %11349 = vmatpush1.bf16.msra.mxu0 %v11301
    %11350 = vmatprep.mubr.bf16.mxu0 %v11168
    %11351 = vmatmul.mubr.bf16.gmra.mrb[0].mxu0 %v11167
    %v11352 = vpop.f32.mrb[0].mxu0
    %v11353 = vadd.f32 %v11220, %v11352
    %v11354 = vpop.f32.mrb[0].mxu0
    %v11355 = vpop.f32.mrb[0].mxu0
    %v11356 = vadd.f32 %v11220, %v11355
    %v11357 = vpop.f32.mrb[0].mxu0
    %11358 = vmatprep.mubr.bf16.mxu0 %v11170
    %11359 = vmatmul.mubr.bf16.gmra.mrb[0].mxu0 %v11169
    %v11360 = vpop.f32.mrb[0].mxu0
    %v11361 = vadd.f32 %v11220, %v11360
    %v11362 = vpop.f32.mrb[0].mxu0
    %v11363 = vpop.f32.mrb[0].mxu0
    %v11364 = vadd.f32 %v11220, %v11363
    %v11365 = vpop.f32.mrb[0].mxu0
    %11366 = vmatprep.mubr.bf16.mxu0 %v11172
    %11367 = vmatmul.mubr.bf16.gmra.mrb[0].mxu0 %v11171
    %v11368 = vpop.f32.mrb[0].mxu0
    %v11369 = vadd.f32 %v11220, %v11368
    %v11370 = vpop.f32.mrb[0].mxu0
    %v11371 = vpop.f32.mrb[0].mxu0
    %v11372 = vadd.f32 %v11220, %v11371
    %v11373 = vpop.f32.mrb[0].mxu0
    %11374 = vmatprep.mubr.bf16.mxu0 %v11174
    %11375 = vmatmul.mubr.bf16.gmra.mrb[0].mxu0 %v11173
    %v11376 = vpop.f32.mrb[0].mxu0
    %v11377 = vadd.f32 %v11220, %v11376
    %v11378 = vpop.f32.mrb[0].mxu0
    %v11379 = vpop.f32.mrb[0].mxu0
    %v11380 = vadd.f32 %v11220, %v11379
    %v11381 = vpop.f32.mrb[0].mxu0
    %11382 = vmatprep.mubr.bf16.mxu0 %v11176
    %11383 = vmatmul.mubr.bf16.gmra.mrb[0].mxu0 %v11175
    %v11384 = vpop.f32.mrb[0].mxu0
    %v11385 = vadd.f32 %v11220, %v11384
    %v11386 = vpop.f32.mrb[0].mxu0
    %v11387 = vpop.f32.mrb[0].mxu0
    %v11388 = vadd.f32 %v11220, %v11387
    %v11389 = vpop.f32.mrb[0].mxu0
    %11390 = vmatprep.mubr.bf16.mxu0 %v11178
    %11391 = vmatmul.mubr.bf16.gmra.mrb[0].mxu0 %v11177
    %v11392 = vpop.f32.mrb[0].mxu0
    %v11393 = vadd.f32 %v11220, %v11392
    %v11394 = vpop.f32.mrb[0].mxu0
    %v11395 = vpop.f32.mrb[0].mxu0
    %v11396 = vadd.f32 %v11220, %v11395
    %v11397 = vpop.f32.mrb[0].mxu0
    %11398 = vmatprep.mubr.bf16.mxu0 %v11180
    %11399 = vmatmul.mubr.bf16.gmra.mrb[0].mxu0 %v11179
    %v11400 = vpop.f32.mrb[0].mxu0
    %v11401 = vadd.f32 %v11220, %v11400
    %v11402 = vpop.f32.mrb[0].mxu0
    %v11403 = vpop.f32.mrb[0].mxu0
    %v11404 = vadd.f32 %v11220, %v11403
    %v11405 = vpop.f32.mrb[0].mxu0
    %11406 = vmatprep.mubr.bf16.mxu0 %v11182
    %11407 = vmatmul.mubr.bf16.gmra.mrb[0].mxu0 %v11181
    %v11408 = vpop.f32.mrb[0].mxu0
    %v11409 = vadd.f32 %v11220, %v11408
    %v11410 = vpop.f32.mrb[0].mxu0
    %v11411 = vpop.f32.mrb[0].mxu0
    %v11412 = vadd.f32 %v11220, %v11411
    %v11413 = vpop.f32.mrb[0].mxu0
    %11414 = vdwg.mxu0
    %v11415 = vld [vmem:[#allocation2] sm:$0xff]
    %v11416 = vld [vmem:[#allocation2 + $0x8] sm:$0xff]
    %v11417 = vld [vmem:[#allocation2 + $0x10] sm:$0xff]
    %v11418 = vld [vmem:[#allocation2 + $0x18] sm:$0xff]
    %v11419 = vld [vmem:[#allocation2 + $0x20] sm:$0xff]
    %v11420 = vld [vmem:[#allocation2 + $0x28] sm:$0xff]
    %v11421 = vld [vmem:[#allocation2 + $0x30] sm:$0xff]
    %v11422 = vld [vmem:[#allocation2 + $0x38] sm:$0xff]
    %v11423 = vld [vmem:[#allocation2 + $0x40] sm:$0xff]
    %v11424 = vld [vmem:[#allocation2 + $0x48] sm:$0xff]
    %v11425 = vld [vmem:[#allocation2 + $0x50] sm:$0xff]
    %v11426 = vld [vmem:[#allocation2 + $0x58] sm:$0xff]
    %v11427 = vld [vmem:[#allocation2 + $0x60] sm:$0xff]
    %v11428 = vld [vmem:[#allocation2 + $0x68] sm:$0xff]
    %v11429 = vld [vmem:[#allocation2 + $0x70] sm:$0xff]
    %v11430 = vld [vmem:[#allocation2 + $0x78] sm:$0xff]
    %v11431 = vadd.f32 %v11415, %v11353
    %v11432 = vadd.f32 %v11416, %v11356
    %v11433 = vadd.f32 %v11417, %v11361
    %v11434 = vadd.f32 %v11418, %v11364
    %v11435 = vadd.f32 %v11419, %v11369
    %v11436 = vadd.f32 %v11420, %v11372
    %v11437 = vadd.f32 %v11421, %v11377
    %v11438 = vadd.f32 %v11422, %v11380
    %v11439 = vadd.f32 %v11423, %v11385
    %v11440 = vadd.f32 %v11424, %v11388
    %v11441 = vadd.f32 %v11425, %v11393
    %v11442 = vadd.f32 %v11426, %v11396
    %v11443 = vadd.f32 %v11427, %v11401
    %v11444 = vadd.f32 %v11428, %v11404
    %v11445 = vadd.f32 %v11429, %v11409
    %v11446 = vadd.f32 %v11430, %v11412
    %11447 = vst [vmem:[#allocation2] sm:$0xff] %v11431
    %11448 = vst [vmem:[#allocation2 + $0x8] sm:$0xff] %v11432
    %11449 = vst [vmem:[#allocation2 + $0x10] sm:$0xff] %v11433
    %11450 = vst [vmem:[#allocation2 + $0x18] sm:$0xff] %v11434
    %11451 = vst [vmem:[#allocation2 + $0x20] sm:$0xff] %v11435
    %11452 = vst [vmem:[#allocation2 + $0x28] sm:$0xff] %v11436
    %11453 = vst [vmem:[#allocation2 + $0x30] sm:$0xff] %v11437
    %11454 = vst [vmem:[#allocation2 + $0x38] sm:$0xff] %v11438
    %11455 = vst [vmem:[#allocation2 + $0x40] sm:$0xff] %v11439
    %11456 = vst [vmem:[#allocation2 + $0x48] sm:$0xff] %v11440
    %11457 = vst [vmem:[#allocation2 + $0x50] sm:$0xff] %v11441
    %11458 = vst [vmem:[#allocation2 + $0x58] sm:$0xff] %v11442
    %11459 = vst [vmem:[#allocation2 + $0x60] sm:$0xff] %v11443
    %11460 = vst [vmem:[#allocation2 + $0x68] sm:$0xff] %v11444
    %11461 = vst [vmem:[#allocation2 + $0x70] sm:$0xff] %v11445
    %11462 = vst [vmem:[#allocation2 + $0x78] sm:$0xff] %v11446
    // Predicated region
    $region110: #{lt_block_forward.1} parent=1 // pred_check
      _
    $region111: #{lt_block_forward.1} parent=1 // pred_check_branch
      %11464 = sbr.rel (0) target = $region113
    $region112: #{lt_block_forward.1} parent=1 // pred_region
      %s11466 = ssub.s32 2048, 2048
      %11467 = vsyncadd [#allocation3], %s11466
      %s11468 = sshll.u32 [#allocation2], 4
      %s11469 = int_to_ptr.vmem [resolvable:$true] %s11468
      %11474 = dma.vmem_to_hbm [thread:$0]  %s11469, 2048, %s27, [#allocation3], 128, 128, 8
    $region113: #{lt_block_forward.1} parent=1 // pred_fallthru
      _
    // Predicated region
    $region114: #{lt_block_forward.1} parent=1 // pred_check
      _
    $region115: #{lt_block_forward.1} parent=1 // pred_check_branch
      %11476 = sbr.rel (0) target = $region117
    $region116: #{lt_block_forward.1} parent=1 // pred_region
      %11477 = dma.done [#allocation3], 2048
    $region117: #{lt_block_forward.1} parent=1 // pred_fallthru
      _
    %11478 = vsyncpa [#allocation3], 1

</llo_original>
